<compile_context>
chip_gen: v5e
topology: v5e:2x2
jax: 0.10.0
libtpu: 0.0.40
codegen_flags: <defaults>
</compile_context>

<pallas_src>
import functools
import math

import jax
import jax.numpy as jnp
from jax.experimental import pallas as pl
from jax.experimental.pallas import tpu as pltpu


def _unet_up_kernel(x1p_ref, x2p_ref, wup_ref, bup_ref,
                    w1a_ref, w1b_ref, b1_ref, w2_ref, b2_ref,
                    o_ref, up_pad_ref, t1_pad_ref,
                    *, negative_slope, reflect_pad):
    """Fused unetUp forward for one batch element.

    x1p_ref : (1, H+2, W+2, C1)  padded, nearest-upsampled inputs1 (NHWC)
    x2p_ref : (1, H+2, W+2, C2)  padded, center-cropped inputs2 (NHWC)
    w*_ref  : (3, 3, Cin, Cout) conv weights;  b*_ref : (1, Cout) biases
    o_ref   : (1, H, W, Cout)
    up_pad_ref / t1_pad_ref : (H+2, W+2, Cout) f32 VMEM scratch holding the
        padded intermediate feature maps (they never leave VMEM).
    """
    _, H, W, Cout = o_ref.shape
    HW = H * W

    def slab4(ref, dy, dx):           # from a (1, H+2, W+2, C) input ref
        v = ref[0, dy:dy + H, dx:dx + W, :]
        return v.reshape(HW, v.shape[-1]).astype(jnp.float32)

    def slab3(ref, dy, dx):           # from a (H+2, W+2, C) scratch ref
        v = ref[dy:dy + H, dx:dx + W, :]
        return v.reshape(HW, v.shape[-1]).astype(jnp.float32)

    def conv_taps(acc, slab_fn, x_ref, w_ref):
        # 3x3 conv as 9 shifted (HW, Cin) @ (Cin, Cout) MXU matmuls.
        for dy in range(3):
            for dx in range(3):
                acc = acc + jnp.dot(slab_fn(x_ref, dy, dx),
                                    w_ref[dy, dx].astype(jnp.float32),
                                    preferred_element_type=jnp.float32)
        return acc

    def leaky(a):
        return jnp.where(a >= 0, a, jnp.float32(negative_slope) * a)

    def write_padded(scr_ref, interior_flat):
        # Store an (HW, Cout) result into the interior of a padded scratch map.
        scr_ref[...] = jnp.zeros(scr_ref.shape, scr_ref.dtype)
        scr_ref[1:H + 1, 1:W + 1, :] = interior_flat.reshape(H, W, Cout)
        if reflect_pad:               # ReflectionPad2d(1) semantics
            scr_ref[0, :, :] = scr_ref[2, :, :]
            scr_ref[H + 1, :, :] = scr_ref[H - 1, :, :]
            scr_ref[:, 0, :] = scr_ref[:, 2, :]
            scr_ref[:, W + 1, :] = scr_ref[:, W - 1, :]

    # --- stage 1: self.up = (nearest upsample done in wrapper) + 3x3 conv ----
    acc = jnp.zeros((HW, Cout), jnp.float32)
    acc = conv_taps(acc, slab4, x1p_ref, wup_ref)
    acc = acc + bup_ref[...].astype(jnp.float32)
    write_padded(up_pad_ref, acc)

    # --- stage 2: unetConv2.conv1 over cat([in1_up, inputs2_], C) ------------
    # Concat fused away: both weight halves accumulate into one acc.
    acc1 = jnp.zeros((HW, Cout), jnp.float32)
    acc1 = conv_taps(acc1, slab3, up_pad_ref, w1a_ref)
    acc1 = conv_taps(acc1, slab4, x2p_ref, w1b_ref)
    acc1 = leaky(acc1 + b1_ref[...].astype(jnp.float32))
    write_padded(t1_pad_ref, acc1)

    # --- stage 3: unetConv2.conv2 ---------------------------------------------
    acc2 = jnp.zeros((HW, Cout), jnp.float32)
    acc2 = conv_taps(acc2, slab3, t1_pad_ref, w2_ref)
    acc2 = leaky(acc2 + b2_ref[...].astype(jnp.float32))
    o_ref[...] = acc2.reshape(1, H, W, Cout).astype(o_ref.dtype)


def init_unet_up_params(key, out_size, *, need_bias=True, same_num_filt=False):
    """PyTorch-layout parameters for unetUp with upsample_mode='nearest'."""
    num_filt = out_size if same_num_filt else 2 * out_size
    k = jax.random.split(key, 6)

    def conv_w(kk, cout, cin):
        scale = 1.0 / math.sqrt(cin * 9)
        return scale * jax.random.normal(kk, (cout, cin, 3, 3), jnp.float32)

    def conv_b(kk, cout):
        if not need_bias:
            return jnp.zeros((cout,), jnp.float32)
        return 0.05 * jax.random.normal(kk, (cout,), jnp.float32)

    return {
        "w_up": conv_w(k[0], out_size, num_filt), "b_up": conv_b(k[1], out_size),
        "w1": conv_w(k[2], out_size, 2 * out_size), "b1": conv_b(k[3], out_size),
        "w2": conv_w(k[4], out_size, out_size), "b2": conv_b(k[5], out_size),
    }


@functools.partial(jax.jit,
                   static_argnames=("upsample_mode", "pad", "negative_slope"))
def unet_up_forward(inputs1, inputs2, params, *, upsample_mode="nearest",
                    pad="zero", negative_slope=0.2):
    """JAX/Pallas equivalent of unetUp(...).forward(inputs1, inputs2), NCHW."""
    if upsample_mode != "nearest":
        # TODO(synk): 'deconv' (ConvTranspose2d 4x4 s2 p1) and 'bilinear' up paths.
        raise NotImplementedError(upsample_mode)

    n, c1, h, w = inputs1.shape
    H, W = 2 * h, 2 * w

    # Center-crop inputs2 to in1_up's spatial size (as in the torch forward).
    d2 = (inputs2.shape[2] - H) // 2
    d3 = (inputs2.shape[3] - W) // 2
    x2 = inputs2[:, :, d2:d2 + H, d3:d3 + W]

    # Layout glue: NCHW -> NHWC so channels sit on the 128-lane axis.
    x1 = jnp.transpose(inputs1, (0, 2, 3, 1))
    x2 = jnp.transpose(x2, (0, 2, 3, 1))

    # Nearest 2x upsample of inputs1 (pure data movement) + 1-px spatial pad.
    x1u = jnp.repeat(jnp.repeat(x1, 2, axis=1), 2, axis=2)
    mode = "constant" if pad == "zero" else "reflect"
    spad = ((0, 0), (1, 1), (1, 1), (0, 0))
    x1p = jnp.pad(x1u, spad, mode=mode)
    x2p = jnp.pad(x2, spad, mode=mode)
    c2 = x2p.shape[-1]

    # Weights: torch (Cout, Cin, 3, 3) -> (3, 3, Cin, Cout); split conv1's
    # input channels so the channel concat never materializes.
    out_size = params["w_up"].shape[0]
    tr = lambda wt: jnp.transpose(wt, (2, 3, 1, 0)).astype(jnp.float32)
    w_up, w1, w2 = tr(params["w_up"]), tr(params["w1"]), tr(params["w2"])
    w1a, w1b = w1[:, :, :out_size, :], w1[:, :, out_size:, :]
    bias = lambda bv: bv.reshape(1, -1).astype(jnp.float32)
    b_up, b1, b2 = bias(params["b_up"]), bias(params["b1"]), bias(params["b2"])

    kernel = functools.partial(_unet_up_kernel,
                               negative_slope=float(negative_slope),
                               reflect_pad=(pad != "zero"))

    def whole(shape):
        zeros = (0,) * len(shape)
        return pl.BlockSpec(shape, lambda i: zeros)

    out_nhwc = pl.pallas_call(
        kernel,
        out_shape=jax.ShapeDtypeStruct((n, H, W, out_size), inputs1.dtype),
        grid=(n,),
        in_specs=[
            pl.BlockSpec((1, H + 2, W + 2, c1), lambda i: (i, 0, 0, 0)),
            pl.BlockSpec((1, H + 2, W + 2, c2), lambda i: (i, 0, 0, 0)),
            whole(w_up.shape), whole(b_up.shape),
            whole(w1a.shape), whole(w1b.shape), whole(b1.shape),
            whole(w2.shape), whole(b2.shape),
        ],
        out_specs=pl.BlockSpec((1, H, W, out_size), lambda i: (i, 0, 0, 0)),
        scratch_shapes=[
            pltpu.VMEM((H + 2, W + 2, out_size), jnp.float32),
            pltpu.VMEM((H + 2, W + 2, out_size), jnp.float32),
        ],
        compiler_params=pltpu.CompilerParams(
            dimension_semantics=("parallel",)),
        # TODO(synk): for large UNet feature maps, additionally tile over H
        # (rows) so a single batch element's padded maps need not fit VMEM.
    )(x1p, x2p, w_up, b_up, w1a, w1b, b1, w2, b2)

    return jnp.transpose(out_nhwc, (0, 3, 1, 2))


def unet_up_reference(inputs1, inputs2, params, *, pad="zero",
                      negative_slope=0.2):
    """Pure-JAX (lax.conv) reference mirroring the PyTorch module."""
    mode = "constant" if pad == "zero" else "reflect"

    def conv3x3(x, wt, bv):
        xp = jnp.pad(x.astype(jnp.float32),
                     ((0, 0), (0, 0), (1, 1), (1, 1)), mode=mode)
        y = jax.lax.conv_general_dilated(
            xp, wt.astype(jnp.float32), window_strides=(1, 1), padding="VALID",
            dimension_numbers=("NCHW", "OIHW", "NCHW"))
        return y + bv.reshape(1, -1, 1, 1).astype(jnp.float32)

    def leaky(a):
        return jnp.where(a >= 0, a, negative_slope * a)

    up_in = jnp.repeat(jnp.repeat(inputs1, 2, axis=2), 2, axis=3)
    in1_up = conv3x3(up_in, params["w_up"], params["b_up"])
    H, W = in1_up.shape[2], in1_up.shape[3]
    d2 = (inputs2.shape[2] - H) // 2
    d3 = (inputs2.shape[3] - W) // 2
    x2 = inputs2[:, :, d2:d2 + H, d3:d3 + W].astype(jnp.float32)
    t1 = leaky(conv3x3(jnp.concatenate([in1_up, x2], axis=1),
                       params["w1"], params["b1"]))
    t2 = leaky(conv3x3(t1, params["w2"], params["b2"]))
    return t2.astype(inputs1.dtype)


if __name__ == "__main__":
    key = jax.random.PRNGKey(0)
    k1, k2, kp = jax.random.split(key, 3)

    out_size = 4                               # num_filt = 8 (same_num_filt=False)
    inputs1 = jax.random.normal(k1, (2, 2 * out_size, 8, 8), jnp.float32)
    inputs2 = jax.random.normal(k2, (2, out_size, 16, 16), jnp.float32)
    params = init_unet_up_params(kp, out_size, need_bias=True)

    out = unet_up_forward(inputs1, inputs2, params)
    out = jax.block_until_ready(out)

    assert out.shape == (2, out_size, 16, 16), out.shape
    assert out.dtype == inputs1.dtype, out.dtype

    ref = unet_up_reference(inputs1, inputs2, params)
    err = float(jnp.max(jnp.abs(out.astype(jnp.float32) -
                                ref.astype(jnp.float32))))
    assert err < 5e-2, f"max abs err vs reference: {err}"

    print("KERNEL_OK")
</pallas_src>

<mosaic_0001>
module attributes {stable_mosaic.version = 11 : i64} {
  func.func @_unet_up_kernel(%arg0: i32, %arg1: memref<1x18x18x8xf32, #tpu.memory_space<vmem>>, %arg2: memref<1x18x18x4xf32, #tpu.memory_space<vmem>>, %arg3: memref<3x3x8x4xf32, #tpu.memory_space<vmem>>, %arg4: memref<1x4xf32, #tpu.memory_space<vmem>>, %arg5: memref<3x3x4x4xf32, #tpu.memory_space<vmem>>, %arg6: memref<3x3x4x4xf32, #tpu.memory_space<vmem>>, %arg7: memref<1x4xf32, #tpu.memory_space<vmem>>, %arg8: memref<3x3x4x4xf32, #tpu.memory_space<vmem>>, %arg9: memref<1x4xf32, #tpu.memory_space<vmem>>, %arg10: memref<1x16x16x4xf32, #tpu.memory_space<vmem>>, %arg11: memref<18x18x4xf32, #tpu.memory_space<vmem>>, %arg12: memref<18x18x4xf32, #tpu.memory_space<vmem>>) attributes {dimension_semantics = [#tpu.dimension_semantics<parallel>], iteration_bounds = array<i64: 2>, scalar_prefetch = 0 : i64, scratch_operands = 2 : i64, tpu.core_type = #tpu.core_type<tc>, window_params = [{transform_indices = @transform_0, window_bounds = array<i64: 1, 18, 18, 8>}, {transform_indices = @transform_1, window_bounds = array<i64: 1, 18, 18, 4>}, {pipeline_mode = #tpu.pipeline_mode<synchronous>, transform_indices = @transform_2, window_bounds = array<i64: 3, 3, 8, 4>}, {pipeline_mode = #tpu.pipeline_mode<synchronous>, transform_indices = @transform_3, window_bounds = array<i64: 1, 4>}, {pipeline_mode = #tpu.pipeline_mode<synchronous>, transform_indices = @transform_4, window_bounds = array<i64: 3, 3, 4, 4>}, {pipeline_mode = #tpu.pipeline_mode<synchronous>, transform_indices = @transform_5, window_bounds = array<i64: 3, 3, 4, 4>}, {pipeline_mode = #tpu.pipeline_mode<synchronous>, transform_indices = @transform_6, window_bounds = array<i64: 1, 4>}, {pipeline_mode = #tpu.pipeline_mode<synchronous>, transform_indices = @transform_7, window_bounds = array<i64: 3, 3, 4, 4>}, {pipeline_mode = #tpu.pipeline_mode<synchronous>, transform_indices = @transform_8, window_bounds = array<i64: 1, 4>}, {transform_indices = @transform_9, window_bounds = array<i64: 1, 16, 16, 4>}]} {
    %cst = arith.constant 0.000000e+00 : f32
    %0 = vector.broadcast %cst : f32 to vector<256x4xf32>
    %c0 = arith.constant 0 : index
    %c0_0 = arith.constant 0 : index
    %c0_1 = arith.constant 0 : index
    %c0_2 = arith.constant 0 : index
    %1 = vector.load %arg1[%c0, %c0_0, %c0_1, %c0_2] : memref<1x18x18x8xf32, #tpu.memory_space<vmem>>, vector<1x16x16x8xf32>
    %2 = vector.shape_cast %1 : vector<1x16x16x8xf32> to vector<16x16x8xf32>
    %3 = vector.shape_cast %2 : vector<16x16x8xf32> to vector<256x8xf32>
    %c0_3 = arith.constant 0 : index
    %c0_4 = arith.constant 0 : index
    %c0_5 = arith.constant 0 : index
    %c0_6 = arith.constant 0 : index
    %4 = vector.load %arg3[%c0_3, %c0_4, %c0_5, %c0_6] : memref<3x3x8x4xf32, #tpu.memory_space<vmem>>, vector<1x1x8x4xf32>
    %5 = vector.shape_cast %4 : vector<1x1x8x4xf32> to vector<8x4xf32>
    %cst_7 = arith.constant dense<0.000000e+00> : vector<256x4xf32>
    %6 = tpu.matmul %3, %5, %cst_7 {dimension_numbers = #tpu.dot_dimension_numbers<[1], [0], [0], [1], [0, 0, 1, 1], [], []>} : vector<256x8xf32>, vector<8x4xf32>, vector<256x4xf32> -> vector<256x4xf32>
    %7 = arith.addf %0, %6 : vector<256x4xf32>
    %c0_8 = arith.constant 0 : index
    %c0_9 = arith.constant 0 : index
    %c1 = arith.constant 1 : index
    %c0_10 = arith.constant 0 : index
    %8 = vector.load %arg1[%c0_8, %c0_9, %c1, %c0_10] : memref<1x18x18x8xf32, #tpu.memory_space<vmem>>, vector<1x16x16x8xf32>
    %9 = vector.shape_cast %8 : vector<1x16x16x8xf32> to vector<16x16x8xf32>
    %10 = vector.shape_cast %9 : vector<16x16x8xf32> to vector<256x8xf32>
    %c0_11 = arith.constant 0 : index
    %c1_12 = arith.constant 1 : index
    %c0_13 = arith.constant 0 : index
    %c0_14 = arith.constant 0 : index
    %11 = vector.load %arg3[%c0_11, %c1_12, %c0_13, %c0_14] : memref<3x3x8x4xf32, #tpu.memory_space<vmem>>, vector<1x1x8x4xf32>
    %12 = vector.shape_cast %11 : vector<1x1x8x4xf32> to vector<8x4xf32>
    %cst_15 = arith.constant dense<0.000000e+00> : vector<256x4xf32>
    %13 = tpu.matmul %10, %12, %cst_15 {dimension_numbers = #tpu.dot_dimension_numbers<[1], [0], [0], [1], [0, 0, 1, 1], [], []>} : vector<256x8xf32>, vector<8x4xf32>, vector<256x4xf32> -> vector<256x4xf32>
    %14 = arith.addf %7, %13 : vector<256x4xf32>
    %c0_16 = arith.constant 0 : index
    %c0_17 = arith.constant 0 : index
    %c2 = arith.constant 2 : index
    %c0_18 = arith.constant 0 : index
    %15 = vector.load %arg1[%c0_16, %c0_17, %c2, %c0_18] : memref<1x18x18x8xf32, #tpu.memory_space<vmem>>, vector<1x16x16x8xf32>
    %16 = vector.shape_cast %15 : vector<1x16x16x8xf32> to vector<16x16x8xf32>
    %17 = vector.shape_cast %16 : vector<16x16x8xf32> to vector<256x8xf32>
    %c0_19 = arith.constant 0 : index
    %c2_20 = arith.constant 2 : index
    %c0_21 = arith.constant 0 : index
    %c0_22 = arith.constant 0 : index
    %18 = vector.load %arg3[%c0_19, %c2_20, %c0_21, %c0_22] : memref<3x3x8x4xf32, #tpu.memory_space<vmem>>, vector<1x1x8x4xf32>
    %19 = vector.shape_cast %18 : vector<1x1x8x4xf32> to vector<8x4xf32>
    %cst_23 = arith.constant dense<0.000000e+00> : vector<256x4xf32>
    %20 = tpu.matmul %17, %19, %cst_23 {dimension_numbers = #tpu.dot_dimension_numbers<[1], [0], [0], [1], [0, 0, 1, 1], [], []>} : vector<256x8xf32>, vector<8x4xf32>, vector<256x4xf32> -> vector<256x4xf32>
    %21 = arith.addf %14, %20 : vector<256x4xf32>
    %c0_24 = arith.constant 0 : index
    %c1_25 = arith.constant 1 : index
    %c0_26 = arith.constant 0 : index
    %c0_27 = arith.constant 0 : index
    %22 = vector.load %arg1[%c0_24, %c1_25, %c0_26, %c0_27] : memref<1x18x18x8xf32, #tpu.memory_space<vmem>>, vector<1x16x16x8xf32>
    %23 = vector.shape_cast %22 : vector<1x16x16x8xf32> to vector<16x16x8xf32>
    %24 = vector.shape_cast %23 : vector<16x16x8xf32> to vector<256x8xf32>
    %c1_28 = arith.constant 1 : index
    %c0_29 = arith.constant 0 : index
    %c0_30 = arith.constant 0 : index
    %c0_31 = arith.constant 0 : index
    %25 = vector.load %arg3[%c1_28, %c0_29, %c0_30, %c0_31] : memref<3x3x8x4xf32, #tpu.memory_space<vmem>>, vector<1x1x8x4xf32>
    %26 = vector.shape_cast %25 : vector<1x1x8x4xf32> to vector<8x4xf32>
    %cst_32 = arith.constant dense<0.000000e+00> : vector<256x4xf32>
    %27 = tpu.matmul %24, %26, %cst_32 {dimension_numbers = #tpu.dot_dimension_numbers<[1], [0], [0], [1], [0, 0, 1, 1], [], []>} : vector<256x8xf32>, vector<8x4xf32>, vector<256x4xf32> -> vector<256x4xf32>
    %28 = arith.addf %21, %27 : vector<256x4xf32>
    %c0_33 = arith.constant 0 : index
    %c1_34 = arith.constant 1 : index
    %c1_35 = arith.constant 1 : index
    %c0_36 = arith.constant 0 : index
    %29 = vector.load %arg1[%c0_33, %c1_34, %c1_35, %c0_36] : memref<1x18x18x8xf32, #tpu.memory_space<vmem>>, vector<1x16x16x8xf32>
    %30 = vector.shape_cast %29 : vector<1x16x16x8xf32> to vector<16x16x8xf32>
    %31 = vector.shape_cast %30 : vector<16x16x8xf32> to vector<256x8xf32>
    %c1_37 = arith.constant 1 : index
    %c1_38 = arith.constant 1 : index
    %c0_39 = arith.constant 0 : index
    %c0_40 = arith.constant 0 : index
    %32 = vector.load %arg3[%c1_37, %c1_38, %c0_39, %c0_40] : memref<3x3x8x4xf32, #tpu.memory_space<vmem>>, vector<1x1x8x4xf32>
    %33 = vector.shape_cast %32 : vector<1x1x8x4xf32> to vector<8x4xf32>
    %cst_41 = arith.constant dense<0.000000e+00> : vector<256x4xf32>
    %34 = tpu.matmul %31, %33, %cst_41 {dimension_numbers = #tpu.dot_dimension_numbers<[1], [0], [0], [1], [0, 0, 1, 1], [], []>} : vector<256x8xf32>, vector<8x4xf32>, vector<256x4xf32> -> vector<256x4xf32>
    %35 = arith.addf %28, %34 : vector<256x4xf32>
    %c0_42 = arith.constant 0 : index
    %c1_43 = arith.constant 1 : index
    %c2_44 = arith.constant 2 : index
    %c0_45 = arith.constant 0 : index
    %36 = vector.load %arg1[%c0_42, %c1_43, %c2_44, %c0_45] : memref<1x18x18x8xf32, #tpu.memory_space<vmem>>, vector<1x16x16x8xf32>
    %37 = vector.shape_cast %36 : vector<1x16x16x8xf32> to vector<16x16x8xf32>
    %38 = vector.shape_cast %37 : vector<16x16x8xf32> to vector<256x8xf32>
    %c1_46 = arith.constant 1 : index
    %c2_47 = arith.constant 2 : index
    %c0_48 = arith.constant 0 : index
    %c0_49 = arith.constant 0 : index
    %39 = vector.load %arg3[%c1_46, %c2_47, %c0_48, %c0_49] : memref<3x3x8x4xf32, #tpu.memory_space<vmem>>, vector<1x1x8x4xf32>
    %40 = vector.shape_cast %39 : vector<1x1x8x4xf32> to vector<8x4xf32>
    %cst_50 = arith.constant dense<0.000000e+00> : vector<256x4xf32>
    %41 = tpu.matmul %38, %40, %cst_50 {dimension_numbers = #tpu.dot_dimension_numbers<[1], [0], [0], [1], [0, 0, 1, 1], [], []>} : vector<256x8xf32>, vector<8x4xf32>, vector<256x4xf32> -> vector<256x4xf32>
    %42 = arith.addf %35, %41 : vector<256x4xf32>
    %c0_51 = arith.constant 0 : index
    %c2_52 = arith.constant 2 : index
    %c0_53 = arith.constant 0 : index
    %c0_54 = arith.constant 0 : index
    %43 = vector.load %arg1[%c0_51, %c2_52, %c0_53, %c0_54] : memref<1x18x18x8xf32, #tpu.memory_space<vmem>>, vector<1x16x16x8xf32>
    %44 = vector.shape_cast %43 : vector<1x16x16x8xf32> to vector<16x16x8xf32>
    %45 = vector.shape_cast %44 : vector<16x16x8xf32> to vector<256x8xf32>
    %c2_55 = arith.constant 2 : index
    %c0_56 = arith.constant 0 : index
    %c0_57 = arith.constant 0 : index
    %c0_58 = arith.constant 0 : index
    %46 = vector.load %arg3[%c2_55, %c0_56, %c0_57, %c0_58] : memref<3x3x8x4xf32, #tpu.memory_space<vmem>>, vector<1x1x8x4xf32>
    %47 = vector.shape_cast %46 : vector<1x1x8x4xf32> to vector<8x4xf32>
    %cst_59 = arith.constant dense<0.000000e+00> : vector<256x4xf32>
    %48 = tpu.matmul %45, %47, %cst_59 {dimension_numbers = #tpu.dot_dimension_numbers<[1], [0], [0], [1], [0, 0, 1, 1], [], []>} : vector<256x8xf32>, vector<8x4xf32>, vector<256x4xf32> -> vector<256x4xf32>
    %49 = arith.addf %42, %48 : vector<256x4xf32>
    %c0_60 = arith.constant 0 : index
    %c2_61 = arith.constant 2 : index
    %c1_62 = arith.constant 1 : index
    %c0_63 = arith.constant 0 : index
    %50 = vector.load %arg1[%c0_60, %c2_61, %c1_62, %c0_63] : memref<1x18x18x8xf32, #tpu.memory_space<vmem>>, vector<1x16x16x8xf32>
    %51 = vector.shape_cast %50 : vector<1x16x16x8xf32> to vector<16x16x8xf32>
    %52 = vector.shape_cast %51 : vector<16x16x8xf32> to vector<256x8xf32>
    %c2_64 = arith.constant 2 : index
    %c1_65 = arith.constant 1 : index
    %c0_66 = arith.constant 0 : index
    %c0_67 = arith.constant 0 : index
    %53 = vector.load %arg3[%c2_64, %c1_65, %c0_66, %c0_67] : memref<3x3x8x4xf32, #tpu.memory_space<vmem>>, vector<1x1x8x4xf32>
    %54 = vector.shape_cast %53 : vector<1x1x8x4xf32> to vector<8x4xf32>
    %cst_68 = arith.constant dense<0.000000e+00> : vector<256x4xf32>
    %55 = tpu.matmul %52, %54, %cst_68 {dimension_numbers = #tpu.dot_dimension_numbers<[1], [0], [0], [1], [0, 0, 1, 1], [], []>} : vector<256x8xf32>, vector<8x4xf32>, vector<256x4xf32> -> vector<256x4xf32>
    %56 = arith.addf %49, %55 : vector<256x4xf32>
    %c0_69 = arith.constant 0 : index
    %c2_70 = arith.constant 2 : index
    %c2_71 = arith.constant 2 : index
    %c0_72 = arith.constant 0 : index
    %57 = vector.load %arg1[%c0_69, %c2_70, %c2_71, %c0_72] : memref<1x18x18x8xf32, #tpu.memory_space<vmem>>, vector<1x16x16x8xf32>
    %58 = vector.shape_cast %57 : vector<1x16x16x8xf32> to vector<16x16x8xf32>
    %59 = vector.shape_cast %58 : vector<16x16x8xf32> to vector<256x8xf32>
    %c2_73 = arith.constant 2 : index
    %c2_74 = arith.constant 2 : index
    %c0_75 = arith.constant 0 : index
    %c0_76 = arith.constant 0 : index
    %60 = vector.load %arg3[%c2_73, %c2_74, %c0_75, %c0_76] : memref<3x3x8x4xf32, #tpu.memory_space<vmem>>, vector<1x1x8x4xf32>
    %61 = vector.shape_cast %60 : vector<1x1x8x4xf32> to vector<8x4xf32>
    %cst_77 = arith.constant dense<0.000000e+00> : vector<256x4xf32>
    %62 = tpu.matmul %59, %61, %cst_77 {dimension_numbers = #tpu.dot_dimension_numbers<[1], [0], [0], [1], [0, 0, 1, 1], [], []>} : vector<256x8xf32>, vector<8x4xf32>, vector<256x4xf32> -> vector<256x4xf32>
    %63 = arith.addf %56, %62 : vector<256x4xf32>
    %c0_78 = arith.constant 0 : index
    %c0_79 = arith.constant 0 : index
    %64 = vector.load %arg4[%c0_78, %c0_79] : memref<1x4xf32, #tpu.memory_space<vmem>>, vector<1x4xf32>
    %65 = vector.broadcast %64 : vector<1x4xf32> to vector<256x4xf32>
    %66 = arith.addf %63, %65 : vector<256x4xf32>
    %cst_80 = arith.constant 0.000000e+00 : f32
    %67 = vector.broadcast %cst_80 : f32 to vector<18x18x4xf32>
    %c0_81 = arith.constant 0 : index
    %c0_82 = arith.constant 0 : index
    %c0_83 = arith.constant 0 : index
    %68 = vector.load %arg11[%c0_81, %c0_82, %c0_83] : memref<18x18x4xf32, #tpu.memory_space<vmem>>, vector<18x18x4xf32>
    tpu.vector_store %arg11[%c0_81, %c0_82, %c0_83], %67 {strides = array<i32>} : memref<18x18x4xf32, #tpu.memory_space<vmem>>, vector<18x18x4xf32>,
    %69 = vector.shape_cast %66 : vector<256x4xf32> to vector<16x16x4xf32>
    %c1_84 = arith.constant 1 : index
    %c1_85 = arith.constant 1 : index
    %c0_86 = arith.constant 0 : index
    %70 = vector.load %arg11[%c1_84, %c1_85, %c0_86] : memref<18x18x4xf32, #tpu.memory_space<vmem>>, vector<16x16x4xf32>
    tpu.vector_store %arg11[%c1_84, %c1_85, %c0_86], %69 {strides = array<i32>} : memref<18x18x4xf32, #tpu.memory_space<vmem>>, vector<16x16x4xf32>,
    %cst_87 = arith.constant 0.000000e+00 : f32
    %71 = vector.broadcast %cst_87 : f32 to vector<256x4xf32>
    %c0_88 = arith.constant 0 : index
    %c0_89 = arith.constant 0 : index
    %c0_90 = arith.constant 0 : index
    %72 = vector.load %arg11[%c0_88, %c0_89, %c0_90] : memref<18x18x4xf32, #tpu.memory_space<vmem>>, vector<16x16x4xf32>
    %73 = vector.shape_cast %72 : vector<16x16x4xf32> to vector<256x4xf32>
    %c0_91 = arith.constant 0 : index
    %c0_92 = arith.constant 0 : index
    %c0_93 = arith.constant 0 : index
    %c0_94 = arith.constant 0 : index
    %74 = vector.load %arg5[%c0_91, %c0_92, %c0_93, %c0_94] : memref<3x3x4x4xf32, #tpu.memory_space<vmem>>, vector<1x1x4x4xf32>
    %75 = vector.shape_cast %74 : vector<1x1x4x4xf32> to vector<4x4xf32>
    %cst_95 = arith.constant dense<0.000000e+00> : vector<256x4xf32>
    %76 = tpu.matmul %73, %75, %cst_95 {dimension_numbers = #tpu.dot_dimension_numbers<[1], [0], [0], [1], [0, 0, 1, 1], [], []>} : vector<256x4xf32>, vector<4x4xf32>, vector<256x4xf32> -> vector<256x4xf32>
    %77 = arith.addf %71, %76 : vector<256x4xf32>
    %c0_96 = arith.constant 0 : index
    %c1_97 = arith.constant 1 : index
    %c0_98 = arith.constant 0 : index
    %78 = vector.load %arg11[%c0_96, %c1_97, %c0_98] : memref<18x18x4xf32, #tpu.memory_space<vmem>>, vector<16x16x4xf32>
    %79 = vector.shape_cast %78 : vector<16x16x4xf32> to vector<256x4xf32>
    %c0_99 = arith.constant 0 : index
    %c1_100 = arith.constant 1 : index
    %c0_101 = arith.constant 0 : index
    %c0_102 = arith.constant 0 : index
    %80 = vector.load %arg5[%c0_99, %c1_100, %c0_101, %c0_102] : memref<3x3x4x4xf32, #tpu.memory_space<vmem>>, vector<1x1x4x4xf32>
    %81 = vector.shape_cast %80 : vector<1x1x4x4xf32> to vector<4x4xf32>
    %cst_103 = arith.constant dense<0.000000e+00> : vector<256x4xf32>
    %82 = tpu.matmul %79, %81, %cst_103 {dimension_numbers = #tpu.dot_dimension_numbers<[1], [0], [0], [1], [0, 0, 1, 1], [], []>} : vector<256x4xf32>, vector<4x4xf32>, vector<256x4xf32> -> vector<256x4xf32>
    %83 = arith.addf %77, %82 : vector<256x4xf32>
    %c0_104 = arith.constant 0 : index
    %c2_105 = arith.constant 2 : index
    %c0_106 = arith.constant 0 : index
    %84 = vector.load %arg11[%c0_104, %c2_105, %c0_106] : memref<18x18x4xf32, #tpu.memory_space<vmem>>, vector<16x16x4xf32>
    %85 = vector.shape_cast %84 : vector<16x16x4xf32> to vector<256x4xf32>
    %c0_107 = arith.constant 0 : index
    %c2_108 = arith.constant 2 : index
    %c0_109 = arith.constant 0 : index
    %c0_110 = arith.constant 0 : index
    %86 = vector.load %arg5[%c0_107, %c2_108, %c0_109, %c0_110] : memref<3x3x4x4xf32, #tpu.memory_space<vmem>>, vector<1x1x4x4xf32>
    %87 = vector.shape_cast %86 : vector<1x1x4x4xf32> to vector<4x4xf32>
    %cst_111 = arith.constant dense<0.000000e+00> : vector<256x4xf32>
    %88 = tpu.matmul %85, %87, %cst_111 {dimension_numbers = #tpu.dot_dimension_numbers<[1], [0], [0], [1], [0, 0, 1, 1], [], []>} : vector<256x4xf32>, vector<4x4xf32>, vector<256x4xf32> -> vector<256x4xf32>
    %89 = arith.addf %83, %88 : vector<256x4xf32>
    %c1_112 = arith.constant 1 : index
    %c0_113 = arith.constant 0 : index
    %c0_114 = arith.constant 0 : index
    %90 = vector.load %arg11[%c1_112, %c0_113, %c0_114] : memref<18x18x4xf32, #tpu.memory_space<vmem>>, vector<16x16x4xf32>
    %91 = vector.shape_cast %90 : vector<16x16x4xf32> to vector<256x4xf32>
    %c1_115 = arith.constant 1 : index
    %c0_116 = arith.constant 0 : index
    %c0_117 = arith.constant 0 : index
    %c0_118 = arith.constant 0 : index
    %92 = vector.load %arg5[%c1_115, %c0_116, %c0_117, %c0_118] : memref<3x3x4x4xf32, #tpu.memory_space<vmem>>, vector<1x1x4x4xf32>
    %93 = vector.shape_cast %92 : vector<1x1x4x4xf32> to vector<4x4xf32>
    %cst_119 = arith.constant dense<0.000000e+00> : vector<256x4xf32>
    %94 = tpu.matmul %91, %93, %cst_119 {dimension_numbers = #tpu.dot_dimension_numbers<[1], [0], [0], [1], [0, 0, 1, 1], [], []>} : vector<256x4xf32>, vector<4x4xf32>, vector<256x4xf32> -> vector<256x4xf32>
    %95 = arith.addf %89, %94 : vector<256x4xf32>
    %c1_120 = arith.constant 1 : index
    %c1_121 = arith.constant 1 : index
    %c0_122 = arith.constant 0 : index
    %96 = vector.load %arg11[%c1_120, %c1_121, %c0_122] : memref<18x18x4xf32, #tpu.memory_space<vmem>>, vector<16x16x4xf32>
    %97 = vector.shape_cast %96 : vector<16x16x4xf32> to vector<256x4xf32>
    %c1_123 = arith.constant 1 : index
    %c1_124 = arith.constant 1 : index
    %c0_125 = arith.constant 0 : index
    %c0_126 = arith.constant 0 : index
    %98 = vector.load %arg5[%c1_123, %c1_124, %c0_125, %c0_126] : memref<3x3x4x4xf32, #tpu.memory_space<vmem>>, vector<1x1x4x4xf32>
    %99 = vector.shape_cast %98 : vector<1x1x4x4xf32> to vector<4x4xf32>
    %cst_127 = arith.constant dense<0.000000e+00> : vector<256x4xf32>
    %100 = tpu.matmul %97, %99, %cst_127 {dimension_numbers = #tpu.dot_dimension_numbers<[1], [0], [0], [1], [0, 0, 1, 1], [], []>} : vector<256x4xf32>, vector<4x4xf32>, vector<256x4xf32> -> vector<256x4xf32>
    %101 = arith.addf %95, %100 : vector<256x4xf32>
    %c1_128 = arith.constant 1 : index
    %c2_129 = arith.constant 2 : index
    %c0_130 = arith.constant 0 : index
    %102 = vector.load %arg11[%c1_128, %c2_129, %c0_130] : memref<18x18x4xf32, #tpu.memory_space<vmem>>, vector<16x16x4xf32>
    %103 = vector.shape_cast %102 : vector<16x16x4xf32> to vector<256x4xf32>
    %c1_131 = arith.constant 1 : index
    %c2_132 = arith.constant 2 : index
    %c0_133 = arith.constant 0 : index
    %c0_134 = arith.constant 0 : index
    %104 = vector.load %arg5[%c1_131, %c2_132, %c0_133, %c0_134] : memref<3x3x4x4xf32, #tpu.memory_space<vmem>>, vector<1x1x4x4xf32>
    %105 = vector.shape_cast %104 : vector<1x1x4x4xf32> to vector<4x4xf32>
    %cst_135 = arith.constant dense<0.000000e+00> : vector<256x4xf32>
    %106 = tpu.matmul %103, %105, %cst_135 {dimension_numbers = #tpu.dot_dimension_numbers<[1], [0], [0], [1], [0, 0, 1, 1], [], []>} : vector<256x4xf32>, vector<4x4xf32>, vector<256x4xf32> -> vector<256x4xf32>
    %107 = arith.addf %101, %106 : vector<256x4xf32>
    %c2_136 = arith.constant 2 : index
    %c0_137 = arith.constant 0 : index
    %c0_138 = arith.constant 0 : index
    %108 = vector.load %arg11[%c2_136, %c0_137, %c0_138] : memref<18x18x4xf32, #tpu.memory_space<vmem>>, vector<16x16x4xf32>
    %109 = vector.shape_cast %108 : vector<16x16x4xf32> to vector<256x4xf32>
    %c2_139 = arith.constant 2 : index
    %c0_140 = arith.constant 0 : index
    %c0_141 = arith.constant 0 : index
    %c0_142 = arith.constant 0 : index
    %110 = vector.load %arg5[%c2_139, %c0_140, %c0_141, %c0_142] : memref<3x3x4x4xf32, #tpu.memory_space<vmem>>, vector<1x1x4x4xf32>
    %111 = vector.shape_cast %110 : vector<1x1x4x4xf32> to vector<4x4xf32>
    %cst_143 = arith.constant dense<0.000000e+00> : vector<256x4xf32>
    %112 = tpu.matmul %109, %111, %cst_143 {dimension_numbers = #tpu.dot_dimension_numbers<[1], [0], [0], [1], [0, 0, 1, 1], [], []>} : vector<256x4xf32>, vector<4x4xf32>, vector<256x4xf32> -> vector<256x4xf32>
    %113 = arith.addf %107, %112 : vector<256x4xf32>
    %c2_144 = arith.constant 2 : index
    %c1_145 = arith.constant 1 : index
    %c0_146 = arith.constant 0 : index
    %114 = vector.load %arg11[%c2_144, %c1_145, %c0_146] : memref<18x18x4xf32, #tpu.memory_space<vmem>>, vector<16x16x4xf32>
    %115 = vector.shape_cast %114 : vector<16x16x4xf32> to vector<256x4xf32>
    %c2_147 = arith.constant 2 : index
    %c1_148 = arith.constant 1 : index
    %c0_149 = arith.constant 0 : index
    %c0_150 = arith.constant 0 : index
    %116 = vector.load %arg5[%c2_147, %c1_148, %c0_149, %c0_150] : memref<3x3x4x4xf32, #tpu.memory_space<vmem>>, vector<1x1x4x4xf32>
    %117 = vector.shape_cast %116 : vector<1x1x4x4xf32> to vector<4x4xf32>
    %cst_151 = arith.constant dense<0.000000e+00> : vector<256x4xf32>
    %118 = tpu.matmul %115, %117, %cst_151 {dimension_numbers = #tpu.dot_dimension_numbers<[1], [0], [0], [1], [0, 0, 1, 1], [], []>} : vector<256x4xf32>, vector<4x4xf32>, vector<256x4xf32> -> vector<256x4xf32>
    %119 = arith.addf %113, %118 : vector<256x4xf32>
    %c2_152 = arith.constant 2 : index
    %c2_153 = arith.constant 2 : index
    %c0_154 = arith.constant 0 : index
    %120 = vector.load %arg11[%c2_152, %c2_153, %c0_154] : memref<18x18x4xf32, #tpu.memory_space<vmem>>, vector<16x16x4xf32>
    %121 = vector.shape_cast %120 : vector<16x16x4xf32> to vector<256x4xf32>
    %c2_155 = arith.constant 2 : index
    %c2_156 = arith.constant 2 : index
    %c0_157 = arith.constant 0 : index
    %c0_158 = arith.constant 0 : index
    %122 = vector.load %arg5[%c2_155, %c2_156, %c0_157, %c0_158] : memref<3x3x4x4xf32, #tpu.memory_space<vmem>>, vector<1x1x4x4xf32>
    %123 = vector.shape_cast %122 : vector<1x1x4x4xf32> to vector<4x4xf32>
    %cst_159 = arith.constant dense<0.000000e+00> : vector<256x4xf32>
    %124 = tpu.matmul %121, %123, %cst_159 {dimension_numbers = #tpu.dot_dimension_numbers<[1], [0], [0], [1], [0, 0, 1, 1], [], []>} : vector<256x4xf32>, vector<4x4xf32>, vector<256x4xf32> -> vector<256x4xf32>
    %125 = arith.addf %119, %124 : vector<256x4xf32>
    %c0_160 = arith.constant 0 : index
    %c0_161 = arith.constant 0 : index
    %c0_162 = arith.constant 0 : index
    %c0_163 = arith.constant 0 : index
    %126 = vector.load %arg2[%c0_160, %c0_161, %c0_162, %c0_163] : memref<1x18x18x4xf32, #tpu.memory_space<vmem>>, vector<1x16x16x4xf32>
    %127 = vector.shape_cast %126 : vector<1x16x16x4xf32> to vector<16x16x4xf32>
    %128 = vector.shape_cast %127 : vector<16x16x4xf32> to vector<256x4xf32>
    %c0_164 = arith.constant 0 : index
    %c0_165 = arith.constant 0 : index
    %c0_166 = arith.constant 0 : index
    %c0_167 = arith.constant 0 : index
    %129 = vector.load %arg6[%c0_164, %c0_165, %c0_166, %c0_167] : memref<3x3x4x4xf32, #tpu.memory_space<vmem>>, vector<1x1x4x4xf32>
    %130 = vector.shape_cast %129 : vector<1x1x4x4xf32> to vector<4x4xf32>
    %cst_168 = arith.constant dense<0.000000e+00> : vector<256x4xf32>
    %131 = tpu.matmul %128, %130, %cst_168 {dimension_numbers = #tpu.dot_dimension_numbers<[1], [0], [0], [1], [0, 0, 1, 1], [], []>} : vector<256x4xf32>, vector<4x4xf32>, vector<256x4xf32> -> vector<256x4xf32>
    %132 = arith.addf %125, %131 : vector<256x4xf32>
    %c0_169 = arith.constant 0 : index
    %c0_170 = arith.constant 0 : index
    %c1_171 = arith.constant 1 : index
    %c0_172 = arith.constant 0 : index
    %133 = vector.load %arg2[%c0_169, %c0_170, %c1_171, %c0_172] : memref<1x18x18x4xf32, #tpu.memory_space<vmem>>, vector<1x16x16x4xf32>
    %134 = vector.shape_cast %133 : vector<1x16x16x4xf32> to vector<16x16x4xf32>
    %135 = vector.shape_cast %134 : vector<16x16x4xf32> to vector<256x4xf32>
    %c0_173 = arith.constant 0 : index
    %c1_174 = arith.constant 1 : index
    %c0_175 = arith.constant 0 : index
    %c0_176 = arith.constant 0 : index
    %136 = vector.load %arg6[%c0_173, %c1_174, %c0_175, %c0_176] : memref<3x3x4x4xf32, #tpu.memory_space<vmem>>, vector<1x1x4x4xf32>
    %137 = vector.shape_cast %136 : vector<1x1x4x4xf32> to vector<4x4xf32>
    %cst_177 = arith.constant dense<0.000000e+00> : vector<256x4xf32>
    %138 = tpu.matmul %135, %137, %cst_177 {dimension_numbers = #tpu.dot_dimension_numbers<[1], [0], [0], [1], [0, 0, 1, 1], [], []>} : vector<256x4xf32>, vector<4x4xf32>, vector<256x4xf32> -> vector<256x4xf32>
    %139 = arith.addf %132, %138 : vector<256x4xf32>
    %c0_178 = arith.constant 0 : index
    %c0_179 = arith.constant 0 : index
    %c2_180 = arith.constant 2 : index
    %c0_181 = arith.constant 0 : index
    %140 = vector.load %arg2[%c0_178, %c0_179, %c2_180, %c0_181] : memref<1x18x18x4xf32, #tpu.memory_space<vmem>>, vector<1x16x16x4xf32>
    %141 = vector.shape_cast %140 : vector<1x16x16x4xf32> to vector<16x16x4xf32>
    %142 = vector.shape_cast %141 : vector<16x16x4xf32> to vector<256x4xf32>
    %c0_182 = arith.constant 0 : index
    %c2_183 = arith.constant 2 : index
    %c0_184 = arith.constant 0 : index
    %c0_185 = arith.constant 0 : index
    %143 = vector.load %arg6[%c0_182, %c2_183, %c0_184, %c0_185] : memref<3x3x4x4xf32, #tpu.memory_space<vmem>>, vector<1x1x4x4xf32>
    %144 = vector.shape_cast %143 : vector<1x1x4x4xf32> to vector<4x4xf32>
    %cst_186 = arith.constant dense<0.000000e+00> : vector<256x4xf32>
    %145 = tpu.matmul %142, %144, %cst_186 {dimension_numbers = #tpu.dot_dimension_numbers<[1], [0], [0], [1], [0, 0, 1, 1], [], []>} : vector<256x4xf32>, vector<4x4xf32>, vector<256x4xf32> -> vector<256x4xf32>
    %146 = arith.addf %139, %145 : vector<256x4xf32>
    %c0_187 = arith.constant 0 : index
    %c1_188 = arith.constant 1 : index
    %c0_189 = arith.constant 0 : index
    %c0_190 = arith.constant 0 : index
    %147 = vector.load %arg2[%c0_187, %c1_188, %c0_189, %c0_190] : memref<1x18x18x4xf32, #tpu.memory_space<vmem>>, vector<1x16x16x4xf32>
    %148 = vector.shape_cast %147 : vector<1x16x16x4xf32> to vector<16x16x4xf32>
    %149 = vector.shape_cast %148 : vector<16x16x4xf32> to vector<256x4xf32>
    %c1_191 = arith.constant 1 : index
    %c0_192 = arith.constant 0 : index
    %c0_193 = arith.constant 0 : index
    %c0_194 = arith.constant 0 : index
    %150 = vector.load %arg6[%c1_191, %c0_192, %c0_193, %c0_194] : memref<3x3x4x4xf32, #tpu.memory_space<vmem>>, vector<1x1x4x4xf32>
    %151 = vector.shape_cast %150 : vector<1x1x4x4xf32> to vector<4x4xf32>
    %cst_195 = arith.constant dense<0.000000e+00> : vector<256x4xf32>
    %152 = tpu.matmul %149, %151, %cst_195 {dimension_numbers = #tpu.dot_dimension_numbers<[1], [0], [0], [1], [0, 0, 1, 1], [], []>} : vector<256x4xf32>, vector<4x4xf32>, vector<256x4xf32> -> vector<256x4xf32>
    %153 = arith.addf %146, %152 : vector<256x4xf32>
    %c0_196 = arith.constant 0 : index
    %c1_197 = arith.constant 1 : index
    %c1_198 = arith.constant 1 : index
    %c0_199 = arith.constant 0 : index
    %154 = vector.load %arg2[%c0_196, %c1_197, %c1_198, %c0_199] : memref<1x18x18x4xf32, #tpu.memory_space<vmem>>, vector<1x16x16x4xf32>
    %155 = vector.shape_cast %154 : vector<1x16x16x4xf32> to vector<16x16x4xf32>
    %156 = vector.shape_cast %155 : vector<16x16x4xf32> to vector<256x4xf32>
    %c1_200 = arith.constant 1 : index
    %c1_201 = arith.constant 1 : index
    %c0_202 = arith.constant 0 : index
    %c0_203 = arith.constant 0 : index
    %157 = vector.load %arg6[%c1_200, %c1_201, %c0_202, %c0_203] : memref<3x3x4x4xf32, #tpu.memory_space<vmem>>, vector<1x1x4x4xf32>
    %158 = vector.shape_cast %157 : vector<1x1x4x4xf32> to vector<4x4xf32>
    %cst_204 = arith.constant dense<0.000000e+00> : vector<256x4xf32>
    %159 = tpu.matmul %156, %158, %cst_204 {dimension_numbers = #tpu.dot_dimension_numbers<[1], [0], [0], [1], [0, 0, 1, 1], [], []>} : vector<256x4xf32>, vector<4x4xf32>, vector<256x4xf32> -> vector<256x4xf32>
    %160 = arith.addf %153, %159 : vector<256x4xf32>
    %c0_205 = arith.constant 0 : index
    %c1_206 = arith.constant 1 : index
    %c2_207 = arith.constant 2 : index
    %c0_208 = arith.constant 0 : index
    %161 = vector.load %arg2[%c0_205, %c1_206, %c2_207, %c0_208] : memref<1x18x18x4xf32, #tpu.memory_space<vmem>>, vector<1x16x16x4xf32>
    %162 = vector.shape_cast %161 : vector<1x16x16x4xf32> to vector<16x16x4xf32>
    %163 = vector.shape_cast %162 : vector<16x16x4xf32> to vector<256x4xf32>
    %c1_209 = arith.constant 1 : index
    %c2_210 = arith.constant 2 : index
    %c0_211 = arith.constant 0 : index
    %c0_212 = arith.constant 0 : index
    %164 = vector.load %arg6[%c1_209, %c2_210, %c0_211, %c0_212] : memref<3x3x4x4xf32, #tpu.memory_space<vmem>>, vector<1x1x4x4xf32>
    %165 = vector.shape_cast %164 : vector<1x1x4x4xf32> to vector<4x4xf32>
    %cst_213 = arith.constant dense<0.000000e+00> : vector<256x4xf32>
    %166 = tpu.matmul %163, %165, %cst_213 {dimension_numbers = #tpu.dot_dimension_numbers<[1], [0], [0], [1], [0, 0, 1, 1], [], []>} : vector<256x4xf32>, vector<4x4xf32>, vector<256x4xf32> -> vector<256x4xf32>
    %167 = arith.addf %160, %166 : vector<256x4xf32>
    %c0_214 = arith.constant 0 : index
    %c2_215 = arith.constant 2 : index
    %c0_216 = arith.constant 0 : index
    %c0_217 = arith.constant 0 : index
    %168 = vector.load %arg2[%c0_214, %c2_215, %c0_216, %c0_217] : memref<1x18x18x4xf32, #tpu.memory_space<vmem>>, vector<1x16x16x4xf32>
    %169 = vector.shape_cast %168 : vector<1x16x16x4xf32> to vector<16x16x4xf32>
    %170 = vector.shape_cast %169 : vector<16x16x4xf32> to vector<256x4xf32>
    %c2_218 = arith.constant 2 : index
    %c0_219 = arith.constant 0 : index
    %c0_220 = arith.constant 0 : index
    %c0_221 = arith.constant 0 : index
    %171 = vector.load %arg6[%c2_218, %c0_219, %c0_220, %c0_221] : memref<3x3x4x4xf32, #tpu.memory_space<vmem>>, vector<1x1x4x4xf32>
    %172 = vector.shape_cast %171 : vector<1x1x4x4xf32> to vector<4x4xf32>
    %cst_222 = arith.constant dense<0.000000e+00> : vector<256x4xf32>
    %173 = tpu.matmul %170, %172, %cst_222 {dimension_numbers = #tpu.dot_dimension_numbers<[1], [0], [0], [1], [0, 0, 1, 1], [], []>} : vector<256x4xf32>, vector<4x4xf32>, vector<256x4xf32> -> vector<256x4xf32>
    %174 = arith.addf %167, %173 : vector<256x4xf32>
    %c0_223 = arith.constant 0 : index
    %c2_224 = arith.constant 2 : index
    %c1_225 = arith.constant 1 : index
    %c0_226 = arith.constant 0 : index
    %175 = vector.load %arg2[%c0_223, %c2_224, %c1_225, %c0_226] : memref<1x18x18x4xf32, #tpu.memory_space<vmem>>, vector<1x16x16x4xf32>
    %176 = vector.shape_cast %175 : vector<1x16x16x4xf32> to vector<16x16x4xf32>
    %177 = vector.shape_cast %176 : vector<16x16x4xf32> to vector<256x4xf32>
    %c2_227 = arith.constant 2 : index
    %c1_228 = arith.constant 1 : index
    %c0_229 = arith.constant 0 : index
    %c0_230 = arith.constant 0 : index
    %178 = vector.load %arg6[%c2_227, %c1_228, %c0_229, %c0_230] : memref<3x3x4x4xf32, #tpu.memory_space<vmem>>, vector<1x1x4x4xf32>
    %179 = vector.shape_cast %178 : vector<1x1x4x4xf32> to vector<4x4xf32>
    %cst_231 = arith.constant dense<0.000000e+00> : vector<256x4xf32>
    %180 = tpu.matmul %177, %179, %cst_231 {dimension_numbers = #tpu.dot_dimension_numbers<[1], [0], [0], [1], [0, 0, 1, 1], [], []>} : vector<256x4xf32>, vector<4x4xf32>, vector<256x4xf32> -> vector<256x4xf32>
    %181 = arith.addf %174, %180 : vector<256x4xf32>
    %c0_232 = arith.constant 0 : index
    %c2_233 = arith.constant 2 : index
    %c2_234 = arith.constant 2 : index
    %c0_235 = arith.constant 0 : index
    %182 = vector.load %arg2[%c0_232, %c2_233, %c2_234, %c0_235] : memref<1x18x18x4xf32, #tpu.memory_space<vmem>>, vector<1x16x16x4xf32>
    %183 = vector.shape_cast %182 : vector<1x16x16x4xf32> to vector<16x16x4xf32>
    %184 = vector.shape_cast %183 : vector<16x16x4xf32> to vector<256x4xf32>
    %c2_236 = arith.constant 2 : index
    %c2_237 = arith.constant 2 : index
    %c0_238 = arith.constant 0 : index
    %c0_239 = arith.constant 0 : index
    %185 = vector.load %arg6[%c2_236, %c2_237, %c0_238, %c0_239] : memref<3x3x4x4xf32, #tpu.memory_space<vmem>>, vector<1x1x4x4xf32>
    %186 = vector.shape_cast %185 : vector<1x1x4x4xf32> to vector<4x4xf32>
    %cst_240 = arith.constant dense<0.000000e+00> : vector<256x4xf32>
    %187 = tpu.matmul %184, %186, %cst_240 {dimension_numbers = #tpu.dot_dimension_numbers<[1], [0], [0], [1], [0, 0, 1, 1], [], []>} : vector<256x4xf32>, vector<4x4xf32>, vector<256x4xf32> -> vector<256x4xf32>
    %188 = arith.addf %181, %187 : vector<256x4xf32>
    %c0_241 = arith.constant 0 : index
    %c0_242 = arith.constant 0 : index
    %189 = vector.load %arg7[%c0_241, %c0_242] : memref<1x4xf32, #tpu.memory_space<vmem>>, vector<1x4xf32>
    %190 = vector.broadcast %189 : vector<1x4xf32> to vector<256x4xf32>
    %191 = arith.addf %188, %190 : vector<256x4xf32>
    %cst_243 = arith.constant 0.000000e+00 : f32
    %192 = vector.broadcast %cst_243 : f32 to vector<256x4xf32>
    %193 = arith.cmpf oge, %191, %192 : vector<256x4xf32>
    %cst_244 = arith.constant 2.000000e-01 : f32
    %194 = vector.broadcast %cst_244 : f32 to vector<256x4xf32>
    %195 = arith.mulf %194, %191 : vector<256x4xf32>
    %196 = arith.select %193, %191, %195 : vector<256x4xi1>, vector<256x4xf32>
    %cst_245 = arith.constant 0.000000e+00 : f32
    %197 = vector.broadcast %cst_245 : f32 to vector<18x18x4xf32>
    %c0_246 = arith.constant 0 : index
    %c0_247 = arith.constant 0 : index
    %c0_248 = arith.constant 0 : index
    %198 = vector.load %arg12[%c0_246, %c0_247, %c0_248] : memref<18x18x4xf32, #tpu.memory_space<vmem>>, vector<18x18x4xf32>
    tpu.vector_store %arg12[%c0_246, %c0_247, %c0_248], %197 {strides = array<i32>} : memref<18x18x4xf32, #tpu.memory_space<vmem>>, vector<18x18x4xf32>,
    %199 = vector.shape_cast %196 : vector<256x4xf32> to vector<16x16x4xf32>
    %c1_249 = arith.constant 1 : index
    %c1_250 = arith.constant 1 : index
    %c0_251 = arith.constant 0 : index
    %200 = vector.load %arg12[%c1_249, %c1_250, %c0_251] : memref<18x18x4xf32, #tpu.memory_space<vmem>>, vector<16x16x4xf32>
    tpu.vector_store %arg12[%c1_249, %c1_250, %c0_251], %199 {strides = array<i32>} : memref<18x18x4xf32, #tpu.memory_space<vmem>>, vector<16x16x4xf32>,
    %cst_252 = arith.constant 0.000000e+00 : f32
    %201 = vector.broadcast %cst_252 : f32 to vector<256x4xf32>
    %c0_253 = arith.constant 0 : index
    %c0_254 = arith.constant 0 : index
    %c0_255 = arith.constant 0 : index
    %202 = vector.load %arg12[%c0_253, %c0_254, %c0_255] : memref<18x18x4xf32, #tpu.memory_space<vmem>>, vector<16x16x4xf32>
    %203 = vector.shape_cast %202 : vector<16x16x4xf32> to vector<256x4xf32>
    %c0_256 = arith.constant 0 : index
    %c0_257 = arith.constant 0 : index
    %c0_258 = arith.constant 0 : index
    %c0_259 = arith.constant 0 : index
    %204 = vector.load %arg8[%c0_256, %c0_257, %c0_258, %c0_259] : memref<3x3x4x4xf32, #tpu.memory_space<vmem>>, vector<1x1x4x4xf32>
    %205 = vector.shape_cast %204 : vector<1x1x4x4xf32> to vector<4x4xf32>
    %cst_260 = arith.constant dense<0.000000e+00> : vector<256x4xf32>
    %206 = tpu.matmul %203, %205, %cst_260 {dimension_numbers = #tpu.dot_dimension_numbers<[1], [0], [0], [1], [0, 0, 1, 1], [], []>} : vector<256x4xf32>, vector<4x4xf32>, vector<256x4xf32> -> vector<256x4xf32>
    %207 = arith.addf %201, %206 : vector<256x4xf32>
    %c0_261 = arith.constant 0 : index
    %c1_262 = arith.constant 1 : index
    %c0_263 = arith.constant 0 : index
    %208 = vector.load %arg12[%c0_261, %c1_262, %c0_263] : memref<18x18x4xf32, #tpu.memory_space<vmem>>, vector<16x16x4xf32>
    %209 = vector.shape_cast %208 : vector<16x16x4xf32> to vector<256x4xf32>
    %c0_264 = arith.constant 0 : index
    %c1_265 = arith.constant 1 : index
    %c0_266 = arith.constant 0 : index
    %c0_267 = arith.constant 0 : index
    %210 = vector.load %arg8[%c0_264, %c1_265, %c0_266, %c0_267] : memref<3x3x4x4xf32, #tpu.memory_space<vmem>>, vector<1x1x4x4xf32>
    %211 = vector.shape_cast %210 : vector<1x1x4x4xf32> to vector<4x4xf32>
    %cst_268 = arith.constant dense<0.000000e+00> : vector<256x4xf32>
    %212 = tpu.matmul %209, %211, %cst_268 {dimension_numbers = #tpu.dot_dimension_numbers<[1], [0], [0], [1], [0, 0, 1, 1], [], []>} : vector<256x4xf32>, vector<4x4xf32>, vector<256x4xf32> -> vector<256x4xf32>
    %213 = arith.addf %207, %212 : vector<256x4xf32>
    %c0_269 = arith.constant 0 : index
    %c2_270 = arith.constant 2 : index
    %c0_271 = arith.constant 0 : index
    %214 = vector.load %arg12[%c0_269, %c2_270, %c0_271] : memref<18x18x4xf32, #tpu.memory_space<vmem>>, vector<16x16x4xf32>
    %215 = vector.shape_cast %214 : vector<16x16x4xf32> to vector<256x4xf32>
    %c0_272 = arith.constant 0 : index
    %c2_273 = arith.constant 2 : index
    %c0_274 = arith.constant 0 : index
    %c0_275 = arith.constant 0 : index
    %216 = vector.load %arg8[%c0_272, %c2_273, %c0_274, %c0_275] : memref<3x3x4x4xf32, #tpu.memory_space<vmem>>, vector<1x1x4x4xf32>
    %217 = vector.shape_cast %216 : vector<1x1x4x4xf32> to vector<4x4xf32>
    %cst_276 = arith.constant dense<0.000000e+00> : vector<256x4xf32>
    %218 = tpu.matmul %215, %217, %cst_276 {dimension_numbers = #tpu.dot_dimension_numbers<[1], [0], [0], [1], [0, 0, 1, 1], [], []>} : vector<256x4xf32>, vector<4x4xf32>, vector<256x4xf32> -> vector<256x4xf32>
    %219 = arith.addf %213, %218 : vector<256x4xf32>
    %c1_277 = arith.constant 1 : index
    %c0_278 = arith.constant 0 : index
    %c0_279 = arith.constant 0 : index
    %220 = vector.load %arg12[%c1_277, %c0_278, %c0_279] : memref<18x18x4xf32, #tpu.memory_space<vmem>>, vector<16x16x4xf32>
    %221 = vector.shape_cast %220 : vector<16x16x4xf32> to vector<256x4xf32>
    %c1_280 = arith.constant 1 : index
    %c0_281 = arith.constant 0 : index
    %c0_282 = arith.constant 0 : index
    %c0_283 = arith.constant 0 : index
    %222 = vector.load %arg8[%c1_280, %c0_281, %c0_282, %c0_283] : memref<3x3x4x4xf32, #tpu.memory_space<vmem>>, vector<1x1x4x4xf32>
    %223 = vector.shape_cast %222 : vector<1x1x4x4xf32> to vector<4x4xf32>
    %cst_284 = arith.constant dense<0.000000e+00> : vector<256x4xf32>
    %224 = tpu.matmul %221, %223, %cst_284 {dimension_numbers = #tpu.dot_dimension_numbers<[1], [0], [0], [1], [0, 0, 1, 1], [], []>} : vector<256x4xf32>, vector<4x4xf32>, vector<256x4xf32> -> vector<256x4xf32>
    %225 = arith.addf %219, %224 : vector<256x4xf32>
    %c1_285 = arith.constant 1 : index
    %c1_286 = arith.constant 1 : index
    %c0_287 = arith.constant 0 : index
    %226 = vector.load %arg12[%c1_285, %c1_286, %c0_287] : memref<18x18x4xf32, #tpu.memory_space<vmem>>, vector<16x16x4xf32>
    %227 = vector.shape_cast %226 : vector<16x16x4xf32> to vector<256x4xf32>
    %c1_288 = arith.constant 1 : index
    %c1_289 = arith.constant 1 : index
    %c0_290 = arith.constant 0 : index
    %c0_291 = arith.constant 0 : index
    %228 = vector.load %arg8[%c1_288, %c1_289, %c0_290, %c0_291] : memref<3x3x4x4xf32, #tpu.memory_space<vmem>>, vector<1x1x4x4xf32>
    %229 = vector.shape_cast %228 : vector<1x1x4x4xf32> to vector<4x4xf32>
    %cst_292 = arith.constant dense<0.000000e+00> : vector<256x4xf32>
    %230 = tpu.matmul %227, %229, %cst_292 {dimension_numbers = #tpu.dot_dimension_numbers<[1], [0], [0], [1], [0, 0, 1, 1], [], []>} : vector<256x4xf32>, vector<4x4xf32>, vector<256x4xf32> -> vector<256x4xf32>
    %231 = arith.addf %225, %230 : vector<256x4xf32>
    %c1_293 = arith.constant 1 : index
    %c2_294 = arith.constant 2 : index
    %c0_295 = arith.constant 0 : index
    %232 = vector.load %arg12[%c1_293, %c2_294, %c0_295] : memref<18x18x4xf32, #tpu.memory_space<vmem>>, vector<16x16x4xf32>
    %233 = vector.shape_cast %232 : vector<16x16x4xf32> to vector<256x4xf32>
    %c1_296 = arith.constant 1 : index
    %c2_297 = arith.constant 2 : index
    %c0_298 = arith.constant 0 : index
    %c0_299 = arith.constant 0 : index
    %234 = vector.load %arg8[%c1_296, %c2_297, %c0_298, %c0_299] : memref<3x3x4x4xf32, #tpu.memory_space<vmem>>, vector<1x1x4x4xf32>
    %235 = vector.shape_cast %234 : vector<1x1x4x4xf32> to vector<4x4xf32>
    %cst_300 = arith.constant dense<0.000000e+00> : vector<256x4xf32>
    %236 = tpu.matmul %233, %235, %cst_300 {dimension_numbers = #tpu.dot_dimension_numbers<[1], [0], [0], [1], [0, 0, 1, 1], [], []>} : vector<256x4xf32>, vector<4x4xf32>, vector<256x4xf32> -> vector<256x4xf32>
    %237 = arith.addf %231, %236 : vector<256x4xf32>
    %c2_301 = arith.constant 2 : index
    %c0_302 = arith.constant 0 : index
    %c0_303 = arith.constant 0 : index
    %238 = vector.load %arg12[%c2_301, %c0_302, %c0_303] : memref<18x18x4xf32, #tpu.memory_space<vmem>>, vector<16x16x4xf32>
    %239 = vector.shape_cast %238 : vector<16x16x4xf32> to vector<256x4xf32>
    %c2_304 = arith.constant 2 : index
    %c0_305 = arith.constant 0 : index
    %c0_306 = arith.constant 0 : index
    %c0_307 = arith.constant 0 : index
    %240 = vector.load %arg8[%c2_304, %c0_305, %c0_306, %c0_307] : memref<3x3x4x4xf32, #tpu.memory_space<vmem>>, vector<1x1x4x4xf32>
    %241 = vector.shape_cast %240 : vector<1x1x4x4xf32> to vector<4x4xf32>
    %cst_308 = arith.constant dense<0.000000e+00> : vector<256x4xf32>
    %242 = tpu.matmul %239, %241, %cst_308 {dimension_numbers = #tpu.dot_dimension_numbers<[1], [0], [0], [1], [0, 0, 1, 1], [], []>} : vector<256x4xf32>, vector<4x4xf32>, vector<256x4xf32> -> vector<256x4xf32>
    %243 = arith.addf %237, %242 : vector<256x4xf32>
    %c2_309 = arith.constant 2 : index
    %c1_310 = arith.constant 1 : index
    %c0_311 = arith.constant 0 : index
    %244 = vector.load %arg12[%c2_309, %c1_310, %c0_311] : memref<18x18x4xf32, #tpu.memory_space<vmem>>, vector<16x16x4xf32>
    %245 = vector.shape_cast %244 : vector<16x16x4xf32> to vector<256x4xf32>
    %c2_312 = arith.constant 2 : index
    %c1_313 = arith.constant 1 : index
    %c0_314 = arith.constant 0 : index
    %c0_315 = arith.constant 0 : index
    %246 = vector.load %arg8[%c2_312, %c1_313, %c0_314, %c0_315] : memref<3x3x4x4xf32, #tpu.memory_space<vmem>>, vector<1x1x4x4xf32>
    %247 = vector.shape_cast %246 : vector<1x1x4x4xf32> to vector<4x4xf32>
    %cst_316 = arith.constant dense<0.000000e+00> : vector<256x4xf32>
    %248 = tpu.matmul %245, %247, %cst_316 {dimension_numbers = #tpu.dot_dimension_numbers<[1], [0], [0], [1], [0, 0, 1, 1], [], []>} : vector<256x4xf32>, vector<4x4xf32>, vector<256x4xf32> -> vector<256x4xf32>
    %249 = arith.addf %243, %248 : vector<256x4xf32>
    %c2_317 = arith.constant 2 : index
    %c2_318 = arith.constant 2 : index
    %c0_319 = arith.constant 0 : index
    %250 = vector.load %arg12[%c2_317, %c2_318, %c0_319] : memref<18x18x4xf32, #tpu.memory_space<vmem>>, vector<16x16x4xf32>
    %251 = vector.shape_cast %250 : vector<16x16x4xf32> to vector<256x4xf32>
    %c2_320 = arith.constant 2 : index
    %c2_321 = arith.constant 2 : index
    %c0_322 = arith.constant 0 : index
    %c0_323 = arith.constant 0 : index
    %252 = vector.load %arg8[%c2_320, %c2_321, %c0_322, %c0_323] : memref<3x3x4x4xf32, #tpu.memory_space<vmem>>, vector<1x1x4x4xf32>
    %253 = vector.shape_cast %252 : vector<1x1x4x4xf32> to vector<4x4xf32>
    %cst_324 = arith.constant dense<0.000000e+00> : vector<256x4xf32>
    %254 = tpu.matmul %251, %253, %cst_324 {dimension_numbers = #tpu.dot_dimension_numbers<[1], [0], [0], [1], [0, 0, 1, 1], [], []>} : vector<256x4xf32>, vector<4x4xf32>, vector<256x4xf32> -> vector<256x4xf32>
    %255 = arith.addf %249, %254 : vector<256x4xf32>
    %c0_325 = arith.constant 0 : index
    %c0_326 = arith.constant 0 : index
    %256 = vector.load %arg9[%c0_325, %c0_326] : memref<1x4xf32, #tpu.memory_space<vmem>>, vector<1x4xf32>
    %257 = vector.broadcast %256 : vector<1x4xf32> to vector<256x4xf32>
    %258 = arith.addf %255, %257 : vector<256x4xf32>
    %cst_327 = arith.constant 0.000000e+00 : f32
    %259 = vector.broadcast %cst_327 : f32 to vector<256x4xf32>
    %260 = arith.cmpf oge, %258, %259 : vector<256x4xf32>
    %cst_328 = arith.constant 2.000000e-01 : f32
    %261 = vector.broadcast %cst_328 : f32 to vector<256x4xf32>
    %262 = arith.mulf %261, %258 : vector<256x4xf32>
    %263 = arith.select %260, %258, %262 : vector<256x4xi1>, vector<256x4xf32>
    %264 = vector.shape_cast %263 : vector<256x4xf32> to vector<1x16x16x4xf32>
    %c0_329 = arith.constant 0 : index
    %c0_330 = arith.constant 0 : index
    %c0_331 = arith.constant 0 : index
    %c0_332 = arith.constant 0 : index
    %265 = vector.load %arg10[%c0_329, %c0_330, %c0_331, %c0_332] : memref<1x16x16x4xf32, #tpu.memory_space<vmem>>, vector<1x16x16x4xf32>
    tpu.vector_store %arg10[%c0_329, %c0_330, %c0_331, %c0_332], %264 {strides = array<i32>} : memref<1x16x16x4xf32, #tpu.memory_space<vmem>>, vector<1x16x16x4xf32>,
    return
  }
  func.func @transform_0(%arg0: i32) -> (i32, i32, i32, i32) {
    %c0_i32 = arith.constant 0 : i32
    %c0_i32_0 = arith.constant 0 : i32
    %c0_i32_1 = arith.constant 0 : i32
    %c0_i32_2 = arith.constant 0 : i32
    return %arg0, %c0_i32, %c0_i32_0, %c0_i32_1 : i32, i32, i32, i32
  }
  func.func @transform_1(%arg0: i32) -> (i32, i32, i32, i32) {
    %c0_i32 = arith.constant 0 : i32
    %c0_i32_0 = arith.constant 0 : i32
    %c0_i32_1 = arith.constant 0 : i32
    %c0_i32_2 = arith.constant 0 : i32
    return %arg0, %c0_i32, %c0_i32_0, %c0_i32_1 : i32, i32, i32, i32
  }
  func.func @transform_2(%arg0: i32) -> (i32, i32, i32, i32) {
    %c0_i32 = arith.constant 0 : i32
    %c0_i32_0 = arith.constant 0 : i32
    %c0_i32_1 = arith.constant 0 : i32
    %c0_i32_2 = arith.constant 0 : i32
    %c0_i32_3 = arith.constant 0 : i32
    return %c0_i32, %c0_i32_0, %c0_i32_1, %c0_i32_2 : i32, i32, i32, i32
  }
  func.func @transform_3(%arg0: i32) -> (i32, i32) {
    %c0_i32 = arith.constant 0 : i32
    %c0_i32_0 = arith.constant 0 : i32
    %c0_i32_1 = arith.constant 0 : i32
    return %c0_i32, %c0_i32_0 : i32, i32
  }
  func.func @transform_4(%arg0: i32) -> (i32, i32, i32, i32) {
    %c0_i32 = arith.constant 0 : i32
    %c0_i32_0 = arith.constant 0 : i32
    %c0_i32_1 = arith.constant 0 : i32
    %c0_i32_2 = arith.constant 0 : i32
    %c0_i32_3 = arith.constant 0 : i32
    return %c0_i32, %c0_i32_0, %c0_i32_1, %c0_i32_2 : i32, i32, i32, i32
  }
  func.func @transform_5(%arg0: i32) -> (i32, i32, i32, i32) {
    %c0_i32 = arith.constant 0 : i32
    %c0_i32_0 = arith.constant 0 : i32
    %c0_i32_1 = arith.constant 0 : i32
    %c0_i32_2 = arith.constant 0 : i32
    %c0_i32_3 = arith.constant 0 : i32
    return %c0_i32, %c0_i32_0, %c0_i32_1, %c0_i32_2 : i32, i32, i32, i32
  }
  func.func @transform_6(%arg0: i32) -> (i32, i32) {
    %c0_i32 = arith.constant 0 : i32
    %c0_i32_0 = arith.constant 0 : i32
    %c0_i32_1 = arith.constant 0 : i32
    return %c0_i32, %c0_i32_0 : i32, i32
  }
  func.func @transform_7(%arg0: i32) -> (i32, i32, i32, i32) {
    %c0_i32 = arith.constant 0 : i32
    %c0_i32_0 = arith.constant 0 : i32
    %c0_i32_1 = arith.constant 0 : i32
    %c0_i32_2 = arith.constant 0 : i32
    %c0_i32_3 = arith.constant 0 : i32
    return %c0_i32, %c0_i32_0, %c0_i32_1, %c0_i32_2 : i32, i32, i32, i32
  }
  func.func @transform_8(%arg0: i32) -> (i32, i32) {
    %c0_i32 = arith.constant 0 : i32
    %c0_i32_0 = arith.constant 0 : i32
    %c0_i32_1 = arith.constant 0 : i32
    return %c0_i32, %c0_i32_0 : i32, i32
  }
  func.func @transform_9(%arg0: i32) -> (i32, i32, i32, i32) {
    %c0_i32 = arith.constant 0 : i32
    %c0_i32_0 = arith.constant 0 : i32
    %c0_i32_1 = arith.constant 0 : i32
    %c0_i32_2 = arith.constant 0 : i32
    return %arg0, %c0_i32, %c0_i32_0, %c0_i32_1 : i32, i32, i32, i32
  }
}

</mosaic_0001>

<llo_original>
// kernel: unet_up_forward.1
$region0: #{unet_up_forward.1}
  #allocation0 [shape = 'u32[]', space=smem, size = 0x4, offset = 0x4, fixed_abs, tag = 'smem constant byte address 0x4 - core index']
  #allocation1 [shape = 'u32[72,128]{1,0:T(1,128)}', space=vmem, size = 0x9000, scoped, tag = 'internal scratch']
  #allocation2 [shape = 'f32[18,18,4]{2,1,0:T(8,128)}', space=vmem, size = 0x36000, scoped, tag = 'scratch operand']
  #allocation3 [shape = 'f32[18,18,4]{2,1,0:T(8,128)}', space=vmem, size = 0x36000, scoped, tag = 'scratch operand']
  %s0 = inlined_call_operand.vmem [shape: f32[2,18,18,8], index: 0, kind: input, shape index: {}]
  %s1 = inlined_call_operand.vmem [shape: f32[2,18,18,4], index: 1, kind: input, shape index: {}]
  %s2 = inlined_call_operand.vmem [shape: f32[3,3,8,4], index: 2, kind: input, shape index: {}]
  %s3 = inlined_call_operand.vmem [shape: f32[1,4], index: 3, kind: input, shape index: {}]
  %s4 = inlined_call_operand.vmem [shape: f32[3,3,4,4], index: 4, kind: input, shape index: {}]
  %s5 = inlined_call_operand.vmem [shape: f32[3,3,4,4], index: 5, kind: input, shape index: {}]
  %s6 = inlined_call_operand.vmem [shape: f32[1,4], index: 6, kind: input, shape index: {}]
  %s7 = inlined_call_operand.vmem [shape: f32[3,3,4,4], index: 7, kind: input, shape index: {}]
  %s8 = inlined_call_operand.vmem [shape: f32[1,4], index: 8, kind: input, shape index: {}]
  %s9 = inlined_call_operand.vmem [shape: f32[2,16,16,4], index: 9, kind: output, shape index: {}]
  %s10 = sld [smem:[#allocation0]]
  $region69: #{unet_up_forward.1} parent=0
    _
  %s12 = ssub.s32 1, %s10
  %s13 = scalar_select 0, %s12, %s10
  loop: start=0, step=1, limit=4
  $region2: #{unet_up_forward.1} parent=0 // loop_pre_header
    _
  $region3: #{unet_up_forward.1} parent=0 // loop_header
    %s15 = sphi 0, %s19
    %p16 = scmp.ge.s32.totalorder %s15, 4
    %s25 = sphi 0, %s27
    %s28 = sphi 0, %s25
    %s29 = sphi 0, %s28
    %s45 = sphi 0, %s29
    %s51 = sphi 0, %s53
    %s54 = sphi 0, %s51
    %s55 = sphi 0, %s54
    %s71 = sphi 0, %s55
    %s75 = sphi 0, %s75
    %s77 = sphi 0, %s75
    %s78 = sphi 0, %s77
    %s92 = sphi 0, %s78
    %s96 = sphi 0, %s96
    %s98 = sphi 0, %s96
    %s99 = sphi 0, %s98
    %s113 = sphi 0, %s99
    %s117 = sphi 0, %s117
    %s119 = sphi 0, %s117
    %s120 = sphi 0, %s119
    %s134 = sphi 0, %s120
    %s138 = sphi 0, %s138
    %s140 = sphi 0, %s138
    %s141 = sphi 0, %s140
    %s155 = sphi 0, %s141
    %s159 = sphi 0, %s159
    %s161 = sphi 0, %s159
    %s162 = sphi 0, %s161
    %s176 = sphi 0, %s162
    %s180 = sphi 0, %s180
    %s182 = sphi 0, %s180
    %s183 = sphi 0, %s182
    %s197 = sphi 0, %s183
    %s201 = sphi 0, %s201
    %s203 = sphi 0, %s201
    %s204 = sphi 0, %s203
    %s218 = sphi 0, %s204
    %s224 = sphi 0, %s226
    %s227 = sphi 0, %s224
    %s228 = sphi 0, %s227
    %s244 = sphi 0, %s228
  $region4: #{unet_up_forward.1} parent=0 // loop_header_branch
    %18 = sbr.rel (%p16) target = $region8
  $region5: #{unet_up_forward.1} parent=0 // loop_body
    %s20 = ssub.s32 %s15, 1
    %s21 = ssub.s32 %s15, 2
    %s22 = sadd.s32 %s15, 1
    %s23 = ssub.s32 %s15, %s22
    %p24 = scmp.eq.s32.totalorder %s23, 0
    %s26 = sadd.s32 %s25, 1
    %s27 = scalar_select %p24, %s25, %s26
    %p30 = pneg %p24
    %p31 = scmp.eq.s32.totalorder %s15, 1
    %p32 = por %p30, %p31
    %p33 = scmp.ne.s32.totalorder %s25, %s28
    %p34 = scmp.eq.s32.totalorder %s15, 0
    %p35 = por %p33, %p34
    %p36 = scmp.ne.s32.totalorder %s25, %s28
    %p37 = scmp.eq.s32.totalorder %s20, 1
    %p38 = por %p36, %p37
    %p39 = scmp.ne.s32.totalorder %s28, %s29
    %p40 = scmp.eq.s32.totalorder %s20, 0
    %p41 = por %p39, %p40
    %p42 = scmp.ne.s32.totalorder %s28, %s29
    %p43 = scmp.eq.s32.totalorder %s21, 1
    %p44 = por %p42, %p43
    %p46 = scmp.ne.s32.totalorder %s29, %s45
    %p47 = scmp.eq.s32.totalorder %s21, 0
    %p48 = por %p46, %p47
    %s49 = ssub.s32 %s15, %s22
    %p50 = scmp.eq.s32.totalorder %s49, 0
    %s52 = sadd.s32 %s51, 1
    %s53 = scalar_select %p50, %s51, %s52
    %p56 = pneg %p50
    %p57 = scmp.eq.s32.totalorder %s15, 1
    %p58 = por %p56, %p57
    %p59 = scmp.ne.s32.totalorder %s51, %s54
    %p60 = scmp.eq.s32.totalorder %s15, 0
    %p61 = por %p59, %p60
    %p62 = scmp.ne.s32.totalorder %s51, %s54
    %p63 = scmp.eq.s32.totalorder %s20, 1
    %p64 = por %p62, %p63
    %p65 = scmp.ne.s32.totalorder %s54, %s55
    %p66 = scmp.eq.s32.totalorder %s20, 0
    %p67 = por %p65, %p66
    %p68 = scmp.ne.s32.totalorder %s54, %s55
    %p69 = scmp.eq.s32.totalorder %s21, 1
    %p70 = por %p68, %p69
    %p72 = scmp.ne.s32.totalorder %s55, %s71
    %p73 = scmp.eq.s32.totalorder %s21, 0
    %p74 = por %p72, %p73
    %s76 = sadd.s32 %s75, 1
    %p79 = scmp.eq.s32.totalorder %s15, 1
    %p80 = scmp.ne.s32.totalorder %s75, %s77
    %p81 = scmp.eq.s32.totalorder %s15, 0
    %p82 = por %p80, %p81
    %p83 = scmp.ne.s32.totalorder %s75, %s77
    %p84 = scmp.eq.s32.totalorder %s20, 1
    %p85 = por %p83, %p84
    %p86 = scmp.ne.s32.totalorder %s77, %s78
    %p87 = scmp.eq.s32.totalorder %s20, 0
    %p88 = por %p86, %p87
    %p89 = scmp.ne.s32.totalorder %s77, %s78
    %p90 = scmp.eq.s32.totalorder %s21, 1
    %p91 = por %p89, %p90
    %p93 = scmp.ne.s32.totalorder %s78, %s92
    %p94 = scmp.eq.s32.totalorder %s21, 0
    %p95 = por %p93, %p94
    %s97 = sadd.s32 %s96, 1
    %p100 = scmp.eq.s32.totalorder %s15, 1
    %p101 = scmp.ne.s32.totalorder %s96, %s98
    %p102 = scmp.eq.s32.totalorder %s15, 0
    %p103 = por %p101, %p102
    %p104 = scmp.ne.s32.totalorder %s96, %s98
    %p105 = scmp.eq.s32.totalorder %s20, 1
    %p106 = por %p104, %p105
    %p107 = scmp.ne.s32.totalorder %s98, %s99
    %p108 = scmp.eq.s32.totalorder %s20, 0
    %p109 = por %p107, %p108
    %p110 = scmp.ne.s32.totalorder %s98, %s99
    %p111 = scmp.eq.s32.totalorder %s21, 1
    %p112 = por %p110, %p111
    %p114 = scmp.ne.s32.totalorder %s99, %s113
    %p115 = scmp.eq.s32.totalorder %s21, 0
    %p116 = por %p114, %p115
    %s118 = sadd.s32 %s117, 1
    %p121 = scmp.eq.s32.totalorder %s15, 1
    %p122 = scmp.ne.s32.totalorder %s117, %s119
    %p123 = scmp.eq.s32.totalorder %s15, 0
    %p124 = por %p122, %p123
    %p125 = scmp.ne.s32.totalorder %s117, %s119
    %p126 = scmp.eq.s32.totalorder %s20, 1
    %p127 = por %p125, %p126
    %p128 = scmp.ne.s32.totalorder %s119, %s120
    %p129 = scmp.eq.s32.totalorder %s20, 0
    %p130 = por %p128, %p129
    %p131 = scmp.ne.s32.totalorder %s119, %s120
    %p132 = scmp.eq.s32.totalorder %s21, 1
    %p133 = por %p131, %p132
    %p135 = scmp.ne.s32.totalorder %s120, %s134
    %p136 = scmp.eq.s32.totalorder %s21, 0
    %p137 = por %p135, %p136
    %s139 = sadd.s32 %s138, 1
    %p142 = scmp.eq.s32.totalorder %s15, 1
    %p143 = scmp.ne.s32.totalorder %s138, %s140
    %p144 = scmp.eq.s32.totalorder %s15, 0
    %p145 = por %p143, %p144
    %p146 = scmp.ne.s32.totalorder %s138, %s140
    %p147 = scmp.eq.s32.totalorder %s20, 1
    %p148 = por %p146, %p147
    %p149 = scmp.ne.s32.totalorder %s140, %s141
    %p150 = scmp.eq.s32.totalorder %s20, 0
    %p151 = por %p149, %p150
    %p152 = scmp.ne.s32.totalorder %s140, %s141
    %p153 = scmp.eq.s32.totalorder %s21, 1
    %p154 = por %p152, %p153
    %p156 = scmp.ne.s32.totalorder %s141, %s155
    %p157 = scmp.eq.s32.totalorder %s21, 0
    %p158 = por %p156, %p157
    %s160 = sadd.s32 %s159, 1
    %p163 = scmp.eq.s32.totalorder %s15, 1
    %p164 = scmp.ne.s32.totalorder %s159, %s161
    %p165 = scmp.eq.s32.totalorder %s15, 0
    %p166 = por %p164, %p165
    %p167 = scmp.ne.s32.totalorder %s159, %s161
    %p168 = scmp.eq.s32.totalorder %s20, 1
    %p169 = por %p167, %p168
    %p170 = scmp.ne.s32.totalorder %s161, %s162
    %p171 = scmp.eq.s32.totalorder %s20, 0
    %p172 = por %p170, %p171
    %p173 = scmp.ne.s32.totalorder %s161, %s162
    %p174 = scmp.eq.s32.totalorder %s21, 1
    %p175 = por %p173, %p174
    %p177 = scmp.ne.s32.totalorder %s162, %s176
    %p178 = scmp.eq.s32.totalorder %s21, 0
    %p179 = por %p177, %p178
    %s181 = sadd.s32 %s180, 1
    %p184 = scmp.eq.s32.totalorder %s15, 1
    %p185 = scmp.ne.s32.totalorder %s180, %s182
    %p186 = scmp.eq.s32.totalorder %s15, 0
    %p187 = por %p185, %p186
    %p188 = scmp.ne.s32.totalorder %s180, %s182
    %p189 = scmp.eq.s32.totalorder %s20, 1
    %p190 = por %p188, %p189
    %p191 = scmp.ne.s32.totalorder %s182, %s183
    %p192 = scmp.eq.s32.totalorder %s20, 0
    %p193 = por %p191, %p192
    %p194 = scmp.ne.s32.totalorder %s182, %s183
    %p195 = scmp.eq.s32.totalorder %s21, 1
    %p196 = por %p194, %p195
    %p198 = scmp.ne.s32.totalorder %s183, %s197
    %p199 = scmp.eq.s32.totalorder %s21, 0
    %p200 = por %p198, %p199
    %s202 = sadd.s32 %s201, 1
    %p205 = scmp.eq.s32.totalorder %s15, 1
    %p206 = scmp.ne.s32.totalorder %s201, %s203
    %p207 = scmp.eq.s32.totalorder %s15, 0
    %p208 = por %p206, %p207
    %p209 = scmp.ne.s32.totalorder %s201, %s203
    %p210 = scmp.eq.s32.totalorder %s20, 1
    %p211 = por %p209, %p210
    %p212 = scmp.ne.s32.totalorder %s203, %s204
    %p213 = scmp.eq.s32.totalorder %s20, 0
    %p214 = por %p212, %p213
    %p215 = scmp.ne.s32.totalorder %s203, %s204
    %p216 = scmp.eq.s32.totalorder %s21, 1
    %p217 = por %p215, %p216
    %p219 = scmp.ne.s32.totalorder %s204, %s218
    %p220 = scmp.eq.s32.totalorder %s21, 0
    %p221 = por %p219, %p220
    %s222 = ssub.s32 %s15, %s22
    %p223 = scmp.eq.s32.totalorder %s222, 0
    %s225 = sadd.s32 %s224, 1
    %s226 = scalar_select %p223, %s224, %s225
    %p229 = pneg %p223
    %p230 = scmp.eq.s32.totalorder %s15, 1
    %p231 = por %p229, %p230
    %p232 = scmp.ne.s32.totalorder %s224, %s227
    %p233 = scmp.eq.s32.totalorder %s15, 0
    %p234 = por %p232, %p233
    %p235 = scmp.ne.s32.totalorder %s224, %s227
    %p236 = scmp.eq.s32.totalorder %s20, 1
    %p237 = por %p235, %p236
    %p238 = scmp.ne.s32.totalorder %s227, %s228
    %p239 = scmp.eq.s32.totalorder %s20, 0
    %p240 = por %p238, %p239
    %p241 = scmp.ne.s32.totalorder %s227, %s228
    %p242 = scmp.eq.s32.totalorder %s21, 1
    %p243 = por %p241, %p242
    %p245 = scmp.ne.s32.totalorder %s228, %s244
    %p246 = scmp.eq.s32.totalorder %s21, 0
    %p247 = por %p245, %p246
    %p248 = scmp.le.s32.totalorder 1, %s15
    %p249 = scmp.lt.s32.totalorder %s15, 3
    %p250 = pnand %p248, %p249
    %p251 = pneg %p250
    // Predicated region
    $region9: #{unet_up_forward.1} parent=5 // pred_check
      _
    $region10: #{unet_up_forward.1} parent=5 // pred_check_branch
      %253 = sbr.rel (%p250) target = $region12
    $region11: #{unet_up_forward.1} parent=5 // pred_region
      %s254 = ssub.s32 %s15, 1
      // Predicated region
      $region13: #{unet_up_forward.1} parent=11 // pred_check
        %p255 = pneg %p88
      $region14: #{unet_up_forward.1} parent=11 // pred_check_branch
        %257 = sbr.rel (%p255) target = $region16
      $region15: #{unet_up_forward.1} parent=11 // pred_region
        _
      $region16: #{unet_up_forward.1} parent=11 // pred_fallthru
        _
      // Predicated region
      $region17: #{unet_up_forward.1} parent=11 // pred_check
        %p258 = pneg %p109
      $region18: #{unet_up_forward.1} parent=11 // pred_check_branch
        %260 = sbr.rel (%p258) target = $region20
      $region19: #{unet_up_forward.1} parent=11 // pred_region
        _
      $region20: #{unet_up_forward.1} parent=11 // pred_fallthru
        _
      // Predicated region
      $region21: #{unet_up_forward.1} parent=11 // pred_check
        %p261 = pneg %p130
      $region22: #{unet_up_forward.1} parent=11 // pred_check_branch
        %263 = sbr.rel (%p261) target = $region24
      $region23: #{unet_up_forward.1} parent=11 // pred_region
        _
      $region24: #{unet_up_forward.1} parent=11 // pred_fallthru
        _
      // Predicated region
      $region25: #{unet_up_forward.1} parent=11 // pred_check
        %p264 = pneg %p151
      $region26: #{unet_up_forward.1} parent=11 // pred_check_branch
        %266 = sbr.rel (%p264) target = $region28
      $region27: #{unet_up_forward.1} parent=11 // pred_region
        _
      $region28: #{unet_up_forward.1} parent=11 // pred_fallthru
        _
      // Predicated region
      $region29: #{unet_up_forward.1} parent=11 // pred_check
        %p267 = pneg %p172
      $region30: #{unet_up_forward.1} parent=11 // pred_check_branch
        %269 = sbr.rel (%p267) target = $region32
      $region31: #{unet_up_forward.1} parent=11 // pred_region
        _
      $region32: #{unet_up_forward.1} parent=11 // pred_fallthru
        _
      // Predicated region
      $region33: #{unet_up_forward.1} parent=11 // pred_check
        %p270 = pneg %p193
      $region34: #{unet_up_forward.1} parent=11 // pred_check_branch
        %272 = sbr.rel (%p270) target = $region36
      $region35: #{unet_up_forward.1} parent=11 // pred_region
        _
      $region36: #{unet_up_forward.1} parent=11 // pred_fallthru
        _
      // Predicated region
      $region37: #{unet_up_forward.1} parent=11 // pred_check
        %p273 = pneg %p214
      $region38: #{unet_up_forward.1} parent=11 // pred_check_branch
        %275 = sbr.rel (%p273) target = $region40
      $region39: #{unet_up_forward.1} parent=11 // pred_region
        _
      $region40: #{unet_up_forward.1} parent=11 // pred_fallthru
        _
    $region12: #{unet_up_forward.1} parent=5 // pred_fallthru
      _
    %p276 = scmp.lt.s32.totalorder %s15, 2
    // Predicated region
    $region41: #{unet_up_forward.1} parent=5 // pred_check
      %p277 = pneg %p276
    $region42: #{unet_up_forward.1} parent=5 // pred_check_branch
      %279 = sbr.rel (%p277) target = $region44
    $region43: #{unet_up_forward.1} parent=5 // pred_region
      // Predicated region
      $region45: #{unet_up_forward.1} parent=43 // pred_check
        %p280 = pneg %p35
      $region46: #{unet_up_forward.1} parent=43 // pred_check_branch
        %282 = sbr.rel (%p280) target = $region48
      $region47: #{unet_up_forward.1} parent=43 // pred_region
        %p283 = scmp.lt.s32.totalorder %s15, 1
        %s284 = scalar_select %p283, %s15, 1
        %s285 = smul.addr %s284, 54
        %s286 = smul.addr %s285, 8
        %s287 = scalar_lea.vmem %s0, %s286
      $region48: #{unet_up_forward.1} parent=43 // pred_fallthru
        _
      // Predicated region
      $region49: #{unet_up_forward.1} parent=43 // pred_check
        %p288 = pneg %p61
      $region50: #{unet_up_forward.1} parent=43 // pred_check_branch
        %290 = sbr.rel (%p288) target = $region52
      $region51: #{unet_up_forward.1} parent=43 // pred_region
        %p291 = scmp.lt.s32.totalorder %s15, 1
        %s292 = scalar_select %p291, %s15, 1
        %s293 = smul.addr %s292, 54
        %s294 = smul.addr %s293, 8
        %s295 = scalar_lea.vmem %s1, %s294
      $region52: #{unet_up_forward.1} parent=43 // pred_fallthru
        _
    $region44: #{unet_up_forward.1} parent=5 // pred_fallthru
      _
    %p296 = scmp.le.s32.totalorder 1, %s15
    %p297 = scmp.lt.s32.totalorder %s15, 3
    %p298 = pnand %p296, %p297
    %p299 = pneg %p298
    // Predicated region
    $region53: #{unet_up_forward.1} parent=5 // pred_check
      _
    $region54: #{unet_up_forward.1} parent=5 // pred_check_branch
      %301 = sbr.rel (%p298) target = $region56
    $region55: #{unet_up_forward.1} parent=5 // pred_region
      %s302 = ssub.s32 %s15, 1
      %p303 = scmp.lt.s32.totalorder %s20, 1
      %s304 = scalar_select %p303, %s20, 1
      %s305 = smul.addr %s304, 54
      %s306 = smul.addr %s305, 8
      %s307 = scalar_lea.vmem %s0, %s306
      %p308 = pneg %p41
      %p309 = pneg %p38
      %p310 = scmp.lt.s32.totalorder %s20, 1
      %s311 = scalar_select %p310, %s20, 1
      %s312 = smul.addr %s311, 54
      %s313 = smul.addr %s312, 8
      %s314 = scalar_lea.vmem %s1, %s313
      %p315 = pneg %p67
      %p316 = pneg %p64
      %p317 = pneg %p88
      %p318 = pneg %p85
      %p319 = pneg %p109
      %p320 = pneg %p106
      %p321 = pneg %p130
      %p322 = pneg %p127
      %p323 = pneg %p151
      %p324 = pneg %p148
      %p325 = pneg %p172
      %p326 = pneg %p169
      %p327 = pneg %p193
      %p328 = pneg %p190
      %p329 = pneg %p214
      %p330 = pneg %p211
      %p331 = pneg %p240
      %p332 = pneg %p237
      %p333 = scmp.lt.s32.totalorder %s20, 1
      %s334 = scalar_select %p333, %s20, 1
      %s335 = smul.addr %s334, 32
      %s336 = smul.addr %s335, 8
      %s337 = scalar_lea.vmem %s9, %s336
      %p338 = scmp.lt.s32.totalorder %s20, 1
      %s339 = scalar_select %p338, %s20, 1
      %s340 = smul.addr %s339, 54
      %s341 = smul.addr %s340, 8
      %s342 = scalar_lea.vmem %s0, %s341
      %p343 = scmp.lt.s32.totalorder %s20, 1
      %s344 = scalar_select %p343, %s20, 1
      %s345 = smul.addr %s344, 54
      %s346 = smul.addr %s345, 8
      %s347 = scalar_lea.vmem %s1, %s346
      %p348 = scmp.lt.s32.totalorder %s20, 1
      %s349 = scalar_select %p348, %s20, 1
      %s350 = smul.addr %s349, 32
      %s351 = smul.addr %s350, 8
      %s352 = scalar_lea.vmem %s9, %s351
      %v353 = vld [vmem:[%s342] sm:$0xff]
      %v354 = vld [vmem:[%s342 + $0x8] sm:$0xff]
      %v355 = vld [vmem:[%s342 + $0x18] sm:$0xff]
      %v356 = vld [vmem:[%s342 + $0x20] sm:$0xff]
      %v357 = vld [vmem:[%s342 + $0x30] sm:$0xff]
      %v358 = vld [vmem:[%s342 + $0x38] sm:$0xff]
      %v359 = vld [vmem:[%s342 + $0x48] sm:$0xff]
      %v360 = vld [vmem:[%s342 + $0x50] sm:$0xff]
      %v361 = vld [vmem:[%s342 + $0x60] sm:$0xff]
      %v362 = vld [vmem:[%s342 + $0x68] sm:$0xff]
      %v363 = vld [vmem:[%s342 + $0x78] sm:$0xff]
      %v364 = vld [vmem:[%s342 + $0x80] sm:$0xff]
      %v365 = vld [vmem:[%s342 + $0x90] sm:$0xff]
      %v366 = vld [vmem:[%s342 + $0x98] sm:$0xff]
      %v367 = vld [vmem:[%s342 + $0xa8] sm:$0xff]
      %v368 = vld [vmem:[%s342 + $0xb0] sm:$0xff]
      %v369 = vld [vmem:[%s342 + $0xc0] sm:$0xff]
      %v370 = vld [vmem:[%s342 + $0xc8] sm:$0xff]
      %v371 = vld [vmem:[%s342 + $0xd8] sm:$0xff]
      %v372 = vld [vmem:[%s342 + $0xe0] sm:$0xff]
      %v373 = vld [vmem:[%s342 + $0xf0] sm:$0xff]
      %v374 = vld [vmem:[%s342 + $0xf8] sm:$0xff]
      %v375 = vld [vmem:[%s342 + $0x108] sm:$0xff]
      %v376 = vld [vmem:[%s342 + $0x110] sm:$0xff]
      %v377 = vld [vmem:[%s342 + $0x120] sm:$0xff]
      %v378 = vld [vmem:[%s342 + $0x128] sm:$0xff]
      %v379 = vld [vmem:[%s342 + $0x138] sm:$0xff]
      %v380 = vld [vmem:[%s342 + $0x140] sm:$0xff]
      %v381 = vld [vmem:[%s342 + $0x150] sm:$0xff]
      %v382 = vld [vmem:[%s342 + $0x158] sm:$0xff]
      %v383 = vld [vmem:[%s342 + $0x168] sm:$0xff]
      %v384 = vld [vmem:[%s342 + $0x170] sm:$0xff]
      %v385 = vld [vmem:[%s2] sm:$0xff]
      %v386 = vld [vmem:[%s342 + $0x1] sm:$0xff]
      %v387 = vld [vmem:[%s342 + $0x9] sm:$0xff]
      %v388 = vld [vmem:[%s342 + $0x19] sm:$0xff]
      %v389 = vld [vmem:[%s342 + $0x21] sm:$0xff]
      %v390 = vld [vmem:[%s342 + $0x31] sm:$0xff]
      %v391 = vld [vmem:[%s342 + $0x39] sm:$0xff]
      %v392 = vld [vmem:[%s342 + $0x49] sm:$0xff]
      %v393 = vld [vmem:[%s342 + $0x51] sm:$0xff]
      %v394 = vld [vmem:[%s342 + $0x61] sm:$0xff]
      %v395 = vld [vmem:[%s342 + $0x69] sm:$0xff]
      %v396 = vld [vmem:[%s342 + $0x79] sm:$0xff]
      %v397 = vld [vmem:[%s342 + $0x81] sm:$0xff]
      %v398 = vld [vmem:[%s342 + $0x91] sm:$0xff]
      %v399 = vld [vmem:[%s342 + $0x99] sm:$0xff]
      %v400 = vld [vmem:[%s342 + $0xa9] sm:$0xff]
      %v401 = vld [vmem:[%s342 + $0xb1] sm:$0xff]
      %v402 = vld [vmem:[%s342 + $0xc1] sm:$0xff]
      %v403 = vld [vmem:[%s342 + $0xc9] sm:$0xff]
      %v404 = vld [vmem:[%s342 + $0xd9] sm:$0xff]
      %v405 = vld [vmem:[%s342 + $0xe1] sm:$0xff]
      %v406 = vld [vmem:[%s342 + $0xf1] sm:$0xff]
      %v407 = vld [vmem:[%s342 + $0xf9] sm:$0xff]
      %v408 = vld [vmem:[%s342 + $0x109] sm:$0xff]
      %v409 = vld [vmem:[%s342 + $0x111] sm:$0xff]
      %v410 = vld [vmem:[%s342 + $0x121] sm:$0xff]
      %v411 = vld [vmem:[%s342 + $0x129] sm:$0xff]
      %v412 = vld [vmem:[%s342 + $0x139] sm:$0xff]
      %v413 = vld [vmem:[%s342 + $0x141] sm:$0xff]
      %v414 = vld [vmem:[%s342 + $0x151] sm:$0xff]
      %v415 = vld [vmem:[%s342 + $0x159] sm:$0xff]
      %v416 = vld [vmem:[%s342 + $0x169] sm:$0xff]
      %v417 = vld [vmem:[%s342 + $0x171] sm:$0xff]
      %s418 = scalar_lea.vmem %s2, 8
      %v419 = vld [vmem:[%s418] sm:$0xff]
      %vm420 = vcmask 64512
      %v422 = vsel %vm420, %v386, 0
      %v425 = vsel %vm420, %v387, 0
      %v428 = vsel %vm420, %v388, 0
      %v431 = vsel %vm420, %v389, 0
      %v434 = vsel %vm420, %v390, 0
      %v437 = vsel %vm420, %v391, 0
      %v440 = vsel %vm420, %v392, 0
      %v443 = vsel %vm420, %v393, 0
      %v446 = vsel %vm420, %v394, 0
      %v449 = vsel %vm420, %v395, 0
      %v452 = vsel %vm420, %v396, 0
      %v455 = vsel %vm420, %v397, 0
      %v458 = vsel %vm420, %v398, 0
      %v461 = vsel %vm420, %v399, 0
      %v464 = vsel %vm420, %v400, 0
      %v467 = vsel %vm420, %v401, 0
      %v470 = vsel %vm420, %v402, 0
      %v473 = vsel %vm420, %v403, 0
      %v476 = vsel %vm420, %v404, 0
      %v479 = vsel %vm420, %v405, 0
      %v482 = vsel %vm420, %v406, 0
      %v485 = vsel %vm420, %v407, 0
      %v488 = vsel %vm420, %v408, 0
      %v491 = vsel %vm420, %v409, 0
      %v494 = vsel %vm420, %v410, 0
      %v497 = vsel %vm420, %v411, 0
      %v500 = vsel %vm420, %v412, 0
      %v503 = vsel %vm420, %v413, 0
      %v506 = vsel %vm420, %v414, 0
      %v509 = vsel %vm420, %v415, 0
      %v512 = vsel %vm420, %v416, 0
      %v515 = vsel %vm420, %v417, 0
      %517 = vmatpush.msra.mxu0 0.0
      %518 = vmatpush.msra.mxu0 0.0
      %519 = vmatpush.msra.mxu0 0.0
      %520 = vmatpush.msra.mxu0 0.0
      %521 = vmatpush.msra.mxu0 0.0
      %522 = vmatpush.msra.mxu0 0.0
      %523 = vmatpush.msra.mxu0 0.0
      %524 = vmatpush.msra.mxu0 0.0
      %525 = vmatpush.msra.mxu0 0.0
      %526 = vmatpush.msra.mxu0 0.0
      %527 = vmatpush.msra.mxu0 0.0
      %528 = vmatpush.msra.mxu0 0.0
      %529 = vmatpush.msra.mxu0 0.0
      %530 = vmatpush.msra.mxu0 0.0
      %531 = vmatpush.msra.mxu0 0.0
      %532 = vmatpush.msra.mxu0 %v419
      %533 = vmatmul.f32.gmra.mxu0 %v422
      %v534 = vpop.f32.mrf.mxu0
      %v535 = vadd.f32 0.0, %v534
      %536 = vmatmul.f32.gmra.mxu0 %v425
      %v537 = vpop.f32.mrf.mxu0
      %v538 = vadd.f32 0.0, %v537
      %539 = vmatmul.f32.gmra.mxu0 %v428
      %v540 = vpop.f32.mrf.mxu0
      %v541 = vadd.f32 0.0, %v540
      %542 = vmatmul.f32.gmra.mxu0 %v431
      %v543 = vpop.f32.mrf.mxu0
      %v544 = vadd.f32 0.0, %v543
      %545 = vmatmul.f32.gmra.mxu0 %v434
      %v546 = vpop.f32.mrf.mxu0
      %v547 = vadd.f32 0.0, %v546
      %548 = vmatmul.f32.gmra.mxu0 %v437
      %v549 = vpop.f32.mrf.mxu0
      %v550 = vadd.f32 0.0, %v549
      %551 = vmatmul.f32.gmra.mxu0 %v440
      %v552 = vpop.f32.mrf.mxu0
      %v553 = vadd.f32 0.0, %v552
      %554 = vmatmul.f32.gmra.mxu0 %v443
      %v555 = vpop.f32.mrf.mxu0
      %v556 = vadd.f32 0.0, %v555
      %557 = vmatmul.f32.gmra.mxu0 %v446
      %v558 = vpop.f32.mrf.mxu0
      %v559 = vadd.f32 0.0, %v558
      %560 = vmatmul.f32.gmra.mxu0 %v449
      %v561 = vpop.f32.mrf.mxu0
      %v562 = vadd.f32 0.0, %v561
      %563 = vmatmul.f32.gmra.mxu0 %v452
      %v564 = vpop.f32.mrf.mxu0
      %v565 = vadd.f32 0.0, %v564
      %566 = vmatmul.f32.gmra.mxu0 %v455
      %v567 = vpop.f32.mrf.mxu0
      %v568 = vadd.f32 0.0, %v567
      %569 = vmatmul.f32.gmra.mxu0 %v458
      %v570 = vpop.f32.mrf.mxu0
      %v571 = vadd.f32 0.0, %v570
      %572 = vmatmul.f32.gmra.mxu0 %v461
      %v573 = vpop.f32.mrf.mxu0
      %v574 = vadd.f32 0.0, %v573
      %575 = vmatmul.f32.gmra.mxu0 %v464
      %v576 = vpop.f32.mrf.mxu0
      %v577 = vadd.f32 0.0, %v576
      %578 = vmatmul.f32.gmra.mxu0 %v467
      %v579 = vpop.f32.mrf.mxu0
      %v580 = vadd.f32 0.0, %v579
      %581 = vmatmul.f32.gmra.mxu0 %v470
      %v582 = vpop.f32.mrf.mxu0
      %v583 = vadd.f32 0.0, %v582
      %584 = vmatmul.f32.gmra.mxu0 %v473
      %v585 = vpop.f32.mrf.mxu0
      %v586 = vadd.f32 0.0, %v585
      %587 = vmatmul.f32.gmra.mxu0 %v476
      %v588 = vpop.f32.mrf.mxu0
      %v589 = vadd.f32 0.0, %v588
      %590 = vmatmul.f32.gmra.mxu0 %v479
      %v591 = vpop.f32.mrf.mxu0
      %v592 = vadd.f32 0.0, %v591
      %593 = vmatmul.f32.gmra.mxu0 %v482
      %v594 = vpop.f32.mrf.mxu0
      %v595 = vadd.f32 0.0, %v594
      %596 = vmatmul.f32.gmra.mxu0 %v485
      %v597 = vpop.f32.mrf.mxu0
      %v598 = vadd.f32 0.0, %v597
      %599 = vmatmul.f32.gmra.mxu0 %v488
      %v600 = vpop.f32.mrf.mxu0
      %v601 = vadd.f32 0.0, %v600
      %602 = vmatmul.f32.gmra.mxu0 %v491
      %v603 = vpop.f32.mrf.mxu0
      %v604 = vadd.f32 0.0, %v603
      %605 = vmatmul.f32.gmra.mxu0 %v494
      %v606 = vpop.f32.mrf.mxu0
      %v607 = vadd.f32 0.0, %v606
      %608 = vmatmul.f32.gmra.mxu0 %v497
      %v609 = vpop.f32.mrf.mxu0
      %v610 = vadd.f32 0.0, %v609
      %611 = vmatmul.f32.gmra.mxu0 %v500
      %v612 = vpop.f32.mrf.mxu0
      %v613 = vadd.f32 0.0, %v612
      %614 = vmatmul.f32.gmra.mxu0 %v503
      %v615 = vpop.f32.mrf.mxu0
      %v616 = vadd.f32 0.0, %v615
      %617 = vmatmul.f32.gmra.mxu0 %v506
      %v618 = vpop.f32.mrf.mxu0
      %v619 = vadd.f32 0.0, %v618
      %620 = vmatmul.f32.gmra.mxu0 %v509
      %v621 = vpop.f32.mrf.mxu0
      %v622 = vadd.f32 0.0, %v621
      %623 = vmatmul.f32.gmra.mxu0 %v512
      %v624 = vpop.f32.mrf.mxu0
      %v625 = vadd.f32 0.0, %v624
      %626 = vmatmul.f32.gmra.mxu0 %v515
      %v627 = vpop.f32.mrf.mxu0
      %v628 = vadd.f32 0.0, %v627
      %629 = vdwg.mxu0
      %v631 = vsel %vm420, %v353, 0
      %v634 = vsel %vm420, %v354, 0
      %v637 = vsel %vm420, %v355, 0
      %v640 = vsel %vm420, %v356, 0
      %v643 = vsel %vm420, %v357, 0
      %v646 = vsel %vm420, %v358, 0
      %v649 = vsel %vm420, %v359, 0
      %v652 = vsel %vm420, %v360, 0
      %v655 = vsel %vm420, %v361, 0
      %v658 = vsel %vm420, %v362, 0
      %v661 = vsel %vm420, %v363, 0
      %v664 = vsel %vm420, %v364, 0
      %v667 = vsel %vm420, %v365, 0
      %v670 = vsel %vm420, %v366, 0
      %v673 = vsel %vm420, %v367, 0
      %v676 = vsel %vm420, %v368, 0
      %v679 = vsel %vm420, %v369, 0
      %v682 = vsel %vm420, %v370, 0
      %v685 = vsel %vm420, %v371, 0
      %v688 = vsel %vm420, %v372, 0
      %v691 = vsel %vm420, %v373, 0
      %v694 = vsel %vm420, %v374, 0
      %v697 = vsel %vm420, %v375, 0
      %v700 = vsel %vm420, %v376, 0
      %v703 = vsel %vm420, %v377, 0
      %v706 = vsel %vm420, %v378, 0
      %v709 = vsel %vm420, %v379, 0
      %v712 = vsel %vm420, %v380, 0
      %v715 = vsel %vm420, %v381, 0
      %v718 = vsel %vm420, %v382, 0
      %v721 = vsel %vm420, %v383, 0
      %v724 = vsel %vm420, %v384, 0
      %726 = vmatpush.msra.mxu0 0.0
      %727 = vmatpush.msra.mxu0 0.0
      %728 = vmatpush.msra.mxu0 0.0
      %729 = vmatpush.msra.mxu0 0.0
      %730 = vmatpush.msra.mxu0 0.0
      %731 = vmatpush.msra.mxu0 0.0
      %732 = vmatpush.msra.mxu0 0.0
      %733 = vmatpush.msra.mxu0 0.0
      %734 = vmatpush.msra.mxu0 0.0
      %735 = vmatpush.msra.mxu0 0.0
      %736 = vmatpush.msra.mxu0 0.0
      %737 = vmatpush.msra.mxu0 0.0
      %738 = vmatpush.msra.mxu0 0.0
      %739 = vmatpush.msra.mxu0 0.0
      %740 = vmatpush.msra.mxu0 0.0
      %741 = vmatpush.msra.mxu0 %v385
      %742 = vmatmul.f32.gmra.mxu0 %v631
      %v743 = vpop.f32.mrf.mxu0
      %v744 = vadd.f32 %v535, %v743
      %745 = vmatmul.f32.gmra.mxu0 %v634
      %v746 = vpop.f32.mrf.mxu0
      %v747 = vadd.f32 %v538, %v746
      %748 = vmatmul.f32.gmra.mxu0 %v637
      %v749 = vpop.f32.mrf.mxu0
      %v750 = vadd.f32 %v541, %v749
      %751 = vmatmul.f32.gmra.mxu0 %v640
      %v752 = vpop.f32.mrf.mxu0
      %v753 = vadd.f32 %v544, %v752
      %754 = vmatmul.f32.gmra.mxu0 %v643
      %v755 = vpop.f32.mrf.mxu0
      %v756 = vadd.f32 %v547, %v755
      %757 = vmatmul.f32.gmra.mxu0 %v646
      %v758 = vpop.f32.mrf.mxu0
      %v759 = vadd.f32 %v550, %v758
      %760 = vmatmul.f32.gmra.mxu0 %v649
      %v761 = vpop.f32.mrf.mxu0
      %v762 = vadd.f32 %v553, %v761
      %763 = vmatmul.f32.gmra.mxu0 %v652
      %v764 = vpop.f32.mrf.mxu0
      %v765 = vadd.f32 %v556, %v764
      %766 = vmatmul.f32.gmra.mxu0 %v655
      %v767 = vpop.f32.mrf.mxu0
      %v768 = vadd.f32 %v559, %v767
      %769 = vmatmul.f32.gmra.mxu0 %v658
      %v770 = vpop.f32.mrf.mxu0
      %v771 = vadd.f32 %v562, %v770
      %772 = vmatmul.f32.gmra.mxu0 %v661
      %v773 = vpop.f32.mrf.mxu0
      %v774 = vadd.f32 %v565, %v773
      %775 = vmatmul.f32.gmra.mxu0 %v664
      %v776 = vpop.f32.mrf.mxu0
      %v777 = vadd.f32 %v568, %v776
      %778 = vmatmul.f32.gmra.mxu0 %v667
      %v779 = vpop.f32.mrf.mxu0
      %v780 = vadd.f32 %v571, %v779
      %781 = vmatmul.f32.gmra.mxu0 %v670
      %v782 = vpop.f32.mrf.mxu0
      %v783 = vadd.f32 %v574, %v782
      %784 = vmatmul.f32.gmra.mxu0 %v673
      %v785 = vpop.f32.mrf.mxu0
      %v786 = vadd.f32 %v577, %v785
      %787 = vmatmul.f32.gmra.mxu0 %v676
      %v788 = vpop.f32.mrf.mxu0
      %v789 = vadd.f32 %v580, %v788
      %790 = vmatmul.f32.gmra.mxu0 %v679
      %v791 = vpop.f32.mrf.mxu0
      %v792 = vadd.f32 %v583, %v791
      %793 = vmatmul.f32.gmra.mxu0 %v682
      %v794 = vpop.f32.mrf.mxu0
      %v795 = vadd.f32 %v586, %v794
      %796 = vmatmul.f32.gmra.mxu0 %v685
      %v797 = vpop.f32.mrf.mxu0
      %v798 = vadd.f32 %v589, %v797
      %799 = vmatmul.f32.gmra.mxu0 %v688
      %v800 = vpop.f32.mrf.mxu0
      %v801 = vadd.f32 %v592, %v800
      %802 = vmatmul.f32.gmra.mxu0 %v691
      %v803 = vpop.f32.mrf.mxu0
      %v804 = vadd.f32 %v595, %v803
      %805 = vmatmul.f32.gmra.mxu0 %v694
      %v806 = vpop.f32.mrf.mxu0
      %v807 = vadd.f32 %v598, %v806
      %808 = vmatmul.f32.gmra.mxu0 %v697
      %v809 = vpop.f32.mrf.mxu0
      %v810 = vadd.f32 %v601, %v809
      %811 = vmatmul.f32.gmra.mxu0 %v700
      %v812 = vpop.f32.mrf.mxu0
      %v813 = vadd.f32 %v604, %v812
      %814 = vmatmul.f32.gmra.mxu0 %v703
      %v815 = vpop.f32.mrf.mxu0
      %v816 = vadd.f32 %v607, %v815
      %817 = vmatmul.f32.gmra.mxu0 %v706
      %v818 = vpop.f32.mrf.mxu0
      %v819 = vadd.f32 %v610, %v818
      %820 = vmatmul.f32.gmra.mxu0 %v709
      %v821 = vpop.f32.mrf.mxu0
      %v822 = vadd.f32 %v613, %v821
      %823 = vmatmul.f32.gmra.mxu0 %v712
      %v824 = vpop.f32.mrf.mxu0
      %v825 = vadd.f32 %v616, %v824
      %826 = vmatmul.f32.gmra.mxu0 %v715
      %v827 = vpop.f32.mrf.mxu0
      %v828 = vadd.f32 %v619, %v827
      %829 = vmatmul.f32.gmra.mxu0 %v718
      %v830 = vpop.f32.mrf.mxu0
      %v831 = vadd.f32 %v622, %v830
      %832 = vmatmul.f32.gmra.mxu0 %v721
      %v833 = vpop.f32.mrf.mxu0
      %v834 = vadd.f32 %v625, %v833
      %835 = vmatmul.f32.gmra.mxu0 %v724
      %v836 = vpop.f32.mrf.mxu0
      %v837 = vadd.f32 %v628, %v836
      %838 = vdwg.mxu0
      %v839 = vld [vmem:[%s342 + $0x2] sm:$0xff]
      %v840 = vld [vmem:[%s342 + $0xa] sm:$0xff]
      %v841 = vld [vmem:[%s342 + $0x1a] sm:$0xff]
      %v842 = vld [vmem:[%s342 + $0x22] sm:$0xff]
      %v843 = vld [vmem:[%s342 + $0x32] sm:$0xff]
      %v844 = vld [vmem:[%s342 + $0x3a] sm:$0xff]
      %v845 = vld [vmem:[%s342 + $0x4a] sm:$0xff]
      %v846 = vld [vmem:[%s342 + $0x52] sm:$0xff]
      %v847 = vld [vmem:[%s342 + $0x62] sm:$0xff]
      %v848 = vld [vmem:[%s342 + $0x6a] sm:$0xff]
      %v849 = vld [vmem:[%s342 + $0x7a] sm:$0xff]
      %v850 = vld [vmem:[%s342 + $0x82] sm:$0xff]
      %v851 = vld [vmem:[%s342 + $0x92] sm:$0xff]
      %v852 = vld [vmem:[%s342 + $0x9a] sm:$0xff]
      %v853 = vld [vmem:[%s342 + $0xaa] sm:$0xff]
      %v854 = vld [vmem:[%s342 + $0xb2] sm:$0xff]
      %v855 = vld [vmem:[%s342 + $0xc2] sm:$0xff]
      %v856 = vld [vmem:[%s342 + $0xca] sm:$0xff]
      %v857 = vld [vmem:[%s342 + $0xda] sm:$0xff]
      %v858 = vld [vmem:[%s342 + $0xe2] sm:$0xff]
      %v859 = vld [vmem:[%s342 + $0xf2] sm:$0xff]
      %v860 = vld [vmem:[%s342 + $0xfa] sm:$0xff]
      %v861 = vld [vmem:[%s342 + $0x10a] sm:$0xff]
      %v862 = vld [vmem:[%s342 + $0x112] sm:$0xff]
      %v863 = vld [vmem:[%s342 + $0x122] sm:$0xff]
      %v864 = vld [vmem:[%s342 + $0x12a] sm:$0xff]
      %v865 = vld [vmem:[%s342 + $0x13a] sm:$0xff]
      %v866 = vld [vmem:[%s342 + $0x142] sm:$0xff]
      %v867 = vld [vmem:[%s342 + $0x152] sm:$0xff]
      %v868 = vld [vmem:[%s342 + $0x15a] sm:$0xff]
      %v869 = vld [vmem:[%s342 + $0x16a] sm:$0xff]
      %v870 = vld [vmem:[%s342 + $0x172] sm:$0xff]
      %s871 = scalar_lea.vmem %s2, 16
      %v872 = vld [vmem:[%s871] sm:$0xff]
      %v874 = vsel %vm420, %v839, 0
      %v877 = vsel %vm420, %v840, 0
      %v880 = vsel %vm420, %v841, 0
      %v883 = vsel %vm420, %v842, 0
      %v886 = vsel %vm420, %v843, 0
      %v889 = vsel %vm420, %v844, 0
      %v892 = vsel %vm420, %v845, 0
      %v895 = vsel %vm420, %v846, 0
      %v898 = vsel %vm420, %v847, 0
      %v901 = vsel %vm420, %v848, 0
      %v904 = vsel %vm420, %v849, 0
      %v907 = vsel %vm420, %v850, 0
      %v910 = vsel %vm420, %v851, 0
      %v913 = vsel %vm420, %v852, 0
      %v916 = vsel %vm420, %v853, 0
      %v919 = vsel %vm420, %v854, 0
      %v922 = vsel %vm420, %v855, 0
      %v925 = vsel %vm420, %v856, 0
      %v928 = vsel %vm420, %v857, 0
      %v931 = vsel %vm420, %v858, 0
      %v934 = vsel %vm420, %v859, 0
      %v937 = vsel %vm420, %v860, 0
      %v940 = vsel %vm420, %v861, 0
      %v943 = vsel %vm420, %v862, 0
      %v946 = vsel %vm420, %v863, 0
      %v949 = vsel %vm420, %v864, 0
      %v952 = vsel %vm420, %v865, 0
      %v955 = vsel %vm420, %v866, 0
      %v958 = vsel %vm420, %v867, 0
      %v961 = vsel %vm420, %v868, 0
      %v964 = vsel %vm420, %v869, 0
      %v967 = vsel %vm420, %v870, 0
      %969 = vmatpush.msra.mxu0 0.0
      %970 = vmatpush.msra.mxu0 0.0
      %971 = vmatpush.msra.mxu0 0.0
      %972 = vmatpush.msra.mxu0 0.0
      %973 = vmatpush.msra.mxu0 0.0
      %974 = vmatpush.msra.mxu0 0.0
      %975 = vmatpush.msra.mxu0 0.0
      %976 = vmatpush.msra.mxu0 0.0
      %977 = vmatpush.msra.mxu0 0.0
      %978 = vmatpush.msra.mxu0 0.0
      %979 = vmatpush.msra.mxu0 0.0
      %980 = vmatpush.msra.mxu0 0.0
      %981 = vmatpush.msra.mxu0 0.0
      %982 = vmatpush.msra.mxu0 0.0
      %983 = vmatpush.msra.mxu0 0.0
      %984 = vmatpush.msra.mxu0 %v872
      %985 = vmatmul.f32.gmra.mxu0 %v874
      %v986 = vpop.f32.mrf.mxu0
      %v987 = vadd.f32 0.0, %v986
      %988 = vmatmul.f32.gmra.mxu0 %v877
      %v989 = vpop.f32.mrf.mxu0
      %v990 = vadd.f32 0.0, %v989
      %991 = vmatmul.f32.gmra.mxu0 %v880
      %v992 = vpop.f32.mrf.mxu0
      %v993 = vadd.f32 0.0, %v992
      %994 = vmatmul.f32.gmra.mxu0 %v883
      %v995 = vpop.f32.mrf.mxu0
      %v996 = vadd.f32 0.0, %v995
      %997 = vmatmul.f32.gmra.mxu0 %v886
      %v998 = vpop.f32.mrf.mxu0
      %v999 = vadd.f32 0.0, %v998
      %1000 = vmatmul.f32.gmra.mxu0 %v889
      %v1001 = vpop.f32.mrf.mxu0
      %v1002 = vadd.f32 0.0, %v1001
      %1003 = vmatmul.f32.gmra.mxu0 %v892
      %v1004 = vpop.f32.mrf.mxu0
      %v1005 = vadd.f32 0.0, %v1004
      %1006 = vmatmul.f32.gmra.mxu0 %v895
      %v1007 = vpop.f32.mrf.mxu0
      %v1008 = vadd.f32 0.0, %v1007
      %1009 = vmatmul.f32.gmra.mxu0 %v898
      %v1010 = vpop.f32.mrf.mxu0
      %v1011 = vadd.f32 0.0, %v1010
      %1012 = vmatmul.f32.gmra.mxu0 %v901
      %v1013 = vpop.f32.mrf.mxu0
      %v1014 = vadd.f32 0.0, %v1013
      %1015 = vmatmul.f32.gmra.mxu0 %v904
      %v1016 = vpop.f32.mrf.mxu0
      %v1017 = vadd.f32 0.0, %v1016
      %1018 = vmatmul.f32.gmra.mxu0 %v907
      %v1019 = vpop.f32.mrf.mxu0
      %v1020 = vadd.f32 0.0, %v1019
      %1021 = vmatmul.f32.gmra.mxu0 %v910
      %v1022 = vpop.f32.mrf.mxu0
      %v1023 = vadd.f32 0.0, %v1022
      %1024 = vmatmul.f32.gmra.mxu0 %v913
      %v1025 = vpop.f32.mrf.mxu0
      %v1026 = vadd.f32 0.0, %v1025
      %1027 = vmatmul.f32.gmra.mxu0 %v916
      %v1028 = vpop.f32.mrf.mxu0
      %v1029 = vadd.f32 0.0, %v1028
      %1030 = vmatmul.f32.gmra.mxu0 %v919
      %v1031 = vpop.f32.mrf.mxu0
      %v1032 = vadd.f32 0.0, %v1031
      %1033 = vmatmul.f32.gmra.mxu0 %v922
      %v1034 = vpop.f32.mrf.mxu0
      %v1035 = vadd.f32 0.0, %v1034
      %1036 = vmatmul.f32.gmra.mxu0 %v925
      %v1037 = vpop.f32.mrf.mxu0
      %v1038 = vadd.f32 0.0, %v1037
      %1039 = vmatmul.f32.gmra.mxu0 %v928
      %v1040 = vpop.f32.mrf.mxu0
      %v1041 = vadd.f32 0.0, %v1040
      %1042 = vmatmul.f32.gmra.mxu0 %v931
      %v1043 = vpop.f32.mrf.mxu0
      %v1044 = vadd.f32 0.0, %v1043
      %1045 = vmatmul.f32.gmra.mxu0 %v934
      %v1046 = vpop.f32.mrf.mxu0
      %v1047 = vadd.f32 0.0, %v1046
      %1048 = vmatmul.f32.gmra.mxu0 %v937
      %v1049 = vpop.f32.mrf.mxu0
      %v1050 = vadd.f32 0.0, %v1049
      %1051 = vmatmul.f32.gmra.mxu0 %v940
      %v1052 = vpop.f32.mrf.mxu0
      %v1053 = vadd.f32 0.0, %v1052
      %1054 = vmatmul.f32.gmra.mxu0 %v943
      %v1055 = vpop.f32.mrf.mxu0
      %v1056 = vadd.f32 0.0, %v1055
      %1057 = vmatmul.f32.gmra.mxu0 %v946
      %v1058 = vpop.f32.mrf.mxu0
      %v1059 = vadd.f32 0.0, %v1058
      %1060 = vmatmul.f32.gmra.mxu0 %v949
      %v1061 = vpop.f32.mrf.mxu0
      %v1062 = vadd.f32 0.0, %v1061
      %1063 = vmatmul.f32.gmra.mxu0 %v952
      %v1064 = vpop.f32.mrf.mxu0
      %v1065 = vadd.f32 0.0, %v1064
      %1066 = vmatmul.f32.gmra.mxu0 %v955
      %v1067 = vpop.f32.mrf.mxu0
      %v1068 = vadd.f32 0.0, %v1067
      %1069 = vmatmul.f32.gmra.mxu0 %v958
      %v1070 = vpop.f32.mrf.mxu0
      %v1071 = vadd.f32 0.0, %v1070
      %1072 = vmatmul.f32.gmra.mxu0 %v961
      %v1073 = vpop.f32.mrf.mxu0
      %v1074 = vadd.f32 0.0, %v1073
      %1075 = vmatmul.f32.gmra.mxu0 %v964
      %v1076 = vpop.f32.mrf.mxu0
      %v1077 = vadd.f32 0.0, %v1076
      %1078 = vmatmul.f32.gmra.mxu0 %v967
      %v1079 = vpop.f32.mrf.mxu0
      %v1080 = vadd.f32 0.0, %v1079
      %1081 = vdwg.mxu0
      %v1082 = vadd.f32 %v744, %v987
      %v1083 = vadd.f32 %v747, %v990
      %v1084 = vadd.f32 %v750, %v993
      %v1085 = vadd.f32 %v753, %v996
      %v1086 = vadd.f32 %v756, %v999
      %v1087 = vadd.f32 %v759, %v1002
      %v1088 = vadd.f32 %v762, %v1005
      %v1089 = vadd.f32 %v765, %v1008
      %v1090 = vadd.f32 %v768, %v1011
      %v1091 = vadd.f32 %v771, %v1014
      %v1092 = vadd.f32 %v774, %v1017
      %v1093 = vadd.f32 %v777, %v1020
      %v1094 = vadd.f32 %v780, %v1023
      %v1095 = vadd.f32 %v783, %v1026
      %v1096 = vadd.f32 %v786, %v1029
      %v1097 = vadd.f32 %v789, %v1032
      %v1098 = vadd.f32 %v792, %v1035
      %v1099 = vadd.f32 %v795, %v1038
      %v1100 = vadd.f32 %v798, %v1041
      %v1101 = vadd.f32 %v801, %v1044
      %v1102 = vadd.f32 %v804, %v1047
      %v1103 = vadd.f32 %v807, %v1050
      %v1104 = vadd.f32 %v810, %v1053
      %v1105 = vadd.f32 %v813, %v1056
      %v1106 = vadd.f32 %v816, %v1059
      %v1107 = vadd.f32 %v819, %v1062
      %v1108 = vadd.f32 %v822, %v1065
      %v1109 = vadd.f32 %v825, %v1068
      %v1110 = vadd.f32 %v828, %v1071
      %v1111 = vadd.f32 %v831, %v1074
      %v1112 = vadd.f32 %v834, %v1077
      %v1113 = vadd.f32 %v837, %v1080
      %s1114 = scalar_lea.vmem %s342, 24
      %v1115 = vld [vmem:[%s1114] sm:$0xff]
      %v1116 = vld [vmem:[%s1114 + $0x8] sm:$0xff]
      %v1117 = vld [vmem:[%s1114 + $0x18] sm:$0xff]
      %v1118 = vld [vmem:[%s1114 + $0x20] sm:$0xff]
      %v1119 = vld [vmem:[%s1114 + $0x30] sm:$0xff]
      %v1120 = vld [vmem:[%s1114 + $0x38] sm:$0xff]
      %v1121 = vld [vmem:[%s1114 + $0x48] sm:$0xff]
      %v1122 = vld [vmem:[%s1114 + $0x50] sm:$0xff]
      %v1123 = vld [vmem:[%s1114 + $0x60] sm:$0xff]
      %v1124 = vld [vmem:[%s1114 + $0x68] sm:$0xff]
      %v1125 = vld [vmem:[%s1114 + $0x78] sm:$0xff]
      %v1126 = vld [vmem:[%s1114 + $0x80] sm:$0xff]
      %v1127 = vld [vmem:[%s1114 + $0x90] sm:$0xff]
      %v1128 = vld [vmem:[%s1114 + $0x98] sm:$0xff]
      %v1129 = vld [vmem:[%s1114 + $0xa8] sm:$0xff]
      %v1130 = vld [vmem:[%s1114 + $0xb0] sm:$0xff]
      %v1131 = vld [vmem:[%s1114 + $0xc0] sm:$0xff]
      %v1132 = vld [vmem:[%s1114 + $0xc8] sm:$0xff]
      %v1133 = vld [vmem:[%s1114 + $0xd8] sm:$0xff]
      %v1134 = vld [vmem:[%s1114 + $0xe0] sm:$0xff]
      %v1135 = vld [vmem:[%s1114 + $0xf0] sm:$0xff]
      %v1136 = vld [vmem:[%s1114 + $0xf8] sm:$0xff]
      %v1137 = vld [vmem:[%s1114 + $0x108] sm:$0xff]
      %v1138 = vld [vmem:[%s1114 + $0x110] sm:$0xff]
      %v1139 = vld [vmem:[%s1114 + $0x120] sm:$0xff]
      %v1140 = vld [vmem:[%s1114 + $0x128] sm:$0xff]
      %v1141 = vld [vmem:[%s1114 + $0x138] sm:$0xff]
      %v1142 = vld [vmem:[%s1114 + $0x140] sm:$0xff]
      %v1143 = vld [vmem:[%s1114 + $0x150] sm:$0xff]
      %v1144 = vld [vmem:[%s1114 + $0x158] sm:$0xff]
      %v1145 = vld [vmem:[%s1114 + $0x168] sm:$0xff]
      %v1146 = vld [vmem:[%s1114 + $0x170] sm:$0xff]
      %s1147 = scalar_lea.vmem %s2, 24
      %v1148 = vld [vmem:[%s1147] sm:$0xff]
      %v1150 = vsel %vm420, %v1115, 0
      %v1153 = vsel %vm420, %v1116, 0
      %v1156 = vsel %vm420, %v1117, 0
      %v1159 = vsel %vm420, %v1118, 0
      %v1162 = vsel %vm420, %v1119, 0
      %v1165 = vsel %vm420, %v1120, 0
      %v1168 = vsel %vm420, %v1121, 0
      %v1171 = vsel %vm420, %v1122, 0
      %v1174 = vsel %vm420, %v1123, 0
      %v1177 = vsel %vm420, %v1124, 0
      %v1180 = vsel %vm420, %v1125, 0
      %v1183 = vsel %vm420, %v1126, 0
      %v1186 = vsel %vm420, %v1127, 0
      %v1189 = vsel %vm420, %v1128, 0
      %v1192 = vsel %vm420, %v1129, 0
      %v1195 = vsel %vm420, %v1130, 0
      %v1198 = vsel %vm420, %v1131, 0
      %v1201 = vsel %vm420, %v1132, 0
      %v1204 = vsel %vm420, %v1133, 0
      %v1207 = vsel %vm420, %v1134, 0
      %v1210 = vsel %vm420, %v1135, 0
      %v1213 = vsel %vm420, %v1136, 0
      %v1216 = vsel %vm420, %v1137, 0
      %v1219 = vsel %vm420, %v1138, 0
      %v1222 = vsel %vm420, %v1139, 0
      %v1225 = vsel %vm420, %v1140, 0
      %v1228 = vsel %vm420, %v1141, 0
      %v1231 = vsel %vm420, %v1142, 0
      %v1234 = vsel %vm420, %v1143, 0
      %v1237 = vsel %vm420, %v1144, 0
      %v1240 = vsel %vm420, %v1145, 0
      %v1243 = vsel %vm420, %v1146, 0
      %1245 = vmatpush.msra.mxu0 0.0
      %1246 = vmatpush.msra.mxu0 0.0
      %1247 = vmatpush.msra.mxu0 0.0
      %1248 = vmatpush.msra.mxu0 0.0
      %1249 = vmatpush.msra.mxu0 0.0
      %1250 = vmatpush.msra.mxu0 0.0
      %1251 = vmatpush.msra.mxu0 0.0
      %1252 = vmatpush.msra.mxu0 0.0
      %1253 = vmatpush.msra.mxu0 0.0
      %1254 = vmatpush.msra.mxu0 0.0
      %1255 = vmatpush.msra.mxu0 0.0
      %1256 = vmatpush.msra.mxu0 0.0
      %1257 = vmatpush.msra.mxu0 0.0
      %1258 = vmatpush.msra.mxu0 0.0
      %1259 = vmatpush.msra.mxu0 0.0
      %1260 = vmatpush.msra.mxu0 %v1148
      %1261 = vmatmul.f32.gmra.mxu0 %v1150
      %v1262 = vpop.f32.mrf.mxu0
      %v1263 = vadd.f32 0.0, %v1262
      %1264 = vmatmul.f32.gmra.mxu0 %v1153
      %v1265 = vpop.f32.mrf.mxu0
      %v1266 = vadd.f32 0.0, %v1265
      %1267 = vmatmul.f32.gmra.mxu0 %v1156
      %v1268 = vpop.f32.mrf.mxu0
      %v1269 = vadd.f32 0.0, %v1268
      %1270 = vmatmul.f32.gmra.mxu0 %v1159
      %v1271 = vpop.f32.mrf.mxu0
      %v1272 = vadd.f32 0.0, %v1271
      %1273 = vmatmul.f32.gmra.mxu0 %v1162
      %v1274 = vpop.f32.mrf.mxu0
      %v1275 = vadd.f32 0.0, %v1274
      %1276 = vmatmul.f32.gmra.mxu0 %v1165
      %v1277 = vpop.f32.mrf.mxu0
      %v1278 = vadd.f32 0.0, %v1277
      %1279 = vmatmul.f32.gmra.mxu0 %v1168
      %v1280 = vpop.f32.mrf.mxu0
      %v1281 = vadd.f32 0.0, %v1280
      %1282 = vmatmul.f32.gmra.mxu0 %v1171
      %v1283 = vpop.f32.mrf.mxu0
      %v1284 = vadd.f32 0.0, %v1283
      %1285 = vmatmul.f32.gmra.mxu0 %v1174
      %v1286 = vpop.f32.mrf.mxu0
      %v1287 = vadd.f32 0.0, %v1286
      %1288 = vmatmul.f32.gmra.mxu0 %v1177
      %v1289 = vpop.f32.mrf.mxu0
      %v1290 = vadd.f32 0.0, %v1289
      %1291 = vmatmul.f32.gmra.mxu0 %v1180
      %v1292 = vpop.f32.mrf.mxu0
      %v1293 = vadd.f32 0.0, %v1292
      %1294 = vmatmul.f32.gmra.mxu0 %v1183
      %v1295 = vpop.f32.mrf.mxu0
      %v1296 = vadd.f32 0.0, %v1295
      %1297 = vmatmul.f32.gmra.mxu0 %v1186
      %v1298 = vpop.f32.mrf.mxu0
      %v1299 = vadd.f32 0.0, %v1298
      %1300 = vmatmul.f32.gmra.mxu0 %v1189
      %v1301 = vpop.f32.mrf.mxu0
      %v1302 = vadd.f32 0.0, %v1301
      %1303 = vmatmul.f32.gmra.mxu0 %v1192
      %v1304 = vpop.f32.mrf.mxu0
      %v1305 = vadd.f32 0.0, %v1304
      %1306 = vmatmul.f32.gmra.mxu0 %v1195
      %v1307 = vpop.f32.mrf.mxu0
      %v1308 = vadd.f32 0.0, %v1307
      %1309 = vmatmul.f32.gmra.mxu0 %v1198
      %v1310 = vpop.f32.mrf.mxu0
      %v1311 = vadd.f32 0.0, %v1310
      %1312 = vmatmul.f32.gmra.mxu0 %v1201
      %v1313 = vpop.f32.mrf.mxu0
      %v1314 = vadd.f32 0.0, %v1313
      %1315 = vmatmul.f32.gmra.mxu0 %v1204
      %v1316 = vpop.f32.mrf.mxu0
      %v1317 = vadd.f32 0.0, %v1316
      %1318 = vmatmul.f32.gmra.mxu0 %v1207
      %v1319 = vpop.f32.mrf.mxu0
      %v1320 = vadd.f32 0.0, %v1319
      %1321 = vmatmul.f32.gmra.mxu0 %v1210
      %v1322 = vpop.f32.mrf.mxu0
      %v1323 = vadd.f32 0.0, %v1322
      %1324 = vmatmul.f32.gmra.mxu0 %v1213
      %v1325 = vpop.f32.mrf.mxu0
      %v1326 = vadd.f32 0.0, %v1325
      %1327 = vmatmul.f32.gmra.mxu0 %v1216
      %v1328 = vpop.f32.mrf.mxu0
      %v1329 = vadd.f32 0.0, %v1328
      %1330 = vmatmul.f32.gmra.mxu0 %v1219
      %v1331 = vpop.f32.mrf.mxu0
      %v1332 = vadd.f32 0.0, %v1331
      %1333 = vmatmul.f32.gmra.mxu0 %v1222
      %v1334 = vpop.f32.mrf.mxu0
      %v1335 = vadd.f32 0.0, %v1334
      %1336 = vmatmul.f32.gmra.mxu0 %v1225
      %v1337 = vpop.f32.mrf.mxu0
      %v1338 = vadd.f32 0.0, %v1337
      %1339 = vmatmul.f32.gmra.mxu0 %v1228
      %v1340 = vpop.f32.mrf.mxu0
      %v1341 = vadd.f32 0.0, %v1340
      %1342 = vmatmul.f32.gmra.mxu0 %v1231
      %v1343 = vpop.f32.mrf.mxu0
      %v1344 = vadd.f32 0.0, %v1343
      %1345 = vmatmul.f32.gmra.mxu0 %v1234
      %v1346 = vpop.f32.mrf.mxu0
      %v1347 = vadd.f32 0.0, %v1346
      %1348 = vmatmul.f32.gmra.mxu0 %v1237
      %v1349 = vpop.f32.mrf.mxu0
      %v1350 = vadd.f32 0.0, %v1349
      %1351 = vmatmul.f32.gmra.mxu0 %v1240
      %v1352 = vpop.f32.mrf.mxu0
      %v1353 = vadd.f32 0.0, %v1352
      %1354 = vmatmul.f32.gmra.mxu0 %v1243
      %v1355 = vpop.f32.mrf.mxu0
      %v1356 = vadd.f32 0.0, %v1355
      %1357 = vdwg.mxu0
      %v1358 = vadd.f32 %v1082, %v1263
      %v1359 = vadd.f32 %v1083, %v1266
      %v1360 = vadd.f32 %v1084, %v1269
      %v1361 = vadd.f32 %v1085, %v1272
      %v1362 = vadd.f32 %v1086, %v1275
      %v1363 = vadd.f32 %v1087, %v1278
      %v1364 = vadd.f32 %v1088, %v1281
      %v1365 = vadd.f32 %v1089, %v1284
      %v1366 = vadd.f32 %v1090, %v1287
      %v1367 = vadd.f32 %v1091, %v1290
      %v1368 = vadd.f32 %v1092, %v1293
      %v1369 = vadd.f32 %v1093, %v1296
      %v1370 = vadd.f32 %v1094, %v1299
      %v1371 = vadd.f32 %v1095, %v1302
      %v1372 = vadd.f32 %v1096, %v1305
      %v1373 = vadd.f32 %v1097, %v1308
      %v1374 = vadd.f32 %v1098, %v1311
      %v1375 = vadd.f32 %v1099, %v1314
      %v1376 = vadd.f32 %v1100, %v1317
      %v1377 = vadd.f32 %v1101, %v1320
      %v1378 = vadd.f32 %v1102, %v1323
      %v1379 = vadd.f32 %v1103, %v1326
      %v1380 = vadd.f32 %v1104, %v1329
      %v1381 = vadd.f32 %v1105, %v1332
      %v1382 = vadd.f32 %v1106, %v1335
      %v1383 = vadd.f32 %v1107, %v1338
      %v1384 = vadd.f32 %v1108, %v1341
      %v1385 = vadd.f32 %v1109, %v1344
      %v1386 = vadd.f32 %v1110, %v1347
      %v1387 = vadd.f32 %v1111, %v1350
      %v1388 = vadd.f32 %v1112, %v1353
      %v1389 = vadd.f32 %v1113, %v1356
      %v1390 = vld [vmem:[%s1114 + $0x1] sm:$0xff]
      %v1391 = vld [vmem:[%s1114 + $0x9] sm:$0xff]
      %v1392 = vld [vmem:[%s1114 + $0x19] sm:$0xff]
      %v1393 = vld [vmem:[%s1114 + $0x21] sm:$0xff]
      %v1394 = vld [vmem:[%s1114 + $0x31] sm:$0xff]
      %v1395 = vld [vmem:[%s1114 + $0x39] sm:$0xff]
      %v1396 = vld [vmem:[%s1114 + $0x49] sm:$0xff]
      %v1397 = vld [vmem:[%s1114 + $0x51] sm:$0xff]
      %v1398 = vld [vmem:[%s1114 + $0x61] sm:$0xff]
      %v1399 = vld [vmem:[%s1114 + $0x69] sm:$0xff]
      %v1400 = vld [vmem:[%s1114 + $0x79] sm:$0xff]
      %v1401 = vld [vmem:[%s1114 + $0x81] sm:$0xff]
      %v1402 = vld [vmem:[%s1114 + $0x91] sm:$0xff]
      %v1403 = vld [vmem:[%s1114 + $0x99] sm:$0xff]
      %v1404 = vld [vmem:[%s1114 + $0xa9] sm:$0xff]
      %v1405 = vld [vmem:[%s1114 + $0xb1] sm:$0xff]
      %v1406 = vld [vmem:[%s1114 + $0xc1] sm:$0xff]
      %v1407 = vld [vmem:[%s1114 + $0xc9] sm:$0xff]
      %v1408 = vld [vmem:[%s1114 + $0xd9] sm:$0xff]
      %v1409 = vld [vmem:[%s1114 + $0xe1] sm:$0xff]
      %v1410 = vld [vmem:[%s1114 + $0xf1] sm:$0xff]
      %v1411 = vld [vmem:[%s1114 + $0xf9] sm:$0xff]
      %v1412 = vld [vmem:[%s1114 + $0x109] sm:$0xff]
      %v1413 = vld [vmem:[%s1114 + $0x111] sm:$0xff]
      %v1414 = vld [vmem:[%s1114 + $0x121] sm:$0xff]
      %v1415 = vld [vmem:[%s1114 + $0x129] sm:$0xff]
      %v1416 = vld [vmem:[%s1114 + $0x139] sm:$0xff]
      %v1417 = vld [vmem:[%s1114 + $0x141] sm:$0xff]
      %v1418 = vld [vmem:[%s1114 + $0x151] sm:$0xff]
      %v1419 = vld [vmem:[%s1114 + $0x159] sm:$0xff]
      %v1420 = vld [vmem:[%s1114 + $0x169] sm:$0xff]
      %v1421 = vld [vmem:[%s1114 + $0x171] sm:$0xff]
      %s1422 = scalar_lea.vmem %s2, 32
      %v1423 = vld [vmem:[%s1422] sm:$0xff]
      %v1425 = vsel %vm420, %v1390, 0
      %v1428 = vsel %vm420, %v1391, 0
      %v1431 = vsel %vm420, %v1392, 0
      %v1434 = vsel %vm420, %v1393, 0
      %v1437 = vsel %vm420, %v1394, 0
      %v1440 = vsel %vm420, %v1395, 0
      %v1443 = vsel %vm420, %v1396, 0
      %v1446 = vsel %vm420, %v1397, 0
      %v1449 = vsel %vm420, %v1398, 0
      %v1452 = vsel %vm420, %v1399, 0
      %v1455 = vsel %vm420, %v1400, 0
      %v1458 = vsel %vm420, %v1401, 0
      %v1461 = vsel %vm420, %v1402, 0
      %v1464 = vsel %vm420, %v1403, 0
      %v1467 = vsel %vm420, %v1404, 0
      %v1470 = vsel %vm420, %v1405, 0
      %v1473 = vsel %vm420, %v1406, 0
      %v1476 = vsel %vm420, %v1407, 0
      %v1479 = vsel %vm420, %v1408, 0
      %v1482 = vsel %vm420, %v1409, 0
      %v1485 = vsel %vm420, %v1410, 0
      %v1488 = vsel %vm420, %v1411, 0
      %v1491 = vsel %vm420, %v1412, 0
      %v1494 = vsel %vm420, %v1413, 0
      %v1497 = vsel %vm420, %v1414, 0
      %v1500 = vsel %vm420, %v1415, 0
      %v1503 = vsel %vm420, %v1416, 0
      %v1506 = vsel %vm420, %v1417, 0
      %v1509 = vsel %vm420, %v1418, 0
      %v1512 = vsel %vm420, %v1419, 0
      %v1515 = vsel %vm420, %v1420, 0
      %v1518 = vsel %vm420, %v1421, 0
      %1520 = vmatpush.msra.mxu0 0.0
      %1521 = vmatpush.msra.mxu0 0.0
      %1522 = vmatpush.msra.mxu0 0.0
      %1523 = vmatpush.msra.mxu0 0.0
      %1524 = vmatpush.msra.mxu0 0.0
      %1525 = vmatpush.msra.mxu0 0.0
      %1526 = vmatpush.msra.mxu0 0.0
      %1527 = vmatpush.msra.mxu0 0.0
      %1528 = vmatpush.msra.mxu0 0.0
      %1529 = vmatpush.msra.mxu0 0.0
      %1530 = vmatpush.msra.mxu0 0.0
      %1531 = vmatpush.msra.mxu0 0.0
      %1532 = vmatpush.msra.mxu0 0.0
      %1533 = vmatpush.msra.mxu0 0.0
      %1534 = vmatpush.msra.mxu0 0.0
      %1535 = vmatpush.msra.mxu0 %v1423
      %1536 = vmatmul.f32.gmra.mxu0 %v1425
      %v1537 = vpop.f32.mrf.mxu0
      %v1538 = vadd.f32 0.0, %v1537
      %1539 = vmatmul.f32.gmra.mxu0 %v1428
      %v1540 = vpop.f32.mrf.mxu0
      %v1541 = vadd.f32 0.0, %v1540
      %1542 = vmatmul.f32.gmra.mxu0 %v1431
      %v1543 = vpop.f32.mrf.mxu0
      %v1544 = vadd.f32 0.0, %v1543
      %1545 = vmatmul.f32.gmra.mxu0 %v1434
      %v1546 = vpop.f32.mrf.mxu0
      %v1547 = vadd.f32 0.0, %v1546
      %1548 = vmatmul.f32.gmra.mxu0 %v1437
      %v1549 = vpop.f32.mrf.mxu0
      %v1550 = vadd.f32 0.0, %v1549
      %1551 = vmatmul.f32.gmra.mxu0 %v1440
      %v1552 = vpop.f32.mrf.mxu0
      %v1553 = vadd.f32 0.0, %v1552
      %1554 = vmatmul.f32.gmra.mxu0 %v1443
      %v1555 = vpop.f32.mrf.mxu0
      %v1556 = vadd.f32 0.0, %v1555
      %1557 = vmatmul.f32.gmra.mxu0 %v1446
      %v1558 = vpop.f32.mrf.mxu0
      %v1559 = vadd.f32 0.0, %v1558
      %1560 = vmatmul.f32.gmra.mxu0 %v1449
      %v1561 = vpop.f32.mrf.mxu0
      %v1562 = vadd.f32 0.0, %v1561
      %1563 = vmatmul.f32.gmra.mxu0 %v1452
      %v1564 = vpop.f32.mrf.mxu0
      %v1565 = vadd.f32 0.0, %v1564
      %1566 = vmatmul.f32.gmra.mxu0 %v1455
      %v1567 = vpop.f32.mrf.mxu0
      %v1568 = vadd.f32 0.0, %v1567
      %1569 = vmatmul.f32.gmra.mxu0 %v1458
      %v1570 = vpop.f32.mrf.mxu0
      %v1571 = vadd.f32 0.0, %v1570
      %1572 = vmatmul.f32.gmra.mxu0 %v1461
      %v1573 = vpop.f32.mrf.mxu0
      %v1574 = vadd.f32 0.0, %v1573
      %1575 = vmatmul.f32.gmra.mxu0 %v1464
      %v1576 = vpop.f32.mrf.mxu0
      %v1577 = vadd.f32 0.0, %v1576
      %1578 = vmatmul.f32.gmra.mxu0 %v1467
      %v1579 = vpop.f32.mrf.mxu0
      %v1580 = vadd.f32 0.0, %v1579
      %1581 = vmatmul.f32.gmra.mxu0 %v1470
      %v1582 = vpop.f32.mrf.mxu0
      %v1583 = vadd.f32 0.0, %v1582
      %1584 = vmatmul.f32.gmra.mxu0 %v1473
      %v1585 = vpop.f32.mrf.mxu0
      %v1586 = vadd.f32 0.0, %v1585
      %1587 = vmatmul.f32.gmra.mxu0 %v1476
      %v1588 = vpop.f32.mrf.mxu0
      %v1589 = vadd.f32 0.0, %v1588
      %1590 = vmatmul.f32.gmra.mxu0 %v1479
      %v1591 = vpop.f32.mrf.mxu0
      %v1592 = vadd.f32 0.0, %v1591
      %1593 = vmatmul.f32.gmra.mxu0 %v1482
      %v1594 = vpop.f32.mrf.mxu0
      %v1595 = vadd.f32 0.0, %v1594
      %1596 = vmatmul.f32.gmra.mxu0 %v1485
      %v1597 = vpop.f32.mrf.mxu0
      %v1598 = vadd.f32 0.0, %v1597
      %1599 = vmatmul.f32.gmra.mxu0 %v1488
      %v1600 = vpop.f32.mrf.mxu0
      %v1601 = vadd.f32 0.0, %v1600
      %1602 = vmatmul.f32.gmra.mxu0 %v1491
      %v1603 = vpop.f32.mrf.mxu0
      %v1604 = vadd.f32 0.0, %v1603
      %1605 = vmatmul.f32.gmra.mxu0 %v1494
      %v1606 = vpop.f32.mrf.mxu0
      %v1607 = vadd.f32 0.0, %v1606
      %1608 = vmatmul.f32.gmra.mxu0 %v1497
      %v1609 = vpop.f32.mrf.mxu0
      %v1610 = vadd.f32 0.0, %v1609
      %1611 = vmatmul.f32.gmra.mxu0 %v1500
      %v1612 = vpop.f32.mrf.mxu0
      %v1613 = vadd.f32 0.0, %v1612
      %1614 = vmatmul.f32.gmra.mxu0 %v1503
      %v1615 = vpop.f32.mrf.mxu0
      %v1616 = vadd.f32 0.0, %v1615
      %1617 = vmatmul.f32.gmra.mxu0 %v1506
      %v1618 = vpop.f32.mrf.mxu0
      %v1619 = vadd.f32 0.0, %v1618
      %1620 = vmatmul.f32.gmra.mxu0 %v1509
      %v1621 = vpop.f32.mrf.mxu0
      %v1622 = vadd.f32 0.0, %v1621
      %1623 = vmatmul.f32.gmra.mxu0 %v1512
      %v1624 = vpop.f32.mrf.mxu0
      %v1625 = vadd.f32 0.0, %v1624
      %1626 = vmatmul.f32.gmra.mxu0 %v1515
      %v1627 = vpop.f32.mrf.mxu0
      %v1628 = vadd.f32 0.0, %v1627
      %1629 = vmatmul.f32.gmra.mxu0 %v1518
      %v1630 = vpop.f32.mrf.mxu0
      %v1631 = vadd.f32 0.0, %v1630
      %1632 = vdwg.mxu0
      %v1633 = vadd.f32 %v1358, %v1538
      %v1634 = vadd.f32 %v1359, %v1541
      %v1635 = vadd.f32 %v1360, %v1544
      %v1636 = vadd.f32 %v1361, %v1547
      %v1637 = vadd.f32 %v1362, %v1550
      %v1638 = vadd.f32 %v1363, %v1553
      %v1639 = vadd.f32 %v1364, %v1556
      %v1640 = vadd.f32 %v1365, %v1559
      %v1641 = vadd.f32 %v1366, %v1562
      %v1642 = vadd.f32 %v1367, %v1565
      %v1643 = vadd.f32 %v1368, %v1568
      %v1644 = vadd.f32 %v1369, %v1571
      %v1645 = vadd.f32 %v1370, %v1574
      %v1646 = vadd.f32 %v1371, %v1577
      %v1647 = vadd.f32 %v1372, %v1580
      %v1648 = vadd.f32 %v1373, %v1583
      %v1649 = vadd.f32 %v1374, %v1586
      %v1650 = vadd.f32 %v1375, %v1589
      %v1651 = vadd.f32 %v1376, %v1592
      %v1652 = vadd.f32 %v1377, %v1595
      %v1653 = vadd.f32 %v1378, %v1598
      %v1654 = vadd.f32 %v1379, %v1601
      %v1655 = vadd.f32 %v1380, %v1604
      %v1656 = vadd.f32 %v1381, %v1607
      %v1657 = vadd.f32 %v1382, %v1610
      %v1658 = vadd.f32 %v1383, %v1613
      %v1659 = vadd.f32 %v1384, %v1616
      %v1660 = vadd.f32 %v1385, %v1619
      %v1661 = vadd.f32 %v1386, %v1622
      %v1662 = vadd.f32 %v1387, %v1625
      %v1663 = vadd.f32 %v1388, %v1628
      %v1664 = vadd.f32 %v1389, %v1631
      %v1665 = vld [vmem:[%s1114 + $0x2] sm:$0xff]
      %v1666 = vld [vmem:[%s1114 + $0xa] sm:$0xff]
      %v1667 = vld [vmem:[%s1114 + $0x1a] sm:$0xff]
      %v1668 = vld [vmem:[%s1114 + $0x22] sm:$0xff]
      %v1669 = vld [vmem:[%s1114 + $0x32] sm:$0xff]
      %v1670 = vld [vmem:[%s1114 + $0x3a] sm:$0xff]
      %v1671 = vld [vmem:[%s1114 + $0x4a] sm:$0xff]
      %v1672 = vld [vmem:[%s1114 + $0x52] sm:$0xff]
      %v1673 = vld [vmem:[%s1114 + $0x62] sm:$0xff]
      %v1674 = vld [vmem:[%s1114 + $0x6a] sm:$0xff]
      %v1675 = vld [vmem:[%s1114 + $0x7a] sm:$0xff]
      %v1676 = vld [vmem:[%s1114 + $0x82] sm:$0xff]
      %v1677 = vld [vmem:[%s1114 + $0x92] sm:$0xff]
      %v1678 = vld [vmem:[%s1114 + $0x9a] sm:$0xff]
      %v1679 = vld [vmem:[%s1114 + $0xaa] sm:$0xff]
      %v1680 = vld [vmem:[%s1114 + $0xb2] sm:$0xff]
      %v1681 = vld [vmem:[%s1114 + $0xc2] sm:$0xff]
      %v1682 = vld [vmem:[%s1114 + $0xca] sm:$0xff]
      %v1683 = vld [vmem:[%s1114 + $0xda] sm:$0xff]
      %v1684 = vld [vmem:[%s1114 + $0xe2] sm:$0xff]
      %v1685 = vld [vmem:[%s1114 + $0xf2] sm:$0xff]
      %v1686 = vld [vmem:[%s1114 + $0xfa] sm:$0xff]
      %v1687 = vld [vmem:[%s1114 + $0x10a] sm:$0xff]
      %v1688 = vld [vmem:[%s1114 + $0x112] sm:$0xff]
      %v1689 = vld [vmem:[%s1114 + $0x122] sm:$0xff]
      %v1690 = vld [vmem:[%s1114 + $0x12a] sm:$0xff]
      %v1691 = vld [vmem:[%s1114 + $0x13a] sm:$0xff]
      %v1692 = vld [vmem:[%s1114 + $0x142] sm:$0xff]
      %v1693 = vld [vmem:[%s1114 + $0x152] sm:$0xff]
      %v1694 = vld [vmem:[%s1114 + $0x15a] sm:$0xff]
      %v1695 = vld [vmem:[%s1114 + $0x16a] sm:$0xff]
      %v1696 = vld [vmem:[%s1114 + $0x172] sm:$0xff]
      %s1697 = scalar_lea.vmem %s2, 40
      %v1698 = vld [vmem:[%s1697] sm:$0xff]
      %v1700 = vsel %vm420, %v1665, 0
      %v1703 = vsel %vm420, %v1666, 0
      %v1706 = vsel %vm420, %v1667, 0
      %v1709 = vsel %vm420, %v1668, 0
      %v1712 = vsel %vm420, %v1669, 0
      %v1715 = vsel %vm420, %v1670, 0
      %v1718 = vsel %vm420, %v1671, 0
      %v1721 = vsel %vm420, %v1672, 0
      %v1724 = vsel %vm420, %v1673, 0
      %v1727 = vsel %vm420, %v1674, 0
      %v1730 = vsel %vm420, %v1675, 0
      %v1733 = vsel %vm420, %v1676, 0
      %v1736 = vsel %vm420, %v1677, 0
      %v1739 = vsel %vm420, %v1678, 0
      %v1742 = vsel %vm420, %v1679, 0
      %v1745 = vsel %vm420, %v1680, 0
      %v1748 = vsel %vm420, %v1681, 0
      %v1751 = vsel %vm420, %v1682, 0
      %v1754 = vsel %vm420, %v1683, 0
      %v1757 = vsel %vm420, %v1684, 0
      %v1760 = vsel %vm420, %v1685, 0
      %v1763 = vsel %vm420, %v1686, 0
      %v1766 = vsel %vm420, %v1687, 0
      %v1769 = vsel %vm420, %v1688, 0
      %v1772 = vsel %vm420, %v1689, 0
      %v1775 = vsel %vm420, %v1690, 0
      %v1778 = vsel %vm420, %v1691, 0
      %v1781 = vsel %vm420, %v1692, 0
      %v1784 = vsel %vm420, %v1693, 0
      %v1787 = vsel %vm420, %v1694, 0
      %v1790 = vsel %vm420, %v1695, 0
      %v1793 = vsel %vm420, %v1696, 0
      %1795 = vmatpush.msra.mxu0 0.0
      %1796 = vmatpush.msra.mxu0 0.0
      %1797 = vmatpush.msra.mxu0 0.0
      %1798 = vmatpush.msra.mxu0 0.0
      %1799 = vmatpush.msra.mxu0 0.0
      %1800 = vmatpush.msra.mxu0 0.0
      %1801 = vmatpush.msra.mxu0 0.0
      %1802 = vmatpush.msra.mxu0 0.0
      %1803 = vmatpush.msra.mxu0 0.0
      %1804 = vmatpush.msra.mxu0 0.0
      %1805 = vmatpush.msra.mxu0 0.0
      %1806 = vmatpush.msra.mxu0 0.0
      %1807 = vmatpush.msra.mxu0 0.0
      %1808 = vmatpush.msra.mxu0 0.0
      %1809 = vmatpush.msra.mxu0 0.0
      %1810 = vmatpush.msra.mxu0 %v1698
      %1811 = vmatmul.f32.gmra.mxu0 %v1700
      %v1812 = vpop.f32.mrf.mxu0
      %v1813 = vadd.f32 0.0, %v1812
      %1814 = vmatmul.f32.gmra.mxu0 %v1703
      %v1815 = vpop.f32.mrf.mxu0
      %v1816 = vadd.f32 0.0, %v1815
      %1817 = vmatmul.f32.gmra.mxu0 %v1706
      %v1818 = vpop.f32.mrf.mxu0
      %v1819 = vadd.f32 0.0, %v1818
      %1820 = vmatmul.f32.gmra.mxu0 %v1709
      %v1821 = vpop.f32.mrf.mxu0
      %v1822 = vadd.f32 0.0, %v1821
      %1823 = vmatmul.f32.gmra.mxu0 %v1712
      %v1824 = vpop.f32.mrf.mxu0
      %v1825 = vadd.f32 0.0, %v1824
      %1826 = vmatmul.f32.gmra.mxu0 %v1715
      %v1827 = vpop.f32.mrf.mxu0
      %v1828 = vadd.f32 0.0, %v1827
      %1829 = vmatmul.f32.gmra.mxu0 %v1718
      %v1830 = vpop.f32.mrf.mxu0
      %v1831 = vadd.f32 0.0, %v1830
      %1832 = vmatmul.f32.gmra.mxu0 %v1721
      %v1833 = vpop.f32.mrf.mxu0
      %v1834 = vadd.f32 0.0, %v1833
      %1835 = vmatmul.f32.gmra.mxu0 %v1724
      %v1836 = vpop.f32.mrf.mxu0
      %v1837 = vadd.f32 0.0, %v1836
      %1838 = vmatmul.f32.gmra.mxu0 %v1727
      %v1839 = vpop.f32.mrf.mxu0
      %v1840 = vadd.f32 0.0, %v1839
      %1841 = vmatmul.f32.gmra.mxu0 %v1730
      %v1842 = vpop.f32.mrf.mxu0
      %v1843 = vadd.f32 0.0, %v1842
      %1844 = vmatmul.f32.gmra.mxu0 %v1733
      %v1845 = vpop.f32.mrf.mxu0
      %v1846 = vadd.f32 0.0, %v1845
      %1847 = vmatmul.f32.gmra.mxu0 %v1736
      %v1848 = vpop.f32.mrf.mxu0
      %v1849 = vadd.f32 0.0, %v1848
      %1850 = vmatmul.f32.gmra.mxu0 %v1739
      %v1851 = vpop.f32.mrf.mxu0
      %v1852 = vadd.f32 0.0, %v1851
      %1853 = vmatmul.f32.gmra.mxu0 %v1742
      %v1854 = vpop.f32.mrf.mxu0
      %v1855 = vadd.f32 0.0, %v1854
      %1856 = vmatmul.f32.gmra.mxu0 %v1745
      %v1857 = vpop.f32.mrf.mxu0
      %v1858 = vadd.f32 0.0, %v1857
      %1859 = vmatmul.f32.gmra.mxu0 %v1748
      %v1860 = vpop.f32.mrf.mxu0
      %v1861 = vadd.f32 0.0, %v1860
      %1862 = vmatmul.f32.gmra.mxu0 %v1751
      %v1863 = vpop.f32.mrf.mxu0
      %v1864 = vadd.f32 0.0, %v1863
      %1865 = vmatmul.f32.gmra.mxu0 %v1754
      %v1866 = vpop.f32.mrf.mxu0
      %v1867 = vadd.f32 0.0, %v1866
      %1868 = vmatmul.f32.gmra.mxu0 %v1757
      %v1869 = vpop.f32.mrf.mxu0
      %v1870 = vadd.f32 0.0, %v1869
      %1871 = vmatmul.f32.gmra.mxu0 %v1760
      %v1872 = vpop.f32.mrf.mxu0
      %v1873 = vadd.f32 0.0, %v1872
      %1874 = vmatmul.f32.gmra.mxu0 %v1763
      %v1875 = vpop.f32.mrf.mxu0
      %v1876 = vadd.f32 0.0, %v1875
      %1877 = vmatmul.f32.gmra.mxu0 %v1766
      %v1878 = vpop.f32.mrf.mxu0
      %v1879 = vadd.f32 0.0, %v1878
      %1880 = vmatmul.f32.gmra.mxu0 %v1769
      %v1881 = vpop.f32.mrf.mxu0
      %v1882 = vadd.f32 0.0, %v1881
      %1883 = vmatmul.f32.gmra.mxu0 %v1772
      %v1884 = vpop.f32.mrf.mxu0
      %v1885 = vadd.f32 0.0, %v1884
      %1886 = vmatmul.f32.gmra.mxu0 %v1775
      %v1887 = vpop.f32.mrf.mxu0
      %v1888 = vadd.f32 0.0, %v1887
      %1889 = vmatmul.f32.gmra.mxu0 %v1778
      %v1890 = vpop.f32.mrf.mxu0
      %v1891 = vadd.f32 0.0, %v1890
      %1892 = vmatmul.f32.gmra.mxu0 %v1781
      %v1893 = vpop.f32.mrf.mxu0
      %v1894 = vadd.f32 0.0, %v1893
      %1895 = vmatmul.f32.gmra.mxu0 %v1784
      %v1896 = vpop.f32.mrf.mxu0
      %v1897 = vadd.f32 0.0, %v1896
      %1898 = vmatmul.f32.gmra.mxu0 %v1787
      %v1899 = vpop.f32.mrf.mxu0
      %v1900 = vadd.f32 0.0, %v1899
      %1901 = vmatmul.f32.gmra.mxu0 %v1790
      %v1902 = vpop.f32.mrf.mxu0
      %v1903 = vadd.f32 0.0, %v1902
      %1904 = vmatmul.f32.gmra.mxu0 %v1793
      %v1905 = vpop.f32.mrf.mxu0
      %v1906 = vadd.f32 0.0, %v1905
      %1907 = vdwg.mxu0
      %v1908 = vadd.f32 %v1633, %v1813
      %v1909 = vadd.f32 %v1634, %v1816
      %v1910 = vadd.f32 %v1635, %v1819
      %v1911 = vadd.f32 %v1636, %v1822
      %v1912 = vadd.f32 %v1637, %v1825
      %v1913 = vadd.f32 %v1638, %v1828
      %v1914 = vadd.f32 %v1639, %v1831
      %v1915 = vadd.f32 %v1640, %v1834
      %v1916 = vadd.f32 %v1641, %v1837
      %v1917 = vadd.f32 %v1642, %v1840
      %v1918 = vadd.f32 %v1643, %v1843
      %v1919 = vadd.f32 %v1644, %v1846
      %v1920 = vadd.f32 %v1645, %v1849
      %v1921 = vadd.f32 %v1646, %v1852
      %v1922 = vadd.f32 %v1647, %v1855
      %v1923 = vadd.f32 %v1648, %v1858
      %v1924 = vadd.f32 %v1649, %v1861
      %v1925 = vadd.f32 %v1650, %v1864
      %v1926 = vadd.f32 %v1651, %v1867
      %v1927 = vadd.f32 %v1652, %v1870
      %v1928 = vadd.f32 %v1653, %v1873
      %v1929 = vadd.f32 %v1654, %v1876
      %v1930 = vadd.f32 %v1655, %v1879
      %v1931 = vadd.f32 %v1656, %v1882
      %v1932 = vadd.f32 %v1657, %v1885
      %v1933 = vadd.f32 %v1658, %v1888
      %v1934 = vadd.f32 %v1659, %v1891
      %v1935 = vadd.f32 %v1660, %v1894
      %v1936 = vadd.f32 %v1661, %v1897
      %v1937 = vadd.f32 %v1662, %v1900
      %v1938 = vadd.f32 %v1663, %v1903
      %v1939 = vadd.f32 %v1664, %v1906
      %s1940 = scalar_lea.vmem %s342, 48
      %v1941 = vld [vmem:[%s1940] sm:$0xff]
      %v1942 = vld [vmem:[%s1940 + $0x8] sm:$0xff]
      %v1943 = vld [vmem:[%s1940 + $0x18] sm:$0xff]
      %v1944 = vld [vmem:[%s1940 + $0x20] sm:$0xff]
      %v1945 = vld [vmem:[%s1940 + $0x30] sm:$0xff]
      %v1946 = vld [vmem:[%s1940 + $0x38] sm:$0xff]
      %v1947 = vld [vmem:[%s1940 + $0x48] sm:$0xff]
      %v1948 = vld [vmem:[%s1940 + $0x50] sm:$0xff]
      %v1949 = vld [vmem:[%s1940 + $0x60] sm:$0xff]
      %v1950 = vld [vmem:[%s1940 + $0x68] sm:$0xff]
      %v1951 = vld [vmem:[%s1940 + $0x78] sm:$0xff]
      %v1952 = vld [vmem:[%s1940 + $0x80] sm:$0xff]
      %v1953 = vld [vmem:[%s1940 + $0x90] sm:$0xff]
      %v1954 = vld [vmem:[%s1940 + $0x98] sm:$0xff]
      %v1955 = vld [vmem:[%s1940 + $0xa8] sm:$0xff]
      %v1956 = vld [vmem:[%s1940 + $0xb0] sm:$0xff]
      %v1957 = vld [vmem:[%s1940 + $0xc0] sm:$0xff]
      %v1958 = vld [vmem:[%s1940 + $0xc8] sm:$0xff]
      %v1959 = vld [vmem:[%s1940 + $0xd8] sm:$0xff]
      %v1960 = vld [vmem:[%s1940 + $0xe0] sm:$0xff]
      %v1961 = vld [vmem:[%s1940 + $0xf0] sm:$0xff]
      %v1962 = vld [vmem:[%s1940 + $0xf8] sm:$0xff]
      %v1963 = vld [vmem:[%s1940 + $0x108] sm:$0xff]
      %v1964 = vld [vmem:[%s1940 + $0x110] sm:$0xff]
      %v1965 = vld [vmem:[%s1940 + $0x120] sm:$0xff]
      %v1966 = vld [vmem:[%s1940 + $0x128] sm:$0xff]
      %v1967 = vld [vmem:[%s1940 + $0x138] sm:$0xff]
      %v1968 = vld [vmem:[%s1940 + $0x140] sm:$0xff]
      %v1969 = vld [vmem:[%s1940 + $0x150] sm:$0xff]
      %v1970 = vld [vmem:[%s1940 + $0x158] sm:$0xff]
      %v1971 = vld [vmem:[%s1940 + $0x168] sm:$0xff]
      %v1972 = vld [vmem:[%s1940 + $0x170] sm:$0xff]
      %s1973 = scalar_lea.vmem %s2, 48
      %v1974 = vld [vmem:[%s1973] sm:$0xff]
      %v1976 = vsel %vm420, %v1941, 0
      %v1979 = vsel %vm420, %v1942, 0
      %v1982 = vsel %vm420, %v1943, 0
      %v1985 = vsel %vm420, %v1944, 0
      %v1988 = vsel %vm420, %v1945, 0
      %v1991 = vsel %vm420, %v1946, 0
      %v1994 = vsel %vm420, %v1947, 0
      %v1997 = vsel %vm420, %v1948, 0
      %v2000 = vsel %vm420, %v1949, 0
      %v2003 = vsel %vm420, %v1950, 0
      %v2006 = vsel %vm420, %v1951, 0
      %v2009 = vsel %vm420, %v1952, 0
      %v2012 = vsel %vm420, %v1953, 0
      %v2015 = vsel %vm420, %v1954, 0
      %v2018 = vsel %vm420, %v1955, 0
      %v2021 = vsel %vm420, %v1956, 0
      %v2024 = vsel %vm420, %v1957, 0
      %v2027 = vsel %vm420, %v1958, 0
      %v2030 = vsel %vm420, %v1959, 0
      %v2033 = vsel %vm420, %v1960, 0
      %v2036 = vsel %vm420, %v1961, 0
      %v2039 = vsel %vm420, %v1962, 0
      %v2042 = vsel %vm420, %v1963, 0
      %v2045 = vsel %vm420, %v1964, 0
      %v2048 = vsel %vm420, %v1965, 0
      %v2051 = vsel %vm420, %v1966, 0
      %v2054 = vsel %vm420, %v1967, 0
      %v2057 = vsel %vm420, %v1968, 0
      %v2060 = vsel %vm420, %v1969, 0
      %v2063 = vsel %vm420, %v1970, 0
      %v2066 = vsel %vm420, %v1971, 0
      %v2069 = vsel %vm420, %v1972, 0
      %2071 = vmatpush.msra.mxu0 0.0
      %2072 = vmatpush.msra.mxu0 0.0
      %2073 = vmatpush.msra.mxu0 0.0
      %2074 = vmatpush.msra.mxu0 0.0
      %2075 = vmatpush.msra.mxu0 0.0
      %2076 = vmatpush.msra.mxu0 0.0
      %2077 = vmatpush.msra.mxu0 0.0
      %2078 = vmatpush.msra.mxu0 0.0
      %2079 = vmatpush.msra.mxu0 0.0
      %2080 = vmatpush.msra.mxu0 0.0
      %2081 = vmatpush.msra.mxu0 0.0
      %2082 = vmatpush.msra.mxu0 0.0
      %2083 = vmatpush.msra.mxu0 0.0
      %2084 = vmatpush.msra.mxu0 0.0
      %2085 = vmatpush.msra.mxu0 0.0
      %2086 = vmatpush.msra.mxu0 %v1974
      %2087 = vmatmul.f32.gmra.mxu0 %v1976
      %v2088 = vpop.f32.mrf.mxu0
      %v2089 = vadd.f32 0.0, %v2088
      %2090 = vmatmul.f32.gmra.mxu0 %v1979
      %v2091 = vpop.f32.mrf.mxu0
      %v2092 = vadd.f32 0.0, %v2091
      %2093 = vmatmul.f32.gmra.mxu0 %v1982
      %v2094 = vpop.f32.mrf.mxu0
      %v2095 = vadd.f32 0.0, %v2094
      %2096 = vmatmul.f32.gmra.mxu0 %v1985
      %v2097 = vpop.f32.mrf.mxu0
      %v2098 = vadd.f32 0.0, %v2097
      %2099 = vmatmul.f32.gmra.mxu0 %v1988
      %v2100 = vpop.f32.mrf.mxu0
      %v2101 = vadd.f32 0.0, %v2100
      %2102 = vmatmul.f32.gmra.mxu0 %v1991
      %v2103 = vpop.f32.mrf.mxu0
      %v2104 = vadd.f32 0.0, %v2103
      %2105 = vmatmul.f32.gmra.mxu0 %v1994
      %v2106 = vpop.f32.mrf.mxu0
      %v2107 = vadd.f32 0.0, %v2106
      %2108 = vmatmul.f32.gmra.mxu0 %v1997
      %v2109 = vpop.f32.mrf.mxu0
      %v2110 = vadd.f32 0.0, %v2109
      %2111 = vmatmul.f32.gmra.mxu0 %v2000
      %v2112 = vpop.f32.mrf.mxu0
      %v2113 = vadd.f32 0.0, %v2112
      %2114 = vmatmul.f32.gmra.mxu0 %v2003
      %v2115 = vpop.f32.mrf.mxu0
      %v2116 = vadd.f32 0.0, %v2115
      %2117 = vmatmul.f32.gmra.mxu0 %v2006
      %v2118 = vpop.f32.mrf.mxu0
      %v2119 = vadd.f32 0.0, %v2118
      %2120 = vmatmul.f32.gmra.mxu0 %v2009
      %v2121 = vpop.f32.mrf.mxu0
      %v2122 = vadd.f32 0.0, %v2121
      %2123 = vmatmul.f32.gmra.mxu0 %v2012
      %v2124 = vpop.f32.mrf.mxu0
      %v2125 = vadd.f32 0.0, %v2124
      %2126 = vmatmul.f32.gmra.mxu0 %v2015
      %v2127 = vpop.f32.mrf.mxu0
      %v2128 = vadd.f32 0.0, %v2127
      %2129 = vmatmul.f32.gmra.mxu0 %v2018
      %v2130 = vpop.f32.mrf.mxu0
      %v2131 = vadd.f32 0.0, %v2130
      %2132 = vmatmul.f32.gmra.mxu0 %v2021
      %v2133 = vpop.f32.mrf.mxu0
      %v2134 = vadd.f32 0.0, %v2133
      %2135 = vmatmul.f32.gmra.mxu0 %v2024
      %v2136 = vpop.f32.mrf.mxu0
      %v2137 = vadd.f32 0.0, %v2136
      %2138 = vmatmul.f32.gmra.mxu0 %v2027
      %v2139 = vpop.f32.mrf.mxu0
      %v2140 = vadd.f32 0.0, %v2139
      %2141 = vmatmul.f32.gmra.mxu0 %v2030
      %v2142 = vpop.f32.mrf.mxu0
      %v2143 = vadd.f32 0.0, %v2142
      %2144 = vmatmul.f32.gmra.mxu0 %v2033
      %v2145 = vpop.f32.mrf.mxu0
      %v2146 = vadd.f32 0.0, %v2145
      %2147 = vmatmul.f32.gmra.mxu0 %v2036
      %v2148 = vpop.f32.mrf.mxu0
      %v2149 = vadd.f32 0.0, %v2148
      %2150 = vmatmul.f32.gmra.mxu0 %v2039
      %v2151 = vpop.f32.mrf.mxu0
      %v2152 = vadd.f32 0.0, %v2151
      %2153 = vmatmul.f32.gmra.mxu0 %v2042
      %v2154 = vpop.f32.mrf.mxu0
      %v2155 = vadd.f32 0.0, %v2154
      %2156 = vmatmul.f32.gmra.mxu0 %v2045
      %v2157 = vpop.f32.mrf.mxu0
      %v2158 = vadd.f32 0.0, %v2157
      %2159 = vmatmul.f32.gmra.mxu0 %v2048
      %v2160 = vpop.f32.mrf.mxu0
      %v2161 = vadd.f32 0.0, %v2160
      %2162 = vmatmul.f32.gmra.mxu0 %v2051
      %v2163 = vpop.f32.mrf.mxu0
      %v2164 = vadd.f32 0.0, %v2163
      %2165 = vmatmul.f32.gmra.mxu0 %v2054
      %v2166 = vpop.f32.mrf.mxu0
      %v2167 = vadd.f32 0.0, %v2166
      %2168 = vmatmul.f32.gmra.mxu0 %v2057
      %v2169 = vpop.f32.mrf.mxu0
      %v2170 = vadd.f32 0.0, %v2169
      %2171 = vmatmul.f32.gmra.mxu0 %v2060
      %v2172 = vpop.f32.mrf.mxu0
      %v2173 = vadd.f32 0.0, %v2172
      %2174 = vmatmul.f32.gmra.mxu0 %v2063
      %v2175 = vpop.f32.mrf.mxu0
      %v2176 = vadd.f32 0.0, %v2175
      %2177 = vmatmul.f32.gmra.mxu0 %v2066
      %v2178 = vpop.f32.mrf.mxu0
      %v2179 = vadd.f32 0.0, %v2178
      %2180 = vmatmul.f32.gmra.mxu0 %v2069
      %v2181 = vpop.f32.mrf.mxu0
      %v2182 = vadd.f32 0.0, %v2181
      %2183 = vdwg.mxu0
      %v2184 = vadd.f32 %v1908, %v2089
      %v2185 = vadd.f32 %v1909, %v2092
      %v2186 = vadd.f32 %v1910, %v2095
      %v2187 = vadd.f32 %v1911, %v2098
      %v2188 = vadd.f32 %v1912, %v2101
      %v2189 = vadd.f32 %v1913, %v2104
      %v2190 = vadd.f32 %v1914, %v2107
      %v2191 = vadd.f32 %v1915, %v2110
      %v2192 = vadd.f32 %v1916, %v2113
      %v2193 = vadd.f32 %v1917, %v2116
      %v2194 = vadd.f32 %v1918, %v2119
      %v2195 = vadd.f32 %v1919, %v2122
      %v2196 = vadd.f32 %v1920, %v2125
      %v2197 = vadd.f32 %v1921, %v2128
      %v2198 = vadd.f32 %v1922, %v2131
      %v2199 = vadd.f32 %v1923, %v2134
      %v2200 = vadd.f32 %v1924, %v2137
      %v2201 = vadd.f32 %v1925, %v2140
      %v2202 = vadd.f32 %v1926, %v2143
      %v2203 = vadd.f32 %v1927, %v2146
      %v2204 = vadd.f32 %v1928, %v2149
      %v2205 = vadd.f32 %v1929, %v2152
      %v2206 = vadd.f32 %v1930, %v2155
      %v2207 = vadd.f32 %v1931, %v2158
      %v2208 = vadd.f32 %v1932, %v2161
      %v2209 = vadd.f32 %v1933, %v2164
      %v2210 = vadd.f32 %v1934, %v2167
      %v2211 = vadd.f32 %v1935, %v2170
      %v2212 = vadd.f32 %v1936, %v2173
      %v2213 = vadd.f32 %v1937, %v2176
      %v2214 = vadd.f32 %v1938, %v2179
      %v2215 = vadd.f32 %v1939, %v2182
      %v2216 = vld [vmem:[%s1940 + $0x1] sm:$0xff]
      %v2217 = vld [vmem:[%s1940 + $0x9] sm:$0xff]
      %v2218 = vld [vmem:[%s1940 + $0x19] sm:$0xff]
      %v2219 = vld [vmem:[%s1940 + $0x21] sm:$0xff]
      %v2220 = vld [vmem:[%s1940 + $0x31] sm:$0xff]
      %v2221 = vld [vmem:[%s1940 + $0x39] sm:$0xff]
      %v2222 = vld [vmem:[%s1940 + $0x49] sm:$0xff]
      %v2223 = vld [vmem:[%s1940 + $0x51] sm:$0xff]
      %v2224 = vld [vmem:[%s1940 + $0x61] sm:$0xff]
      %v2225 = vld [vmem:[%s1940 + $0x69] sm:$0xff]
      %v2226 = vld [vmem:[%s1940 + $0x79] sm:$0xff]
      %v2227 = vld [vmem:[%s1940 + $0x81] sm:$0xff]
      %v2228 = vld [vmem:[%s1940 + $0x91] sm:$0xff]
      %v2229 = vld [vmem:[%s1940 + $0x99] sm:$0xff]
      %v2230 = vld [vmem:[%s1940 + $0xa9] sm:$0xff]
      %v2231 = vld [vmem:[%s1940 + $0xb1] sm:$0xff]
      %v2232 = vld [vmem:[%s1940 + $0xc1] sm:$0xff]
      %v2233 = vld [vmem:[%s1940 + $0xc9] sm:$0xff]
      %v2234 = vld [vmem:[%s1940 + $0xd9] sm:$0xff]
      %v2235 = vld [vmem:[%s1940 + $0xe1] sm:$0xff]
      %v2236 = vld [vmem:[%s1940 + $0xf1] sm:$0xff]
      %v2237 = vld [vmem:[%s1940 + $0xf9] sm:$0xff]
      %v2238 = vld [vmem:[%s1940 + $0x109] sm:$0xff]
      %v2239 = vld [vmem:[%s1940 + $0x111] sm:$0xff]
      %v2240 = vld [vmem:[%s1940 + $0x121] sm:$0xff]
      %v2241 = vld [vmem:[%s1940 + $0x129] sm:$0xff]
      %v2242 = vld [vmem:[%s1940 + $0x139] sm:$0xff]
      %v2243 = vld [vmem:[%s1940 + $0x141] sm:$0xff]
      %v2244 = vld [vmem:[%s1940 + $0x151] sm:$0xff]
      %v2245 = vld [vmem:[%s1940 + $0x159] sm:$0xff]
      %v2246 = vld [vmem:[%s1940 + $0x169] sm:$0xff]
      %v2247 = vld [vmem:[%s1940 + $0x171] sm:$0xff]
      %s2248 = scalar_lea.vmem %s2, 56
      %v2249 = vld [vmem:[%s2248] sm:$0xff]
      %v2251 = vsel %vm420, %v2216, 0
      %v2254 = vsel %vm420, %v2217, 0
      %v2257 = vsel %vm420, %v2218, 0
      %v2260 = vsel %vm420, %v2219, 0
      %v2263 = vsel %vm420, %v2220, 0
      %v2266 = vsel %vm420, %v2221, 0
      %v2269 = vsel %vm420, %v2222, 0
      %v2272 = vsel %vm420, %v2223, 0
      %v2275 = vsel %vm420, %v2224, 0
      %v2278 = vsel %vm420, %v2225, 0
      %v2281 = vsel %vm420, %v2226, 0
      %v2284 = vsel %vm420, %v2227, 0
      %v2287 = vsel %vm420, %v2228, 0
      %v2290 = vsel %vm420, %v2229, 0
      %v2293 = vsel %vm420, %v2230, 0
      %v2296 = vsel %vm420, %v2231, 0
      %v2299 = vsel %vm420, %v2232, 0
      %v2302 = vsel %vm420, %v2233, 0
      %v2305 = vsel %vm420, %v2234, 0
      %v2308 = vsel %vm420, %v2235, 0
      %v2311 = vsel %vm420, %v2236, 0
      %v2314 = vsel %vm420, %v2237, 0
      %v2317 = vsel %vm420, %v2238, 0
      %v2320 = vsel %vm420, %v2239, 0
      %v2323 = vsel %vm420, %v2240, 0
      %v2326 = vsel %vm420, %v2241, 0
      %v2329 = vsel %vm420, %v2242, 0
      %v2332 = vsel %vm420, %v2243, 0
      %v2335 = vsel %vm420, %v2244, 0
      %v2338 = vsel %vm420, %v2245, 0
      %v2341 = vsel %vm420, %v2246, 0
      %v2344 = vsel %vm420, %v2247, 0
      %2346 = vmatpush.msra.mxu0 0.0
      %2347 = vmatpush.msra.mxu0 0.0
      %2348 = vmatpush.msra.mxu0 0.0
      %2349 = vmatpush.msra.mxu0 0.0
      %2350 = vmatpush.msra.mxu0 0.0
      %2351 = vmatpush.msra.mxu0 0.0
      %2352 = vmatpush.msra.mxu0 0.0
      %2353 = vmatpush.msra.mxu0 0.0
      %2354 = vmatpush.msra.mxu0 0.0
      %2355 = vmatpush.msra.mxu0 0.0
      %2356 = vmatpush.msra.mxu0 0.0
      %2357 = vmatpush.msra.mxu0 0.0
      %2358 = vmatpush.msra.mxu0 0.0
      %2359 = vmatpush.msra.mxu0 0.0
      %2360 = vmatpush.msra.mxu0 0.0
      %2361 = vmatpush.msra.mxu0 %v2249
      %2362 = vmatmul.f32.gmra.mxu0 %v2251
      %v2363 = vpop.f32.mrf.mxu0
      %v2364 = vadd.f32 0.0, %v2363
      %2365 = vmatmul.f32.gmra.mxu0 %v2254
      %v2366 = vpop.f32.mrf.mxu0
      %v2367 = vadd.f32 0.0, %v2366
      %2368 = vmatmul.f32.gmra.mxu0 %v2257
      %v2369 = vpop.f32.mrf.mxu0
      %v2370 = vadd.f32 0.0, %v2369
      %2371 = vmatmul.f32.gmra.mxu0 %v2260
      %v2372 = vpop.f32.mrf.mxu0
      %v2373 = vadd.f32 0.0, %v2372
      %2374 = vmatmul.f32.gmra.mxu0 %v2263
      %v2375 = vpop.f32.mrf.mxu0
      %v2376 = vadd.f32 0.0, %v2375
      %2377 = vmatmul.f32.gmra.mxu0 %v2266
      %v2378 = vpop.f32.mrf.mxu0
      %v2379 = vadd.f32 0.0, %v2378
      %2380 = vmatmul.f32.gmra.mxu0 %v2269
      %v2381 = vpop.f32.mrf.mxu0
      %v2382 = vadd.f32 0.0, %v2381
      %2383 = vmatmul.f32.gmra.mxu0 %v2272
      %v2384 = vpop.f32.mrf.mxu0
      %v2385 = vadd.f32 0.0, %v2384
      %2386 = vmatmul.f32.gmra.mxu0 %v2275
      %v2387 = vpop.f32.mrf.mxu0
      %v2388 = vadd.f32 0.0, %v2387
      %2389 = vmatmul.f32.gmra.mxu0 %v2278
      %v2390 = vpop.f32.mrf.mxu0
      %v2391 = vadd.f32 0.0, %v2390
      %2392 = vmatmul.f32.gmra.mxu0 %v2281
      %v2393 = vpop.f32.mrf.mxu0
      %v2394 = vadd.f32 0.0, %v2393
      %2395 = vmatmul.f32.gmra.mxu0 %v2284
      %v2396 = vpop.f32.mrf.mxu0
      %v2397 = vadd.f32 0.0, %v2396
      %2398 = vmatmul.f32.gmra.mxu0 %v2287
      %v2399 = vpop.f32.mrf.mxu0
      %v2400 = vadd.f32 0.0, %v2399
      %2401 = vmatmul.f32.gmra.mxu0 %v2290
      %v2402 = vpop.f32.mrf.mxu0
      %v2403 = vadd.f32 0.0, %v2402
      %2404 = vmatmul.f32.gmra.mxu0 %v2293
      %v2405 = vpop.f32.mrf.mxu0
      %v2406 = vadd.f32 0.0, %v2405
      %2407 = vmatmul.f32.gmra.mxu0 %v2296
      %v2408 = vpop.f32.mrf.mxu0
      %v2409 = vadd.f32 0.0, %v2408
      %2410 = vmatmul.f32.gmra.mxu0 %v2299
      %v2411 = vpop.f32.mrf.mxu0
      %v2412 = vadd.f32 0.0, %v2411
      %2413 = vmatmul.f32.gmra.mxu0 %v2302
      %v2414 = vpop.f32.mrf.mxu0
      %v2415 = vadd.f32 0.0, %v2414
      %2416 = vmatmul.f32.gmra.mxu0 %v2305
      %v2417 = vpop.f32.mrf.mxu0
      %v2418 = vadd.f32 0.0, %v2417
      %2419 = vmatmul.f32.gmra.mxu0 %v2308
      %v2420 = vpop.f32.mrf.mxu0
      %v2421 = vadd.f32 0.0, %v2420
      %2422 = vmatmul.f32.gmra.mxu0 %v2311
      %v2423 = vpop.f32.mrf.mxu0
      %v2424 = vadd.f32 0.0, %v2423
      %2425 = vmatmul.f32.gmra.mxu0 %v2314
      %v2426 = vpop.f32.mrf.mxu0
      %v2427 = vadd.f32 0.0, %v2426
      %2428 = vmatmul.f32.gmra.mxu0 %v2317
      %v2429 = vpop.f32.mrf.mxu0
      %v2430 = vadd.f32 0.0, %v2429
      %2431 = vmatmul.f32.gmra.mxu0 %v2320
      %v2432 = vpop.f32.mrf.mxu0
      %v2433 = vadd.f32 0.0, %v2432
      %2434 = vmatmul.f32.gmra.mxu0 %v2323
      %v2435 = vpop.f32.mrf.mxu0
      %v2436 = vadd.f32 0.0, %v2435
      %2437 = vmatmul.f32.gmra.mxu0 %v2326
      %v2438 = vpop.f32.mrf.mxu0
      %v2439 = vadd.f32 0.0, %v2438
      %2440 = vmatmul.f32.gmra.mxu0 %v2329
      %v2441 = vpop.f32.mrf.mxu0
      %v2442 = vadd.f32 0.0, %v2441
      %2443 = vmatmul.f32.gmra.mxu0 %v2332
      %v2444 = vpop.f32.mrf.mxu0
      %v2445 = vadd.f32 0.0, %v2444
      %2446 = vmatmul.f32.gmra.mxu0 %v2335
      %v2447 = vpop.f32.mrf.mxu0
      %v2448 = vadd.f32 0.0, %v2447
      %2449 = vmatmul.f32.gmra.mxu0 %v2338
      %v2450 = vpop.f32.mrf.mxu0
      %v2451 = vadd.f32 0.0, %v2450
      %2452 = vmatmul.f32.gmra.mxu0 %v2341
      %v2453 = vpop.f32.mrf.mxu0
      %v2454 = vadd.f32 0.0, %v2453
      %2455 = vmatmul.f32.gmra.mxu0 %v2344
      %v2456 = vpop.f32.mrf.mxu0
      %v2457 = vadd.f32 0.0, %v2456
      %2458 = vdwg.mxu0
      %v2459 = vadd.f32 %v2184, %v2364
      %v2460 = vadd.f32 %v2185, %v2367
      %v2461 = vadd.f32 %v2186, %v2370
      %v2462 = vadd.f32 %v2187, %v2373
      %v2463 = vadd.f32 %v2188, %v2376
      %v2464 = vadd.f32 %v2189, %v2379
      %v2465 = vadd.f32 %v2190, %v2382
      %v2466 = vadd.f32 %v2191, %v2385
      %v2467 = vadd.f32 %v2192, %v2388
      %v2468 = vadd.f32 %v2193, %v2391
      %v2469 = vadd.f32 %v2194, %v2394
      %v2470 = vadd.f32 %v2195, %v2397
      %v2471 = vadd.f32 %v2196, %v2400
      %v2472 = vadd.f32 %v2197, %v2403
      %v2473 = vadd.f32 %v2198, %v2406
      %v2474 = vadd.f32 %v2199, %v2409
      %v2475 = vadd.f32 %v2200, %v2412
      %v2476 = vadd.f32 %v2201, %v2415
      %v2477 = vadd.f32 %v2202, %v2418
      %v2478 = vadd.f32 %v2203, %v2421
      %v2479 = vadd.f32 %v2204, %v2424
      %v2480 = vadd.f32 %v2205, %v2427
      %v2481 = vadd.f32 %v2206, %v2430
      %v2482 = vadd.f32 %v2207, %v2433
      %v2483 = vadd.f32 %v2208, %v2436
      %v2484 = vadd.f32 %v2209, %v2439
      %v2485 = vadd.f32 %v2210, %v2442
      %v2486 = vadd.f32 %v2211, %v2445
      %v2487 = vadd.f32 %v2212, %v2448
      %v2488 = vadd.f32 %v2213, %v2451
      %v2489 = vadd.f32 %v2214, %v2454
      %v2490 = vadd.f32 %v2215, %v2457
      %v2491 = vld [vmem:[%s1940 + $0x2] sm:$0xff]
      %v2492 = vld [vmem:[%s1940 + $0xa] sm:$0xff]
      %v2493 = vld [vmem:[%s1940 + $0x1a] sm:$0xff]
      %v2494 = vld [vmem:[%s1940 + $0x22] sm:$0xff]
      %v2495 = vld [vmem:[%s1940 + $0x32] sm:$0xff]
      %v2496 = vld [vmem:[%s1940 + $0x3a] sm:$0xff]
      %v2497 = vld [vmem:[%s1940 + $0x4a] sm:$0xff]
      %v2498 = vld [vmem:[%s1940 + $0x52] sm:$0xff]
      %v2499 = vld [vmem:[%s1940 + $0x62] sm:$0xff]
      %v2500 = vld [vmem:[%s1940 + $0x6a] sm:$0xff]
      %v2501 = vld [vmem:[%s1940 + $0x7a] sm:$0xff]
      %v2502 = vld [vmem:[%s1940 + $0x82] sm:$0xff]
      %v2503 = vld [vmem:[%s1940 + $0x92] sm:$0xff]
      %v2504 = vld [vmem:[%s1940 + $0x9a] sm:$0xff]
      %v2505 = vld [vmem:[%s1940 + $0xaa] sm:$0xff]
      %v2506 = vld [vmem:[%s1940 + $0xb2] sm:$0xff]
      %v2507 = vld [vmem:[%s1940 + $0xc2] sm:$0xff]
      %v2508 = vld [vmem:[%s1940 + $0xca] sm:$0xff]
      %v2509 = vld [vmem:[%s1940 + $0xda] sm:$0xff]
      %v2510 = vld [vmem:[%s1940 + $0xe2] sm:$0xff]
      %v2511 = vld [vmem:[%s1940 + $0xf2] sm:$0xff]
      %v2512 = vld [vmem:[%s1940 + $0xfa] sm:$0xff]
      %v2513 = vld [vmem:[%s1940 + $0x10a] sm:$0xff]
      %v2514 = vld [vmem:[%s1940 + $0x112] sm:$0xff]
      %v2515 = vld [vmem:[%s1940 + $0x122] sm:$0xff]
      %v2516 = vld [vmem:[%s1940 + $0x12a] sm:$0xff]
      %v2517 = vld [vmem:[%s1940 + $0x13a] sm:$0xff]
      %v2518 = vld [vmem:[%s1940 + $0x142] sm:$0xff]
      %v2519 = vld [vmem:[%s1940 + $0x152] sm:$0xff]
      %v2520 = vld [vmem:[%s1940 + $0x15a] sm:$0xff]
      %v2521 = vld [vmem:[%s1940 + $0x16a] sm:$0xff]
      %v2522 = vld [vmem:[%s1940 + $0x172] sm:$0xff]
      %s2523 = scalar_lea.vmem %s2, 64
      %v2524 = vld [vmem:[%s2523] sm:$0xff]
      %v2526 = vsel %vm420, %v2491, 0
      %v2529 = vsel %vm420, %v2492, 0
      %v2532 = vsel %vm420, %v2493, 0
      %v2535 = vsel %vm420, %v2494, 0
      %v2538 = vsel %vm420, %v2495, 0
      %v2541 = vsel %vm420, %v2496, 0
      %v2544 = vsel %vm420, %v2497, 0
      %v2547 = vsel %vm420, %v2498, 0
      %v2550 = vsel %vm420, %v2499, 0
      %v2553 = vsel %vm420, %v2500, 0
      %v2556 = vsel %vm420, %v2501, 0
      %v2559 = vsel %vm420, %v2502, 0
      %v2562 = vsel %vm420, %v2503, 0
      %v2565 = vsel %vm420, %v2504, 0
      %v2568 = vsel %vm420, %v2505, 0
      %v2571 = vsel %vm420, %v2506, 0
      %v2574 = vsel %vm420, %v2507, 0
      %v2577 = vsel %vm420, %v2508, 0
      %v2580 = vsel %vm420, %v2509, 0
      %v2583 = vsel %vm420, %v2510, 0
      %v2586 = vsel %vm420, %v2511, 0
      %v2589 = vsel %vm420, %v2512, 0
      %v2592 = vsel %vm420, %v2513, 0
      %v2595 = vsel %vm420, %v2514, 0
      %v2598 = vsel %vm420, %v2515, 0
      %v2601 = vsel %vm420, %v2516, 0
      %v2604 = vsel %vm420, %v2517, 0
      %v2607 = vsel %vm420, %v2518, 0
      %v2610 = vsel %vm420, %v2519, 0
      %v2613 = vsel %vm420, %v2520, 0
      %v2616 = vsel %vm420, %v2521, 0
      %v2619 = vsel %vm420, %v2522, 0
      %2621 = vmatpush.msra.mxu0 0.0
      %2622 = vmatpush.msra.mxu0 0.0
      %2623 = vmatpush.msra.mxu0 0.0
      %2624 = vmatpush.msra.mxu0 0.0
      %2625 = vmatpush.msra.mxu0 0.0
      %2626 = vmatpush.msra.mxu0 0.0
      %2627 = vmatpush.msra.mxu0 0.0
      %2628 = vmatpush.msra.mxu0 0.0
      %2629 = vmatpush.msra.mxu0 0.0
      %2630 = vmatpush.msra.mxu0 0.0
      %2631 = vmatpush.msra.mxu0 0.0
      %2632 = vmatpush.msra.mxu0 0.0
      %2633 = vmatpush.msra.mxu0 0.0
      %2634 = vmatpush.msra.mxu0 0.0
      %2635 = vmatpush.msra.mxu0 0.0
      %2636 = vmatpush.msra.mxu0 %v2524
      %2637 = vmatmul.f32.gmra.mxu0 %v2526
      %v2638 = vpop.f32.mrf.mxu0
      %v2639 = vadd.f32 0.0, %v2638
      %2640 = vmatmul.f32.gmra.mxu0 %v2529
      %v2641 = vpop.f32.mrf.mxu0
      %v2642 = vadd.f32 0.0, %v2641
      %2643 = vmatmul.f32.gmra.mxu0 %v2532
      %v2644 = vpop.f32.mrf.mxu0
      %v2645 = vadd.f32 0.0, %v2644
      %2646 = vmatmul.f32.gmra.mxu0 %v2535
      %v2647 = vpop.f32.mrf.mxu0
      %v2648 = vadd.f32 0.0, %v2647
      %2649 = vmatmul.f32.gmra.mxu0 %v2538
      %v2650 = vpop.f32.mrf.mxu0
      %v2651 = vadd.f32 0.0, %v2650
      %2652 = vmatmul.f32.gmra.mxu0 %v2541
      %v2653 = vpop.f32.mrf.mxu0
      %v2654 = vadd.f32 0.0, %v2653
      %2655 = vmatmul.f32.gmra.mxu0 %v2544
      %v2656 = vpop.f32.mrf.mxu0
      %v2657 = vadd.f32 0.0, %v2656
      %2658 = vmatmul.f32.gmra.mxu0 %v2547
      %v2659 = vpop.f32.mrf.mxu0
      %v2660 = vadd.f32 0.0, %v2659
      %2661 = vmatmul.f32.gmra.mxu0 %v2550
      %v2662 = vpop.f32.mrf.mxu0
      %v2663 = vadd.f32 0.0, %v2662
      %2664 = vmatmul.f32.gmra.mxu0 %v2553
      %v2665 = vpop.f32.mrf.mxu0
      %v2666 = vadd.f32 0.0, %v2665
      %2667 = vmatmul.f32.gmra.mxu0 %v2556
      %v2668 = vpop.f32.mrf.mxu0
      %v2669 = vadd.f32 0.0, %v2668
      %2670 = vmatmul.f32.gmra.mxu0 %v2559
      %v2671 = vpop.f32.mrf.mxu0
      %v2672 = vadd.f32 0.0, %v2671
      %2673 = vmatmul.f32.gmra.mxu0 %v2562
      %v2674 = vpop.f32.mrf.mxu0
      %v2675 = vadd.f32 0.0, %v2674
      %2676 = vmatmul.f32.gmra.mxu0 %v2565
      %v2677 = vpop.f32.mrf.mxu0
      %v2678 = vadd.f32 0.0, %v2677
      %2679 = vmatmul.f32.gmra.mxu0 %v2568
      %v2680 = vpop.f32.mrf.mxu0
      %v2681 = vadd.f32 0.0, %v2680
      %2682 = vmatmul.f32.gmra.mxu0 %v2571
      %v2683 = vpop.f32.mrf.mxu0
      %v2684 = vadd.f32 0.0, %v2683
      %2685 = vmatmul.f32.gmra.mxu0 %v2574
      %v2686 = vpop.f32.mrf.mxu0
      %v2687 = vadd.f32 0.0, %v2686
      %2688 = vmatmul.f32.gmra.mxu0 %v2577
      %v2689 = vpop.f32.mrf.mxu0
      %v2690 = vadd.f32 0.0, %v2689
      %2691 = vmatmul.f32.gmra.mxu0 %v2580
      %v2692 = vpop.f32.mrf.mxu0
      %v2693 = vadd.f32 0.0, %v2692
      %2694 = vmatmul.f32.gmra.mxu0 %v2583
      %v2695 = vpop.f32.mrf.mxu0
      %v2696 = vadd.f32 0.0, %v2695
      %2697 = vmatmul.f32.gmra.mxu0 %v2586
      %v2698 = vpop.f32.mrf.mxu0
      %v2699 = vadd.f32 0.0, %v2698
      %2700 = vmatmul.f32.gmra.mxu0 %v2589
      %v2701 = vpop.f32.mrf.mxu0
      %v2702 = vadd.f32 0.0, %v2701
      %2703 = vmatmul.f32.gmra.mxu0 %v2592
      %v2704 = vpop.f32.mrf.mxu0
      %v2705 = vadd.f32 0.0, %v2704
      %2706 = vmatmul.f32.gmra.mxu0 %v2595
      %v2707 = vpop.f32.mrf.mxu0
      %v2708 = vadd.f32 0.0, %v2707
      %2709 = vmatmul.f32.gmra.mxu0 %v2598
      %v2710 = vpop.f32.mrf.mxu0
      %v2711 = vadd.f32 0.0, %v2710
      %2712 = vmatmul.f32.gmra.mxu0 %v2601
      %v2713 = vpop.f32.mrf.mxu0
      %v2714 = vadd.f32 0.0, %v2713
      %2715 = vmatmul.f32.gmra.mxu0 %v2604
      %v2716 = vpop.f32.mrf.mxu0
      %v2717 = vadd.f32 0.0, %v2716
      %2718 = vmatmul.f32.gmra.mxu0 %v2607
      %v2719 = vpop.f32.mrf.mxu0
      %v2720 = vadd.f32 0.0, %v2719
      %2721 = vmatmul.f32.gmra.mxu0 %v2610
      %v2722 = vpop.f32.mrf.mxu0
      %v2723 = vadd.f32 0.0, %v2722
      %2724 = vmatmul.f32.gmra.mxu0 %v2613
      %v2725 = vpop.f32.mrf.mxu0
      %v2726 = vadd.f32 0.0, %v2725
      %2727 = vmatmul.f32.gmra.mxu0 %v2616
      %v2728 = vpop.f32.mrf.mxu0
      %v2729 = vadd.f32 0.0, %v2728
      %2730 = vmatmul.f32.gmra.mxu0 %v2619
      %v2731 = vpop.f32.mrf.mxu0
      %v2732 = vadd.f32 0.0, %v2731
      %2733 = vdwg.mxu0
      %v2734 = vadd.f32 %v2459, %v2639
      %v2735 = vadd.f32 %v2460, %v2642
      %v2736 = vadd.f32 %v2461, %v2645
      %v2737 = vadd.f32 %v2462, %v2648
      %v2738 = vadd.f32 %v2463, %v2651
      %v2739 = vadd.f32 %v2464, %v2654
      %v2740 = vadd.f32 %v2465, %v2657
      %v2741 = vadd.f32 %v2466, %v2660
      %v2742 = vadd.f32 %v2467, %v2663
      %v2743 = vadd.f32 %v2468, %v2666
      %v2744 = vadd.f32 %v2469, %v2669
      %v2745 = vadd.f32 %v2470, %v2672
      %v2746 = vadd.f32 %v2471, %v2675
      %v2747 = vadd.f32 %v2472, %v2678
      %v2748 = vadd.f32 %v2473, %v2681
      %v2749 = vadd.f32 %v2474, %v2684
      %v2750 = vadd.f32 %v2475, %v2687
      %v2751 = vadd.f32 %v2476, %v2690
      %v2752 = vadd.f32 %v2477, %v2693
      %v2753 = vadd.f32 %v2478, %v2696
      %v2754 = vadd.f32 %v2479, %v2699
      %v2755 = vadd.f32 %v2480, %v2702
      %v2756 = vadd.f32 %v2481, %v2705
      %v2757 = vadd.f32 %v2482, %v2708
      %v2758 = vadd.f32 %v2483, %v2711
      %v2759 = vadd.f32 %v2484, %v2714
      %v2760 = vadd.f32 %v2485, %v2717
      %v2761 = vadd.f32 %v2486, %v2720
      %v2762 = vadd.f32 %v2487, %v2723
      %v2763 = vadd.f32 %v2488, %v2726
      %v2764 = vadd.f32 %v2489, %v2729
      %v2765 = vadd.f32 %v2490, %v2732
      %v2766 = vld [vmem:[%s3] sm:$0x1]
      %v2768 = vperm.slane %v2766, 0
      %v2770 = vadd.f32 %v2734, %v2768
      %v2771 = vadd.f32 %v2735, %v2768
      %v2772 = vadd.f32 %v2736, %v2768
      %v2773 = vadd.f32 %v2737, %v2768
      %v2774 = vadd.f32 %v2738, %v2768
      %v2775 = vadd.f32 %v2739, %v2768
      %v2776 = vadd.f32 %v2740, %v2768
      %v2777 = vadd.f32 %v2741, %v2768
      %v2778 = vadd.f32 %v2742, %v2768
      %v2779 = vadd.f32 %v2743, %v2768
      %v2780 = vadd.f32 %v2744, %v2768
      %v2781 = vadd.f32 %v2745, %v2768
      %v2782 = vadd.f32 %v2746, %v2768
      %v2783 = vadd.f32 %v2747, %v2768
      %v2784 = vadd.f32 %v2748, %v2768
      %v2785 = vadd.f32 %v2749, %v2768
      %v2786 = vadd.f32 %v2750, %v2768
      %v2787 = vadd.f32 %v2751, %v2768
      %v2788 = vadd.f32 %v2752, %v2768
      %v2789 = vadd.f32 %v2753, %v2768
      %v2790 = vadd.f32 %v2754, %v2768
      %v2791 = vadd.f32 %v2755, %v2768
      %v2792 = vadd.f32 %v2756, %v2768
      %v2793 = vadd.f32 %v2757, %v2768
      %v2794 = vadd.f32 %v2758, %v2768
      %v2795 = vadd.f32 %v2759, %v2768
      %v2796 = vadd.f32 %v2760, %v2768
      %v2797 = vadd.f32 %v2761, %v2768
      %v2798 = vadd.f32 %v2762, %v2768
      %v2799 = vadd.f32 %v2763, %v2768
      %v2800 = vadd.f32 %v2764, %v2768
      %v2801 = vadd.f32 %v2765, %v2768
      %vm2802 = vcmask 31744
      %2803 = vst.msk [vmem:[#allocation2] sm:$0xff] %vm2802, 0.0
      %2804 = vst.msk [vmem:[#allocation2 + $0x8] sm:$0xff] %vm2802, 0.0
      %vm2805 = vcmask 25600
      %2806 = vst.msk [vmem:[#allocation2 + $0x10] sm:$0x3] %vm2805, 0.0
      %2807 = vst.msk [vmem:[#allocation2 + $0x18] sm:$0xff] %vm2802, 0.0
      %2808 = vst.msk [vmem:[#allocation2 + $0x20] sm:$0xff] %vm2802, 0.0
      %2809 = vst.msk [vmem:[#allocation2 + $0x28] sm:$0x3] %vm2805, 0.0
      %2810 = vst.msk [vmem:[#allocation2 + $0x30] sm:$0xff] %vm2802, 0.0
      %2811 = vst.msk [vmem:[#allocation2 + $0x38] sm:$0xff] %vm2802, 0.0
      %2812 = vst.msk [vmem:[#allocation2 + $0x40] sm:$0x3] %vm2805, 0.0
      %2813 = vst.msk [vmem:[#allocation2 + $0x48] sm:$0xff] %vm2802, 0.0
      %2814 = vst.msk [vmem:[#allocation2 + $0x50] sm:$0xff] %vm2802, 0.0
      %2815 = vst.msk [vmem:[#allocation2 + $0x58] sm:$0x3] %vm2805, 0.0
      %2816 = vst.msk [vmem:[#allocation2 + $0x60] sm:$0xff] %vm2802, 0.0
      %2817 = vst.msk [vmem:[#allocation2 + $0x68] sm:$0xff] %vm2802, 0.0
      %2818 = vst.msk [vmem:[#allocation2 + $0x70] sm:$0x3] %vm2805, 0.0
      %2819 = vst.msk [vmem:[#allocation2 + $0x78] sm:$0xff] %vm2802, 0.0
      %2820 = vst.msk [vmem:[#allocation2 + $0x80] sm:$0xff] %vm2802, 0.0
      %2821 = vst.msk [vmem:[#allocation2 + $0x88] sm:$0x3] %vm2805, 0.0
      %2822 = vst.msk [vmem:[#allocation2 + $0x90] sm:$0xff] %vm2802, 0.0
      %2823 = vst.msk [vmem:[#allocation2 + $0x98] sm:$0xff] %vm2802, 0.0
      %2824 = vst.msk [vmem:[#allocation2 + $0xa0] sm:$0x3] %vm2805, 0.0
      %2825 = vst.msk [vmem:[#allocation2 + $0xa8] sm:$0xff] %vm2802, 0.0
      %2826 = vst.msk [vmem:[#allocation2 + $0xb0] sm:$0xff] %vm2802, 0.0
      %2827 = vst.msk [vmem:[#allocation2 + $0xb8] sm:$0x3] %vm2805, 0.0
      %2828 = vst.msk [vmem:[#allocation2 + $0xc0] sm:$0xff] %vm2802, 0.0
      %2829 = vst.msk [vmem:[#allocation2 + $0xc8] sm:$0xff] %vm2802, 0.0
      %2830 = vst.msk [vmem:[#allocation2 + $0xd0] sm:$0x3] %vm2805, 0.0
      %2831 = vst.msk [vmem:[#allocation2 + $0xd8] sm:$0xff] %vm2802, 0.0
      %2832 = vst.msk [vmem:[#allocation2 + $0xe0] sm:$0xff] %vm2802, 0.0
      %2833 = vst.msk [vmem:[#allocation2 + $0xe8] sm:$0x3] %vm2805, 0.0
      %2834 = vst.msk [vmem:[#allocation2 + $0xf0] sm:$0xff] %vm2802, 0.0
      %2835 = vst.msk [vmem:[#allocation2 + $0xf8] sm:$0xff] %vm2802, 0.0
      %2836 = vst.msk [vmem:[#allocation2 + $0x100] sm:$0x3] %vm2805, 0.0
      %2837 = vst.msk [vmem:[#allocation2 + $0x108] sm:$0xff] %vm2802, 0.0
      %2838 = vst.msk [vmem:[#allocation2 + $0x110] sm:$0xff] %vm2802, 0.0
      %2839 = vst.msk [vmem:[#allocation2 + $0x118] sm:$0x3] %vm2805, 0.0
      %2840 = vst.msk [vmem:[#allocation2 + $0x120] sm:$0xff] %vm2802, 0.0
      %2841 = vst.msk [vmem:[#allocation2 + $0x128] sm:$0xff] %vm2802, 0.0
      %2842 = vst.msk [vmem:[#allocation2 + $0x130] sm:$0x3] %vm2805, 0.0
      %2843 = vst.msk [vmem:[#allocation2 + $0x138] sm:$0xff] %vm2802, 0.0
      %2844 = vst.msk [vmem:[#allocation2 + $0x140] sm:$0xff] %vm2802, 0.0
      %2845 = vst.msk [vmem:[#allocation2 + $0x148] sm:$0x3] %vm2805, 0.0
      %2846 = vst.msk [vmem:[#allocation2 + $0x150] sm:$0xff] %vm2802, 0.0
      %2847 = vst.msk [vmem:[#allocation2 + $0x158] sm:$0xff] %vm2802, 0.0
      %2848 = vst.msk [vmem:[#allocation2 + $0x160] sm:$0x3] %vm2805, 0.0
      %2849 = vst.msk [vmem:[#allocation2 + $0x168] sm:$0xff] %vm2802, 0.0
      %2850 = vst.msk [vmem:[#allocation2 + $0x170] sm:$0xff] %vm2802, 0.0
      %2851 = vst.msk [vmem:[#allocation2 + $0x178] sm:$0x3] %vm2805, 0.0
      %2852 = vst.msk [vmem:[#allocation2 + $0x180] sm:$0xff] %vm2802, 0.0
      %2853 = vst.msk [vmem:[#allocation2 + $0x188] sm:$0xff] %vm2802, 0.0
      %2854 = vst.msk [vmem:[#allocation2 + $0x190] sm:$0x3] %vm2805, 0.0
      %2855 = vst.msk [vmem:[#allocation2 + $0x198] sm:$0xff] %vm2802, 0.0
      %2856 = vst.msk [vmem:[#allocation2 + $0x1a0] sm:$0xff] %vm2802, 0.0
      %2857 = vst.msk [vmem:[#allocation2 + $0x1a8] sm:$0x3] %vm2805, 0.0
      %s2858 = scalar_lea.vmem [#allocation2], 24
      %2859 = vst.msk [vmem:[%s2858 + $0x1] sm:$0xff] %vm2802, %v2770
      %2860 = vst.msk [vmem:[%s2858 + $0x9] sm:$0xff] %vm2802, %v2771
      %2861 = vst.msk [vmem:[%s2858 + $0x19] sm:$0xff] %vm2802, %v2772
      %2862 = vst.msk [vmem:[%s2858 + $0x21] sm:$0xff] %vm2802, %v2773
      %2863 = vst.msk [vmem:[%s2858 + $0x31] sm:$0xff] %vm2802, %v2774
      %2864 = vst.msk [vmem:[%s2858 + $0x39] sm:$0xff] %vm2802, %v2775
      %2865 = vst.msk [vmem:[%s2858 + $0x49] sm:$0xff] %vm2802, %v2776
      %2866 = vst.msk [vmem:[%s2858 + $0x51] sm:$0xff] %vm2802, %v2777
      %2867 = vst.msk [vmem:[%s2858 + $0x61] sm:$0xff] %vm2802, %v2778
      %2868 = vst.msk [vmem:[%s2858 + $0x69] sm:$0xff] %vm2802, %v2779
      %2869 = vst.msk [vmem:[%s2858 + $0x79] sm:$0xff] %vm2802, %v2780
      %2870 = vst.msk [vmem:[%s2858 + $0x81] sm:$0xff] %vm2802, %v2781
      %2871 = vst.msk [vmem:[%s2858 + $0x91] sm:$0xff] %vm2802, %v2782
      %2872 = vst.msk [vmem:[%s2858 + $0x99] sm:$0xff] %vm2802, %v2783
      %2873 = vst.msk [vmem:[%s2858 + $0xa9] sm:$0xff] %vm2802, %v2784
      %2874 = vst.msk [vmem:[%s2858 + $0xb1] sm:$0xff] %vm2802, %v2785
      %2875 = vst.msk [vmem:[%s2858 + $0xc1] sm:$0xff] %vm2802, %v2786
      %2876 = vst.msk [vmem:[%s2858 + $0xc9] sm:$0xff] %vm2802, %v2787
      %2877 = vst.msk [vmem:[%s2858 + $0xd9] sm:$0xff] %vm2802, %v2788
      %2878 = vst.msk [vmem:[%s2858 + $0xe1] sm:$0xff] %vm2802, %v2789
      %2879 = vst.msk [vmem:[%s2858 + $0xf1] sm:$0xff] %vm2802, %v2790
      %2880 = vst.msk [vmem:[%s2858 + $0xf9] sm:$0xff] %vm2802, %v2791
      %2881 = vst.msk [vmem:[%s2858 + $0x109] sm:$0xff] %vm2802, %v2792
      %2882 = vst.msk [vmem:[%s2858 + $0x111] sm:$0xff] %vm2802, %v2793
      %2883 = vst.msk [vmem:[%s2858 + $0x121] sm:$0xff] %vm2802, %v2794
      %2884 = vst.msk [vmem:[%s2858 + $0x129] sm:$0xff] %vm2802, %v2795
      %2885 = vst.msk [vmem:[%s2858 + $0x139] sm:$0xff] %vm2802, %v2796
      %2886 = vst.msk [vmem:[%s2858 + $0x141] sm:$0xff] %vm2802, %v2797
      %2887 = vst.msk [vmem:[%s2858 + $0x151] sm:$0xff] %vm2802, %v2798
      %2888 = vst.msk [vmem:[%s2858 + $0x159] sm:$0xff] %vm2802, %v2799
      %2889 = vst.msk [vmem:[%s2858 + $0x169] sm:$0xff] %vm2802, %v2800
      %2890 = vst.msk [vmem:[%s2858 + $0x171] sm:$0xff] %vm2802, %v2801
      %v2891 = vld [vmem:[#allocation2] sm:$0xff]
      %v2892 = vld [vmem:[#allocation2 + $0x8] sm:$0xff]
      %v2893 = vld [vmem:[#allocation2 + $0x18] sm:$0xff]
      %v2894 = vld [vmem:[#allocation2 + $0x20] sm:$0xff]
      %v2895 = vld [vmem:[#allocation2 + $0x30] sm:$0xff]
      %v2896 = vld [vmem:[#allocation2 + $0x38] sm:$0xff]
      %v2897 = vld [vmem:[#allocation2 + $0x48] sm:$0xff]
      %v2898 = vld [vmem:[#allocation2 + $0x50] sm:$0xff]
      %v2899 = vld [vmem:[#allocation2 + $0x60] sm:$0xff]
      %v2900 = vld [vmem:[#allocation2 + $0x68] sm:$0xff]
      %v2901 = vld [vmem:[#allocation2 + $0x78] sm:$0xff]
      %v2902 = vld [vmem:[#allocation2 + $0x80] sm:$0xff]
      %v2903 = vld [vmem:[#allocation2 + $0x90] sm:$0xff]
      %v2904 = vld [vmem:[#allocation2 + $0x98] sm:$0xff]
      %v2905 = vld [vmem:[#allocation2 + $0xa8] sm:$0xff]
      %v2906 = vld [vmem:[#allocation2 + $0xb0] sm:$0xff]
      %v2907 = vld [vmem:[#allocation2 + $0xc0] sm:$0xff]
      %v2908 = vld [vmem:[#allocation2 + $0xc8] sm:$0xff]
      %v2909 = vld [vmem:[#allocation2 + $0xd8] sm:$0xff]
      %v2910 = vld [vmem:[#allocation2 + $0xe0] sm:$0xff]
      %v2911 = vld [vmem:[#allocation2 + $0xf0] sm:$0xff]
      %v2912 = vld [vmem:[#allocation2 + $0xf8] sm:$0xff]
      %v2913 = vld [vmem:[#allocation2 + $0x108] sm:$0xff]
      %v2914 = vld [vmem:[#allocation2 + $0x110] sm:$0xff]
      %v2915 = vld [vmem:[#allocation2 + $0x120] sm:$0xff]
      %v2916 = vld [vmem:[#allocation2 + $0x128] sm:$0xff]
      %v2917 = vld [vmem:[#allocation2 + $0x138] sm:$0xff]
      %v2918 = vld [vmem:[#allocation2 + $0x140] sm:$0xff]
      %v2919 = vld [vmem:[#allocation2 + $0x150] sm:$0xff]
      %v2920 = vld [vmem:[#allocation2 + $0x158] sm:$0xff]
      %v2921 = vld [vmem:[#allocation2 + $0x168] sm:$0xff]
      %v2922 = vld [vmem:[#allocation2 + $0x170] sm:$0xff]
      %v2923 = vld [vmem:[%s4] sm:$0xf]
      %v2924 = vld [vmem:[#allocation2 + $0x1] sm:$0xff]
      %v2925 = vld [vmem:[#allocation2 + $0x9] sm:$0xff]
      %v2926 = vld [vmem:[#allocation2 + $0x19] sm:$0xff]
      %v2927 = vld [vmem:[#allocation2 + $0x21] sm:$0xff]
      %v2928 = vld [vmem:[#allocation2 + $0x31] sm:$0xff]
      %v2929 = vld [vmem:[#allocation2 + $0x39] sm:$0xff]
      %v2930 = vld [vmem:[#allocation2 + $0x49] sm:$0xff]
      %v2931 = vld [vmem:[#allocation2 + $0x51] sm:$0xff]
      %v2932 = vld [vmem:[#allocation2 + $0x61] sm:$0xff]
      %v2933 = vld [vmem:[#allocation2 + $0x69] sm:$0xff]
      %v2934 = vld [vmem:[#allocation2 + $0x79] sm:$0xff]
      %v2935 = vld [vmem:[#allocation2 + $0x81] sm:$0xff]
      %v2936 = vld [vmem:[#allocation2 + $0x91] sm:$0xff]
      %v2937 = vld [vmem:[#allocation2 + $0x99] sm:$0xff]
      %v2938 = vld [vmem:[#allocation2 + $0xa9] sm:$0xff]
      %v2939 = vld [vmem:[#allocation2 + $0xb1] sm:$0xff]
      %v2940 = vld [vmem:[#allocation2 + $0xc1] sm:$0xff]
      %v2941 = vld [vmem:[#allocation2 + $0xc9] sm:$0xff]
      %v2942 = vld [vmem:[#allocation2 + $0xd9] sm:$0xff]
      %v2943 = vld [vmem:[#allocation2 + $0xe1] sm:$0xff]
      %v2944 = vld [vmem:[#allocation2 + $0xf1] sm:$0xff]
      %v2945 = vld [vmem:[#allocation2 + $0xf9] sm:$0xff]
      %v2946 = vld [vmem:[#allocation2 + $0x109] sm:$0xff]
      %v2947 = vld [vmem:[#allocation2 + $0x111] sm:$0xff]
      %v2948 = vld [vmem:[#allocation2 + $0x121] sm:$0xff]
      %v2949 = vld [vmem:[#allocation2 + $0x129] sm:$0xff]
      %v2950 = vld [vmem:[#allocation2 + $0x139] sm:$0xff]
      %v2951 = vld [vmem:[#allocation2 + $0x141] sm:$0xff]
      %v2952 = vld [vmem:[#allocation2 + $0x151] sm:$0xff]
      %v2953 = vld [vmem:[#allocation2 + $0x159] sm:$0xff]
      %v2954 = vld [vmem:[#allocation2 + $0x169] sm:$0xff]
      %v2955 = vld [vmem:[#allocation2 + $0x171] sm:$0xff]
      %s2956 = scalar_lea.vmem %s4, 4
      %v2957 = vld [vmem:[%s2956] sm:$0xf]
      %v2959 = vsel %vm2802, %v2924, 0
      %v2962 = vsel %vm2802, %v2925, 0
      %v2965 = vsel %vm2802, %v2926, 0
      %v2968 = vsel %vm2802, %v2927, 0
      %v2971 = vsel %vm2802, %v2928, 0
      %v2974 = vsel %vm2802, %v2929, 0
      %v2977 = vsel %vm2802, %v2930, 0
      %v2980 = vsel %vm2802, %v2931, 0
      %v2983 = vsel %vm2802, %v2932, 0
      %v2986 = vsel %vm2802, %v2933, 0
      %v2989 = vsel %vm2802, %v2934, 0
      %v2992 = vsel %vm2802, %v2935, 0
      %v2995 = vsel %vm2802, %v2936, 0
      %v2998 = vsel %vm2802, %v2937, 0
      %v3001 = vsel %vm2802, %v2938, 0
      %v3004 = vsel %vm2802, %v2939, 0
      %v3007 = vsel %vm2802, %v2940, 0
      %v3010 = vsel %vm2802, %v2941, 0
      %v3013 = vsel %vm2802, %v2942, 0
      %v3016 = vsel %vm2802, %v2943, 0
      %v3019 = vsel %vm2802, %v2944, 0
      %v3022 = vsel %vm2802, %v2945, 0
      %v3025 = vsel %vm2802, %v2946, 0
      %v3028 = vsel %vm2802, %v2947, 0
      %v3031 = vsel %vm2802, %v2948, 0
      %v3034 = vsel %vm2802, %v2949, 0
      %v3037 = vsel %vm2802, %v2950, 0
      %v3040 = vsel %vm2802, %v2951, 0
      %v3043 = vsel %vm2802, %v2952, 0
      %v3046 = vsel %vm2802, %v2953, 0
      %v3049 = vsel %vm2802, %v2954, 0
      %v3052 = vsel %vm2802, %v2955, 0
      %vm3054 = vcmask 1043456
      %v3056 = vsel %vm3054, %v2957, 0
      %3058 = vmatpush.msra.mxu0 0.0
      %3059 = vmatpush.msra.mxu0 0.0
      %3060 = vmatpush.msra.mxu0 0.0
      %3061 = vmatpush.msra.mxu0 0.0
      %3062 = vmatpush.msra.mxu0 0.0
      %3063 = vmatpush.msra.mxu0 0.0
      %3064 = vmatpush.msra.mxu0 0.0
      %3065 = vmatpush.msra.mxu0 0.0
      %3066 = vmatpush.msra.mxu0 0.0
      %3067 = vmatpush.msra.mxu0 0.0
      %3068 = vmatpush.msra.mxu0 0.0
      %3069 = vmatpush.msra.mxu0 0.0
      %3070 = vmatpush.msra.mxu0 0.0
      %3071 = vmatpush.msra.mxu0 0.0
      %3072 = vmatpush.msra.mxu0 0.0
      %3073 = vmatpush.msra.mxu0 %v3056
      %3074 = vmatmul.f32.gmra.mxu0 %v2959
      %v3075 = vpop.f32.mrf.mxu0
      %v3076 = vadd.f32 0.0, %v3075
      %3077 = vmatmul.f32.gmra.mxu0 %v2962
      %v3078 = vpop.f32.mrf.mxu0
      %v3079 = vadd.f32 0.0, %v3078
      %3080 = vmatmul.f32.gmra.mxu0 %v2965
      %v3081 = vpop.f32.mrf.mxu0
      %v3082 = vadd.f32 0.0, %v3081
      %3083 = vmatmul.f32.gmra.mxu0 %v2968
      %v3084 = vpop.f32.mrf.mxu0
      %v3085 = vadd.f32 0.0, %v3084
      %3086 = vmatmul.f32.gmra.mxu0 %v2971
      %v3087 = vpop.f32.mrf.mxu0
      %v3088 = vadd.f32 0.0, %v3087
      %3089 = vmatmul.f32.gmra.mxu0 %v2974
      %v3090 = vpop.f32.mrf.mxu0
      %v3091 = vadd.f32 0.0, %v3090
      %3092 = vmatmul.f32.gmra.mxu0 %v2977
      %v3093 = vpop.f32.mrf.mxu0
      %v3094 = vadd.f32 0.0, %v3093
      %3095 = vmatmul.f32.gmra.mxu0 %v2980
      %v3096 = vpop.f32.mrf.mxu0
      %v3097 = vadd.f32 0.0, %v3096
      %3098 = vmatmul.f32.gmra.mxu0 %v2983
      %v3099 = vpop.f32.mrf.mxu0
      %v3100 = vadd.f32 0.0, %v3099
      %3101 = vmatmul.f32.gmra.mxu0 %v2986
      %v3102 = vpop.f32.mrf.mxu0
      %v3103 = vadd.f32 0.0, %v3102
      %3104 = vmatmul.f32.gmra.mxu0 %v2989
      %v3105 = vpop.f32.mrf.mxu0
      %v3106 = vadd.f32 0.0, %v3105
      %3107 = vmatmul.f32.gmra.mxu0 %v2992
      %v3108 = vpop.f32.mrf.mxu0
      %v3109 = vadd.f32 0.0, %v3108
      %3110 = vmatmul.f32.gmra.mxu0 %v2995
      %v3111 = vpop.f32.mrf.mxu0
      %v3112 = vadd.f32 0.0, %v3111
      %3113 = vmatmul.f32.gmra.mxu0 %v2998
      %v3114 = vpop.f32.mrf.mxu0
      %v3115 = vadd.f32 0.0, %v3114
      %3116 = vmatmul.f32.gmra.mxu0 %v3001
      %v3117 = vpop.f32.mrf.mxu0
      %v3118 = vadd.f32 0.0, %v3117
      %3119 = vmatmul.f32.gmra.mxu0 %v3004
      %v3120 = vpop.f32.mrf.mxu0
      %v3121 = vadd.f32 0.0, %v3120
      %3122 = vmatmul.f32.gmra.mxu0 %v3007
      %v3123 = vpop.f32.mrf.mxu0
      %v3124 = vadd.f32 0.0, %v3123
      %3125 = vmatmul.f32.gmra.mxu0 %v3010
      %v3126 = vpop.f32.mrf.mxu0
      %v3127 = vadd.f32 0.0, %v3126
      %3128 = vmatmul.f32.gmra.mxu0 %v3013
      %v3129 = vpop.f32.mrf.mxu0
      %v3130 = vadd.f32 0.0, %v3129
      %3131 = vmatmul.f32.gmra.mxu0 %v3016
      %v3132 = vpop.f32.mrf.mxu0
      %v3133 = vadd.f32 0.0, %v3132
      %3134 = vmatmul.f32.gmra.mxu0 %v3019
      %v3135 = vpop.f32.mrf.mxu0
      %v3136 = vadd.f32 0.0, %v3135
      %3137 = vmatmul.f32.gmra.mxu0 %v3022
      %v3138 = vpop.f32.mrf.mxu0
      %v3139 = vadd.f32 0.0, %v3138
      %3140 = vmatmul.f32.gmra.mxu0 %v3025
      %v3141 = vpop.f32.mrf.mxu0
      %v3142 = vadd.f32 0.0, %v3141
      %3143 = vmatmul.f32.gmra.mxu0 %v3028
      %v3144 = vpop.f32.mrf.mxu0
      %v3145 = vadd.f32 0.0, %v3144
      %3146 = vmatmul.f32.gmra.mxu0 %v3031
      %v3147 = vpop.f32.mrf.mxu0
      %v3148 = vadd.f32 0.0, %v3147
      %3149 = vmatmul.f32.gmra.mxu0 %v3034
      %v3150 = vpop.f32.mrf.mxu0
      %v3151 = vadd.f32 0.0, %v3150
      %3152 = vmatmul.f32.gmra.mxu0 %v3037
      %v3153 = vpop.f32.mrf.mxu0
      %v3154 = vadd.f32 0.0, %v3153
      %3155 = vmatmul.f32.gmra.mxu0 %v3040
      %v3156 = vpop.f32.mrf.mxu0
      %v3157 = vadd.f32 0.0, %v3156
      %3158 = vmatmul.f32.gmra.mxu0 %v3043
      %v3159 = vpop.f32.mrf.mxu0
      %v3160 = vadd.f32 0.0, %v3159
      %3161 = vmatmul.f32.gmra.mxu0 %v3046
      %v3162 = vpop.f32.mrf.mxu0
      %v3163 = vadd.f32 0.0, %v3162
      %3164 = vmatmul.f32.gmra.mxu0 %v3049
      %v3165 = vpop.f32.mrf.mxu0
      %v3166 = vadd.f32 0.0, %v3165
      %3167 = vmatmul.f32.gmra.mxu0 %v3052
      %v3168 = vpop.f32.mrf.mxu0
      %v3169 = vadd.f32 0.0, %v3168
      %3170 = vdwg.mxu0
      %v3172 = vsel %vm2802, %v2891, 0
      %v3175 = vsel %vm2802, %v2892, 0
      %v3178 = vsel %vm2802, %v2893, 0
      %v3181 = vsel %vm2802, %v2894, 0
      %v3184 = vsel %vm2802, %v2895, 0
      %v3187 = vsel %vm2802, %v2896, 0
      %v3190 = vsel %vm2802, %v2897, 0
      %v3193 = vsel %vm2802, %v2898, 0
      %v3196 = vsel %vm2802, %v2899, 0
      %v3199 = vsel %vm2802, %v2900, 0
      %v3202 = vsel %vm2802, %v2901, 0
      %v3205 = vsel %vm2802, %v2902, 0
      %v3208 = vsel %vm2802, %v2903, 0
      %v3211 = vsel %vm2802, %v2904, 0
      %v3214 = vsel %vm2802, %v2905, 0
      %v3217 = vsel %vm2802, %v2906, 0
      %v3220 = vsel %vm2802, %v2907, 0
      %v3223 = vsel %vm2802, %v2908, 0
      %v3226 = vsel %vm2802, %v2909, 0
      %v3229 = vsel %vm2802, %v2910, 0
      %v3232 = vsel %vm2802, %v2911, 0
      %v3235 = vsel %vm2802, %v2912, 0
      %v3238 = vsel %vm2802, %v2913, 0
      %v3241 = vsel %vm2802, %v2914, 0
      %v3244 = vsel %vm2802, %v2915, 0
      %v3247 = vsel %vm2802, %v2916, 0
      %v3250 = vsel %vm2802, %v2917, 0
      %v3253 = vsel %vm2802, %v2918, 0
      %v3256 = vsel %vm2802, %v2919, 0
      %v3259 = vsel %vm2802, %v2920, 0
      %v3262 = vsel %vm2802, %v2921, 0
      %v3265 = vsel %vm2802, %v2922, 0
      %v3268 = vsel %vm3054, %v2923, 0
      %3270 = vmatpush.msra.mxu0 0.0
      %3271 = vmatpush.msra.mxu0 0.0
      %3272 = vmatpush.msra.mxu0 0.0
      %3273 = vmatpush.msra.mxu0 0.0
      %3274 = vmatpush.msra.mxu0 0.0
      %3275 = vmatpush.msra.mxu0 0.0
      %3276 = vmatpush.msra.mxu0 0.0
      %3277 = vmatpush.msra.mxu0 0.0
      %3278 = vmatpush.msra.mxu0 0.0
      %3279 = vmatpush.msra.mxu0 0.0
      %3280 = vmatpush.msra.mxu0 0.0
      %3281 = vmatpush.msra.mxu0 0.0
      %3282 = vmatpush.msra.mxu0 0.0
      %3283 = vmatpush.msra.mxu0 0.0
      %3284 = vmatpush.msra.mxu0 0.0
      %3285 = vmatpush.msra.mxu0 %v3268
      %3286 = vmatmul.f32.gmra.mxu0 %v3172
      %v3287 = vpop.f32.mrf.mxu0
      %v3288 = vadd.f32 %v3076, %v3287
      %3289 = vmatmul.f32.gmra.mxu0 %v3175
      %v3290 = vpop.f32.mrf.mxu0
      %v3291 = vadd.f32 %v3079, %v3290
      %3292 = vmatmul.f32.gmra.mxu0 %v3178
      %v3293 = vpop.f32.mrf.mxu0
      %v3294 = vadd.f32 %v3082, %v3293
      %3295 = vmatmul.f32.gmra.mxu0 %v3181
      %v3296 = vpop.f32.mrf.mxu0
      %v3297 = vadd.f32 %v3085, %v3296
      %3298 = vmatmul.f32.gmra.mxu0 %v3184
      %v3299 = vpop.f32.mrf.mxu0
      %v3300 = vadd.f32 %v3088, %v3299
      %3301 = vmatmul.f32.gmra.mxu0 %v3187
      %v3302 = vpop.f32.mrf.mxu0
      %v3303 = vadd.f32 %v3091, %v3302
      %3304 = vmatmul.f32.gmra.mxu0 %v3190
      %v3305 = vpop.f32.mrf.mxu0
      %v3306 = vadd.f32 %v3094, %v3305
      %3307 = vmatmul.f32.gmra.mxu0 %v3193
      %v3308 = vpop.f32.mrf.mxu0
      %v3309 = vadd.f32 %v3097, %v3308
      %3310 = vmatmul.f32.gmra.mxu0 %v3196
      %v3311 = vpop.f32.mrf.mxu0
      %v3312 = vadd.f32 %v3100, %v3311
      %3313 = vmatmul.f32.gmra.mxu0 %v3199
      %v3314 = vpop.f32.mrf.mxu0
      %v3315 = vadd.f32 %v3103, %v3314
      %3316 = vmatmul.f32.gmra.mxu0 %v3202
      %v3317 = vpop.f32.mrf.mxu0
      %v3318 = vadd.f32 %v3106, %v3317
      %3319 = vmatmul.f32.gmra.mxu0 %v3205
      %v3320 = vpop.f32.mrf.mxu0
      %v3321 = vadd.f32 %v3109, %v3320
      %3322 = vmatmul.f32.gmra.mxu0 %v3208
      %v3323 = vpop.f32.mrf.mxu0
      %v3324 = vadd.f32 %v3112, %v3323
      %3325 = vmatmul.f32.gmra.mxu0 %v3211
      %v3326 = vpop.f32.mrf.mxu0
      %v3327 = vadd.f32 %v3115, %v3326
      %3328 = vmatmul.f32.gmra.mxu0 %v3214
      %v3329 = vpop.f32.mrf.mxu0
      %v3330 = vadd.f32 %v3118, %v3329
      %3331 = vmatmul.f32.gmra.mxu0 %v3217
      %v3332 = vpop.f32.mrf.mxu0
      %v3333 = vadd.f32 %v3121, %v3332
      %3334 = vmatmul.f32.gmra.mxu0 %v3220
      %v3335 = vpop.f32.mrf.mxu0
      %v3336 = vadd.f32 %v3124, %v3335
      %3337 = vmatmul.f32.gmra.mxu0 %v3223
      %v3338 = vpop.f32.mrf.mxu0
      %v3339 = vadd.f32 %v3127, %v3338
      %3340 = vmatmul.f32.gmra.mxu0 %v3226
      %v3341 = vpop.f32.mrf.mxu0
      %v3342 = vadd.f32 %v3130, %v3341
      %3343 = vmatmul.f32.gmra.mxu0 %v3229
      %v3344 = vpop.f32.mrf.mxu0
      %v3345 = vadd.f32 %v3133, %v3344
      %3346 = vmatmul.f32.gmra.mxu0 %v3232
      %v3347 = vpop.f32.mrf.mxu0
      %v3348 = vadd.f32 %v3136, %v3347
      %3349 = vmatmul.f32.gmra.mxu0 %v3235
      %v3350 = vpop.f32.mrf.mxu0
      %v3351 = vadd.f32 %v3139, %v3350
      %3352 = vmatmul.f32.gmra.mxu0 %v3238
      %v3353 = vpop.f32.mrf.mxu0
      %v3354 = vadd.f32 %v3142, %v3353
      %3355 = vmatmul.f32.gmra.mxu0 %v3241
      %v3356 = vpop.f32.mrf.mxu0
      %v3357 = vadd.f32 %v3145, %v3356
      %3358 = vmatmul.f32.gmra.mxu0 %v3244
      %v3359 = vpop.f32.mrf.mxu0
      %v3360 = vadd.f32 %v3148, %v3359
      %3361 = vmatmul.f32.gmra.mxu0 %v3247
      %v3362 = vpop.f32.mrf.mxu0
      %v3363 = vadd.f32 %v3151, %v3362
      %3364 = vmatmul.f32.gmra.mxu0 %v3250
      %v3365 = vpop.f32.mrf.mxu0
      %v3366 = vadd.f32 %v3154, %v3365
      %3367 = vmatmul.f32.gmra.mxu0 %v3253
      %v3368 = vpop.f32.mrf.mxu0
      %v3369 = vadd.f32 %v3157, %v3368
      %3370 = vmatmul.f32.gmra.mxu0 %v3256
      %v3371 = vpop.f32.mrf.mxu0
      %v3372 = vadd.f32 %v3160, %v3371
      %3373 = vmatmul.f32.gmra.mxu0 %v3259
      %v3374 = vpop.f32.mrf.mxu0
      %v3375 = vadd.f32 %v3163, %v3374
      %3376 = vmatmul.f32.gmra.mxu0 %v3262
      %v3377 = vpop.f32.mrf.mxu0
      %v3378 = vadd.f32 %v3166, %v3377
      %3379 = vmatmul.f32.gmra.mxu0 %v3265
      %v3380 = vpop.f32.mrf.mxu0
      %v3381 = vadd.f32 %v3169, %v3380
      %3382 = vdwg.mxu0
      %v3383 = vld [vmem:[#allocation2 + $0x2] sm:$0xff]
      %v3384 = vld [vmem:[#allocation2 + $0xa] sm:$0xff]
      %v3385 = vld [vmem:[#allocation2 + $0x1a] sm:$0xff]
      %v3386 = vld [vmem:[#allocation2 + $0x22] sm:$0xff]
      %v3387 = vld [vmem:[#allocation2 + $0x32] sm:$0xff]
      %v3388 = vld [vmem:[#allocation2 + $0x3a] sm:$0xff]
      %v3389 = vld [vmem:[#allocation2 + $0x4a] sm:$0xff]
      %v3390 = vld [vmem:[#allocation2 + $0x52] sm:$0xff]
      %v3391 = vld [vmem:[#allocation2 + $0x62] sm:$0xff]
      %v3392 = vld [vmem:[#allocation2 + $0x6a] sm:$0xff]
      %v3393 = vld [vmem:[#allocation2 + $0x7a] sm:$0xff]
      %v3394 = vld [vmem:[#allocation2 + $0x82] sm:$0xff]
      %v3395 = vld [vmem:[#allocation2 + $0x92] sm:$0xff]
      %v3396 = vld [vmem:[#allocation2 + $0x9a] sm:$0xff]
      %v3397 = vld [vmem:[#allocation2 + $0xaa] sm:$0xff]
      %v3398 = vld [vmem:[#allocation2 + $0xb2] sm:$0xff]
      %v3399 = vld [vmem:[#allocation2 + $0xc2] sm:$0xff]
      %v3400 = vld [vmem:[#allocation2 + $0xca] sm:$0xff]
      %v3401 = vld [vmem:[#allocation2 + $0xda] sm:$0xff]
      %v3402 = vld [vmem:[#allocation2 + $0xe2] sm:$0xff]
      %v3403 = vld [vmem:[#allocation2 + $0xf2] sm:$0xff]
      %v3404 = vld [vmem:[#allocation2 + $0xfa] sm:$0xff]
      %v3405 = vld [vmem:[#allocation2 + $0x10a] sm:$0xff]
      %v3406 = vld [vmem:[#allocation2 + $0x112] sm:$0xff]
      %v3407 = vld [vmem:[#allocation2 + $0x122] sm:$0xff]
      %v3408 = vld [vmem:[#allocation2 + $0x12a] sm:$0xff]
      %v3409 = vld [vmem:[#allocation2 + $0x13a] sm:$0xff]
      %v3410 = vld [vmem:[#allocation2 + $0x142] sm:$0xff]
      %v3411 = vld [vmem:[#allocation2 + $0x152] sm:$0xff]
      %v3412 = vld [vmem:[#allocation2 + $0x15a] sm:$0xff]
      %v3413 = vld [vmem:[#allocation2 + $0x16a] sm:$0xff]
      %v3414 = vld [vmem:[#allocation2 + $0x172] sm:$0xff]
      %s3415 = scalar_lea.vmem %s4, 8
      %v3416 = vld [vmem:[%s3415] sm:$0xf]
      %v3418 = vsel %vm2802, %v3383, 0
      %v3421 = vsel %vm2802, %v3384, 0
      %v3424 = vsel %vm2802, %v3385, 0
      %v3427 = vsel %vm2802, %v3386, 0
      %v3430 = vsel %vm2802, %v3387, 0
      %v3433 = vsel %vm2802, %v3388, 0
      %v3436 = vsel %vm2802, %v3389, 0
      %v3439 = vsel %vm2802, %v3390, 0
      %v3442 = vsel %vm2802, %v3391, 0
      %v3445 = vsel %vm2802, %v3392, 0
      %v3448 = vsel %vm2802, %v3393, 0
      %v3451 = vsel %vm2802, %v3394, 0
      %v3454 = vsel %vm2802, %v3395, 0
      %v3457 = vsel %vm2802, %v3396, 0
      %v3460 = vsel %vm2802, %v3397, 0
      %v3463 = vsel %vm2802, %v3398, 0
      %v3466 = vsel %vm2802, %v3399, 0
      %v3469 = vsel %vm2802, %v3400, 0
      %v3472 = vsel %vm2802, %v3401, 0
      %v3475 = vsel %vm2802, %v3402, 0
      %v3478 = vsel %vm2802, %v3403, 0
      %v3481 = vsel %vm2802, %v3404, 0
      %v3484 = vsel %vm2802, %v3405, 0
      %v3487 = vsel %vm2802, %v3406, 0
      %v3490 = vsel %vm2802, %v3407, 0
      %v3493 = vsel %vm2802, %v3408, 0
      %v3496 = vsel %vm2802, %v3409, 0
      %v3499 = vsel %vm2802, %v3410, 0
      %v3502 = vsel %vm2802, %v3411, 0
      %v3505 = vsel %vm2802, %v3412, 0
      %v3508 = vsel %vm2802, %v3413, 0
      %v3511 = vsel %vm2802, %v3414, 0
      %v3514 = vsel %vm3054, %v3416, 0
      %3516 = vmatpush.msra.mxu0 0.0
      %3517 = vmatpush.msra.mxu0 0.0
      %3518 = vmatpush.msra.mxu0 0.0
      %3519 = vmatpush.msra.mxu0 0.0
      %3520 = vmatpush.msra.mxu0 0.0
      %3521 = vmatpush.msra.mxu0 0.0
      %3522 = vmatpush.msra.mxu0 0.0
      %3523 = vmatpush.msra.mxu0 0.0
      %3524 = vmatpush.msra.mxu0 0.0
      %3525 = vmatpush.msra.mxu0 0.0
      %3526 = vmatpush.msra.mxu0 0.0
      %3527 = vmatpush.msra.mxu0 0.0
      %3528 = vmatpush.msra.mxu0 0.0
      %3529 = vmatpush.msra.mxu0 0.0
      %3530 = vmatpush.msra.mxu0 0.0
      %3531 = vmatpush.msra.mxu0 %v3514
      %3532 = vmatmul.f32.gmra.mxu0 %v3418
      %v3533 = vpop.f32.mrf.mxu0
      %v3534 = vadd.f32 0.0, %v3533
      %3535 = vmatmul.f32.gmra.mxu0 %v3421
      %v3536 = vpop.f32.mrf.mxu0
      %v3537 = vadd.f32 0.0, %v3536
      %3538 = vmatmul.f32.gmra.mxu0 %v3424
      %v3539 = vpop.f32.mrf.mxu0
      %v3540 = vadd.f32 0.0, %v3539
      %3541 = vmatmul.f32.gmra.mxu0 %v3427
      %v3542 = vpop.f32.mrf.mxu0
      %v3543 = vadd.f32 0.0, %v3542
      %3544 = vmatmul.f32.gmra.mxu0 %v3430
      %v3545 = vpop.f32.mrf.mxu0
      %v3546 = vadd.f32 0.0, %v3545
      %3547 = vmatmul.f32.gmra.mxu0 %v3433
      %v3548 = vpop.f32.mrf.mxu0
      %v3549 = vadd.f32 0.0, %v3548
      %3550 = vmatmul.f32.gmra.mxu0 %v3436
      %v3551 = vpop.f32.mrf.mxu0
      %v3552 = vadd.f32 0.0, %v3551
      %3553 = vmatmul.f32.gmra.mxu0 %v3439
      %v3554 = vpop.f32.mrf.mxu0
      %v3555 = vadd.f32 0.0, %v3554
      %3556 = vmatmul.f32.gmra.mxu0 %v3442
      %v3557 = vpop.f32.mrf.mxu0
      %v3558 = vadd.f32 0.0, %v3557
      %3559 = vmatmul.f32.gmra.mxu0 %v3445
      %v3560 = vpop.f32.mrf.mxu0
      %v3561 = vadd.f32 0.0, %v3560
      %3562 = vmatmul.f32.gmra.mxu0 %v3448
      %v3563 = vpop.f32.mrf.mxu0
      %v3564 = vadd.f32 0.0, %v3563
      %3565 = vmatmul.f32.gmra.mxu0 %v3451
      %v3566 = vpop.f32.mrf.mxu0
      %v3567 = vadd.f32 0.0, %v3566
      %3568 = vmatmul.f32.gmra.mxu0 %v3454
      %v3569 = vpop.f32.mrf.mxu0
      %v3570 = vadd.f32 0.0, %v3569
      %3571 = vmatmul.f32.gmra.mxu0 %v3457
      %v3572 = vpop.f32.mrf.mxu0
      %v3573 = vadd.f32 0.0, %v3572
      %3574 = vmatmul.f32.gmra.mxu0 %v3460
      %v3575 = vpop.f32.mrf.mxu0
      %v3576 = vadd.f32 0.0, %v3575
      %3577 = vmatmul.f32.gmra.mxu0 %v3463
      %v3578 = vpop.f32.mrf.mxu0
      %v3579 = vadd.f32 0.0, %v3578
      %3580 = vmatmul.f32.gmra.mxu0 %v3466
      %v3581 = vpop.f32.mrf.mxu0
      %v3582 = vadd.f32 0.0, %v3581
      %3583 = vmatmul.f32.gmra.mxu0 %v3469
      %v3584 = vpop.f32.mrf.mxu0
      %v3585 = vadd.f32 0.0, %v3584
      %3586 = vmatmul.f32.gmra.mxu0 %v3472
      %v3587 = vpop.f32.mrf.mxu0
      %v3588 = vadd.f32 0.0, %v3587
      %3589 = vmatmul.f32.gmra.mxu0 %v3475
      %v3590 = vpop.f32.mrf.mxu0
      %v3591 = vadd.f32 0.0, %v3590
      %3592 = vmatmul.f32.gmra.mxu0 %v3478
      %v3593 = vpop.f32.mrf.mxu0
      %v3594 = vadd.f32 0.0, %v3593
      %3595 = vmatmul.f32.gmra.mxu0 %v3481
      %v3596 = vpop.f32.mrf.mxu0
      %v3597 = vadd.f32 0.0, %v3596
      %3598 = vmatmul.f32.gmra.mxu0 %v3484
      %v3599 = vpop.f32.mrf.mxu0
      %v3600 = vadd.f32 0.0, %v3599
      %3601 = vmatmul.f32.gmra.mxu0 %v3487
      %v3602 = vpop.f32.mrf.mxu0
      %v3603 = vadd.f32 0.0, %v3602
      %3604 = vmatmul.f32.gmra.mxu0 %v3490
      %v3605 = vpop.f32.mrf.mxu0
      %v3606 = vadd.f32 0.0, %v3605
      %3607 = vmatmul.f32.gmra.mxu0 %v3493
      %v3608 = vpop.f32.mrf.mxu0
      %v3609 = vadd.f32 0.0, %v3608
      %3610 = vmatmul.f32.gmra.mxu0 %v3496
      %v3611 = vpop.f32.mrf.mxu0
      %v3612 = vadd.f32 0.0, %v3611
      %3613 = vmatmul.f32.gmra.mxu0 %v3499
      %v3614 = vpop.f32.mrf.mxu0
      %v3615 = vadd.f32 0.0, %v3614
      %3616 = vmatmul.f32.gmra.mxu0 %v3502
      %v3617 = vpop.f32.mrf.mxu0
      %v3618 = vadd.f32 0.0, %v3617
      %3619 = vmatmul.f32.gmra.mxu0 %v3505
      %v3620 = vpop.f32.mrf.mxu0
      %v3621 = vadd.f32 0.0, %v3620
      %3622 = vmatmul.f32.gmra.mxu0 %v3508
      %v3623 = vpop.f32.mrf.mxu0
      %v3624 = vadd.f32 0.0, %v3623
      %3625 = vmatmul.f32.gmra.mxu0 %v3511
      %v3626 = vpop.f32.mrf.mxu0
      %v3627 = vadd.f32 0.0, %v3626
      %3628 = vdwg.mxu0
      %v3629 = vadd.f32 %v3288, %v3534
      %v3630 = vadd.f32 %v3291, %v3537
      %v3631 = vadd.f32 %v3294, %v3540
      %v3632 = vadd.f32 %v3297, %v3543
      %v3633 = vadd.f32 %v3300, %v3546
      %v3634 = vadd.f32 %v3303, %v3549
      %v3635 = vadd.f32 %v3306, %v3552
      %v3636 = vadd.f32 %v3309, %v3555
      %v3637 = vadd.f32 %v3312, %v3558
      %v3638 = vadd.f32 %v3315, %v3561
      %v3639 = vadd.f32 %v3318, %v3564
      %v3640 = vadd.f32 %v3321, %v3567
      %v3641 = vadd.f32 %v3324, %v3570
      %v3642 = vadd.f32 %v3327, %v3573
      %v3643 = vadd.f32 %v3330, %v3576
      %v3644 = vadd.f32 %v3333, %v3579
      %v3645 = vadd.f32 %v3336, %v3582
      %v3646 = vadd.f32 %v3339, %v3585
      %v3647 = vadd.f32 %v3342, %v3588
      %v3648 = vadd.f32 %v3345, %v3591
      %v3649 = vadd.f32 %v3348, %v3594
      %v3650 = vadd.f32 %v3351, %v3597
      %v3651 = vadd.f32 %v3354, %v3600
      %v3652 = vadd.f32 %v3357, %v3603
      %v3653 = vadd.f32 %v3360, %v3606
      %v3654 = vadd.f32 %v3363, %v3609
      %v3655 = vadd.f32 %v3366, %v3612
      %v3656 = vadd.f32 %v3369, %v3615
      %v3657 = vadd.f32 %v3372, %v3618
      %v3658 = vadd.f32 %v3375, %v3621
      %v3659 = vadd.f32 %v3378, %v3624
      %v3660 = vadd.f32 %v3381, %v3627
      %v3661 = vld [vmem:[%s2858] sm:$0xff]
      %v3662 = vld [vmem:[%s2858 + $0x8] sm:$0xff]
      %v3663 = vld [vmem:[%s2858 + $0x18] sm:$0xff]
      %v3664 = vld [vmem:[%s2858 + $0x20] sm:$0xff]
      %v3665 = vld [vmem:[%s2858 + $0x30] sm:$0xff]
      %v3666 = vld [vmem:[%s2858 + $0x38] sm:$0xff]
      %v3667 = vld [vmem:[%s2858 + $0x48] sm:$0xff]
      %v3668 = vld [vmem:[%s2858 + $0x50] sm:$0xff]
      %v3669 = vld [vmem:[%s2858 + $0x60] sm:$0xff]
      %v3670 = vld [vmem:[%s2858 + $0x68] sm:$0xff]
      %v3671 = vld [vmem:[%s2858 + $0x78] sm:$0xff]
      %v3672 = vld [vmem:[%s2858 + $0x80] sm:$0xff]
      %v3673 = vld [vmem:[%s2858 + $0x90] sm:$0xff]
      %v3674 = vld [vmem:[%s2858 + $0x98] sm:$0xff]
      %v3675 = vld [vmem:[%s2858 + $0xa8] sm:$0xff]
      %v3676 = vld [vmem:[%s2858 + $0xb0] sm:$0xff]
      %v3677 = vld [vmem:[%s2858 + $0xc0] sm:$0xff]
      %v3678 = vld [vmem:[%s2858 + $0xc8] sm:$0xff]
      %v3679 = vld [vmem:[%s2858 + $0xd8] sm:$0xff]
      %v3680 = vld [vmem:[%s2858 + $0xe0] sm:$0xff]
      %v3681 = vld [vmem:[%s2858 + $0xf0] sm:$0xff]
      %v3682 = vld [vmem:[%s2858 + $0xf8] sm:$0xff]
      %v3683 = vld [vmem:[%s2858 + $0x108] sm:$0xff]
      %v3684 = vld [vmem:[%s2858 + $0x110] sm:$0xff]
      %v3685 = vld [vmem:[%s2858 + $0x120] sm:$0xff]
      %v3686 = vld [vmem:[%s2858 + $0x128] sm:$0xff]
      %v3687 = vld [vmem:[%s2858 + $0x138] sm:$0xff]
      %v3688 = vld [vmem:[%s2858 + $0x140] sm:$0xff]
      %v3689 = vld [vmem:[%s2858 + $0x150] sm:$0xff]
      %v3690 = vld [vmem:[%s2858 + $0x158] sm:$0xff]
      %v3691 = vld [vmem:[%s2858 + $0x168] sm:$0xff]
      %v3692 = vld [vmem:[%s2858 + $0x170] sm:$0xff]
      %s3693 = scalar_lea.vmem %s4, 12
      %v3694 = vld [vmem:[%s3693] sm:$0xf]
      %v3696 = vsel %vm2802, %v3661, 0
      %v3699 = vsel %vm2802, %v3662, 0
      %v3702 = vsel %vm2802, %v3663, 0
      %v3705 = vsel %vm2802, %v3664, 0
      %v3708 = vsel %vm2802, %v3665, 0
      %v3711 = vsel %vm2802, %v3666, 0
      %v3714 = vsel %vm2802, %v3667, 0
      %v3717 = vsel %vm2802, %v3668, 0
      %v3720 = vsel %vm2802, %v3669, 0
      %v3723 = vsel %vm2802, %v3670, 0
      %v3726 = vsel %vm2802, %v3671, 0
      %v3729 = vsel %vm2802, %v3672, 0
      %v3732 = vsel %vm2802, %v3673, 0
      %v3735 = vsel %vm2802, %v3674, 0
      %v3738 = vsel %vm2802, %v3675, 0
      %v3741 = vsel %vm2802, %v3676, 0
      %v3744 = vsel %vm2802, %v3677, 0
      %v3747 = vsel %vm2802, %v3678, 0
      %v3750 = vsel %vm2802, %v3679, 0
      %v3753 = vsel %vm2802, %v3680, 0
      %v3756 = vsel %vm2802, %v3681, 0
      %v3759 = vsel %vm2802, %v3682, 0
      %v3762 = vsel %vm2802, %v3683, 0
      %v3765 = vsel %vm2802, %v3684, 0
      %v3768 = vsel %vm2802, %v3685, 0
      %v3771 = vsel %vm2802, %v3686, 0
      %v3774 = vsel %vm2802, %v3687, 0
      %v3777 = vsel %vm2802, %v3688, 0
      %v3780 = vsel %vm2802, %v3689, 0
      %v3783 = vsel %vm2802, %v3690, 0
      %v3786 = vsel %vm2802, %v3691, 0
      %v3789 = vsel %vm2802, %v3692, 0
      %v3792 = vsel %vm3054, %v3694, 0
      %3794 = vmatpush.msra.mxu0 0.0
      %3795 = vmatpush.msra.mxu0 0.0
      %3796 = vmatpush.msra.mxu0 0.0
      %3797 = vmatpush.msra.mxu0 0.0
      %3798 = vmatpush.msra.mxu0 0.0
      %3799 = vmatpush.msra.mxu0 0.0
      %3800 = vmatpush.msra.mxu0 0.0
      %3801 = vmatpush.msra.mxu0 0.0
      %3802 = vmatpush.msra.mxu0 0.0
      %3803 = vmatpush.msra.mxu0 0.0
      %3804 = vmatpush.msra.mxu0 0.0
      %3805 = vmatpush.msra.mxu0 0.0
      %3806 = vmatpush.msra.mxu0 0.0
      %3807 = vmatpush.msra.mxu0 0.0
      %3808 = vmatpush.msra.mxu0 0.0
      %3809 = vmatpush.msra.mxu0 %v3792
      %3810 = vmatmul.f32.gmra.mxu0 %v3696
      %v3811 = vpop.f32.mrf.mxu0
      %v3812 = vadd.f32 0.0, %v3811
      %3813 = vmatmul.f32.gmra.mxu0 %v3699
      %v3814 = vpop.f32.mrf.mxu0
      %v3815 = vadd.f32 0.0, %v3814
      %3816 = vmatmul.f32.gmra.mxu0 %v3702
      %v3817 = vpop.f32.mrf.mxu0
      %v3818 = vadd.f32 0.0, %v3817
      %3819 = vmatmul.f32.gmra.mxu0 %v3705
      %v3820 = vpop.f32.mrf.mxu0
      %v3821 = vadd.f32 0.0, %v3820
      %3822 = vmatmul.f32.gmra.mxu0 %v3708
      %v3823 = vpop.f32.mrf.mxu0
      %v3824 = vadd.f32 0.0, %v3823
      %3825 = vmatmul.f32.gmra.mxu0 %v3711
      %v3826 = vpop.f32.mrf.mxu0
      %v3827 = vadd.f32 0.0, %v3826
      %3828 = vmatmul.f32.gmra.mxu0 %v3714
      %v3829 = vpop.f32.mrf.mxu0
      %v3830 = vadd.f32 0.0, %v3829
      %3831 = vmatmul.f32.gmra.mxu0 %v3717
      %v3832 = vpop.f32.mrf.mxu0
      %v3833 = vadd.f32 0.0, %v3832
      %3834 = vmatmul.f32.gmra.mxu0 %v3720
      %v3835 = vpop.f32.mrf.mxu0
      %v3836 = vadd.f32 0.0, %v3835
      %3837 = vmatmul.f32.gmra.mxu0 %v3723
      %v3838 = vpop.f32.mrf.mxu0
      %v3839 = vadd.f32 0.0, %v3838
      %3840 = vmatmul.f32.gmra.mxu0 %v3726
      %v3841 = vpop.f32.mrf.mxu0
      %v3842 = vadd.f32 0.0, %v3841
      %3843 = vmatmul.f32.gmra.mxu0 %v3729
      %v3844 = vpop.f32.mrf.mxu0
      %v3845 = vadd.f32 0.0, %v3844
      %3846 = vmatmul.f32.gmra.mxu0 %v3732
      %v3847 = vpop.f32.mrf.mxu0
      %v3848 = vadd.f32 0.0, %v3847
      %3849 = vmatmul.f32.gmra.mxu0 %v3735
      %v3850 = vpop.f32.mrf.mxu0
      %v3851 = vadd.f32 0.0, %v3850
      %3852 = vmatmul.f32.gmra.mxu0 %v3738
      %v3853 = vpop.f32.mrf.mxu0
      %v3854 = vadd.f32 0.0, %v3853
      %3855 = vmatmul.f32.gmra.mxu0 %v3741
      %v3856 = vpop.f32.mrf.mxu0
      %v3857 = vadd.f32 0.0, %v3856
      %3858 = vmatmul.f32.gmra.mxu0 %v3744
      %v3859 = vpop.f32.mrf.mxu0
      %v3860 = vadd.f32 0.0, %v3859
      %3861 = vmatmul.f32.gmra.mxu0 %v3747
      %v3862 = vpop.f32.mrf.mxu0
      %v3863 = vadd.f32 0.0, %v3862
      %3864 = vmatmul.f32.gmra.mxu0 %v3750
      %v3865 = vpop.f32.mrf.mxu0
      %v3866 = vadd.f32 0.0, %v3865
      %3867 = vmatmul.f32.gmra.mxu0 %v3753
      %v3868 = vpop.f32.mrf.mxu0
      %v3869 = vadd.f32 0.0, %v3868
      %3870 = vmatmul.f32.gmra.mxu0 %v3756
      %v3871 = vpop.f32.mrf.mxu0
      %v3872 = vadd.f32 0.0, %v3871
      %3873 = vmatmul.f32.gmra.mxu0 %v3759
      %v3874 = vpop.f32.mrf.mxu0
      %v3875 = vadd.f32 0.0, %v3874
      %3876 = vmatmul.f32.gmra.mxu0 %v3762
      %v3877 = vpop.f32.mrf.mxu0
      %v3878 = vadd.f32 0.0, %v3877
      %3879 = vmatmul.f32.gmra.mxu0 %v3765
      %v3880 = vpop.f32.mrf.mxu0
      %v3881 = vadd.f32 0.0, %v3880
      %3882 = vmatmul.f32.gmra.mxu0 %v3768
      %v3883 = vpop.f32.mrf.mxu0
      %v3884 = vadd.f32 0.0, %v3883
      %3885 = vmatmul.f32.gmra.mxu0 %v3771
      %v3886 = vpop.f32.mrf.mxu0
      %v3887 = vadd.f32 0.0, %v3886
      %3888 = vmatmul.f32.gmra.mxu0 %v3774
      %v3889 = vpop.f32.mrf.mxu0
      %v3890 = vadd.f32 0.0, %v3889
      %3891 = vmatmul.f32.gmra.mxu0 %v3777
      %v3892 = vpop.f32.mrf.mxu0
      %v3893 = vadd.f32 0.0, %v3892
      %3894 = vmatmul.f32.gmra.mxu0 %v3780
      %v3895 = vpop.f32.mrf.mxu0
      %v3896 = vadd.f32 0.0, %v3895
      %3897 = vmatmul.f32.gmra.mxu0 %v3783
      %v3898 = vpop.f32.mrf.mxu0
      %v3899 = vadd.f32 0.0, %v3898
      %3900 = vmatmul.f32.gmra.mxu0 %v3786
      %v3901 = vpop.f32.mrf.mxu0
      %v3902 = vadd.f32 0.0, %v3901
      %3903 = vmatmul.f32.gmra.mxu0 %v3789
      %v3904 = vpop.f32.mrf.mxu0
      %v3905 = vadd.f32 0.0, %v3904
      %3906 = vdwg.mxu0
      %v3907 = vadd.f32 %v3629, %v3812
      %v3908 = vadd.f32 %v3630, %v3815
      %v3909 = vadd.f32 %v3631, %v3818
      %v3910 = vadd.f32 %v3632, %v3821
      %v3911 = vadd.f32 %v3633, %v3824
      %v3912 = vadd.f32 %v3634, %v3827
      %v3913 = vadd.f32 %v3635, %v3830
      %v3914 = vadd.f32 %v3636, %v3833
      %v3915 = vadd.f32 %v3637, %v3836
      %v3916 = vadd.f32 %v3638, %v3839
      %v3917 = vadd.f32 %v3639, %v3842
      %v3918 = vadd.f32 %v3640, %v3845
      %v3919 = vadd.f32 %v3641, %v3848
      %v3920 = vadd.f32 %v3642, %v3851
      %v3921 = vadd.f32 %v3643, %v3854
      %v3922 = vadd.f32 %v3644, %v3857
      %v3923 = vadd.f32 %v3645, %v3860
      %v3924 = vadd.f32 %v3646, %v3863
      %v3925 = vadd.f32 %v3647, %v3866
      %v3926 = vadd.f32 %v3648, %v3869
      %v3927 = vadd.f32 %v3649, %v3872
      %v3928 = vadd.f32 %v3650, %v3875
      %v3929 = vadd.f32 %v3651, %v3878
      %v3930 = vadd.f32 %v3652, %v3881
      %v3931 = vadd.f32 %v3653, %v3884
      %v3932 = vadd.f32 %v3654, %v3887
      %v3933 = vadd.f32 %v3655, %v3890
      %v3934 = vadd.f32 %v3656, %v3893
      %v3935 = vadd.f32 %v3657, %v3896
      %v3936 = vadd.f32 %v3658, %v3899
      %v3937 = vadd.f32 %v3659, %v3902
      %v3938 = vadd.f32 %v3660, %v3905
      %v3939 = vld [vmem:[%s2858 + $0x1] sm:$0xff]
      %v3940 = vld [vmem:[%s2858 + $0x9] sm:$0xff]
      %v3941 = vld [vmem:[%s2858 + $0x19] sm:$0xff]
      %v3942 = vld [vmem:[%s2858 + $0x21] sm:$0xff]
      %v3943 = vld [vmem:[%s2858 + $0x31] sm:$0xff]
      %v3944 = vld [vmem:[%s2858 + $0x39] sm:$0xff]
      %v3945 = vld [vmem:[%s2858 + $0x49] sm:$0xff]
      %v3946 = vld [vmem:[%s2858 + $0x51] sm:$0xff]
      %v3947 = vld [vmem:[%s2858 + $0x61] sm:$0xff]
      %v3948 = vld [vmem:[%s2858 + $0x69] sm:$0xff]
      %v3949 = vld [vmem:[%s2858 + $0x79] sm:$0xff]
      %v3950 = vld [vmem:[%s2858 + $0x81] sm:$0xff]
      %v3951 = vld [vmem:[%s2858 + $0x91] sm:$0xff]
      %v3952 = vld [vmem:[%s2858 + $0x99] sm:$0xff]
      %v3953 = vld [vmem:[%s2858 + $0xa9] sm:$0xff]
      %v3954 = vld [vmem:[%s2858 + $0xb1] sm:$0xff]
      %v3955 = vld [vmem:[%s2858 + $0xc1] sm:$0xff]
      %v3956 = vld [vmem:[%s2858 + $0xc9] sm:$0xff]
      %v3957 = vld [vmem:[%s2858 + $0xd9] sm:$0xff]
      %v3958 = vld [vmem:[%s2858 + $0xe1] sm:$0xff]
      %v3959 = vld [vmem:[%s2858 + $0xf1] sm:$0xff]
      %v3960 = vld [vmem:[%s2858 + $0xf9] sm:$0xff]
      %v3961 = vld [vmem:[%s2858 + $0x109] sm:$0xff]
      %v3962 = vld [vmem:[%s2858 + $0x111] sm:$0xff]
      %v3963 = vld [vmem:[%s2858 + $0x121] sm:$0xff]
      %v3964 = vld [vmem:[%s2858 + $0x129] sm:$0xff]
      %v3965 = vld [vmem:[%s2858 + $0x139] sm:$0xff]
      %v3966 = vld [vmem:[%s2858 + $0x141] sm:$0xff]
      %v3967 = vld [vmem:[%s2858 + $0x151] sm:$0xff]
      %v3968 = vld [vmem:[%s2858 + $0x159] sm:$0xff]
      %v3969 = vld [vmem:[%s2858 + $0x169] sm:$0xff]
      %v3970 = vld [vmem:[%s2858 + $0x171] sm:$0xff]
      %s3971 = scalar_lea.vmem %s4, 16
      %v3972 = vld [vmem:[%s3971] sm:$0xf]
      %v3974 = vsel %vm2802, %v3939, 0
      %v3977 = vsel %vm2802, %v3940, 0
      %v3980 = vsel %vm2802, %v3941, 0
      %v3983 = vsel %vm2802, %v3942, 0
      %v3986 = vsel %vm2802, %v3943, 0
      %v3989 = vsel %vm2802, %v3944, 0
      %v3992 = vsel %vm2802, %v3945, 0
      %v3995 = vsel %vm2802, %v3946, 0
      %v3998 = vsel %vm2802, %v3947, 0
      %v4001 = vsel %vm2802, %v3948, 0
      %v4004 = vsel %vm2802, %v3949, 0
      %v4007 = vsel %vm2802, %v3950, 0
      %v4010 = vsel %vm2802, %v3951, 0
      %v4013 = vsel %vm2802, %v3952, 0
      %v4016 = vsel %vm2802, %v3953, 0
      %v4019 = vsel %vm2802, %v3954, 0
      %v4022 = vsel %vm2802, %v3955, 0
      %v4025 = vsel %vm2802, %v3956, 0
      %v4028 = vsel %vm2802, %v3957, 0
      %v4031 = vsel %vm2802, %v3958, 0
      %v4034 = vsel %vm2802, %v3959, 0
      %v4037 = vsel %vm2802, %v3960, 0
      %v4040 = vsel %vm2802, %v3961, 0
      %v4043 = vsel %vm2802, %v3962, 0
      %v4046 = vsel %vm2802, %v3963, 0
      %v4049 = vsel %vm2802, %v3964, 0
      %v4052 = vsel %vm2802, %v3965, 0
      %v4055 = vsel %vm2802, %v3966, 0
      %v4058 = vsel %vm2802, %v3967, 0
      %v4061 = vsel %vm2802, %v3968, 0
      %v4064 = vsel %vm2802, %v3969, 0
      %v4067 = vsel %vm2802, %v3970, 0
      %v4070 = vsel %vm3054, %v3972, 0
      %4072 = vmatpush.msra.mxu0 0.0
      %4073 = vmatpush.msra.mxu0 0.0
      %4074 = vmatpush.msra.mxu0 0.0
      %4075 = vmatpush.msra.mxu0 0.0
      %4076 = vmatpush.msra.mxu0 0.0
      %4077 = vmatpush.msra.mxu0 0.0
      %4078 = vmatpush.msra.mxu0 0.0
      %4079 = vmatpush.msra.mxu0 0.0
      %4080 = vmatpush.msra.mxu0 0.0
      %4081 = vmatpush.msra.mxu0 0.0
      %4082 = vmatpush.msra.mxu0 0.0
      %4083 = vmatpush.msra.mxu0 0.0
      %4084 = vmatpush.msra.mxu0 0.0
      %4085 = vmatpush.msra.mxu0 0.0
      %4086 = vmatpush.msra.mxu0 0.0
      %4087 = vmatpush.msra.mxu0 %v4070
      %4088 = vmatmul.f32.gmra.mxu0 %v3974
      %v4089 = vpop.f32.mrf.mxu0
      %v4090 = vadd.f32 0.0, %v4089
      %4091 = vmatmul.f32.gmra.mxu0 %v3977
      %v4092 = vpop.f32.mrf.mxu0
      %v4093 = vadd.f32 0.0, %v4092
      %4094 = vmatmul.f32.gmra.mxu0 %v3980
      %v4095 = vpop.f32.mrf.mxu0
      %v4096 = vadd.f32 0.0, %v4095
      %4097 = vmatmul.f32.gmra.mxu0 %v3983
      %v4098 = vpop.f32.mrf.mxu0
      %v4099 = vadd.f32 0.0, %v4098
      %4100 = vmatmul.f32.gmra.mxu0 %v3986
      %v4101 = vpop.f32.mrf.mxu0
      %v4102 = vadd.f32 0.0, %v4101
      %4103 = vmatmul.f32.gmra.mxu0 %v3989
      %v4104 = vpop.f32.mrf.mxu0
      %v4105 = vadd.f32 0.0, %v4104
      %4106 = vmatmul.f32.gmra.mxu0 %v3992
      %v4107 = vpop.f32.mrf.mxu0
      %v4108 = vadd.f32 0.0, %v4107
      %4109 = vmatmul.f32.gmra.mxu0 %v3995
      %v4110 = vpop.f32.mrf.mxu0
      %v4111 = vadd.f32 0.0, %v4110
      %4112 = vmatmul.f32.gmra.mxu0 %v3998
      %v4113 = vpop.f32.mrf.mxu0
      %v4114 = vadd.f32 0.0, %v4113
      %4115 = vmatmul.f32.gmra.mxu0 %v4001
      %v4116 = vpop.f32.mrf.mxu0
      %v4117 = vadd.f32 0.0, %v4116
      %4118 = vmatmul.f32.gmra.mxu0 %v4004
      %v4119 = vpop.f32.mrf.mxu0
      %v4120 = vadd.f32 0.0, %v4119
      %4121 = vmatmul.f32.gmra.mxu0 %v4007
      %v4122 = vpop.f32.mrf.mxu0
      %v4123 = vadd.f32 0.0, %v4122
      %4124 = vmatmul.f32.gmra.mxu0 %v4010
      %v4125 = vpop.f32.mrf.mxu0
      %v4126 = vadd.f32 0.0, %v4125
      %4127 = vmatmul.f32.gmra.mxu0 %v4013
      %v4128 = vpop.f32.mrf.mxu0
      %v4129 = vadd.f32 0.0, %v4128
      %4130 = vmatmul.f32.gmra.mxu0 %v4016
      %v4131 = vpop.f32.mrf.mxu0
      %v4132 = vadd.f32 0.0, %v4131
      %4133 = vmatmul.f32.gmra.mxu0 %v4019
      %v4134 = vpop.f32.mrf.mxu0
      %v4135 = vadd.f32 0.0, %v4134
      %4136 = vmatmul.f32.gmra.mxu0 %v4022
      %v4137 = vpop.f32.mrf.mxu0
      %v4138 = vadd.f32 0.0, %v4137
      %4139 = vmatmul.f32.gmra.mxu0 %v4025
      %v4140 = vpop.f32.mrf.mxu0
      %v4141 = vadd.f32 0.0, %v4140
      %4142 = vmatmul.f32.gmra.mxu0 %v4028
      %v4143 = vpop.f32.mrf.mxu0
      %v4144 = vadd.f32 0.0, %v4143
      %4145 = vmatmul.f32.gmra.mxu0 %v4031
      %v4146 = vpop.f32.mrf.mxu0
      %v4147 = vadd.f32 0.0, %v4146
      %4148 = vmatmul.f32.gmra.mxu0 %v4034
      %v4149 = vpop.f32.mrf.mxu0
      %v4150 = vadd.f32 0.0, %v4149
      %4151 = vmatmul.f32.gmra.mxu0 %v4037
      %v4152 = vpop.f32.mrf.mxu0
      %v4153 = vadd.f32 0.0, %v4152
      %4154 = vmatmul.f32.gmra.mxu0 %v4040
      %v4155 = vpop.f32.mrf.mxu0
      %v4156 = vadd.f32 0.0, %v4155
      %4157 = vmatmul.f32.gmra.mxu0 %v4043
      %v4158 = vpop.f32.mrf.mxu0
      %v4159 = vadd.f32 0.0, %v4158
      %4160 = vmatmul.f32.gmra.mxu0 %v4046
      %v4161 = vpop.f32.mrf.mxu0
      %v4162 = vadd.f32 0.0, %v4161
      %4163 = vmatmul.f32.gmra.mxu0 %v4049
      %v4164 = vpop.f32.mrf.mxu0
      %v4165 = vadd.f32 0.0, %v4164
      %4166 = vmatmul.f32.gmra.mxu0 %v4052
      %v4167 = vpop.f32.mrf.mxu0
      %v4168 = vadd.f32 0.0, %v4167
      %4169 = vmatmul.f32.gmra.mxu0 %v4055
      %v4170 = vpop.f32.mrf.mxu0
      %v4171 = vadd.f32 0.0, %v4170
      %4172 = vmatmul.f32.gmra.mxu0 %v4058
      %v4173 = vpop.f32.mrf.mxu0
      %v4174 = vadd.f32 0.0, %v4173
      %4175 = vmatmul.f32.gmra.mxu0 %v4061
      %v4176 = vpop.f32.mrf.mxu0
      %v4177 = vadd.f32 0.0, %v4176
      %4178 = vmatmul.f32.gmra.mxu0 %v4064
      %v4179 = vpop.f32.mrf.mxu0
      %v4180 = vadd.f32 0.0, %v4179
      %4181 = vmatmul.f32.gmra.mxu0 %v4067
      %v4182 = vpop.f32.mrf.mxu0
      %v4183 = vadd.f32 0.0, %v4182
      %4184 = vdwg.mxu0
      %v4185 = vadd.f32 %v3907, %v4090
      %v4186 = vadd.f32 %v3908, %v4093
      %v4187 = vadd.f32 %v3909, %v4096
      %v4188 = vadd.f32 %v3910, %v4099
      %v4189 = vadd.f32 %v3911, %v4102
      %v4190 = vadd.f32 %v3912, %v4105
      %v4191 = vadd.f32 %v3913, %v4108
      %v4192 = vadd.f32 %v3914, %v4111
      %v4193 = vadd.f32 %v3915, %v4114
      %v4194 = vadd.f32 %v3916, %v4117
      %v4195 = vadd.f32 %v3917, %v4120
      %v4196 = vadd.f32 %v3918, %v4123
      %v4197 = vadd.f32 %v3919, %v4126
      %v4198 = vadd.f32 %v3920, %v4129
      %v4199 = vadd.f32 %v3921, %v4132
      %v4200 = vadd.f32 %v3922, %v4135
      %v4201 = vadd.f32 %v3923, %v4138
      %v4202 = vadd.f32 %v3924, %v4141
      %v4203 = vadd.f32 %v3925, %v4144
      %v4204 = vadd.f32 %v3926, %v4147
      %v4205 = vadd.f32 %v3927, %v4150
      %v4206 = vadd.f32 %v3928, %v4153
      %v4207 = vadd.f32 %v3929, %v4156
      %v4208 = vadd.f32 %v3930, %v4159
      %v4209 = vadd.f32 %v3931, %v4162
      %v4210 = vadd.f32 %v3932, %v4165
      %v4211 = vadd.f32 %v3933, %v4168
      %v4212 = vadd.f32 %v3934, %v4171
      %v4213 = vadd.f32 %v3935, %v4174
      %v4214 = vadd.f32 %v3936, %v4177
      %v4215 = vadd.f32 %v3937, %v4180
      %v4216 = vadd.f32 %v3938, %v4183
      %v4217 = vld [vmem:[%s2858 + $0x2] sm:$0xff]
      %v4218 = vld [vmem:[%s2858 + $0xa] sm:$0xff]
      %v4219 = vld [vmem:[%s2858 + $0x1a] sm:$0xff]
      %v4220 = vld [vmem:[%s2858 + $0x22] sm:$0xff]
      %v4221 = vld [vmem:[%s2858 + $0x32] sm:$0xff]
      %v4222 = vld [vmem:[%s2858 + $0x3a] sm:$0xff]
      %v4223 = vld [vmem:[%s2858 + $0x4a] sm:$0xff]
      %v4224 = vld [vmem:[%s2858 + $0x52] sm:$0xff]
      %v4225 = vld [vmem:[%s2858 + $0x62] sm:$0xff]
      %v4226 = vld [vmem:[%s2858 + $0x6a] sm:$0xff]
      %v4227 = vld [vmem:[%s2858 + $0x7a] sm:$0xff]
      %v4228 = vld [vmem:[%s2858 + $0x82] sm:$0xff]
      %v4229 = vld [vmem:[%s2858 + $0x92] sm:$0xff]
      %v4230 = vld [vmem:[%s2858 + $0x9a] sm:$0xff]
      %v4231 = vld [vmem:[%s2858 + $0xaa] sm:$0xff]
      %v4232 = vld [vmem:[%s2858 + $0xb2] sm:$0xff]
      %v4233 = vld [vmem:[%s2858 + $0xc2] sm:$0xff]
      %v4234 = vld [vmem:[%s2858 + $0xca] sm:$0xff]
      %v4235 = vld [vmem:[%s2858 + $0xda] sm:$0xff]
      %v4236 = vld [vmem:[%s2858 + $0xe2] sm:$0xff]
      %v4237 = vld [vmem:[%s2858 + $0xf2] sm:$0xff]
      %v4238 = vld [vmem:[%s2858 + $0xfa] sm:$0xff]
      %v4239 = vld [vmem:[%s2858 + $0x10a] sm:$0xff]
      %v4240 = vld [vmem:[%s2858 + $0x112] sm:$0xff]
      %v4241 = vld [vmem:[%s2858 + $0x122] sm:$0xff]
      %v4242 = vld [vmem:[%s2858 + $0x12a] sm:$0xff]
      %v4243 = vld [vmem:[%s2858 + $0x13a] sm:$0xff]
      %v4244 = vld [vmem:[%s2858 + $0x142] sm:$0xff]
      %v4245 = vld [vmem:[%s2858 + $0x152] sm:$0xff]
      %v4246 = vld [vmem:[%s2858 + $0x15a] sm:$0xff]
      %v4247 = vld [vmem:[%s2858 + $0x16a] sm:$0xff]
      %v4248 = vld [vmem:[%s2858 + $0x172] sm:$0xff]
      %s4249 = scalar_lea.vmem %s4, 20
      %v4250 = vld [vmem:[%s4249] sm:$0xf]
      %v4252 = vsel %vm2802, %v4217, 0
      %v4255 = vsel %vm2802, %v4218, 0
      %v4258 = vsel %vm2802, %v4219, 0
      %v4261 = vsel %vm2802, %v4220, 0
      %v4264 = vsel %vm2802, %v4221, 0
      %v4267 = vsel %vm2802, %v4222, 0
      %v4270 = vsel %vm2802, %v4223, 0
      %v4273 = vsel %vm2802, %v4224, 0
      %v4276 = vsel %vm2802, %v4225, 0
      %v4279 = vsel %vm2802, %v4226, 0
      %v4282 = vsel %vm2802, %v4227, 0
      %v4285 = vsel %vm2802, %v4228, 0
      %v4288 = vsel %vm2802, %v4229, 0
      %v4291 = vsel %vm2802, %v4230, 0
      %v4294 = vsel %vm2802, %v4231, 0
      %v4297 = vsel %vm2802, %v4232, 0
      %v4300 = vsel %vm2802, %v4233, 0
      %v4303 = vsel %vm2802, %v4234, 0
      %v4306 = vsel %vm2802, %v4235, 0
      %v4309 = vsel %vm2802, %v4236, 0
      %v4312 = vsel %vm2802, %v4237, 0
      %v4315 = vsel %vm2802, %v4238, 0
      %v4318 = vsel %vm2802, %v4239, 0
      %v4321 = vsel %vm2802, %v4240, 0
      %v4324 = vsel %vm2802, %v4241, 0
      %v4327 = vsel %vm2802, %v4242, 0
      %v4330 = vsel %vm2802, %v4243, 0
      %v4333 = vsel %vm2802, %v4244, 0
      %v4336 = vsel %vm2802, %v4245, 0
      %v4339 = vsel %vm2802, %v4246, 0
      %v4342 = vsel %vm2802, %v4247, 0
      %v4345 = vsel %vm2802, %v4248, 0
      %v4348 = vsel %vm3054, %v4250, 0
      %4350 = vmatpush.msra.mxu0 0.0
      %4351 = vmatpush.msra.mxu0 0.0
      %4352 = vmatpush.msra.mxu0 0.0
      %4353 = vmatpush.msra.mxu0 0.0
      %4354 = vmatpush.msra.mxu0 0.0
      %4355 = vmatpush.msra.mxu0 0.0
      %4356 = vmatpush.msra.mxu0 0.0
      %4357 = vmatpush.msra.mxu0 0.0
      %4358 = vmatpush.msra.mxu0 0.0
      %4359 = vmatpush.msra.mxu0 0.0
      %4360 = vmatpush.msra.mxu0 0.0
      %4361 = vmatpush.msra.mxu0 0.0
      %4362 = vmatpush.msra.mxu0 0.0
      %4363 = vmatpush.msra.mxu0 0.0
      %4364 = vmatpush.msra.mxu0 0.0
      %4365 = vmatpush.msra.mxu0 %v4348
      %4366 = vmatmul.f32.gmra.mxu0 %v4252
      %v4367 = vpop.f32.mrf.mxu0
      %v4368 = vadd.f32 0.0, %v4367
      %4369 = vmatmul.f32.gmra.mxu0 %v4255
      %v4370 = vpop.f32.mrf.mxu0
      %v4371 = vadd.f32 0.0, %v4370
      %4372 = vmatmul.f32.gmra.mxu0 %v4258
      %v4373 = vpop.f32.mrf.mxu0
      %v4374 = vadd.f32 0.0, %v4373
      %4375 = vmatmul.f32.gmra.mxu0 %v4261
      %v4376 = vpop.f32.mrf.mxu0
      %v4377 = vadd.f32 0.0, %v4376
      %4378 = vmatmul.f32.gmra.mxu0 %v4264
      %v4379 = vpop.f32.mrf.mxu0
      %v4380 = vadd.f32 0.0, %v4379
      %4381 = vmatmul.f32.gmra.mxu0 %v4267
      %v4382 = vpop.f32.mrf.mxu0
      %v4383 = vadd.f32 0.0, %v4382
      %4384 = vmatmul.f32.gmra.mxu0 %v4270
      %v4385 = vpop.f32.mrf.mxu0
      %v4386 = vadd.f32 0.0, %v4385
      %4387 = vmatmul.f32.gmra.mxu0 %v4273
      %v4388 = vpop.f32.mrf.mxu0
      %v4389 = vadd.f32 0.0, %v4388
      %4390 = vmatmul.f32.gmra.mxu0 %v4276
      %v4391 = vpop.f32.mrf.mxu0
      %v4392 = vadd.f32 0.0, %v4391
      %4393 = vmatmul.f32.gmra.mxu0 %v4279
      %v4394 = vpop.f32.mrf.mxu0
      %v4395 = vadd.f32 0.0, %v4394
      %4396 = vmatmul.f32.gmra.mxu0 %v4282
      %v4397 = vpop.f32.mrf.mxu0
      %v4398 = vadd.f32 0.0, %v4397
      %4399 = vmatmul.f32.gmra.mxu0 %v4285
      %v4400 = vpop.f32.mrf.mxu0
      %v4401 = vadd.f32 0.0, %v4400
      %4402 = vmatmul.f32.gmra.mxu0 %v4288
      %v4403 = vpop.f32.mrf.mxu0
      %v4404 = vadd.f32 0.0, %v4403
      %4405 = vmatmul.f32.gmra.mxu0 %v4291
      %v4406 = vpop.f32.mrf.mxu0
      %v4407 = vadd.f32 0.0, %v4406
      %4408 = vmatmul.f32.gmra.mxu0 %v4294
      %v4409 = vpop.f32.mrf.mxu0
      %v4410 = vadd.f32 0.0, %v4409
      %4411 = vmatmul.f32.gmra.mxu0 %v4297
      %v4412 = vpop.f32.mrf.mxu0
      %v4413 = vadd.f32 0.0, %v4412
      %4414 = vmatmul.f32.gmra.mxu0 %v4300
      %v4415 = vpop.f32.mrf.mxu0
      %v4416 = vadd.f32 0.0, %v4415
      %4417 = vmatmul.f32.gmra.mxu0 %v4303
      %v4418 = vpop.f32.mrf.mxu0
      %v4419 = vadd.f32 0.0, %v4418
      %4420 = vmatmul.f32.gmra.mxu0 %v4306
      %v4421 = vpop.f32.mrf.mxu0
      %v4422 = vadd.f32 0.0, %v4421
      %4423 = vmatmul.f32.gmra.mxu0 %v4309
      %v4424 = vpop.f32.mrf.mxu0
      %v4425 = vadd.f32 0.0, %v4424
      %4426 = vmatmul.f32.gmra.mxu0 %v4312
      %v4427 = vpop.f32.mrf.mxu0
      %v4428 = vadd.f32 0.0, %v4427
      %4429 = vmatmul.f32.gmra.mxu0 %v4315
      %v4430 = vpop.f32.mrf.mxu0
      %v4431 = vadd.f32 0.0, %v4430
      %4432 = vmatmul.f32.gmra.mxu0 %v4318
      %v4433 = vpop.f32.mrf.mxu0
      %v4434 = vadd.f32 0.0, %v4433
      %4435 = vmatmul.f32.gmra.mxu0 %v4321
      %v4436 = vpop.f32.mrf.mxu0
      %v4437 = vadd.f32 0.0, %v4436
      %4438 = vmatmul.f32.gmra.mxu0 %v4324
      %v4439 = vpop.f32.mrf.mxu0
      %v4440 = vadd.f32 0.0, %v4439
      %4441 = vmatmul.f32.gmra.mxu0 %v4327
      %v4442 = vpop.f32.mrf.mxu0
      %v4443 = vadd.f32 0.0, %v4442
      %4444 = vmatmul.f32.gmra.mxu0 %v4330
      %v4445 = vpop.f32.mrf.mxu0
      %v4446 = vadd.f32 0.0, %v4445
      %4447 = vmatmul.f32.gmra.mxu0 %v4333
      %v4448 = vpop.f32.mrf.mxu0
      %v4449 = vadd.f32 0.0, %v4448
      %4450 = vmatmul.f32.gmra.mxu0 %v4336
      %v4451 = vpop.f32.mrf.mxu0
      %v4452 = vadd.f32 0.0, %v4451
      %4453 = vmatmul.f32.gmra.mxu0 %v4339
      %v4454 = vpop.f32.mrf.mxu0
      %v4455 = vadd.f32 0.0, %v4454
      %4456 = vmatmul.f32.gmra.mxu0 %v4342
      %v4457 = vpop.f32.mrf.mxu0
      %v4458 = vadd.f32 0.0, %v4457
      %4459 = vmatmul.f32.gmra.mxu0 %v4345
      %v4460 = vpop.f32.mrf.mxu0
      %v4461 = vadd.f32 0.0, %v4460
      %4462 = vdwg.mxu0
      %v4463 = vadd.f32 %v4185, %v4368
      %v4464 = vadd.f32 %v4186, %v4371
      %v4465 = vadd.f32 %v4187, %v4374
      %v4466 = vadd.f32 %v4188, %v4377
      %v4467 = vadd.f32 %v4189, %v4380
      %v4468 = vadd.f32 %v4190, %v4383
      %v4469 = vadd.f32 %v4191, %v4386
      %v4470 = vadd.f32 %v4192, %v4389
      %v4471 = vadd.f32 %v4193, %v4392
      %v4472 = vadd.f32 %v4194, %v4395
      %v4473 = vadd.f32 %v4195, %v4398
      %v4474 = vadd.f32 %v4196, %v4401
      %v4475 = vadd.f32 %v4197, %v4404
      %v4476 = vadd.f32 %v4198, %v4407
      %v4477 = vadd.f32 %v4199, %v4410
      %v4478 = vadd.f32 %v4200, %v4413
      %v4479 = vadd.f32 %v4201, %v4416
      %v4480 = vadd.f32 %v4202, %v4419
      %v4481 = vadd.f32 %v4203, %v4422
      %v4482 = vadd.f32 %v4204, %v4425
      %v4483 = vadd.f32 %v4205, %v4428
      %v4484 = vadd.f32 %v4206, %v4431
      %v4485 = vadd.f32 %v4207, %v4434
      %v4486 = vadd.f32 %v4208, %v4437
      %v4487 = vadd.f32 %v4209, %v4440
      %v4488 = vadd.f32 %v4210, %v4443
      %v4489 = vadd.f32 %v4211, %v4446
      %v4490 = vadd.f32 %v4212, %v4449
      %v4491 = vadd.f32 %v4213, %v4452
      %v4492 = vadd.f32 %v4214, %v4455
      %v4493 = vadd.f32 %v4215, %v4458
      %v4494 = vadd.f32 %v4216, %v4461
      %s4495 = scalar_lea.vmem [#allocation2], 48
      %v4496 = vld [vmem:[%s4495] sm:$0xff]
      %v4497 = vld [vmem:[%s4495 + $0x8] sm:$0xff]
      %v4498 = vld [vmem:[%s4495 + $0x18] sm:$0xff]
      %v4499 = vld [vmem:[%s4495 + $0x20] sm:$0xff]
      %v4500 = vld [vmem:[%s4495 + $0x30] sm:$0xff]
      %v4501 = vld [vmem:[%s4495 + $0x38] sm:$0xff]
      %v4502 = vld [vmem:[%s4495 + $0x48] sm:$0xff]
      %v4503 = vld [vmem:[%s4495 + $0x50] sm:$0xff]
      %v4504 = vld [vmem:[%s4495 + $0x60] sm:$0xff]
      %v4505 = vld [vmem:[%s4495 + $0x68] sm:$0xff]
      %v4506 = vld [vmem:[%s4495 + $0x78] sm:$0xff]
      %v4507 = vld [vmem:[%s4495 + $0x80] sm:$0xff]
      %v4508 = vld [vmem:[%s4495 + $0x90] sm:$0xff]
      %v4509 = vld [vmem:[%s4495 + $0x98] sm:$0xff]
      %v4510 = vld [vmem:[%s4495 + $0xa8] sm:$0xff]
      %v4511 = vld [vmem:[%s4495 + $0xb0] sm:$0xff]
      %v4512 = vld [vmem:[%s4495 + $0xc0] sm:$0xff]
      %v4513 = vld [vmem:[%s4495 + $0xc8] sm:$0xff]
      %v4514 = vld [vmem:[%s4495 + $0xd8] sm:$0xff]
      %v4515 = vld [vmem:[%s4495 + $0xe0] sm:$0xff]
      %v4516 = vld [vmem:[%s4495 + $0xf0] sm:$0xff]
      %v4517 = vld [vmem:[%s4495 + $0xf8] sm:$0xff]
      %v4518 = vld [vmem:[%s4495 + $0x108] sm:$0xff]
      %v4519 = vld [vmem:[%s4495 + $0x110] sm:$0xff]
      %v4520 = vld [vmem:[%s4495 + $0x120] sm:$0xff]
      %v4521 = vld [vmem:[%s4495 + $0x128] sm:$0xff]
      %v4522 = vld [vmem:[%s4495 + $0x138] sm:$0xff]
      %v4523 = vld [vmem:[%s4495 + $0x140] sm:$0xff]
      %v4524 = vld [vmem:[%s4495 + $0x150] sm:$0xff]
      %v4525 = vld [vmem:[%s4495 + $0x158] sm:$0xff]
      %v4526 = vld [vmem:[%s4495 + $0x168] sm:$0xff]
      %v4527 = vld [vmem:[%s4495 + $0x170] sm:$0xff]
      %s4528 = scalar_lea.vmem %s4, 24
      %v4529 = vld [vmem:[%s4528] sm:$0xf]
      %v4531 = vsel %vm2802, %v4496, 0
      %v4534 = vsel %vm2802, %v4497, 0
      %v4537 = vsel %vm2802, %v4498, 0
      %v4540 = vsel %vm2802, %v4499, 0
      %v4543 = vsel %vm2802, %v4500, 0
      %v4546 = vsel %vm2802, %v4501, 0
      %v4549 = vsel %vm2802, %v4502, 0
      %v4552 = vsel %vm2802, %v4503, 0
      %v4555 = vsel %vm2802, %v4504, 0
      %v4558 = vsel %vm2802, %v4505, 0
      %v4561 = vsel %vm2802, %v4506, 0
      %v4564 = vsel %vm2802, %v4507, 0
      %v4567 = vsel %vm2802, %v4508, 0
      %v4570 = vsel %vm2802, %v4509, 0
      %v4573 = vsel %vm2802, %v4510, 0
      %v4576 = vsel %vm2802, %v4511, 0
      %v4579 = vsel %vm2802, %v4512, 0
      %v4582 = vsel %vm2802, %v4513, 0
      %v4585 = vsel %vm2802, %v4514, 0
      %v4588 = vsel %vm2802, %v4515, 0
      %v4591 = vsel %vm2802, %v4516, 0
      %v4594 = vsel %vm2802, %v4517, 0
      %v4597 = vsel %vm2802, %v4518, 0
      %v4600 = vsel %vm2802, %v4519, 0
      %v4603 = vsel %vm2802, %v4520, 0
      %v4606 = vsel %vm2802, %v4521, 0
      %v4609 = vsel %vm2802, %v4522, 0
      %v4612 = vsel %vm2802, %v4523, 0
      %v4615 = vsel %vm2802, %v4524, 0
      %v4618 = vsel %vm2802, %v4525, 0
      %v4621 = vsel %vm2802, %v4526, 0
      %v4624 = vsel %vm2802, %v4527, 0
      %v4627 = vsel %vm3054, %v4529, 0
      %4629 = vmatpush.msra.mxu0 0.0
      %4630 = vmatpush.msra.mxu0 0.0
      %4631 = vmatpush.msra.mxu0 0.0
      %4632 = vmatpush.msra.mxu0 0.0
      %4633 = vmatpush.msra.mxu0 0.0
      %4634 = vmatpush.msra.mxu0 0.0
      %4635 = vmatpush.msra.mxu0 0.0
      %4636 = vmatpush.msra.mxu0 0.0
      %4637 = vmatpush.msra.mxu0 0.0
      %4638 = vmatpush.msra.mxu0 0.0
      %4639 = vmatpush.msra.mxu0 0.0
      %4640 = vmatpush.msra.mxu0 0.0
      %4641 = vmatpush.msra.mxu0 0.0
      %4642 = vmatpush.msra.mxu0 0.0
      %4643 = vmatpush.msra.mxu0 0.0
      %4644 = vmatpush.msra.mxu0 %v4627
      %4645 = vmatmul.f32.gmra.mxu0 %v4531
      %v4646 = vpop.f32.mrf.mxu0
      %v4647 = vadd.f32 0.0, %v4646
      %4648 = vmatmul.f32.gmra.mxu0 %v4534
      %v4649 = vpop.f32.mrf.mxu0
      %v4650 = vadd.f32 0.0, %v4649
      %4651 = vmatmul.f32.gmra.mxu0 %v4537
      %v4652 = vpop.f32.mrf.mxu0
      %v4653 = vadd.f32 0.0, %v4652
      %4654 = vmatmul.f32.gmra.mxu0 %v4540
      %v4655 = vpop.f32.mrf.mxu0
      %v4656 = vadd.f32 0.0, %v4655
      %4657 = vmatmul.f32.gmra.mxu0 %v4543
      %v4658 = vpop.f32.mrf.mxu0
      %v4659 = vadd.f32 0.0, %v4658
      %4660 = vmatmul.f32.gmra.mxu0 %v4546
      %v4661 = vpop.f32.mrf.mxu0
      %v4662 = vadd.f32 0.0, %v4661
      %4663 = vmatmul.f32.gmra.mxu0 %v4549
      %v4664 = vpop.f32.mrf.mxu0
      %v4665 = vadd.f32 0.0, %v4664
      %4666 = vmatmul.f32.gmra.mxu0 %v4552
      %v4667 = vpop.f32.mrf.mxu0
      %v4668 = vadd.f32 0.0, %v4667
      %4669 = vmatmul.f32.gmra.mxu0 %v4555
      %v4670 = vpop.f32.mrf.mxu0
      %v4671 = vadd.f32 0.0, %v4670
      %4672 = vmatmul.f32.gmra.mxu0 %v4558
      %v4673 = vpop.f32.mrf.mxu0
      %v4674 = vadd.f32 0.0, %v4673
      %4675 = vmatmul.f32.gmra.mxu0 %v4561
      %v4676 = vpop.f32.mrf.mxu0
      %v4677 = vadd.f32 0.0, %v4676
      %4678 = vmatmul.f32.gmra.mxu0 %v4564
      %v4679 = vpop.f32.mrf.mxu0
      %v4680 = vadd.f32 0.0, %v4679
      %4681 = vmatmul.f32.gmra.mxu0 %v4567
      %v4682 = vpop.f32.mrf.mxu0
      %v4683 = vadd.f32 0.0, %v4682
      %4684 = vmatmul.f32.gmra.mxu0 %v4570
      %v4685 = vpop.f32.mrf.mxu0
      %v4686 = vadd.f32 0.0, %v4685
      %4687 = vmatmul.f32.gmra.mxu0 %v4573
      %v4688 = vpop.f32.mrf.mxu0
      %v4689 = vadd.f32 0.0, %v4688
      %4690 = vmatmul.f32.gmra.mxu0 %v4576
      %v4691 = vpop.f32.mrf.mxu0
      %v4692 = vadd.f32 0.0, %v4691
      %4693 = vmatmul.f32.gmra.mxu0 %v4579
      %v4694 = vpop.f32.mrf.mxu0
      %v4695 = vadd.f32 0.0, %v4694
      %4696 = vmatmul.f32.gmra.mxu0 %v4582
      %v4697 = vpop.f32.mrf.mxu0
      %v4698 = vadd.f32 0.0, %v4697
      %4699 = vmatmul.f32.gmra.mxu0 %v4585
      %v4700 = vpop.f32.mrf.mxu0
      %v4701 = vadd.f32 0.0, %v4700
      %4702 = vmatmul.f32.gmra.mxu0 %v4588
      %v4703 = vpop.f32.mrf.mxu0
      %v4704 = vadd.f32 0.0, %v4703
      %4705 = vmatmul.f32.gmra.mxu0 %v4591
      %v4706 = vpop.f32.mrf.mxu0
      %v4707 = vadd.f32 0.0, %v4706
      %4708 = vmatmul.f32.gmra.mxu0 %v4594
      %v4709 = vpop.f32.mrf.mxu0
      %v4710 = vadd.f32 0.0, %v4709
      %4711 = vmatmul.f32.gmra.mxu0 %v4597
      %v4712 = vpop.f32.mrf.mxu0
      %v4713 = vadd.f32 0.0, %v4712
      %4714 = vmatmul.f32.gmra.mxu0 %v4600
      %v4715 = vpop.f32.mrf.mxu0
      %v4716 = vadd.f32 0.0, %v4715
      %4717 = vmatmul.f32.gmra.mxu0 %v4603
      %v4718 = vpop.f32.mrf.mxu0
      %v4719 = vadd.f32 0.0, %v4718
      %4720 = vmatmul.f32.gmra.mxu0 %v4606
      %v4721 = vpop.f32.mrf.mxu0
      %v4722 = vadd.f32 0.0, %v4721
      %4723 = vmatmul.f32.gmra.mxu0 %v4609
      %v4724 = vpop.f32.mrf.mxu0
      %v4725 = vadd.f32 0.0, %v4724
      %4726 = vmatmul.f32.gmra.mxu0 %v4612
      %v4727 = vpop.f32.mrf.mxu0
      %v4728 = vadd.f32 0.0, %v4727
      %4729 = vmatmul.f32.gmra.mxu0 %v4615
      %v4730 = vpop.f32.mrf.mxu0
      %v4731 = vadd.f32 0.0, %v4730
      %4732 = vmatmul.f32.gmra.mxu0 %v4618
      %v4733 = vpop.f32.mrf.mxu0
      %v4734 = vadd.f32 0.0, %v4733
      %4735 = vmatmul.f32.gmra.mxu0 %v4621
      %v4736 = vpop.f32.mrf.mxu0
      %v4737 = vadd.f32 0.0, %v4736
      %4738 = vmatmul.f32.gmra.mxu0 %v4624
      %v4739 = vpop.f32.mrf.mxu0
      %v4740 = vadd.f32 0.0, %v4739
      %4741 = vdwg.mxu0
      %v4742 = vadd.f32 %v4463, %v4647
      %v4743 = vadd.f32 %v4464, %v4650
      %v4744 = vadd.f32 %v4465, %v4653
      %v4745 = vadd.f32 %v4466, %v4656
      %v4746 = vadd.f32 %v4467, %v4659
      %v4747 = vadd.f32 %v4468, %v4662
      %v4748 = vadd.f32 %v4469, %v4665
      %v4749 = vadd.f32 %v4470, %v4668
      %v4750 = vadd.f32 %v4471, %v4671
      %v4751 = vadd.f32 %v4472, %v4674
      %v4752 = vadd.f32 %v4473, %v4677
      %v4753 = vadd.f32 %v4474, %v4680
      %v4754 = vadd.f32 %v4475, %v4683
      %v4755 = vadd.f32 %v4476, %v4686
      %v4756 = vadd.f32 %v4477, %v4689
      %v4757 = vadd.f32 %v4478, %v4692
      %v4758 = vadd.f32 %v4479, %v4695
      %v4759 = vadd.f32 %v4480, %v4698
      %v4760 = vadd.f32 %v4481, %v4701
      %v4761 = vadd.f32 %v4482, %v4704
      %v4762 = vadd.f32 %v4483, %v4707
      %v4763 = vadd.f32 %v4484, %v4710
      %v4764 = vadd.f32 %v4485, %v4713
      %v4765 = vadd.f32 %v4486, %v4716
      %v4766 = vadd.f32 %v4487, %v4719
      %v4767 = vadd.f32 %v4488, %v4722
      %v4768 = vadd.f32 %v4489, %v4725
      %v4769 = vadd.f32 %v4490, %v4728
      %v4770 = vadd.f32 %v4491, %v4731
      %v4771 = vadd.f32 %v4492, %v4734
      %v4772 = vadd.f32 %v4493, %v4737
      %v4773 = vadd.f32 %v4494, %v4740
      %v4774 = vld [vmem:[%s4495 + $0x1] sm:$0xff]
      %v4775 = vld [vmem:[%s4495 + $0x9] sm:$0xff]
      %v4776 = vld [vmem:[%s4495 + $0x19] sm:$0xff]
      %v4777 = vld [vmem:[%s4495 + $0x21] sm:$0xff]
      %v4778 = vld [vmem:[%s4495 + $0x31] sm:$0xff]
      %v4779 = vld [vmem:[%s4495 + $0x39] sm:$0xff]
      %v4780 = vld [vmem:[%s4495 + $0x49] sm:$0xff]
      %v4781 = vld [vmem:[%s4495 + $0x51] sm:$0xff]
      %v4782 = vld [vmem:[%s4495 + $0x61] sm:$0xff]
      %v4783 = vld [vmem:[%s4495 + $0x69] sm:$0xff]
      %v4784 = vld [vmem:[%s4495 + $0x79] sm:$0xff]
      %v4785 = vld [vmem:[%s4495 + $0x81] sm:$0xff]
      %v4786 = vld [vmem:[%s4495 + $0x91] sm:$0xff]
      %v4787 = vld [vmem:[%s4495 + $0x99] sm:$0xff]
      %v4788 = vld [vmem:[%s4495 + $0xa9] sm:$0xff]
      %v4789 = vld [vmem:[%s4495 + $0xb1] sm:$0xff]
      %v4790 = vld [vmem:[%s4495 + $0xc1] sm:$0xff]
      %v4791 = vld [vmem:[%s4495 + $0xc9] sm:$0xff]
      %v4792 = vld [vmem:[%s4495 + $0xd9] sm:$0xff]
      %v4793 = vld [vmem:[%s4495 + $0xe1] sm:$0xff]
      %v4794 = vld [vmem:[%s4495 + $0xf1] sm:$0xff]
      %v4795 = vld [vmem:[%s4495 + $0xf9] sm:$0xff]
      %v4796 = vld [vmem:[%s4495 + $0x109] sm:$0xff]
      %v4797 = vld [vmem:[%s4495 + $0x111] sm:$0xff]
      %v4798 = vld [vmem:[%s4495 + $0x121] sm:$0xff]
      %v4799 = vld [vmem:[%s4495 + $0x129] sm:$0xff]
      %v4800 = vld [vmem:[%s4495 + $0x139] sm:$0xff]
      %v4801 = vld [vmem:[%s4495 + $0x141] sm:$0xff]
      %v4802 = vld [vmem:[%s4495 + $0x151] sm:$0xff]
      %v4803 = vld [vmem:[%s4495 + $0x159] sm:$0xff]
      %v4804 = vld [vmem:[%s4495 + $0x169] sm:$0xff]
      %v4805 = vld [vmem:[%s4495 + $0x171] sm:$0xff]
      %s4806 = scalar_lea.vmem %s4, 28
      %v4807 = vld [vmem:[%s4806] sm:$0xf]
      %v4809 = vsel %vm2802, %v4774, 0
      %v4812 = vsel %vm2802, %v4775, 0
      %v4815 = vsel %vm2802, %v4776, 0
      %v4818 = vsel %vm2802, %v4777, 0
      %v4821 = vsel %vm2802, %v4778, 0
      %v4824 = vsel %vm2802, %v4779, 0
      %v4827 = vsel %vm2802, %v4780, 0
      %v4830 = vsel %vm2802, %v4781, 0
      %v4833 = vsel %vm2802, %v4782, 0
      %v4836 = vsel %vm2802, %v4783, 0
      %v4839 = vsel %vm2802, %v4784, 0
      %v4842 = vsel %vm2802, %v4785, 0
      %v4845 = vsel %vm2802, %v4786, 0
      %v4848 = vsel %vm2802, %v4787, 0
      %v4851 = vsel %vm2802, %v4788, 0
      %v4854 = vsel %vm2802, %v4789, 0
      %v4857 = vsel %vm2802, %v4790, 0
      %v4860 = vsel %vm2802, %v4791, 0
      %v4863 = vsel %vm2802, %v4792, 0
      %v4866 = vsel %vm2802, %v4793, 0
      %v4869 = vsel %vm2802, %v4794, 0
      %v4872 = vsel %vm2802, %v4795, 0
      %v4875 = vsel %vm2802, %v4796, 0
      %v4878 = vsel %vm2802, %v4797, 0
      %v4881 = vsel %vm2802, %v4798, 0
      %v4884 = vsel %vm2802, %v4799, 0
      %v4887 = vsel %vm2802, %v4800, 0
      %v4890 = vsel %vm2802, %v4801, 0
      %v4893 = vsel %vm2802, %v4802, 0
      %v4896 = vsel %vm2802, %v4803, 0
      %v4899 = vsel %vm2802, %v4804, 0
      %v4902 = vsel %vm2802, %v4805, 0
      %v4905 = vsel %vm3054, %v4807, 0
      %4907 = vmatpush.msra.mxu0 0.0
      %4908 = vmatpush.msra.mxu0 0.0
      %4909 = vmatpush.msra.mxu0 0.0
      %4910 = vmatpush.msra.mxu0 0.0
      %4911 = vmatpush.msra.mxu0 0.0
      %4912 = vmatpush.msra.mxu0 0.0
      %4913 = vmatpush.msra.mxu0 0.0
      %4914 = vmatpush.msra.mxu0 0.0
      %4915 = vmatpush.msra.mxu0 0.0
      %4916 = vmatpush.msra.mxu0 0.0
      %4917 = vmatpush.msra.mxu0 0.0
      %4918 = vmatpush.msra.mxu0 0.0
      %4919 = vmatpush.msra.mxu0 0.0
      %4920 = vmatpush.msra.mxu0 0.0
      %4921 = vmatpush.msra.mxu0 0.0
      %4922 = vmatpush.msra.mxu0 %v4905
      %4923 = vmatmul.f32.gmra.mxu0 %v4809
      %v4924 = vpop.f32.mrf.mxu0
      %v4925 = vadd.f32 0.0, %v4924
      %4926 = vmatmul.f32.gmra.mxu0 %v4812
      %v4927 = vpop.f32.mrf.mxu0
      %v4928 = vadd.f32 0.0, %v4927
      %4929 = vmatmul.f32.gmra.mxu0 %v4815
      %v4930 = vpop.f32.mrf.mxu0
      %v4931 = vadd.f32 0.0, %v4930
      %4932 = vmatmul.f32.gmra.mxu0 %v4818
      %v4933 = vpop.f32.mrf.mxu0
      %v4934 = vadd.f32 0.0, %v4933
      %4935 = vmatmul.f32.gmra.mxu0 %v4821
      %v4936 = vpop.f32.mrf.mxu0
      %v4937 = vadd.f32 0.0, %v4936
      %4938 = vmatmul.f32.gmra.mxu0 %v4824
      %v4939 = vpop.f32.mrf.mxu0
      %v4940 = vadd.f32 0.0, %v4939
      %4941 = vmatmul.f32.gmra.mxu0 %v4827
      %v4942 = vpop.f32.mrf.mxu0
      %v4943 = vadd.f32 0.0, %v4942
      %4944 = vmatmul.f32.gmra.mxu0 %v4830
      %v4945 = vpop.f32.mrf.mxu0
      %v4946 = vadd.f32 0.0, %v4945
      %4947 = vmatmul.f32.gmra.mxu0 %v4833
      %v4948 = vpop.f32.mrf.mxu0
      %v4949 = vadd.f32 0.0, %v4948
      %4950 = vmatmul.f32.gmra.mxu0 %v4836
      %v4951 = vpop.f32.mrf.mxu0
      %v4952 = vadd.f32 0.0, %v4951
      %4953 = vmatmul.f32.gmra.mxu0 %v4839
      %v4954 = vpop.f32.mrf.mxu0
      %v4955 = vadd.f32 0.0, %v4954
      %4956 = vmatmul.f32.gmra.mxu0 %v4842
      %v4957 = vpop.f32.mrf.mxu0
      %v4958 = vadd.f32 0.0, %v4957
      %4959 = vmatmul.f32.gmra.mxu0 %v4845
      %v4960 = vpop.f32.mrf.mxu0
      %v4961 = vadd.f32 0.0, %v4960
      %4962 = vmatmul.f32.gmra.mxu0 %v4848
      %v4963 = vpop.f32.mrf.mxu0
      %v4964 = vadd.f32 0.0, %v4963
      %4965 = vmatmul.f32.gmra.mxu0 %v4851
      %v4966 = vpop.f32.mrf.mxu0
      %v4967 = vadd.f32 0.0, %v4966
      %4968 = vmatmul.f32.gmra.mxu0 %v4854
      %v4969 = vpop.f32.mrf.mxu0
      %v4970 = vadd.f32 0.0, %v4969
      %4971 = vmatmul.f32.gmra.mxu0 %v4857
      %v4972 = vpop.f32.mrf.mxu0
      %v4973 = vadd.f32 0.0, %v4972
      %4974 = vmatmul.f32.gmra.mxu0 %v4860
      %v4975 = vpop.f32.mrf.mxu0
      %v4976 = vadd.f32 0.0, %v4975
      %4977 = vmatmul.f32.gmra.mxu0 %v4863
      %v4978 = vpop.f32.mrf.mxu0
      %v4979 = vadd.f32 0.0, %v4978
      %4980 = vmatmul.f32.gmra.mxu0 %v4866
      %v4981 = vpop.f32.mrf.mxu0
      %v4982 = vadd.f32 0.0, %v4981
      %4983 = vmatmul.f32.gmra.mxu0 %v4869
      %v4984 = vpop.f32.mrf.mxu0
      %v4985 = vadd.f32 0.0, %v4984
      %4986 = vmatmul.f32.gmra.mxu0 %v4872
      %v4987 = vpop.f32.mrf.mxu0
      %v4988 = vadd.f32 0.0, %v4987
      %4989 = vmatmul.f32.gmra.mxu0 %v4875
      %v4990 = vpop.f32.mrf.mxu0
      %v4991 = vadd.f32 0.0, %v4990
      %4992 = vmatmul.f32.gmra.mxu0 %v4878
      %v4993 = vpop.f32.mrf.mxu0
      %v4994 = vadd.f32 0.0, %v4993
      %4995 = vmatmul.f32.gmra.mxu0 %v4881
      %v4996 = vpop.f32.mrf.mxu0
      %v4997 = vadd.f32 0.0, %v4996
      %4998 = vmatmul.f32.gmra.mxu0 %v4884
      %v4999 = vpop.f32.mrf.mxu0
      %v5000 = vadd.f32 0.0, %v4999
      %5001 = vmatmul.f32.gmra.mxu0 %v4887
      %v5002 = vpop.f32.mrf.mxu0
      %v5003 = vadd.f32 0.0, %v5002
      %5004 = vmatmul.f32.gmra.mxu0 %v4890
      %v5005 = vpop.f32.mrf.mxu0
      %v5006 = vadd.f32 0.0, %v5005
      %5007 = vmatmul.f32.gmra.mxu0 %v4893
      %v5008 = vpop.f32.mrf.mxu0
      %v5009 = vadd.f32 0.0, %v5008
      %5010 = vmatmul.f32.gmra.mxu0 %v4896
      %v5011 = vpop.f32.mrf.mxu0
      %v5012 = vadd.f32 0.0, %v5011
      %5013 = vmatmul.f32.gmra.mxu0 %v4899
      %v5014 = vpop.f32.mrf.mxu0
      %v5015 = vadd.f32 0.0, %v5014
      %5016 = vmatmul.f32.gmra.mxu0 %v4902
      %v5017 = vpop.f32.mrf.mxu0
      %v5018 = vadd.f32 0.0, %v5017
      %5019 = vdwg.mxu0
      %v5020 = vadd.f32 %v4742, %v4925
      %v5021 = vadd.f32 %v4743, %v4928
      %v5022 = vadd.f32 %v4744, %v4931
      %v5023 = vadd.f32 %v4745, %v4934
      %v5024 = vadd.f32 %v4746, %v4937
      %v5025 = vadd.f32 %v4747, %v4940
      %v5026 = vadd.f32 %v4748, %v4943
      %v5027 = vadd.f32 %v4749, %v4946
      %v5028 = vadd.f32 %v4750, %v4949
      %v5029 = vadd.f32 %v4751, %v4952
      %v5030 = vadd.f32 %v4752, %v4955
      %v5031 = vadd.f32 %v4753, %v4958
      %v5032 = vadd.f32 %v4754, %v4961
      %v5033 = vadd.f32 %v4755, %v4964
      %v5034 = vadd.f32 %v4756, %v4967
      %v5035 = vadd.f32 %v4757, %v4970
      %v5036 = vadd.f32 %v4758, %v4973
      %v5037 = vadd.f32 %v4759, %v4976
      %v5038 = vadd.f32 %v4760, %v4979
      %v5039 = vadd.f32 %v4761, %v4982
      %v5040 = vadd.f32 %v4762, %v4985
      %v5041 = vadd.f32 %v4763, %v4988
      %v5042 = vadd.f32 %v4764, %v4991
      %v5043 = vadd.f32 %v4765, %v4994
      %v5044 = vadd.f32 %v4766, %v4997
      %v5045 = vadd.f32 %v4767, %v5000
      %v5046 = vadd.f32 %v4768, %v5003
      %v5047 = vadd.f32 %v4769, %v5006
      %v5048 = vadd.f32 %v4770, %v5009
      %v5049 = vadd.f32 %v4771, %v5012
      %v5050 = vadd.f32 %v4772, %v5015
      %v5051 = vadd.f32 %v4773, %v5018
      %v5052 = vld [vmem:[%s4495 + $0x2] sm:$0xff]
      %v5053 = vld [vmem:[%s4495 + $0xa] sm:$0xff]
      %v5054 = vld [vmem:[%s4495 + $0x1a] sm:$0xff]
      %v5055 = vld [vmem:[%s4495 + $0x22] sm:$0xff]
      %v5056 = vld [vmem:[%s4495 + $0x32] sm:$0xff]
      %v5057 = vld [vmem:[%s4495 + $0x3a] sm:$0xff]
      %v5058 = vld [vmem:[%s4495 + $0x4a] sm:$0xff]
      %v5059 = vld [vmem:[%s4495 + $0x52] sm:$0xff]
      %v5060 = vld [vmem:[%s4495 + $0x62] sm:$0xff]
      %v5061 = vld [vmem:[%s4495 + $0x6a] sm:$0xff]
      %v5062 = vld [vmem:[%s4495 + $0x7a] sm:$0xff]
      %v5063 = vld [vmem:[%s4495 + $0x82] sm:$0xff]
      %v5064 = vld [vmem:[%s4495 + $0x92] sm:$0xff]
      %v5065 = vld [vmem:[%s4495 + $0x9a] sm:$0xff]
      %v5066 = vld [vmem:[%s4495 + $0xaa] sm:$0xff]
      %v5067 = vld [vmem:[%s4495 + $0xb2] sm:$0xff]
      %v5068 = vld [vmem:[%s4495 + $0xc2] sm:$0xff]
      %v5069 = vld [vmem:[%s4495 + $0xca] sm:$0xff]
      %v5070 = vld [vmem:[%s4495 + $0xda] sm:$0xff]
      %v5071 = vld [vmem:[%s4495 + $0xe2] sm:$0xff]
      %v5072 = vld [vmem:[%s4495 + $0xf2] sm:$0xff]
      %v5073 = vld [vmem:[%s4495 + $0xfa] sm:$0xff]
      %v5074 = vld [vmem:[%s4495 + $0x10a] sm:$0xff]
      %v5075 = vld [vmem:[%s4495 + $0x112] sm:$0xff]
      %v5076 = vld [vmem:[%s4495 + $0x122] sm:$0xff]
      %v5077 = vld [vmem:[%s4495 + $0x12a] sm:$0xff]
      %v5078 = vld [vmem:[%s4495 + $0x13a] sm:$0xff]
      %v5079 = vld [vmem:[%s4495 + $0x142] sm:$0xff]
      %v5080 = vld [vmem:[%s4495 + $0x152] sm:$0xff]
      %v5081 = vld [vmem:[%s4495 + $0x15a] sm:$0xff]
      %v5082 = vld [vmem:[%s4495 + $0x16a] sm:$0xff]
      %v5083 = vld [vmem:[%s4495 + $0x172] sm:$0xff]
      %s5084 = scalar_lea.vmem %s4, 32
      %v5085 = vld [vmem:[%s5084] sm:$0xf]
      %v5087 = vsel %vm2802, %v5052, 0
      %v5090 = vsel %vm2802, %v5053, 0
      %v5093 = vsel %vm2802, %v5054, 0
      %v5096 = vsel %vm2802, %v5055, 0
      %v5099 = vsel %vm2802, %v5056, 0
      %v5102 = vsel %vm2802, %v5057, 0
      %v5105 = vsel %vm2802, %v5058, 0
      %v5108 = vsel %vm2802, %v5059, 0
      %v5111 = vsel %vm2802, %v5060, 0
      %v5114 = vsel %vm2802, %v5061, 0
      %v5117 = vsel %vm2802, %v5062, 0
      %v5120 = vsel %vm2802, %v5063, 0
      %v5123 = vsel %vm2802, %v5064, 0
      %v5126 = vsel %vm2802, %v5065, 0
      %v5129 = vsel %vm2802, %v5066, 0
      %v5132 = vsel %vm2802, %v5067, 0
      %v5135 = vsel %vm2802, %v5068, 0
      %v5138 = vsel %vm2802, %v5069, 0
      %v5141 = vsel %vm2802, %v5070, 0
      %v5144 = vsel %vm2802, %v5071, 0
      %v5147 = vsel %vm2802, %v5072, 0
      %v5150 = vsel %vm2802, %v5073, 0
      %v5153 = vsel %vm2802, %v5074, 0
      %v5156 = vsel %vm2802, %v5075, 0
      %v5159 = vsel %vm2802, %v5076, 0
      %v5162 = vsel %vm2802, %v5077, 0
      %v5165 = vsel %vm2802, %v5078, 0
      %v5168 = vsel %vm2802, %v5079, 0
      %v5171 = vsel %vm2802, %v5080, 0
      %v5174 = vsel %vm2802, %v5081, 0
      %v5177 = vsel %vm2802, %v5082, 0
      %v5180 = vsel %vm2802, %v5083, 0
      %v5183 = vsel %vm3054, %v5085, 0
      %5185 = vmatpush.msra.mxu0 0.0
      %5186 = vmatpush.msra.mxu0 0.0
      %5187 = vmatpush.msra.mxu0 0.0
      %5188 = vmatpush.msra.mxu0 0.0
      %5189 = vmatpush.msra.mxu0 0.0
      %5190 = vmatpush.msra.mxu0 0.0
      %5191 = vmatpush.msra.mxu0 0.0
      %5192 = vmatpush.msra.mxu0 0.0
      %5193 = vmatpush.msra.mxu0 0.0
      %5194 = vmatpush.msra.mxu0 0.0
      %5195 = vmatpush.msra.mxu0 0.0
      %5196 = vmatpush.msra.mxu0 0.0
      %5197 = vmatpush.msra.mxu0 0.0
      %5198 = vmatpush.msra.mxu0 0.0
      %5199 = vmatpush.msra.mxu0 0.0
      %5200 = vmatpush.msra.mxu0 %v5183
      %5201 = vmatmul.f32.gmra.mxu0 %v5087
      %v5202 = vpop.f32.mrf.mxu0
      %v5203 = vadd.f32 0.0, %v5202
      %5204 = vmatmul.f32.gmra.mxu0 %v5090
      %v5205 = vpop.f32.mrf.mxu0
      %v5206 = vadd.f32 0.0, %v5205
      %5207 = vmatmul.f32.gmra.mxu0 %v5093
      %v5208 = vpop.f32.mrf.mxu0
      %v5209 = vadd.f32 0.0, %v5208
      %5210 = vmatmul.f32.gmra.mxu0 %v5096
      %v5211 = vpop.f32.mrf.mxu0
      %v5212 = vadd.f32 0.0, %v5211
      %5213 = vmatmul.f32.gmra.mxu0 %v5099
      %v5214 = vpop.f32.mrf.mxu0
      %v5215 = vadd.f32 0.0, %v5214
      %5216 = vmatmul.f32.gmra.mxu0 %v5102
      %v5217 = vpop.f32.mrf.mxu0
      %v5218 = vadd.f32 0.0, %v5217
      %5219 = vmatmul.f32.gmra.mxu0 %v5105
      %v5220 = vpop.f32.mrf.mxu0
      %v5221 = vadd.f32 0.0, %v5220
      %5222 = vmatmul.f32.gmra.mxu0 %v5108
      %v5223 = vpop.f32.mrf.mxu0
      %v5224 = vadd.f32 0.0, %v5223
      %5225 = vmatmul.f32.gmra.mxu0 %v5111
      %v5226 = vpop.f32.mrf.mxu0
      %v5227 = vadd.f32 0.0, %v5226
      %5228 = vmatmul.f32.gmra.mxu0 %v5114
      %v5229 = vpop.f32.mrf.mxu0
      %v5230 = vadd.f32 0.0, %v5229
      %5231 = vmatmul.f32.gmra.mxu0 %v5117
      %v5232 = vpop.f32.mrf.mxu0
      %v5233 = vadd.f32 0.0, %v5232
      %5234 = vmatmul.f32.gmra.mxu0 %v5120
      %v5235 = vpop.f32.mrf.mxu0
      %v5236 = vadd.f32 0.0, %v5235
      %5237 = vmatmul.f32.gmra.mxu0 %v5123
      %v5238 = vpop.f32.mrf.mxu0
      %v5239 = vadd.f32 0.0, %v5238
      %5240 = vmatmul.f32.gmra.mxu0 %v5126
      %v5241 = vpop.f32.mrf.mxu0
      %v5242 = vadd.f32 0.0, %v5241
      %5243 = vmatmul.f32.gmra.mxu0 %v5129
      %v5244 = vpop.f32.mrf.mxu0
      %v5245 = vadd.f32 0.0, %v5244
      %5246 = vmatmul.f32.gmra.mxu0 %v5132
      %v5247 = vpop.f32.mrf.mxu0
      %v5248 = vadd.f32 0.0, %v5247
      %5249 = vmatmul.f32.gmra.mxu0 %v5135
      %v5250 = vpop.f32.mrf.mxu0
      %v5251 = vadd.f32 0.0, %v5250
      %5252 = vmatmul.f32.gmra.mxu0 %v5138
      %v5253 = vpop.f32.mrf.mxu0
      %v5254 = vadd.f32 0.0, %v5253
      %5255 = vmatmul.f32.gmra.mxu0 %v5141
      %v5256 = vpop.f32.mrf.mxu0
      %v5257 = vadd.f32 0.0, %v5256
      %5258 = vmatmul.f32.gmra.mxu0 %v5144
      %v5259 = vpop.f32.mrf.mxu0
      %v5260 = vadd.f32 0.0, %v5259
      %5261 = vmatmul.f32.gmra.mxu0 %v5147
      %v5262 = vpop.f32.mrf.mxu0
      %v5263 = vadd.f32 0.0, %v5262
      %5264 = vmatmul.f32.gmra.mxu0 %v5150
      %v5265 = vpop.f32.mrf.mxu0
      %v5266 = vadd.f32 0.0, %v5265
      %5267 = vmatmul.f32.gmra.mxu0 %v5153
      %v5268 = vpop.f32.mrf.mxu0
      %v5269 = vadd.f32 0.0, %v5268
      %5270 = vmatmul.f32.gmra.mxu0 %v5156
      %v5271 = vpop.f32.mrf.mxu0
      %v5272 = vadd.f32 0.0, %v5271
      %5273 = vmatmul.f32.gmra.mxu0 %v5159
      %v5274 = vpop.f32.mrf.mxu0
      %v5275 = vadd.f32 0.0, %v5274
      %5276 = vmatmul.f32.gmra.mxu0 %v5162
      %v5277 = vpop.f32.mrf.mxu0
      %v5278 = vadd.f32 0.0, %v5277
      %5279 = vmatmul.f32.gmra.mxu0 %v5165
      %v5280 = vpop.f32.mrf.mxu0
      %v5281 = vadd.f32 0.0, %v5280
      %5282 = vmatmul.f32.gmra.mxu0 %v5168
      %v5283 = vpop.f32.mrf.mxu0
      %v5284 = vadd.f32 0.0, %v5283
      %5285 = vmatmul.f32.gmra.mxu0 %v5171
      %v5286 = vpop.f32.mrf.mxu0
      %v5287 = vadd.f32 0.0, %v5286
      %5288 = vmatmul.f32.gmra.mxu0 %v5174
      %v5289 = vpop.f32.mrf.mxu0
      %v5290 = vadd.f32 0.0, %v5289
      %5291 = vmatmul.f32.gmra.mxu0 %v5177
      %v5292 = vpop.f32.mrf.mxu0
      %v5293 = vadd.f32 0.0, %v5292
      %5294 = vmatmul.f32.gmra.mxu0 %v5180
      %v5295 = vpop.f32.mrf.mxu0
      %v5296 = vadd.f32 0.0, %v5295
      %5297 = vdwg.mxu0
      %v5298 = vadd.f32 %v5020, %v5203
      %v5299 = vadd.f32 %v5021, %v5206
      %v5300 = vadd.f32 %v5022, %v5209
      %v5301 = vadd.f32 %v5023, %v5212
      %v5302 = vadd.f32 %v5024, %v5215
      %v5303 = vadd.f32 %v5025, %v5218
      %v5304 = vadd.f32 %v5026, %v5221
      %v5305 = vadd.f32 %v5027, %v5224
      %v5306 = vadd.f32 %v5028, %v5227
      %v5307 = vadd.f32 %v5029, %v5230
      %v5308 = vadd.f32 %v5030, %v5233
      %v5309 = vadd.f32 %v5031, %v5236
      %v5310 = vadd.f32 %v5032, %v5239
      %v5311 = vadd.f32 %v5033, %v5242
      %v5312 = vadd.f32 %v5034, %v5245
      %v5313 = vadd.f32 %v5035, %v5248
      %v5314 = vadd.f32 %v5036, %v5251
      %v5315 = vadd.f32 %v5037, %v5254
      %v5316 = vadd.f32 %v5038, %v5257
      %v5317 = vadd.f32 %v5039, %v5260
      %v5318 = vadd.f32 %v5040, %v5263
      %v5319 = vadd.f32 %v5041, %v5266
      %v5320 = vadd.f32 %v5042, %v5269
      %v5321 = vadd.f32 %v5043, %v5272
      %v5322 = vadd.f32 %v5044, %v5275
      %v5323 = vadd.f32 %v5045, %v5278
      %v5324 = vadd.f32 %v5046, %v5281
      %v5325 = vadd.f32 %v5047, %v5284
      %v5326 = vadd.f32 %v5048, %v5287
      %v5327 = vadd.f32 %v5049, %v5290
      %v5328 = vadd.f32 %v5050, %v5293
      %v5329 = vadd.f32 %v5051, %v5296
      %v5330 = vld [vmem:[%s347] sm:$0xff]
      %v5331 = vld [vmem:[%s347 + $0x8] sm:$0xff]
      %v5332 = vld [vmem:[%s347 + $0x18] sm:$0xff]
      %v5333 = vld [vmem:[%s347 + $0x20] sm:$0xff]
      %v5334 = vld [vmem:[%s347 + $0x30] sm:$0xff]
      %v5335 = vld [vmem:[%s347 + $0x38] sm:$0xff]
      %v5336 = vld [vmem:[%s347 + $0x48] sm:$0xff]
      %v5337 = vld [vmem:[%s347 + $0x50] sm:$0xff]
      %v5338 = vld [vmem:[%s347 + $0x60] sm:$0xff]
      %v5339 = vld [vmem:[%s347 + $0x68] sm:$0xff]
      %v5340 = vld [vmem:[%s347 + $0x78] sm:$0xff]
      %v5341 = vld [vmem:[%s347 + $0x80] sm:$0xff]
      %v5342 = vld [vmem:[%s347 + $0x90] sm:$0xff]
      %v5343 = vld [vmem:[%s347 + $0x98] sm:$0xff]
      %v5344 = vld [vmem:[%s347 + $0xa8] sm:$0xff]
      %v5345 = vld [vmem:[%s347 + $0xb0] sm:$0xff]
      %v5346 = vld [vmem:[%s347 + $0xc0] sm:$0xff]
      %v5347 = vld [vmem:[%s347 + $0xc8] sm:$0xff]
      %v5348 = vld [vmem:[%s347 + $0xd8] sm:$0xff]
      %v5349 = vld [vmem:[%s347 + $0xe0] sm:$0xff]
      %v5350 = vld [vmem:[%s347 + $0xf0] sm:$0xff]
      %v5351 = vld [vmem:[%s347 + $0xf8] sm:$0xff]
      %v5352 = vld [vmem:[%s347 + $0x108] sm:$0xff]
      %v5353 = vld [vmem:[%s347 + $0x110] sm:$0xff]
      %v5354 = vld [vmem:[%s347 + $0x120] sm:$0xff]
      %v5355 = vld [vmem:[%s347 + $0x128] sm:$0xff]
      %v5356 = vld [vmem:[%s347 + $0x138] sm:$0xff]
      %v5357 = vld [vmem:[%s347 + $0x140] sm:$0xff]
      %v5358 = vld [vmem:[%s347 + $0x150] sm:$0xff]
      %v5359 = vld [vmem:[%s347 + $0x158] sm:$0xff]
      %v5360 = vld [vmem:[%s347 + $0x168] sm:$0xff]
      %v5361 = vld [vmem:[%s347 + $0x170] sm:$0xff]
      %v5362 = vld [vmem:[%s5] sm:$0xf]
      %v5364 = vsel %vm2802, %v5330, 0
      %v5367 = vsel %vm2802, %v5331, 0
      %v5370 = vsel %vm2802, %v5332, 0
      %v5373 = vsel %vm2802, %v5333, 0
      %v5376 = vsel %vm2802, %v5334, 0
      %v5379 = vsel %vm2802, %v5335, 0
      %v5382 = vsel %vm2802, %v5336, 0
      %v5385 = vsel %vm2802, %v5337, 0
      %v5388 = vsel %vm2802, %v5338, 0
      %v5391 = vsel %vm2802, %v5339, 0
      %v5394 = vsel %vm2802, %v5340, 0
      %v5397 = vsel %vm2802, %v5341, 0
      %v5400 = vsel %vm2802, %v5342, 0
      %v5403 = vsel %vm2802, %v5343, 0
      %v5406 = vsel %vm2802, %v5344, 0
      %v5409 = vsel %vm2802, %v5345, 0
      %v5412 = vsel %vm2802, %v5346, 0
      %v5415 = vsel %vm2802, %v5347, 0
      %v5418 = vsel %vm2802, %v5348, 0
      %v5421 = vsel %vm2802, %v5349, 0
      %v5424 = vsel %vm2802, %v5350, 0
      %v5427 = vsel %vm2802, %v5351, 0
      %v5430 = vsel %vm2802, %v5352, 0
      %v5433 = vsel %vm2802, %v5353, 0
      %v5436 = vsel %vm2802, %v5354, 0
      %v5439 = vsel %vm2802, %v5355, 0
      %v5442 = vsel %vm2802, %v5356, 0
      %v5445 = vsel %vm2802, %v5357, 0
      %v5448 = vsel %vm2802, %v5358, 0
      %v5451 = vsel %vm2802, %v5359, 0
      %v5454 = vsel %vm2802, %v5360, 0
      %v5457 = vsel %vm2802, %v5361, 0
      %v5460 = vsel %vm3054, %v5362, 0
      %5462 = vmatpush.msra.mxu0 0.0
      %5463 = vmatpush.msra.mxu0 0.0
      %5464 = vmatpush.msra.mxu0 0.0
      %5465 = vmatpush.msra.mxu0 0.0
      %5466 = vmatpush.msra.mxu0 0.0
      %5467 = vmatpush.msra.mxu0 0.0
      %5468 = vmatpush.msra.mxu0 0.0
      %5469 = vmatpush.msra.mxu0 0.0
      %5470 = vmatpush.msra.mxu0 0.0
      %5471 = vmatpush.msra.mxu0 0.0
      %5472 = vmatpush.msra.mxu0 0.0
      %5473 = vmatpush.msra.mxu0 0.0
      %5474 = vmatpush.msra.mxu0 0.0
      %5475 = vmatpush.msra.mxu0 0.0
      %5476 = vmatpush.msra.mxu0 0.0
      %5477 = vmatpush.msra.mxu0 %v5460
      %5478 = vmatmul.f32.gmra.mxu0 %v5364
      %v5479 = vpop.f32.mrf.mxu0
      %v5480 = vadd.f32 0.0, %v5479
      %5481 = vmatmul.f32.gmra.mxu0 %v5367
      %v5482 = vpop.f32.mrf.mxu0
      %v5483 = vadd.f32 0.0, %v5482
      %5484 = vmatmul.f32.gmra.mxu0 %v5370
      %v5485 = vpop.f32.mrf.mxu0
      %v5486 = vadd.f32 0.0, %v5485
      %5487 = vmatmul.f32.gmra.mxu0 %v5373
      %v5488 = vpop.f32.mrf.mxu0
      %v5489 = vadd.f32 0.0, %v5488
      %5490 = vmatmul.f32.gmra.mxu0 %v5376
      %v5491 = vpop.f32.mrf.mxu0
      %v5492 = vadd.f32 0.0, %v5491
      %5493 = vmatmul.f32.gmra.mxu0 %v5379
      %v5494 = vpop.f32.mrf.mxu0
      %v5495 = vadd.f32 0.0, %v5494
      %5496 = vmatmul.f32.gmra.mxu0 %v5382
      %v5497 = vpop.f32.mrf.mxu0
      %v5498 = vadd.f32 0.0, %v5497
      %5499 = vmatmul.f32.gmra.mxu0 %v5385
      %v5500 = vpop.f32.mrf.mxu0
      %v5501 = vadd.f32 0.0, %v5500
      %5502 = vmatmul.f32.gmra.mxu0 %v5388
      %v5503 = vpop.f32.mrf.mxu0
      %v5504 = vadd.f32 0.0, %v5503
      %5505 = vmatmul.f32.gmra.mxu0 %v5391
      %v5506 = vpop.f32.mrf.mxu0
      %v5507 = vadd.f32 0.0, %v5506
      %5508 = vmatmul.f32.gmra.mxu0 %v5394
      %v5509 = vpop.f32.mrf.mxu0
      %v5510 = vadd.f32 0.0, %v5509
      %5511 = vmatmul.f32.gmra.mxu0 %v5397
      %v5512 = vpop.f32.mrf.mxu0
      %v5513 = vadd.f32 0.0, %v5512
      %5514 = vmatmul.f32.gmra.mxu0 %v5400
      %v5515 = vpop.f32.mrf.mxu0
      %v5516 = vadd.f32 0.0, %v5515
      %5517 = vmatmul.f32.gmra.mxu0 %v5403
      %v5518 = vpop.f32.mrf.mxu0
      %v5519 = vadd.f32 0.0, %v5518
      %5520 = vmatmul.f32.gmra.mxu0 %v5406
      %v5521 = vpop.f32.mrf.mxu0
      %v5522 = vadd.f32 0.0, %v5521
      %5523 = vmatmul.f32.gmra.mxu0 %v5409
      %v5524 = vpop.f32.mrf.mxu0
      %v5525 = vadd.f32 0.0, %v5524
      %5526 = vmatmul.f32.gmra.mxu0 %v5412
      %v5527 = vpop.f32.mrf.mxu0
      %v5528 = vadd.f32 0.0, %v5527
      %5529 = vmatmul.f32.gmra.mxu0 %v5415
      %v5530 = vpop.f32.mrf.mxu0
      %v5531 = vadd.f32 0.0, %v5530
      %5532 = vmatmul.f32.gmra.mxu0 %v5418
      %v5533 = vpop.f32.mrf.mxu0
      %v5534 = vadd.f32 0.0, %v5533
      %5535 = vmatmul.f32.gmra.mxu0 %v5421
      %v5536 = vpop.f32.mrf.mxu0
      %v5537 = vadd.f32 0.0, %v5536
      %5538 = vmatmul.f32.gmra.mxu0 %v5424
      %v5539 = vpop.f32.mrf.mxu0
      %v5540 = vadd.f32 0.0, %v5539
      %5541 = vmatmul.f32.gmra.mxu0 %v5427
      %v5542 = vpop.f32.mrf.mxu0
      %v5543 = vadd.f32 0.0, %v5542
      %5544 = vmatmul.f32.gmra.mxu0 %v5430
      %v5545 = vpop.f32.mrf.mxu0
      %v5546 = vadd.f32 0.0, %v5545
      %5547 = vmatmul.f32.gmra.mxu0 %v5433
      %v5548 = vpop.f32.mrf.mxu0
      %v5549 = vadd.f32 0.0, %v5548
      %5550 = vmatmul.f32.gmra.mxu0 %v5436
      %v5551 = vpop.f32.mrf.mxu0
      %v5552 = vadd.f32 0.0, %v5551
      %5553 = vmatmul.f32.gmra.mxu0 %v5439
      %v5554 = vpop.f32.mrf.mxu0
      %v5555 = vadd.f32 0.0, %v5554
      %5556 = vmatmul.f32.gmra.mxu0 %v5442
      %v5557 = vpop.f32.mrf.mxu0
      %v5558 = vadd.f32 0.0, %v5557
      %5559 = vmatmul.f32.gmra.mxu0 %v5445
      %v5560 = vpop.f32.mrf.mxu0
      %v5561 = vadd.f32 0.0, %v5560
      %5562 = vmatmul.f32.gmra.mxu0 %v5448
      %v5563 = vpop.f32.mrf.mxu0
      %v5564 = vadd.f32 0.0, %v5563
      %5565 = vmatmul.f32.gmra.mxu0 %v5451
      %v5566 = vpop.f32.mrf.mxu0
      %v5567 = vadd.f32 0.0, %v5566
      %5568 = vmatmul.f32.gmra.mxu0 %v5454
      %v5569 = vpop.f32.mrf.mxu0
      %v5570 = vadd.f32 0.0, %v5569
      %5571 = vmatmul.f32.gmra.mxu0 %v5457
      %v5572 = vpop.f32.mrf.mxu0
      %v5573 = vadd.f32 0.0, %v5572
      %5574 = vdwg.mxu0
      %v5575 = vadd.f32 %v5298, %v5480
      %v5576 = vadd.f32 %v5299, %v5483
      %v5577 = vadd.f32 %v5300, %v5486
      %v5578 = vadd.f32 %v5301, %v5489
      %v5579 = vadd.f32 %v5302, %v5492
      %v5580 = vadd.f32 %v5303, %v5495
      %v5581 = vadd.f32 %v5304, %v5498
      %v5582 = vadd.f32 %v5305, %v5501
      %v5583 = vadd.f32 %v5306, %v5504
      %v5584 = vadd.f32 %v5307, %v5507
      %v5585 = vadd.f32 %v5308, %v5510
      %v5586 = vadd.f32 %v5309, %v5513
      %v5587 = vadd.f32 %v5310, %v5516
      %v5588 = vadd.f32 %v5311, %v5519
      %v5589 = vadd.f32 %v5312, %v5522
      %v5590 = vadd.f32 %v5313, %v5525
      %v5591 = vadd.f32 %v5314, %v5528
      %v5592 = vadd.f32 %v5315, %v5531
      %v5593 = vadd.f32 %v5316, %v5534
      %v5594 = vadd.f32 %v5317, %v5537
      %v5595 = vadd.f32 %v5318, %v5540
      %v5596 = vadd.f32 %v5319, %v5543
      %v5597 = vadd.f32 %v5320, %v5546
      %v5598 = vadd.f32 %v5321, %v5549
      %v5599 = vadd.f32 %v5322, %v5552
      %v5600 = vadd.f32 %v5323, %v5555
      %v5601 = vadd.f32 %v5324, %v5558
      %v5602 = vadd.f32 %v5325, %v5561
      %v5603 = vadd.f32 %v5326, %v5564
      %v5604 = vadd.f32 %v5327, %v5567
      %v5605 = vadd.f32 %v5328, %v5570
      %v5606 = vadd.f32 %v5329, %v5573
      %v5607 = vld [vmem:[%s347 + $0x1] sm:$0xff]
      %v5608 = vld [vmem:[%s347 + $0x9] sm:$0xff]
      %v5609 = vld [vmem:[%s347 + $0x19] sm:$0xff]
      %v5610 = vld [vmem:[%s347 + $0x21] sm:$0xff]
      %v5611 = vld [vmem:[%s347 + $0x31] sm:$0xff]
      %v5612 = vld [vmem:[%s347 + $0x39] sm:$0xff]
      %v5613 = vld [vmem:[%s347 + $0x49] sm:$0xff]
      %v5614 = vld [vmem:[%s347 + $0x51] sm:$0xff]
      %v5615 = vld [vmem:[%s347 + $0x61] sm:$0xff]
      %v5616 = vld [vmem:[%s347 + $0x69] sm:$0xff]
      %v5617 = vld [vmem:[%s347 + $0x79] sm:$0xff]
      %v5618 = vld [vmem:[%s347 + $0x81] sm:$0xff]
      %v5619 = vld [vmem:[%s347 + $0x91] sm:$0xff]
      %v5620 = vld [vmem:[%s347 + $0x99] sm:$0xff]
      %v5621 = vld [vmem:[%s347 + $0xa9] sm:$0xff]
      %v5622 = vld [vmem:[%s347 + $0xb1] sm:$0xff]
      %v5623 = vld [vmem:[%s347 + $0xc1] sm:$0xff]
      %v5624 = vld [vmem:[%s347 + $0xc9] sm:$0xff]
      %v5625 = vld [vmem:[%s347 + $0xd9] sm:$0xff]
      %v5626 = vld [vmem:[%s347 + $0xe1] sm:$0xff]
      %v5627 = vld [vmem:[%s347 + $0xf1] sm:$0xff]
      %v5628 = vld [vmem:[%s347 + $0xf9] sm:$0xff]
      %v5629 = vld [vmem:[%s347 + $0x109] sm:$0xff]
      %v5630 = vld [vmem:[%s347 + $0x111] sm:$0xff]
      %v5631 = vld [vmem:[%s347 + $0x121] sm:$0xff]
      %v5632 = vld [vmem:[%s347 + $0x129] sm:$0xff]
      %v5633 = vld [vmem:[%s347 + $0x139] sm:$0xff]
      %v5634 = vld [vmem:[%s347 + $0x141] sm:$0xff]
      %v5635 = vld [vmem:[%s347 + $0x151] sm:$0xff]
      %v5636 = vld [vmem:[%s347 + $0x159] sm:$0xff]
      %v5637 = vld [vmem:[%s347 + $0x169] sm:$0xff]
      %v5638 = vld [vmem:[%s347 + $0x171] sm:$0xff]
      %s5639 = scalar_lea.vmem %s5, 4
      %v5640 = vld [vmem:[%s5639] sm:$0xf]
      %v5642 = vsel %vm2802, %v5607, 0
      %v5645 = vsel %vm2802, %v5608, 0
      %v5648 = vsel %vm2802, %v5609, 0
      %v5651 = vsel %vm2802, %v5610, 0
      %v5654 = vsel %vm2802, %v5611, 0
      %v5657 = vsel %vm2802, %v5612, 0
      %v5660 = vsel %vm2802, %v5613, 0
      %v5663 = vsel %vm2802, %v5614, 0
      %v5666 = vsel %vm2802, %v5615, 0
      %v5669 = vsel %vm2802, %v5616, 0
      %v5672 = vsel %vm2802, %v5617, 0
      %v5675 = vsel %vm2802, %v5618, 0
      %v5678 = vsel %vm2802, %v5619, 0
      %v5681 = vsel %vm2802, %v5620, 0
      %v5684 = vsel %vm2802, %v5621, 0
      %v5687 = vsel %vm2802, %v5622, 0
      %v5690 = vsel %vm2802, %v5623, 0
      %v5693 = vsel %vm2802, %v5624, 0
      %v5696 = vsel %vm2802, %v5625, 0
      %v5699 = vsel %vm2802, %v5626, 0
      %v5702 = vsel %vm2802, %v5627, 0
      %v5705 = vsel %vm2802, %v5628, 0
      %v5708 = vsel %vm2802, %v5629, 0
      %v5711 = vsel %vm2802, %v5630, 0
      %v5714 = vsel %vm2802, %v5631, 0
      %v5717 = vsel %vm2802, %v5632, 0
      %v5720 = vsel %vm2802, %v5633, 0
      %v5723 = vsel %vm2802, %v5634, 0
      %v5726 = vsel %vm2802, %v5635, 0
      %v5729 = vsel %vm2802, %v5636, 0
      %v5732 = vsel %vm2802, %v5637, 0
      %v5735 = vsel %vm2802, %v5638, 0
      %v5738 = vsel %vm3054, %v5640, 0
      %5740 = vmatpush.msra.mxu0 0.0
      %5741 = vmatpush.msra.mxu0 0.0
      %5742 = vmatpush.msra.mxu0 0.0
      %5743 = vmatpush.msra.mxu0 0.0
      %5744 = vmatpush.msra.mxu0 0.0
      %5745 = vmatpush.msra.mxu0 0.0
      %5746 = vmatpush.msra.mxu0 0.0
      %5747 = vmatpush.msra.mxu0 0.0
      %5748 = vmatpush.msra.mxu0 0.0
      %5749 = vmatpush.msra.mxu0 0.0
      %5750 = vmatpush.msra.mxu0 0.0
      %5751 = vmatpush.msra.mxu0 0.0
      %5752 = vmatpush.msra.mxu0 0.0
      %5753 = vmatpush.msra.mxu0 0.0
      %5754 = vmatpush.msra.mxu0 0.0
      %5755 = vmatpush.msra.mxu0 %v5738
      %5756 = vmatmul.f32.gmra.mxu0 %v5642
      %v5757 = vpop.f32.mrf.mxu0
      %v5758 = vadd.f32 0.0, %v5757
      %5759 = vmatmul.f32.gmra.mxu0 %v5645
      %v5760 = vpop.f32.mrf.mxu0
      %v5761 = vadd.f32 0.0, %v5760
      %5762 = vmatmul.f32.gmra.mxu0 %v5648
      %v5763 = vpop.f32.mrf.mxu0
      %v5764 = vadd.f32 0.0, %v5763
      %5765 = vmatmul.f32.gmra.mxu0 %v5651
      %v5766 = vpop.f32.mrf.mxu0
      %v5767 = vadd.f32 0.0, %v5766
      %5768 = vmatmul.f32.gmra.mxu0 %v5654
      %v5769 = vpop.f32.mrf.mxu0
      %v5770 = vadd.f32 0.0, %v5769
      %5771 = vmatmul.f32.gmra.mxu0 %v5657
      %v5772 = vpop.f32.mrf.mxu0
      %v5773 = vadd.f32 0.0, %v5772
      %5774 = vmatmul.f32.gmra.mxu0 %v5660
      %v5775 = vpop.f32.mrf.mxu0
      %v5776 = vadd.f32 0.0, %v5775
      %5777 = vmatmul.f32.gmra.mxu0 %v5663
      %v5778 = vpop.f32.mrf.mxu0
      %v5779 = vadd.f32 0.0, %v5778
      %5780 = vmatmul.f32.gmra.mxu0 %v5666
      %v5781 = vpop.f32.mrf.mxu0
      %v5782 = vadd.f32 0.0, %v5781
      %5783 = vmatmul.f32.gmra.mxu0 %v5669
      %v5784 = vpop.f32.mrf.mxu0
      %v5785 = vadd.f32 0.0, %v5784
      %5786 = vmatmul.f32.gmra.mxu0 %v5672
      %v5787 = vpop.f32.mrf.mxu0
      %v5788 = vadd.f32 0.0, %v5787
      %5789 = vmatmul.f32.gmra.mxu0 %v5675
      %v5790 = vpop.f32.mrf.mxu0
      %v5791 = vadd.f32 0.0, %v5790
      %5792 = vmatmul.f32.gmra.mxu0 %v5678
      %v5793 = vpop.f32.mrf.mxu0
      %v5794 = vadd.f32 0.0, %v5793
      %5795 = vmatmul.f32.gmra.mxu0 %v5681
      %v5796 = vpop.f32.mrf.mxu0
      %v5797 = vadd.f32 0.0, %v5796
      %5798 = vmatmul.f32.gmra.mxu0 %v5684
      %v5799 = vpop.f32.mrf.mxu0
      %v5800 = vadd.f32 0.0, %v5799
      %5801 = vmatmul.f32.gmra.mxu0 %v5687
      %v5802 = vpop.f32.mrf.mxu0
      %v5803 = vadd.f32 0.0, %v5802
      %5804 = vmatmul.f32.gmra.mxu0 %v5690
      %v5805 = vpop.f32.mrf.mxu0
      %v5806 = vadd.f32 0.0, %v5805
      %5807 = vmatmul.f32.gmra.mxu0 %v5693
      %v5808 = vpop.f32.mrf.mxu0
      %v5809 = vadd.f32 0.0, %v5808
      %5810 = vmatmul.f32.gmra.mxu0 %v5696
      %v5811 = vpop.f32.mrf.mxu0
      %v5812 = vadd.f32 0.0, %v5811
      %5813 = vmatmul.f32.gmra.mxu0 %v5699
      %v5814 = vpop.f32.mrf.mxu0
      %v5815 = vadd.f32 0.0, %v5814
      %5816 = vmatmul.f32.gmra.mxu0 %v5702
      %v5817 = vpop.f32.mrf.mxu0
      %v5818 = vadd.f32 0.0, %v5817
      %5819 = vmatmul.f32.gmra.mxu0 %v5705
      %v5820 = vpop.f32.mrf.mxu0
      %v5821 = vadd.f32 0.0, %v5820
      %5822 = vmatmul.f32.gmra.mxu0 %v5708
      %v5823 = vpop.f32.mrf.mxu0
      %v5824 = vadd.f32 0.0, %v5823
      %5825 = vmatmul.f32.gmra.mxu0 %v5711
      %v5826 = vpop.f32.mrf.mxu0
      %v5827 = vadd.f32 0.0, %v5826
      %5828 = vmatmul.f32.gmra.mxu0 %v5714
      %v5829 = vpop.f32.mrf.mxu0
      %v5830 = vadd.f32 0.0, %v5829
      %5831 = vmatmul.f32.gmra.mxu0 %v5717
      %v5832 = vpop.f32.mrf.mxu0
      %v5833 = vadd.f32 0.0, %v5832
      %5834 = vmatmul.f32.gmra.mxu0 %v5720
      %v5835 = vpop.f32.mrf.mxu0
      %v5836 = vadd.f32 0.0, %v5835
      %5837 = vmatmul.f32.gmra.mxu0 %v5723
      %v5838 = vpop.f32.mrf.mxu0
      %v5839 = vadd.f32 0.0, %v5838
      %5840 = vmatmul.f32.gmra.mxu0 %v5726
      %v5841 = vpop.f32.mrf.mxu0
      %v5842 = vadd.f32 0.0, %v5841
      %5843 = vmatmul.f32.gmra.mxu0 %v5729
      %v5844 = vpop.f32.mrf.mxu0
      %v5845 = vadd.f32 0.0, %v5844
      %5846 = vmatmul.f32.gmra.mxu0 %v5732
      %v5847 = vpop.f32.mrf.mxu0
      %v5848 = vadd.f32 0.0, %v5847
      %5849 = vmatmul.f32.gmra.mxu0 %v5735
      %v5850 = vpop.f32.mrf.mxu0
      %v5851 = vadd.f32 0.0, %v5850
      %5852 = vdwg.mxu0
      %v5853 = vadd.f32 %v5575, %v5758
      %v5854 = vadd.f32 %v5576, %v5761
      %v5855 = vadd.f32 %v5577, %v5764
      %v5856 = vadd.f32 %v5578, %v5767
      %v5857 = vadd.f32 %v5579, %v5770
      %v5858 = vadd.f32 %v5580, %v5773
      %v5859 = vadd.f32 %v5581, %v5776
      %v5860 = vadd.f32 %v5582, %v5779
      %v5861 = vadd.f32 %v5583, %v5782
      %v5862 = vadd.f32 %v5584, %v5785
      %v5863 = vadd.f32 %v5585, %v5788
      %v5864 = vadd.f32 %v5586, %v5791
      %v5865 = vadd.f32 %v5587, %v5794
      %v5866 = vadd.f32 %v5588, %v5797
      %v5867 = vadd.f32 %v5589, %v5800
      %v5868 = vadd.f32 %v5590, %v5803
      %v5869 = vadd.f32 %v5591, %v5806
      %v5870 = vadd.f32 %v5592, %v5809
      %v5871 = vadd.f32 %v5593, %v5812
      %v5872 = vadd.f32 %v5594, %v5815
      %v5873 = vadd.f32 %v5595, %v5818
      %v5874 = vadd.f32 %v5596, %v5821
      %v5875 = vadd.f32 %v5597, %v5824
      %v5876 = vadd.f32 %v5598, %v5827
      %v5877 = vadd.f32 %v5599, %v5830
      %v5878 = vadd.f32 %v5600, %v5833
      %v5879 = vadd.f32 %v5601, %v5836
      %v5880 = vadd.f32 %v5602, %v5839
      %v5881 = vadd.f32 %v5603, %v5842
      %v5882 = vadd.f32 %v5604, %v5845
      %v5883 = vadd.f32 %v5605, %v5848
      %v5884 = vadd.f32 %v5606, %v5851
      %v5885 = vld [vmem:[%s347 + $0x2] sm:$0xff]
      %v5886 = vld [vmem:[%s347 + $0xa] sm:$0xff]
      %v5887 = vld [vmem:[%s347 + $0x1a] sm:$0xff]
      %v5888 = vld [vmem:[%s347 + $0x22] sm:$0xff]
      %v5889 = vld [vmem:[%s347 + $0x32] sm:$0xff]
      %v5890 = vld [vmem:[%s347 + $0x3a] sm:$0xff]
      %v5891 = vld [vmem:[%s347 + $0x4a] sm:$0xff]
      %v5892 = vld [vmem:[%s347 + $0x52] sm:$0xff]
      %v5893 = vld [vmem:[%s347 + $0x62] sm:$0xff]
      %v5894 = vld [vmem:[%s347 + $0x6a] sm:$0xff]
      %v5895 = vld [vmem:[%s347 + $0x7a] sm:$0xff]
      %v5896 = vld [vmem:[%s347 + $0x82] sm:$0xff]
      %v5897 = vld [vmem:[%s347 + $0x92] sm:$0xff]
      %v5898 = vld [vmem:[%s347 + $0x9a] sm:$0xff]
      %v5899 = vld [vmem:[%s347 + $0xaa] sm:$0xff]
      %v5900 = vld [vmem:[%s347 + $0xb2] sm:$0xff]
      %v5901 = vld [vmem:[%s347 + $0xc2] sm:$0xff]
      %v5902 = vld [vmem:[%s347 + $0xca] sm:$0xff]
      %v5903 = vld [vmem:[%s347 + $0xda] sm:$0xff]
      %v5904 = vld [vmem:[%s347 + $0xe2] sm:$0xff]
      %v5905 = vld [vmem:[%s347 + $0xf2] sm:$0xff]
      %v5906 = vld [vmem:[%s347 + $0xfa] sm:$0xff]
      %v5907 = vld [vmem:[%s347 + $0x10a] sm:$0xff]
      %v5908 = vld [vmem:[%s347 + $0x112] sm:$0xff]
      %v5909 = vld [vmem:[%s347 + $0x122] sm:$0xff]
      %v5910 = vld [vmem:[%s347 + $0x12a] sm:$0xff]
      %v5911 = vld [vmem:[%s347 + $0x13a] sm:$0xff]
      %v5912 = vld [vmem:[%s347 + $0x142] sm:$0xff]
      %v5913 = vld [vmem:[%s347 + $0x152] sm:$0xff]
      %v5914 = vld [vmem:[%s347 + $0x15a] sm:$0xff]
      %v5915 = vld [vmem:[%s347 + $0x16a] sm:$0xff]
      %v5916 = vld [vmem:[%s347 + $0x172] sm:$0xff]
      %s5917 = scalar_lea.vmem %s5, 8
      %v5918 = vld [vmem:[%s5917] sm:$0xf]
      %v5920 = vsel %vm2802, %v5885, 0
      %v5923 = vsel %vm2802, %v5886, 0
      %v5926 = vsel %vm2802, %v5887, 0
      %v5929 = vsel %vm2802, %v5888, 0
      %v5932 = vsel %vm2802, %v5889, 0
      %v5935 = vsel %vm2802, %v5890, 0
      %v5938 = vsel %vm2802, %v5891, 0
      %v5941 = vsel %vm2802, %v5892, 0
      %v5944 = vsel %vm2802, %v5893, 0
      %v5947 = vsel %vm2802, %v5894, 0
      %v5950 = vsel %vm2802, %v5895, 0
      %v5953 = vsel %vm2802, %v5896, 0
      %v5956 = vsel %vm2802, %v5897, 0
      %v5959 = vsel %vm2802, %v5898, 0
      %v5962 = vsel %vm2802, %v5899, 0
      %v5965 = vsel %vm2802, %v5900, 0
      %v5968 = vsel %vm2802, %v5901, 0
      %v5971 = vsel %vm2802, %v5902, 0
      %v5974 = vsel %vm2802, %v5903, 0
      %v5977 = vsel %vm2802, %v5904, 0
      %v5980 = vsel %vm2802, %v5905, 0
      %v5983 = vsel %vm2802, %v5906, 0
      %v5986 = vsel %vm2802, %v5907, 0
      %v5989 = vsel %vm2802, %v5908, 0
      %v5992 = vsel %vm2802, %v5909, 0
      %v5995 = vsel %vm2802, %v5910, 0
      %v5998 = vsel %vm2802, %v5911, 0
      %v6001 = vsel %vm2802, %v5912, 0
      %v6004 = vsel %vm2802, %v5913, 0
      %v6007 = vsel %vm2802, %v5914, 0
      %v6010 = vsel %vm2802, %v5915, 0
      %v6013 = vsel %vm2802, %v5916, 0
      %v6016 = vsel %vm3054, %v5918, 0
      %6018 = vmatpush.msra.mxu0 0.0
      %6019 = vmatpush.msra.mxu0 0.0
      %6020 = vmatpush.msra.mxu0 0.0
      %6021 = vmatpush.msra.mxu0 0.0
      %6022 = vmatpush.msra.mxu0 0.0
      %6023 = vmatpush.msra.mxu0 0.0
      %6024 = vmatpush.msra.mxu0 0.0
      %6025 = vmatpush.msra.mxu0 0.0
      %6026 = vmatpush.msra.mxu0 0.0
      %6027 = vmatpush.msra.mxu0 0.0
      %6028 = vmatpush.msra.mxu0 0.0
      %6029 = vmatpush.msra.mxu0 0.0
      %6030 = vmatpush.msra.mxu0 0.0
      %6031 = vmatpush.msra.mxu0 0.0
      %6032 = vmatpush.msra.mxu0 0.0
      %6033 = vmatpush.msra.mxu0 %v6016
      %6034 = vmatmul.f32.gmra.mxu0 %v5920
      %v6035 = vpop.f32.mrf.mxu0
      %v6036 = vadd.f32 0.0, %v6035
      %6037 = vmatmul.f32.gmra.mxu0 %v5923
      %v6038 = vpop.f32.mrf.mxu0
      %v6039 = vadd.f32 0.0, %v6038
      %6040 = vmatmul.f32.gmra.mxu0 %v5926
      %v6041 = vpop.f32.mrf.mxu0
      %v6042 = vadd.f32 0.0, %v6041
      %6043 = vmatmul.f32.gmra.mxu0 %v5929
      %v6044 = vpop.f32.mrf.mxu0
      %v6045 = vadd.f32 0.0, %v6044
      %6046 = vmatmul.f32.gmra.mxu0 %v5932
      %v6047 = vpop.f32.mrf.mxu0
      %v6048 = vadd.f32 0.0, %v6047
      %6049 = vmatmul.f32.gmra.mxu0 %v5935
      %v6050 = vpop.f32.mrf.mxu0
      %v6051 = vadd.f32 0.0, %v6050
      %6052 = vmatmul.f32.gmra.mxu0 %v5938
      %v6053 = vpop.f32.mrf.mxu0
      %v6054 = vadd.f32 0.0, %v6053
      %6055 = vmatmul.f32.gmra.mxu0 %v5941
      %v6056 = vpop.f32.mrf.mxu0
      %v6057 = vadd.f32 0.0, %v6056
      %6058 = vmatmul.f32.gmra.mxu0 %v5944
      %v6059 = vpop.f32.mrf.mxu0
      %v6060 = vadd.f32 0.0, %v6059
      %6061 = vmatmul.f32.gmra.mxu0 %v5947
      %v6062 = vpop.f32.mrf.mxu0
      %v6063 = vadd.f32 0.0, %v6062
      %6064 = vmatmul.f32.gmra.mxu0 %v5950
      %v6065 = vpop.f32.mrf.mxu0
      %v6066 = vadd.f32 0.0, %v6065
      %6067 = vmatmul.f32.gmra.mxu0 %v5953
      %v6068 = vpop.f32.mrf.mxu0
      %v6069 = vadd.f32 0.0, %v6068
      %6070 = vmatmul.f32.gmra.mxu0 %v5956
      %v6071 = vpop.f32.mrf.mxu0
      %v6072 = vadd.f32 0.0, %v6071
      %6073 = vmatmul.f32.gmra.mxu0 %v5959
      %v6074 = vpop.f32.mrf.mxu0
      %v6075 = vadd.f32 0.0, %v6074
      %6076 = vmatmul.f32.gmra.mxu0 %v5962
      %v6077 = vpop.f32.mrf.mxu0
      %v6078 = vadd.f32 0.0, %v6077
      %6079 = vmatmul.f32.gmra.mxu0 %v5965
      %v6080 = vpop.f32.mrf.mxu0
      %v6081 = vadd.f32 0.0, %v6080
      %6082 = vmatmul.f32.gmra.mxu0 %v5968
      %v6083 = vpop.f32.mrf.mxu0
      %v6084 = vadd.f32 0.0, %v6083
      %6085 = vmatmul.f32.gmra.mxu0 %v5971
      %v6086 = vpop.f32.mrf.mxu0
      %v6087 = vadd.f32 0.0, %v6086
      %6088 = vmatmul.f32.gmra.mxu0 %v5974
      %v6089 = vpop.f32.mrf.mxu0
      %v6090 = vadd.f32 0.0, %v6089
      %6091 = vmatmul.f32.gmra.mxu0 %v5977
      %v6092 = vpop.f32.mrf.mxu0
      %v6093 = vadd.f32 0.0, %v6092
      %6094 = vmatmul.f32.gmra.mxu0 %v5980
      %v6095 = vpop.f32.mrf.mxu0
      %v6096 = vadd.f32 0.0, %v6095
      %6097 = vmatmul.f32.gmra.mxu0 %v5983
      %v6098 = vpop.f32.mrf.mxu0
      %v6099 = vadd.f32 0.0, %v6098
      %6100 = vmatmul.f32.gmra.mxu0 %v5986
      %v6101 = vpop.f32.mrf.mxu0
      %v6102 = vadd.f32 0.0, %v6101
      %6103 = vmatmul.f32.gmra.mxu0 %v5989
      %v6104 = vpop.f32.mrf.mxu0
      %v6105 = vadd.f32 0.0, %v6104
      %6106 = vmatmul.f32.gmra.mxu0 %v5992
      %v6107 = vpop.f32.mrf.mxu0
      %v6108 = vadd.f32 0.0, %v6107
      %6109 = vmatmul.f32.gmra.mxu0 %v5995
      %v6110 = vpop.f32.mrf.mxu0
      %v6111 = vadd.f32 0.0, %v6110
      %6112 = vmatmul.f32.gmra.mxu0 %v5998
      %v6113 = vpop.f32.mrf.mxu0
      %v6114 = vadd.f32 0.0, %v6113
      %6115 = vmatmul.f32.gmra.mxu0 %v6001
      %v6116 = vpop.f32.mrf.mxu0
      %v6117 = vadd.f32 0.0, %v6116
      %6118 = vmatmul.f32.gmra.mxu0 %v6004
      %v6119 = vpop.f32.mrf.mxu0
      %v6120 = vadd.f32 0.0, %v6119
      %6121 = vmatmul.f32.gmra.mxu0 %v6007
      %v6122 = vpop.f32.mrf.mxu0
      %v6123 = vadd.f32 0.0, %v6122
      %6124 = vmatmul.f32.gmra.mxu0 %v6010
      %v6125 = vpop.f32.mrf.mxu0
      %v6126 = vadd.f32 0.0, %v6125
      %6127 = vmatmul.f32.gmra.mxu0 %v6013
      %v6128 = vpop.f32.mrf.mxu0
      %v6129 = vadd.f32 0.0, %v6128
      %6130 = vdwg.mxu0
      %v6131 = vadd.f32 %v5853, %v6036
      %v6132 = vadd.f32 %v5854, %v6039
      %v6133 = vadd.f32 %v5855, %v6042
      %v6134 = vadd.f32 %v5856, %v6045
      %v6135 = vadd.f32 %v5857, %v6048
      %v6136 = vadd.f32 %v5858, %v6051
      %v6137 = vadd.f32 %v5859, %v6054
      %v6138 = vadd.f32 %v5860, %v6057
      %v6139 = vadd.f32 %v5861, %v6060
      %v6140 = vadd.f32 %v5862, %v6063
      %v6141 = vadd.f32 %v5863, %v6066
      %v6142 = vadd.f32 %v5864, %v6069
      %v6143 = vadd.f32 %v5865, %v6072
      %v6144 = vadd.f32 %v5866, %v6075
      %v6145 = vadd.f32 %v5867, %v6078
      %v6146 = vadd.f32 %v5868, %v6081
      %v6147 = vadd.f32 %v5869, %v6084
      %v6148 = vadd.f32 %v5870, %v6087
      %v6149 = vadd.f32 %v5871, %v6090
      %v6150 = vadd.f32 %v5872, %v6093
      %v6151 = vadd.f32 %v5873, %v6096
      %v6152 = vadd.f32 %v5874, %v6099
      %v6153 = vadd.f32 %v5875, %v6102
      %v6154 = vadd.f32 %v5876, %v6105
      %v6155 = vadd.f32 %v5877, %v6108
      %v6156 = vadd.f32 %v5878, %v6111
      %v6157 = vadd.f32 %v5879, %v6114
      %v6158 = vadd.f32 %v5880, %v6117
      %v6159 = vadd.f32 %v5881, %v6120
      %v6160 = vadd.f32 %v5882, %v6123
      %v6161 = vadd.f32 %v5883, %v6126
      %v6162 = vadd.f32 %v5884, %v6129
      %s6163 = scalar_lea.vmem %s347, 24
      %v6164 = vld [vmem:[%s6163] sm:$0xff]
      %v6165 = vld [vmem:[%s6163 + $0x8] sm:$0xff]
      %v6166 = vld [vmem:[%s6163 + $0x18] sm:$0xff]
      %v6167 = vld [vmem:[%s6163 + $0x20] sm:$0xff]
      %v6168 = vld [vmem:[%s6163 + $0x30] sm:$0xff]
      %v6169 = vld [vmem:[%s6163 + $0x38] sm:$0xff]
      %v6170 = vld [vmem:[%s6163 + $0x48] sm:$0xff]
      %v6171 = vld [vmem:[%s6163 + $0x50] sm:$0xff]
      %v6172 = vld [vmem:[%s6163 + $0x60] sm:$0xff]
      %v6173 = vld [vmem:[%s6163 + $0x68] sm:$0xff]
      %v6174 = vld [vmem:[%s6163 + $0x78] sm:$0xff]
      %v6175 = vld [vmem:[%s6163 + $0x80] sm:$0xff]
      %v6176 = vld [vmem:[%s6163 + $0x90] sm:$0xff]
      %v6177 = vld [vmem:[%s6163 + $0x98] sm:$0xff]
      %v6178 = vld [vmem:[%s6163 + $0xa8] sm:$0xff]
      %v6179 = vld [vmem:[%s6163 + $0xb0] sm:$0xff]
      %v6180 = vld [vmem:[%s6163 + $0xc0] sm:$0xff]
      %v6181 = vld [vmem:[%s6163 + $0xc8] sm:$0xff]
      %v6182 = vld [vmem:[%s6163 + $0xd8] sm:$0xff]
      %v6183 = vld [vmem:[%s6163 + $0xe0] sm:$0xff]
      %v6184 = vld [vmem:[%s6163 + $0xf0] sm:$0xff]
      %v6185 = vld [vmem:[%s6163 + $0xf8] sm:$0xff]
      %v6186 = vld [vmem:[%s6163 + $0x108] sm:$0xff]
      %v6187 = vld [vmem:[%s6163 + $0x110] sm:$0xff]
      %v6188 = vld [vmem:[%s6163 + $0x120] sm:$0xff]
      %v6189 = vld [vmem:[%s6163 + $0x128] sm:$0xff]
      %v6190 = vld [vmem:[%s6163 + $0x138] sm:$0xff]
      %v6191 = vld [vmem:[%s6163 + $0x140] sm:$0xff]
      %v6192 = vld [vmem:[%s6163 + $0x150] sm:$0xff]
      %v6193 = vld [vmem:[%s6163 + $0x158] sm:$0xff]
      %v6194 = vld [vmem:[%s6163 + $0x168] sm:$0xff]
      %v6195 = vld [vmem:[%s6163 + $0x170] sm:$0xff]
      %s6196 = scalar_lea.vmem %s5, 12
      %v6197 = vld [vmem:[%s6196] sm:$0xf]
      %v6199 = vsel %vm2802, %v6164, 0
      %v6202 = vsel %vm2802, %v6165, 0
      %v6205 = vsel %vm2802, %v6166, 0
      %v6208 = vsel %vm2802, %v6167, 0
      %v6211 = vsel %vm2802, %v6168, 0
      %v6214 = vsel %vm2802, %v6169, 0
      %v6217 = vsel %vm2802, %v6170, 0
      %v6220 = vsel %vm2802, %v6171, 0
      %v6223 = vsel %vm2802, %v6172, 0
      %v6226 = vsel %vm2802, %v6173, 0
      %v6229 = vsel %vm2802, %v6174, 0
      %v6232 = vsel %vm2802, %v6175, 0
      %v6235 = vsel %vm2802, %v6176, 0
      %v6238 = vsel %vm2802, %v6177, 0
      %v6241 = vsel %vm2802, %v6178, 0
      %v6244 = vsel %vm2802, %v6179, 0
      %v6247 = vsel %vm2802, %v6180, 0
      %v6250 = vsel %vm2802, %v6181, 0
      %v6253 = vsel %vm2802, %v6182, 0
      %v6256 = vsel %vm2802, %v6183, 0
      %v6259 = vsel %vm2802, %v6184, 0
      %v6262 = vsel %vm2802, %v6185, 0
      %v6265 = vsel %vm2802, %v6186, 0
      %v6268 = vsel %vm2802, %v6187, 0
      %v6271 = vsel %vm2802, %v6188, 0
      %v6274 = vsel %vm2802, %v6189, 0
      %v6277 = vsel %vm2802, %v6190, 0
      %v6280 = vsel %vm2802, %v6191, 0
      %v6283 = vsel %vm2802, %v6192, 0
      %v6286 = vsel %vm2802, %v6193, 0
      %v6289 = vsel %vm2802, %v6194, 0
      %v6292 = vsel %vm2802, %v6195, 0
      %v6295 = vsel %vm3054, %v6197, 0
      %6297 = vmatpush.msra.mxu0 0.0
      %6298 = vmatpush.msra.mxu0 0.0
      %6299 = vmatpush.msra.mxu0 0.0
      %6300 = vmatpush.msra.mxu0 0.0
      %6301 = vmatpush.msra.mxu0 0.0
      %6302 = vmatpush.msra.mxu0 0.0
      %6303 = vmatpush.msra.mxu0 0.0
      %6304 = vmatpush.msra.mxu0 0.0
      %6305 = vmatpush.msra.mxu0 0.0
      %6306 = vmatpush.msra.mxu0 0.0
      %6307 = vmatpush.msra.mxu0 0.0
      %6308 = vmatpush.msra.mxu0 0.0
      %6309 = vmatpush.msra.mxu0 0.0
      %6310 = vmatpush.msra.mxu0 0.0
      %6311 = vmatpush.msra.mxu0 0.0
      %6312 = vmatpush.msra.mxu0 %v6295
      %6313 = vmatmul.f32.gmra.mxu0 %v6199
      %v6314 = vpop.f32.mrf.mxu0
      %v6315 = vadd.f32 0.0, %v6314
      %6316 = vmatmul.f32.gmra.mxu0 %v6202
      %v6317 = vpop.f32.mrf.mxu0
      %v6318 = vadd.f32 0.0, %v6317
      %6319 = vmatmul.f32.gmra.mxu0 %v6205
      %v6320 = vpop.f32.mrf.mxu0
      %v6321 = vadd.f32 0.0, %v6320
      %6322 = vmatmul.f32.gmra.mxu0 %v6208
      %v6323 = vpop.f32.mrf.mxu0
      %v6324 = vadd.f32 0.0, %v6323
      %6325 = vmatmul.f32.gmra.mxu0 %v6211
      %v6326 = vpop.f32.mrf.mxu0
      %v6327 = vadd.f32 0.0, %v6326
      %6328 = vmatmul.f32.gmra.mxu0 %v6214
      %v6329 = vpop.f32.mrf.mxu0
      %v6330 = vadd.f32 0.0, %v6329
      %6331 = vmatmul.f32.gmra.mxu0 %v6217
      %v6332 = vpop.f32.mrf.mxu0
      %v6333 = vadd.f32 0.0, %v6332
      %6334 = vmatmul.f32.gmra.mxu0 %v6220
      %v6335 = vpop.f32.mrf.mxu0
      %v6336 = vadd.f32 0.0, %v6335
      %6337 = vmatmul.f32.gmra.mxu0 %v6223
      %v6338 = vpop.f32.mrf.mxu0
      %v6339 = vadd.f32 0.0, %v6338
      %6340 = vmatmul.f32.gmra.mxu0 %v6226
      %v6341 = vpop.f32.mrf.mxu0
      %v6342 = vadd.f32 0.0, %v6341
      %6343 = vmatmul.f32.gmra.mxu0 %v6229
      %v6344 = vpop.f32.mrf.mxu0
      %v6345 = vadd.f32 0.0, %v6344
      %6346 = vmatmul.f32.gmra.mxu0 %v6232
      %v6347 = vpop.f32.mrf.mxu0
      %v6348 = vadd.f32 0.0, %v6347
      %6349 = vmatmul.f32.gmra.mxu0 %v6235
      %v6350 = vpop.f32.mrf.mxu0
      %v6351 = vadd.f32 0.0, %v6350
      %6352 = vmatmul.f32.gmra.mxu0 %v6238
      %v6353 = vpop.f32.mrf.mxu0
      %v6354 = vadd.f32 0.0, %v6353
      %6355 = vmatmul.f32.gmra.mxu0 %v6241
      %v6356 = vpop.f32.mrf.mxu0
      %v6357 = vadd.f32 0.0, %v6356
      %6358 = vmatmul.f32.gmra.mxu0 %v6244
      %v6359 = vpop.f32.mrf.mxu0
      %v6360 = vadd.f32 0.0, %v6359
      %6361 = vmatmul.f32.gmra.mxu0 %v6247
      %v6362 = vpop.f32.mrf.mxu0
      %v6363 = vadd.f32 0.0, %v6362
      %6364 = vmatmul.f32.gmra.mxu0 %v6250
      %v6365 = vpop.f32.mrf.mxu0
      %v6366 = vadd.f32 0.0, %v6365
      %6367 = vmatmul.f32.gmra.mxu0 %v6253
      %v6368 = vpop.f32.mrf.mxu0
      %v6369 = vadd.f32 0.0, %v6368
      %6370 = vmatmul.f32.gmra.mxu0 %v6256
      %v6371 = vpop.f32.mrf.mxu0
      %v6372 = vadd.f32 0.0, %v6371
      %6373 = vmatmul.f32.gmra.mxu0 %v6259
      %v6374 = vpop.f32.mrf.mxu0
      %v6375 = vadd.f32 0.0, %v6374
      %6376 = vmatmul.f32.gmra.mxu0 %v6262
      %v6377 = vpop.f32.mrf.mxu0
      %v6378 = vadd.f32 0.0, %v6377
      %6379 = vmatmul.f32.gmra.mxu0 %v6265
      %v6380 = vpop.f32.mrf.mxu0
      %v6381 = vadd.f32 0.0, %v6380
      %6382 = vmatmul.f32.gmra.mxu0 %v6268
      %v6383 = vpop.f32.mrf.mxu0
      %v6384 = vadd.f32 0.0, %v6383
      %6385 = vmatmul.f32.gmra.mxu0 %v6271
      %v6386 = vpop.f32.mrf.mxu0
      %v6387 = vadd.f32 0.0, %v6386
      %6388 = vmatmul.f32.gmra.mxu0 %v6274
      %v6389 = vpop.f32.mrf.mxu0
      %v6390 = vadd.f32 0.0, %v6389
      %6391 = vmatmul.f32.gmra.mxu0 %v6277
      %v6392 = vpop.f32.mrf.mxu0
      %v6393 = vadd.f32 0.0, %v6392
      %6394 = vmatmul.f32.gmra.mxu0 %v6280
      %v6395 = vpop.f32.mrf.mxu0
      %v6396 = vadd.f32 0.0, %v6395
      %6397 = vmatmul.f32.gmra.mxu0 %v6283
      %v6398 = vpop.f32.mrf.mxu0
      %v6399 = vadd.f32 0.0, %v6398
      %6400 = vmatmul.f32.gmra.mxu0 %v6286
      %v6401 = vpop.f32.mrf.mxu0
      %v6402 = vadd.f32 0.0, %v6401
      %6403 = vmatmul.f32.gmra.mxu0 %v6289
      %v6404 = vpop.f32.mrf.mxu0
      %v6405 = vadd.f32 0.0, %v6404
      %6406 = vmatmul.f32.gmra.mxu0 %v6292
      %v6407 = vpop.f32.mrf.mxu0
      %v6408 = vadd.f32 0.0, %v6407
      %6409 = vdwg.mxu0
      %v6410 = vadd.f32 %v6131, %v6315
      %v6411 = vadd.f32 %v6132, %v6318
      %v6412 = vadd.f32 %v6133, %v6321
      %v6413 = vadd.f32 %v6134, %v6324
      %v6414 = vadd.f32 %v6135, %v6327
      %v6415 = vadd.f32 %v6136, %v6330
      %v6416 = vadd.f32 %v6137, %v6333
      %v6417 = vadd.f32 %v6138, %v6336
      %v6418 = vadd.f32 %v6139, %v6339
      %v6419 = vadd.f32 %v6140, %v6342
      %v6420 = vadd.f32 %v6141, %v6345
      %v6421 = vadd.f32 %v6142, %v6348
      %v6422 = vadd.f32 %v6143, %v6351
      %v6423 = vadd.f32 %v6144, %v6354
      %v6424 = vadd.f32 %v6145, %v6357
      %v6425 = vadd.f32 %v6146, %v6360
      %v6426 = vadd.f32 %v6147, %v6363
      %v6427 = vadd.f32 %v6148, %v6366
      %v6428 = vadd.f32 %v6149, %v6369
      %v6429 = vadd.f32 %v6150, %v6372
      %v6430 = vadd.f32 %v6151, %v6375
      %v6431 = vadd.f32 %v6152, %v6378
      %v6432 = vadd.f32 %v6153, %v6381
      %v6433 = vadd.f32 %v6154, %v6384
      %v6434 = vadd.f32 %v6155, %v6387
      %v6435 = vadd.f32 %v6156, %v6390
      %v6436 = vadd.f32 %v6157, %v6393
      %v6437 = vadd.f32 %v6158, %v6396
      %v6438 = vadd.f32 %v6159, %v6399
      %v6439 = vadd.f32 %v6160, %v6402
      %v6440 = vadd.f32 %v6161, %v6405
      %v6441 = vadd.f32 %v6162, %v6408
      %v6442 = vld [vmem:[%s6163 + $0x1] sm:$0xff]
      %v6443 = vld [vmem:[%s6163 + $0x9] sm:$0xff]
      %v6444 = vld [vmem:[%s6163 + $0x19] sm:$0xff]
      %v6445 = vld [vmem:[%s6163 + $0x21] sm:$0xff]
      %v6446 = vld [vmem:[%s6163 + $0x31] sm:$0xff]
      %v6447 = vld [vmem:[%s6163 + $0x39] sm:$0xff]
      %v6448 = vld [vmem:[%s6163 + $0x49] sm:$0xff]
      %v6449 = vld [vmem:[%s6163 + $0x51] sm:$0xff]
      %v6450 = vld [vmem:[%s6163 + $0x61] sm:$0xff]
      %v6451 = vld [vmem:[%s6163 + $0x69] sm:$0xff]
      %v6452 = vld [vmem:[%s6163 + $0x79] sm:$0xff]
      %v6453 = vld [vmem:[%s6163 + $0x81] sm:$0xff]
      %v6454 = vld [vmem:[%s6163 + $0x91] sm:$0xff]
      %v6455 = vld [vmem:[%s6163 + $0x99] sm:$0xff]
      %v6456 = vld [vmem:[%s6163 + $0xa9] sm:$0xff]
      %v6457 = vld [vmem:[%s6163 + $0xb1] sm:$0xff]
      %v6458 = vld [vmem:[%s6163 + $0xc1] sm:$0xff]
      %v6459 = vld [vmem:[%s6163 + $0xc9] sm:$0xff]
      %v6460 = vld [vmem:[%s6163 + $0xd9] sm:$0xff]
      %v6461 = vld [vmem:[%s6163 + $0xe1] sm:$0xff]
      %v6462 = vld [vmem:[%s6163 + $0xf1] sm:$0xff]
      %v6463 = vld [vmem:[%s6163 + $0xf9] sm:$0xff]
      %v6464 = vld [vmem:[%s6163 + $0x109] sm:$0xff]
      %v6465 = vld [vmem:[%s6163 + $0x111] sm:$0xff]
      %v6466 = vld [vmem:[%s6163 + $0x121] sm:$0xff]
      %v6467 = vld [vmem:[%s6163 + $0x129] sm:$0xff]
      %v6468 = vld [vmem:[%s6163 + $0x139] sm:$0xff]
      %v6469 = vld [vmem:[%s6163 + $0x141] sm:$0xff]
      %v6470 = vld [vmem:[%s6163 + $0x151] sm:$0xff]
      %v6471 = vld [vmem:[%s6163 + $0x159] sm:$0xff]
      %v6472 = vld [vmem:[%s6163 + $0x169] sm:$0xff]
      %v6473 = vld [vmem:[%s6163 + $0x171] sm:$0xff]
      %s6474 = scalar_lea.vmem %s5, 16
      %v6475 = vld [vmem:[%s6474] sm:$0xf]
      %v6477 = vsel %vm2802, %v6442, 0
      %v6480 = vsel %vm2802, %v6443, 0
      %v6483 = vsel %vm2802, %v6444, 0
      %v6486 = vsel %vm2802, %v6445, 0
      %v6489 = vsel %vm2802, %v6446, 0
      %v6492 = vsel %vm2802, %v6447, 0
      %v6495 = vsel %vm2802, %v6448, 0
      %v6498 = vsel %vm2802, %v6449, 0
      %v6501 = vsel %vm2802, %v6450, 0
      %v6504 = vsel %vm2802, %v6451, 0
      %v6507 = vsel %vm2802, %v6452, 0
      %v6510 = vsel %vm2802, %v6453, 0
      %v6513 = vsel %vm2802, %v6454, 0
      %v6516 = vsel %vm2802, %v6455, 0
      %v6519 = vsel %vm2802, %v6456, 0
      %v6522 = vsel %vm2802, %v6457, 0
      %v6525 = vsel %vm2802, %v6458, 0
      %v6528 = vsel %vm2802, %v6459, 0
      %v6531 = vsel %vm2802, %v6460, 0
      %v6534 = vsel %vm2802, %v6461, 0
      %v6537 = vsel %vm2802, %v6462, 0
      %v6540 = vsel %vm2802, %v6463, 0
      %v6543 = vsel %vm2802, %v6464, 0
      %v6546 = vsel %vm2802, %v6465, 0
      %v6549 = vsel %vm2802, %v6466, 0
      %v6552 = vsel %vm2802, %v6467, 0
      %v6555 = vsel %vm2802, %v6468, 0
      %v6558 = vsel %vm2802, %v6469, 0
      %v6561 = vsel %vm2802, %v6470, 0
      %v6564 = vsel %vm2802, %v6471, 0
      %v6567 = vsel %vm2802, %v6472, 0
      %v6570 = vsel %vm2802, %v6473, 0
      %v6573 = vsel %vm3054, %v6475, 0
      %6575 = vmatpush.msra.mxu0 0.0
      %6576 = vmatpush.msra.mxu0 0.0
      %6577 = vmatpush.msra.mxu0 0.0
      %6578 = vmatpush.msra.mxu0 0.0
      %6579 = vmatpush.msra.mxu0 0.0
      %6580 = vmatpush.msra.mxu0 0.0
      %6581 = vmatpush.msra.mxu0 0.0
      %6582 = vmatpush.msra.mxu0 0.0
      %6583 = vmatpush.msra.mxu0 0.0
      %6584 = vmatpush.msra.mxu0 0.0
      %6585 = vmatpush.msra.mxu0 0.0
      %6586 = vmatpush.msra.mxu0 0.0
      %6587 = vmatpush.msra.mxu0 0.0
      %6588 = vmatpush.msra.mxu0 0.0
      %6589 = vmatpush.msra.mxu0 0.0
      %6590 = vmatpush.msra.mxu0 %v6573
      %6591 = vmatmul.f32.gmra.mxu0 %v6477
      %v6592 = vpop.f32.mrf.mxu0
      %v6593 = vadd.f32 0.0, %v6592
      %6594 = vmatmul.f32.gmra.mxu0 %v6480
      %v6595 = vpop.f32.mrf.mxu0
      %v6596 = vadd.f32 0.0, %v6595
      %6597 = vmatmul.f32.gmra.mxu0 %v6483
      %v6598 = vpop.f32.mrf.mxu0
      %v6599 = vadd.f32 0.0, %v6598
      %6600 = vmatmul.f32.gmra.mxu0 %v6486
      %v6601 = vpop.f32.mrf.mxu0
      %v6602 = vadd.f32 0.0, %v6601
      %6603 = vmatmul.f32.gmra.mxu0 %v6489
      %v6604 = vpop.f32.mrf.mxu0
      %v6605 = vadd.f32 0.0, %v6604
      %6606 = vmatmul.f32.gmra.mxu0 %v6492
      %v6607 = vpop.f32.mrf.mxu0
      %v6608 = vadd.f32 0.0, %v6607
      %6609 = vmatmul.f32.gmra.mxu0 %v6495
      %v6610 = vpop.f32.mrf.mxu0
      %v6611 = vadd.f32 0.0, %v6610
      %6612 = vmatmul.f32.gmra.mxu0 %v6498
      %v6613 = vpop.f32.mrf.mxu0
      %v6614 = vadd.f32 0.0, %v6613
      %6615 = vmatmul.f32.gmra.mxu0 %v6501
      %v6616 = vpop.f32.mrf.mxu0
      %v6617 = vadd.f32 0.0, %v6616
      %6618 = vmatmul.f32.gmra.mxu0 %v6504
      %v6619 = vpop.f32.mrf.mxu0
      %v6620 = vadd.f32 0.0, %v6619
      %6621 = vmatmul.f32.gmra.mxu0 %v6507
      %v6622 = vpop.f32.mrf.mxu0
      %v6623 = vadd.f32 0.0, %v6622
      %6624 = vmatmul.f32.gmra.mxu0 %v6510
      %v6625 = vpop.f32.mrf.mxu0
      %v6626 = vadd.f32 0.0, %v6625
      %6627 = vmatmul.f32.gmra.mxu0 %v6513
      %v6628 = vpop.f32.mrf.mxu0
      %v6629 = vadd.f32 0.0, %v6628
      %6630 = vmatmul.f32.gmra.mxu0 %v6516
      %v6631 = vpop.f32.mrf.mxu0
      %v6632 = vadd.f32 0.0, %v6631
      %6633 = vmatmul.f32.gmra.mxu0 %v6519
      %v6634 = vpop.f32.mrf.mxu0
      %v6635 = vadd.f32 0.0, %v6634
      %6636 = vmatmul.f32.gmra.mxu0 %v6522
      %v6637 = vpop.f32.mrf.mxu0
      %v6638 = vadd.f32 0.0, %v6637
      %6639 = vmatmul.f32.gmra.mxu0 %v6525
      %v6640 = vpop.f32.mrf.mxu0
      %v6641 = vadd.f32 0.0, %v6640
      %6642 = vmatmul.f32.gmra.mxu0 %v6528
      %v6643 = vpop.f32.mrf.mxu0
      %v6644 = vadd.f32 0.0, %v6643
      %6645 = vmatmul.f32.gmra.mxu0 %v6531
      %v6646 = vpop.f32.mrf.mxu0
      %v6647 = vadd.f32 0.0, %v6646
      %6648 = vmatmul.f32.gmra.mxu0 %v6534
      %v6649 = vpop.f32.mrf.mxu0
      %v6650 = vadd.f32 0.0, %v6649
      %6651 = vmatmul.f32.gmra.mxu0 %v6537
      %v6652 = vpop.f32.mrf.mxu0
      %v6653 = vadd.f32 0.0, %v6652
      %6654 = vmatmul.f32.gmra.mxu0 %v6540
      %v6655 = vpop.f32.mrf.mxu0
      %v6656 = vadd.f32 0.0, %v6655
      %6657 = vmatmul.f32.gmra.mxu0 %v6543
      %v6658 = vpop.f32.mrf.mxu0
      %v6659 = vadd.f32 0.0, %v6658
      %6660 = vmatmul.f32.gmra.mxu0 %v6546
      %v6661 = vpop.f32.mrf.mxu0
      %v6662 = vadd.f32 0.0, %v6661
      %6663 = vmatmul.f32.gmra.mxu0 %v6549
      %v6664 = vpop.f32.mrf.mxu0
      %v6665 = vadd.f32 0.0, %v6664
      %6666 = vmatmul.f32.gmra.mxu0 %v6552
      %v6667 = vpop.f32.mrf.mxu0
      %v6668 = vadd.f32 0.0, %v6667
      %6669 = vmatmul.f32.gmra.mxu0 %v6555
      %v6670 = vpop.f32.mrf.mxu0
      %v6671 = vadd.f32 0.0, %v6670
      %6672 = vmatmul.f32.gmra.mxu0 %v6558
      %v6673 = vpop.f32.mrf.mxu0
      %v6674 = vadd.f32 0.0, %v6673
      %6675 = vmatmul.f32.gmra.mxu0 %v6561
      %v6676 = vpop.f32.mrf.mxu0
      %v6677 = vadd.f32 0.0, %v6676
      %6678 = vmatmul.f32.gmra.mxu0 %v6564
      %v6679 = vpop.f32.mrf.mxu0
      %v6680 = vadd.f32 0.0, %v6679
      %6681 = vmatmul.f32.gmra.mxu0 %v6567
      %v6682 = vpop.f32.mrf.mxu0
      %v6683 = vadd.f32 0.0, %v6682
      %6684 = vmatmul.f32.gmra.mxu0 %v6570
      %v6685 = vpop.f32.mrf.mxu0
      %v6686 = vadd.f32 0.0, %v6685
      %6687 = vdwg.mxu0
      %v6688 = vadd.f32 %v6410, %v6593
      %v6689 = vadd.f32 %v6411, %v6596
      %v6690 = vadd.f32 %v6412, %v6599
      %v6691 = vadd.f32 %v6413, %v6602
      %v6692 = vadd.f32 %v6414, %v6605
      %v6693 = vadd.f32 %v6415, %v6608
      %v6694 = vadd.f32 %v6416, %v6611
      %v6695 = vadd.f32 %v6417, %v6614
      %v6696 = vadd.f32 %v6418, %v6617
      %v6697 = vadd.f32 %v6419, %v6620
      %v6698 = vadd.f32 %v6420, %v6623
      %v6699 = vadd.f32 %v6421, %v6626
      %v6700 = vadd.f32 %v6422, %v6629
      %v6701 = vadd.f32 %v6423, %v6632
      %v6702 = vadd.f32 %v6424, %v6635
      %v6703 = vadd.f32 %v6425, %v6638
      %v6704 = vadd.f32 %v6426, %v6641
      %v6705 = vadd.f32 %v6427, %v6644
      %v6706 = vadd.f32 %v6428, %v6647
      %v6707 = vadd.f32 %v6429, %v6650
      %v6708 = vadd.f32 %v6430, %v6653
      %v6709 = vadd.f32 %v6431, %v6656
      %v6710 = vadd.f32 %v6432, %v6659
      %v6711 = vadd.f32 %v6433, %v6662
      %v6712 = vadd.f32 %v6434, %v6665
      %v6713 = vadd.f32 %v6435, %v6668
      %v6714 = vadd.f32 %v6436, %v6671
      %v6715 = vadd.f32 %v6437, %v6674
      %v6716 = vadd.f32 %v6438, %v6677
      %v6717 = vadd.f32 %v6439, %v6680
      %v6718 = vadd.f32 %v6440, %v6683
      %v6719 = vadd.f32 %v6441, %v6686
      %v6720 = vld [vmem:[%s6163 + $0x2] sm:$0xff]
      %v6721 = vld [vmem:[%s6163 + $0xa] sm:$0xff]
      %v6722 = vld [vmem:[%s6163 + $0x1a] sm:$0xff]
      %v6723 = vld [vmem:[%s6163 + $0x22] sm:$0xff]
      %v6724 = vld [vmem:[%s6163 + $0x32] sm:$0xff]
      %v6725 = vld [vmem:[%s6163 + $0x3a] sm:$0xff]
      %v6726 = vld [vmem:[%s6163 + $0x4a] sm:$0xff]
      %v6727 = vld [vmem:[%s6163 + $0x52] sm:$0xff]
      %v6728 = vld [vmem:[%s6163 + $0x62] sm:$0xff]
      %v6729 = vld [vmem:[%s6163 + $0x6a] sm:$0xff]
      %v6730 = vld [vmem:[%s6163 + $0x7a] sm:$0xff]
      %v6731 = vld [vmem:[%s6163 + $0x82] sm:$0xff]
      %v6732 = vld [vmem:[%s6163 + $0x92] sm:$0xff]
      %v6733 = vld [vmem:[%s6163 + $0x9a] sm:$0xff]
      %v6734 = vld [vmem:[%s6163 + $0xaa] sm:$0xff]
      %v6735 = vld [vmem:[%s6163 + $0xb2] sm:$0xff]
      %v6736 = vld [vmem:[%s6163 + $0xc2] sm:$0xff]
      %v6737 = vld [vmem:[%s6163 + $0xca] sm:$0xff]
      %v6738 = vld [vmem:[%s6163 + $0xda] sm:$0xff]
      %v6739 = vld [vmem:[%s6163 + $0xe2] sm:$0xff]
      %v6740 = vld [vmem:[%s6163 + $0xf2] sm:$0xff]
      %v6741 = vld [vmem:[%s6163 + $0xfa] sm:$0xff]
      %v6742 = vld [vmem:[%s6163 + $0x10a] sm:$0xff]
      %v6743 = vld [vmem:[%s6163 + $0x112] sm:$0xff]
      %v6744 = vld [vmem:[%s6163 + $0x122] sm:$0xff]
      %v6745 = vld [vmem:[%s6163 + $0x12a] sm:$0xff]
      %v6746 = vld [vmem:[%s6163 + $0x13a] sm:$0xff]
      %v6747 = vld [vmem:[%s6163 + $0x142] sm:$0xff]
      %v6748 = vld [vmem:[%s6163 + $0x152] sm:$0xff]
      %v6749 = vld [vmem:[%s6163 + $0x15a] sm:$0xff]
      %v6750 = vld [vmem:[%s6163 + $0x16a] sm:$0xff]
      %v6751 = vld [vmem:[%s6163 + $0x172] sm:$0xff]
      %s6752 = scalar_lea.vmem %s5, 20
      %v6753 = vld [vmem:[%s6752] sm:$0xf]
      %v6755 = vsel %vm2802, %v6720, 0
      %v6758 = vsel %vm2802, %v6721, 0
      %v6761 = vsel %vm2802, %v6722, 0
      %v6764 = vsel %vm2802, %v6723, 0
      %v6767 = vsel %vm2802, %v6724, 0
      %v6770 = vsel %vm2802, %v6725, 0
      %v6773 = vsel %vm2802, %v6726, 0
      %v6776 = vsel %vm2802, %v6727, 0
      %v6779 = vsel %vm2802, %v6728, 0
      %v6782 = vsel %vm2802, %v6729, 0
      %v6785 = vsel %vm2802, %v6730, 0
      %v6788 = vsel %vm2802, %v6731, 0
      %v6791 = vsel %vm2802, %v6732, 0
      %v6794 = vsel %vm2802, %v6733, 0
      %v6797 = vsel %vm2802, %v6734, 0
      %v6800 = vsel %vm2802, %v6735, 0
      %v6803 = vsel %vm2802, %v6736, 0
      %v6806 = vsel %vm2802, %v6737, 0
      %v6809 = vsel %vm2802, %v6738, 0
      %v6812 = vsel %vm2802, %v6739, 0
      %v6815 = vsel %vm2802, %v6740, 0
      %v6818 = vsel %vm2802, %v6741, 0
      %v6821 = vsel %vm2802, %v6742, 0
      %v6824 = vsel %vm2802, %v6743, 0
      %v6827 = vsel %vm2802, %v6744, 0
      %v6830 = vsel %vm2802, %v6745, 0
      %v6833 = vsel %vm2802, %v6746, 0
      %v6836 = vsel %vm2802, %v6747, 0
      %v6839 = vsel %vm2802, %v6748, 0
      %v6842 = vsel %vm2802, %v6749, 0
      %v6845 = vsel %vm2802, %v6750, 0
      %v6848 = vsel %vm2802, %v6751, 0
      %v6851 = vsel %vm3054, %v6753, 0
      %6853 = vmatpush.msra.mxu0 0.0
      %6854 = vmatpush.msra.mxu0 0.0
      %6855 = vmatpush.msra.mxu0 0.0
      %6856 = vmatpush.msra.mxu0 0.0
      %6857 = vmatpush.msra.mxu0 0.0
      %6858 = vmatpush.msra.mxu0 0.0
      %6859 = vmatpush.msra.mxu0 0.0
      %6860 = vmatpush.msra.mxu0 0.0
      %6861 = vmatpush.msra.mxu0 0.0
      %6862 = vmatpush.msra.mxu0 0.0
      %6863 = vmatpush.msra.mxu0 0.0
      %6864 = vmatpush.msra.mxu0 0.0
      %6865 = vmatpush.msra.mxu0 0.0
      %6866 = vmatpush.msra.mxu0 0.0
      %6867 = vmatpush.msra.mxu0 0.0
      %6868 = vmatpush.msra.mxu0 %v6851
      %6869 = vmatmul.f32.gmra.mxu0 %v6755
      %v6870 = vpop.f32.mrf.mxu0
      %v6871 = vadd.f32 0.0, %v6870
      %6872 = vmatmul.f32.gmra.mxu0 %v6758
      %v6873 = vpop.f32.mrf.mxu0
      %v6874 = vadd.f32 0.0, %v6873
      %6875 = vmatmul.f32.gmra.mxu0 %v6761
      %v6876 = vpop.f32.mrf.mxu0
      %v6877 = vadd.f32 0.0, %v6876
      %6878 = vmatmul.f32.gmra.mxu0 %v6764
      %v6879 = vpop.f32.mrf.mxu0
      %v6880 = vadd.f32 0.0, %v6879
      %6881 = vmatmul.f32.gmra.mxu0 %v6767
      %v6882 = vpop.f32.mrf.mxu0
      %v6883 = vadd.f32 0.0, %v6882
      %6884 = vmatmul.f32.gmra.mxu0 %v6770
      %v6885 = vpop.f32.mrf.mxu0
      %v6886 = vadd.f32 0.0, %v6885
      %6887 = vmatmul.f32.gmra.mxu0 %v6773
      %v6888 = vpop.f32.mrf.mxu0
      %v6889 = vadd.f32 0.0, %v6888
      %6890 = vmatmul.f32.gmra.mxu0 %v6776
      %v6891 = vpop.f32.mrf.mxu0
      %v6892 = vadd.f32 0.0, %v6891
      %6893 = vmatmul.f32.gmra.mxu0 %v6779
      %v6894 = vpop.f32.mrf.mxu0
      %v6895 = vadd.f32 0.0, %v6894
      %6896 = vmatmul.f32.gmra.mxu0 %v6782
      %v6897 = vpop.f32.mrf.mxu0
      %v6898 = vadd.f32 0.0, %v6897
      %6899 = vmatmul.f32.gmra.mxu0 %v6785
      %v6900 = vpop.f32.mrf.mxu0
      %v6901 = vadd.f32 0.0, %v6900
      %6902 = vmatmul.f32.gmra.mxu0 %v6788
      %v6903 = vpop.f32.mrf.mxu0
      %v6904 = vadd.f32 0.0, %v6903
      %6905 = vmatmul.f32.gmra.mxu0 %v6791
      %v6906 = vpop.f32.mrf.mxu0
      %v6907 = vadd.f32 0.0, %v6906
      %6908 = vmatmul.f32.gmra.mxu0 %v6794
      %v6909 = vpop.f32.mrf.mxu0
      %v6910 = vadd.f32 0.0, %v6909
      %6911 = vmatmul.f32.gmra.mxu0 %v6797
      %v6912 = vpop.f32.mrf.mxu0
      %v6913 = vadd.f32 0.0, %v6912
      %6914 = vmatmul.f32.gmra.mxu0 %v6800
      %v6915 = vpop.f32.mrf.mxu0
      %v6916 = vadd.f32 0.0, %v6915
      %6917 = vmatmul.f32.gmra.mxu0 %v6803
      %v6918 = vpop.f32.mrf.mxu0
      %v6919 = vadd.f32 0.0, %v6918
      %6920 = vmatmul.f32.gmra.mxu0 %v6806
      %v6921 = vpop.f32.mrf.mxu0
      %v6922 = vadd.f32 0.0, %v6921
      %6923 = vmatmul.f32.gmra.mxu0 %v6809
      %v6924 = vpop.f32.mrf.mxu0
      %v6925 = vadd.f32 0.0, %v6924
      %6926 = vmatmul.f32.gmra.mxu0 %v6812
      %v6927 = vpop.f32.mrf.mxu0
      %v6928 = vadd.f32 0.0, %v6927
      %6929 = vmatmul.f32.gmra.mxu0 %v6815
      %v6930 = vpop.f32.mrf.mxu0
      %v6931 = vadd.f32 0.0, %v6930
      %6932 = vmatmul.f32.gmra.mxu0 %v6818
      %v6933 = vpop.f32.mrf.mxu0
      %v6934 = vadd.f32 0.0, %v6933
      %6935 = vmatmul.f32.gmra.mxu0 %v6821
      %v6936 = vpop.f32.mrf.mxu0
      %v6937 = vadd.f32 0.0, %v6936
      %6938 = vmatmul.f32.gmra.mxu0 %v6824
      %v6939 = vpop.f32.mrf.mxu0
      %v6940 = vadd.f32 0.0, %v6939
      %6941 = vmatmul.f32.gmra.mxu0 %v6827
      %v6942 = vpop.f32.mrf.mxu0
      %v6943 = vadd.f32 0.0, %v6942
      %6944 = vmatmul.f32.gmra.mxu0 %v6830
      %v6945 = vpop.f32.mrf.mxu0
      %v6946 = vadd.f32 0.0, %v6945
      %6947 = vmatmul.f32.gmra.mxu0 %v6833
      %v6948 = vpop.f32.mrf.mxu0
      %v6949 = vadd.f32 0.0, %v6948
      %6950 = vmatmul.f32.gmra.mxu0 %v6836
      %v6951 = vpop.f32.mrf.mxu0
      %v6952 = vadd.f32 0.0, %v6951
      %6953 = vmatmul.f32.gmra.mxu0 %v6839
      %v6954 = vpop.f32.mrf.mxu0
      %v6955 = vadd.f32 0.0, %v6954
      %6956 = vmatmul.f32.gmra.mxu0 %v6842
      %v6957 = vpop.f32.mrf.mxu0
      %v6958 = vadd.f32 0.0, %v6957
      %6959 = vmatmul.f32.gmra.mxu0 %v6845
      %v6960 = vpop.f32.mrf.mxu0
      %v6961 = vadd.f32 0.0, %v6960
      %6962 = vmatmul.f32.gmra.mxu0 %v6848
      %v6963 = vpop.f32.mrf.mxu0
      %v6964 = vadd.f32 0.0, %v6963
      %6965 = vdwg.mxu0
      %v6966 = vadd.f32 %v6688, %v6871
      %v6967 = vadd.f32 %v6689, %v6874
      %v6968 = vadd.f32 %v6690, %v6877
      %v6969 = vadd.f32 %v6691, %v6880
      %v6970 = vadd.f32 %v6692, %v6883
      %v6971 = vadd.f32 %v6693, %v6886
      %v6972 = vadd.f32 %v6694, %v6889
      %v6973 = vadd.f32 %v6695, %v6892
      %v6974 = vadd.f32 %v6696, %v6895
      %v6975 = vadd.f32 %v6697, %v6898
      %v6976 = vadd.f32 %v6698, %v6901
      %v6977 = vadd.f32 %v6699, %v6904
      %v6978 = vadd.f32 %v6700, %v6907
      %v6979 = vadd.f32 %v6701, %v6910
      %v6980 = vadd.f32 %v6702, %v6913
      %v6981 = vadd.f32 %v6703, %v6916
      %v6982 = vadd.f32 %v6704, %v6919
      %v6983 = vadd.f32 %v6705, %v6922
      %v6984 = vadd.f32 %v6706, %v6925
      %v6985 = vadd.f32 %v6707, %v6928
      %v6986 = vadd.f32 %v6708, %v6931
      %v6987 = vadd.f32 %v6709, %v6934
      %v6988 = vadd.f32 %v6710, %v6937
      %v6989 = vadd.f32 %v6711, %v6940
      %v6990 = vadd.f32 %v6712, %v6943
      %v6991 = vadd.f32 %v6713, %v6946
      %v6992 = vadd.f32 %v6714, %v6949
      %v6993 = vadd.f32 %v6715, %v6952
      %v6994 = vadd.f32 %v6716, %v6955
      %v6995 = vadd.f32 %v6717, %v6958
      %v6996 = vadd.f32 %v6718, %v6961
      %v6997 = vadd.f32 %v6719, %v6964
      %s6998 = scalar_lea.vmem %s347, 48
      %v6999 = vld [vmem:[%s6998] sm:$0xff]
      %v7000 = vld [vmem:[%s6998 + $0x8] sm:$0xff]
      %v7001 = vld [vmem:[%s6998 + $0x18] sm:$0xff]
      %v7002 = vld [vmem:[%s6998 + $0x20] sm:$0xff]
      %v7003 = vld [vmem:[%s6998 + $0x30] sm:$0xff]
      %v7004 = vld [vmem:[%s6998 + $0x38] sm:$0xff]
      %v7005 = vld [vmem:[%s6998 + $0x48] sm:$0xff]
      %v7006 = vld [vmem:[%s6998 + $0x50] sm:$0xff]
      %v7007 = vld [vmem:[%s6998 + $0x60] sm:$0xff]
      %v7008 = vld [vmem:[%s6998 + $0x68] sm:$0xff]
      %v7009 = vld [vmem:[%s6998 + $0x78] sm:$0xff]
      %v7010 = vld [vmem:[%s6998 + $0x80] sm:$0xff]
      %v7011 = vld [vmem:[%s6998 + $0x90] sm:$0xff]
      %v7012 = vld [vmem:[%s6998 + $0x98] sm:$0xff]
      %v7013 = vld [vmem:[%s6998 + $0xa8] sm:$0xff]
      %v7014 = vld [vmem:[%s6998 + $0xb0] sm:$0xff]
      %v7015 = vld [vmem:[%s6998 + $0xc0] sm:$0xff]
      %v7016 = vld [vmem:[%s6998 + $0xc8] sm:$0xff]
      %v7017 = vld [vmem:[%s6998 + $0xd8] sm:$0xff]
      %v7018 = vld [vmem:[%s6998 + $0xe0] sm:$0xff]
      %v7019 = vld [vmem:[%s6998 + $0xf0] sm:$0xff]
      %v7020 = vld [vmem:[%s6998 + $0xf8] sm:$0xff]
      %v7021 = vld [vmem:[%s6998 + $0x108] sm:$0xff]
      %v7022 = vld [vmem:[%s6998 + $0x110] sm:$0xff]
      %v7023 = vld [vmem:[%s6998 + $0x120] sm:$0xff]
      %v7024 = vld [vmem:[%s6998 + $0x128] sm:$0xff]
      %v7025 = vld [vmem:[%s6998 + $0x138] sm:$0xff]
      %v7026 = vld [vmem:[%s6998 + $0x140] sm:$0xff]
      %v7027 = vld [vmem:[%s6998 + $0x150] sm:$0xff]
      %v7028 = vld [vmem:[%s6998 + $0x158] sm:$0xff]
      %v7029 = vld [vmem:[%s6998 + $0x168] sm:$0xff]
      %v7030 = vld [vmem:[%s6998 + $0x170] sm:$0xff]
      %s7031 = scalar_lea.vmem %s5, 24
      %v7032 = vld [vmem:[%s7031] sm:$0xf]
      %v7034 = vsel %vm2802, %v6999, 0
      %v7037 = vsel %vm2802, %v7000, 0
      %v7040 = vsel %vm2802, %v7001, 0
      %v7043 = vsel %vm2802, %v7002, 0
      %v7046 = vsel %vm2802, %v7003, 0
      %v7049 = vsel %vm2802, %v7004, 0
      %v7052 = vsel %vm2802, %v7005, 0
      %v7055 = vsel %vm2802, %v7006, 0
      %v7058 = vsel %vm2802, %v7007, 0
      %v7061 = vsel %vm2802, %v7008, 0
      %v7064 = vsel %vm2802, %v7009, 0
      %v7067 = vsel %vm2802, %v7010, 0
      %v7070 = vsel %vm2802, %v7011, 0
      %v7073 = vsel %vm2802, %v7012, 0
      %v7076 = vsel %vm2802, %v7013, 0
      %v7079 = vsel %vm2802, %v7014, 0
      %v7082 = vsel %vm2802, %v7015, 0
      %v7085 = vsel %vm2802, %v7016, 0
      %v7088 = vsel %vm2802, %v7017, 0
      %v7091 = vsel %vm2802, %v7018, 0
      %v7094 = vsel %vm2802, %v7019, 0
      %v7097 = vsel %vm2802, %v7020, 0
      %v7100 = vsel %vm2802, %v7021, 0
      %v7103 = vsel %vm2802, %v7022, 0
      %v7106 = vsel %vm2802, %v7023, 0
      %v7109 = vsel %vm2802, %v7024, 0
      %v7112 = vsel %vm2802, %v7025, 0
      %v7115 = vsel %vm2802, %v7026, 0
      %v7118 = vsel %vm2802, %v7027, 0
      %v7121 = vsel %vm2802, %v7028, 0
      %v7124 = vsel %vm2802, %v7029, 0
      %v7127 = vsel %vm2802, %v7030, 0
      %v7130 = vsel %vm3054, %v7032, 0
      %7132 = vmatpush.msra.mxu0 0.0
      %7133 = vmatpush.msra.mxu0 0.0
      %7134 = vmatpush.msra.mxu0 0.0
      %7135 = vmatpush.msra.mxu0 0.0
      %7136 = vmatpush.msra.mxu0 0.0
      %7137 = vmatpush.msra.mxu0 0.0
      %7138 = vmatpush.msra.mxu0 0.0
      %7139 = vmatpush.msra.mxu0 0.0
      %7140 = vmatpush.msra.mxu0 0.0
      %7141 = vmatpush.msra.mxu0 0.0
      %7142 = vmatpush.msra.mxu0 0.0
      %7143 = vmatpush.msra.mxu0 0.0
      %7144 = vmatpush.msra.mxu0 0.0
      %7145 = vmatpush.msra.mxu0 0.0
      %7146 = vmatpush.msra.mxu0 0.0
      %7147 = vmatpush.msra.mxu0 %v7130
      %7148 = vmatmul.f32.gmra.mxu0 %v7034
      %v7149 = vpop.f32.mrf.mxu0
      %v7150 = vadd.f32 0.0, %v7149
      %7151 = vmatmul.f32.gmra.mxu0 %v7037
      %v7152 = vpop.f32.mrf.mxu0
      %v7153 = vadd.f32 0.0, %v7152
      %7154 = vmatmul.f32.gmra.mxu0 %v7040
      %v7155 = vpop.f32.mrf.mxu0
      %v7156 = vadd.f32 0.0, %v7155
      %7157 = vmatmul.f32.gmra.mxu0 %v7043
      %v7158 = vpop.f32.mrf.mxu0
      %v7159 = vadd.f32 0.0, %v7158
      %7160 = vmatmul.f32.gmra.mxu0 %v7046
      %v7161 = vpop.f32.mrf.mxu0
      %v7162 = vadd.f32 0.0, %v7161
      %7163 = vmatmul.f32.gmra.mxu0 %v7049
      %v7164 = vpop.f32.mrf.mxu0
      %v7165 = vadd.f32 0.0, %v7164
      %7166 = vmatmul.f32.gmra.mxu0 %v7052
      %v7167 = vpop.f32.mrf.mxu0
      %v7168 = vadd.f32 0.0, %v7167
      %7169 = vmatmul.f32.gmra.mxu0 %v7055
      %v7170 = vpop.f32.mrf.mxu0
      %v7171 = vadd.f32 0.0, %v7170
      %7172 = vmatmul.f32.gmra.mxu0 %v7058
      %v7173 = vpop.f32.mrf.mxu0
      %v7174 = vadd.f32 0.0, %v7173
      %7175 = vmatmul.f32.gmra.mxu0 %v7061
      %v7176 = vpop.f32.mrf.mxu0
      %v7177 = vadd.f32 0.0, %v7176
      %7178 = vmatmul.f32.gmra.mxu0 %v7064
      %v7179 = vpop.f32.mrf.mxu0
      %v7180 = vadd.f32 0.0, %v7179
      %7181 = vmatmul.f32.gmra.mxu0 %v7067
      %v7182 = vpop.f32.mrf.mxu0
      %v7183 = vadd.f32 0.0, %v7182
      %7184 = vmatmul.f32.gmra.mxu0 %v7070
      %v7185 = vpop.f32.mrf.mxu0
      %v7186 = vadd.f32 0.0, %v7185
      %7187 = vmatmul.f32.gmra.mxu0 %v7073
      %v7188 = vpop.f32.mrf.mxu0
      %v7189 = vadd.f32 0.0, %v7188
      %7190 = vmatmul.f32.gmra.mxu0 %v7076
      %v7191 = vpop.f32.mrf.mxu0
      %v7192 = vadd.f32 0.0, %v7191
      %7193 = vmatmul.f32.gmra.mxu0 %v7079
      %v7194 = vpop.f32.mrf.mxu0
      %v7195 = vadd.f32 0.0, %v7194
      %7196 = vmatmul.f32.gmra.mxu0 %v7082
      %v7197 = vpop.f32.mrf.mxu0
      %v7198 = vadd.f32 0.0, %v7197
      %7199 = vmatmul.f32.gmra.mxu0 %v7085
      %v7200 = vpop.f32.mrf.mxu0
      %v7201 = vadd.f32 0.0, %v7200
      %7202 = vmatmul.f32.gmra.mxu0 %v7088
      %v7203 = vpop.f32.mrf.mxu0
      %v7204 = vadd.f32 0.0, %v7203
      %7205 = vmatmul.f32.gmra.mxu0 %v7091
      %v7206 = vpop.f32.mrf.mxu0
      %v7207 = vadd.f32 0.0, %v7206
      %7208 = vmatmul.f32.gmra.mxu0 %v7094
      %v7209 = vpop.f32.mrf.mxu0
      %v7210 = vadd.f32 0.0, %v7209
      %7211 = vmatmul.f32.gmra.mxu0 %v7097
      %v7212 = vpop.f32.mrf.mxu0
      %v7213 = vadd.f32 0.0, %v7212
      %7214 = vmatmul.f32.gmra.mxu0 %v7100
      %v7215 = vpop.f32.mrf.mxu0
      %v7216 = vadd.f32 0.0, %v7215
      %7217 = vmatmul.f32.gmra.mxu0 %v7103
      %v7218 = vpop.f32.mrf.mxu0
      %v7219 = vadd.f32 0.0, %v7218
      %7220 = vmatmul.f32.gmra.mxu0 %v7106
      %v7221 = vpop.f32.mrf.mxu0
      %v7222 = vadd.f32 0.0, %v7221
      %7223 = vmatmul.f32.gmra.mxu0 %v7109
      %v7224 = vpop.f32.mrf.mxu0
      %v7225 = vadd.f32 0.0, %v7224
      %7226 = vmatmul.f32.gmra.mxu0 %v7112
      %v7227 = vpop.f32.mrf.mxu0
      %v7228 = vadd.f32 0.0, %v7227
      %7229 = vmatmul.f32.gmra.mxu0 %v7115
      %v7230 = vpop.f32.mrf.mxu0
      %v7231 = vadd.f32 0.0, %v7230
      %7232 = vmatmul.f32.gmra.mxu0 %v7118
      %v7233 = vpop.f32.mrf.mxu0
      %v7234 = vadd.f32 0.0, %v7233
      %7235 = vmatmul.f32.gmra.mxu0 %v7121
      %v7236 = vpop.f32.mrf.mxu0
      %v7237 = vadd.f32 0.0, %v7236
      %7238 = vmatmul.f32.gmra.mxu0 %v7124
      %v7239 = vpop.f32.mrf.mxu0
      %v7240 = vadd.f32 0.0, %v7239
      %7241 = vmatmul.f32.gmra.mxu0 %v7127
      %v7242 = vpop.f32.mrf.mxu0
      %v7243 = vadd.f32 0.0, %v7242
      %7244 = vdwg.mxu0
      %v7245 = vadd.f32 %v6966, %v7150
      %v7246 = vadd.f32 %v6967, %v7153
      %v7247 = vadd.f32 %v6968, %v7156
      %v7248 = vadd.f32 %v6969, %v7159
      %v7249 = vadd.f32 %v6970, %v7162
      %v7250 = vadd.f32 %v6971, %v7165
      %v7251 = vadd.f32 %v6972, %v7168
      %v7252 = vadd.f32 %v6973, %v7171
      %v7253 = vadd.f32 %v6974, %v7174
      %v7254 = vadd.f32 %v6975, %v7177
      %v7255 = vadd.f32 %v6976, %v7180
      %v7256 = vadd.f32 %v6977, %v7183
      %v7257 = vadd.f32 %v6978, %v7186
      %v7258 = vadd.f32 %v6979, %v7189
      %v7259 = vadd.f32 %v6980, %v7192
      %v7260 = vadd.f32 %v6981, %v7195
      %v7261 = vadd.f32 %v6982, %v7198
      %v7262 = vadd.f32 %v6983, %v7201
      %v7263 = vadd.f32 %v6984, %v7204
      %v7264 = vadd.f32 %v6985, %v7207
      %v7265 = vadd.f32 %v6986, %v7210
      %v7266 = vadd.f32 %v6987, %v7213
      %v7267 = vadd.f32 %v6988, %v7216
      %v7268 = vadd.f32 %v6989, %v7219
      %v7269 = vadd.f32 %v6990, %v7222
      %v7270 = vadd.f32 %v6991, %v7225
      %v7271 = vadd.f32 %v6992, %v7228
      %v7272 = vadd.f32 %v6993, %v7231
      %v7273 = vadd.f32 %v6994, %v7234
      %v7274 = vadd.f32 %v6995, %v7237
      %v7275 = vadd.f32 %v6996, %v7240
      %v7276 = vadd.f32 %v6997, %v7243
      %v7277 = vld [vmem:[%s6998 + $0x1] sm:$0xff]
      %v7278 = vld [vmem:[%s6998 + $0x9] sm:$0xff]
      %v7279 = vld [vmem:[%s6998 + $0x19] sm:$0xff]
      %v7280 = vld [vmem:[%s6998 + $0x21] sm:$0xff]
      %v7281 = vld [vmem:[%s6998 + $0x31] sm:$0xff]
      %v7282 = vld [vmem:[%s6998 + $0x39] sm:$0xff]
      %v7283 = vld [vmem:[%s6998 + $0x49] sm:$0xff]
      %v7284 = vld [vmem:[%s6998 + $0x51] sm:$0xff]
      %v7285 = vld [vmem:[%s6998 + $0x61] sm:$0xff]
      %v7286 = vld [vmem:[%s6998 + $0x69] sm:$0xff]
      %v7287 = vld [vmem:[%s6998 + $0x79] sm:$0xff]
      %v7288 = vld [vmem:[%s6998 + $0x81] sm:$0xff]
      %v7289 = vld [vmem:[%s6998 + $0x91] sm:$0xff]
      %v7290 = vld [vmem:[%s6998 + $0x99] sm:$0xff]
      %v7291 = vld [vmem:[%s6998 + $0xa9] sm:$0xff]
      %v7292 = vld [vmem:[%s6998 + $0xb1] sm:$0xff]
      %v7293 = vld [vmem:[%s6998 + $0xc1] sm:$0xff]
      %v7294 = vld [vmem:[%s6998 + $0xc9] sm:$0xff]
      %v7295 = vld [vmem:[%s6998 + $0xd9] sm:$0xff]
      %v7296 = vld [vmem:[%s6998 + $0xe1] sm:$0xff]
      %v7297 = vld [vmem:[%s6998 + $0xf1] sm:$0xff]
      %v7298 = vld [vmem:[%s6998 + $0xf9] sm:$0xff]
      %v7299 = vld [vmem:[%s6998 + $0x109] sm:$0xff]
      %v7300 = vld [vmem:[%s6998 + $0x111] sm:$0xff]
      %v7301 = vld [vmem:[%s6998 + $0x121] sm:$0xff]
      %v7302 = vld [vmem:[%s6998 + $0x129] sm:$0xff]
      %v7303 = vld [vmem:[%s6998 + $0x139] sm:$0xff]
      %v7304 = vld [vmem:[%s6998 + $0x141] sm:$0xff]
      %v7305 = vld [vmem:[%s6998 + $0x151] sm:$0xff]
      %v7306 = vld [vmem:[%s6998 + $0x159] sm:$0xff]
      %v7307 = vld [vmem:[%s6998 + $0x169] sm:$0xff]
      %v7308 = vld [vmem:[%s6998 + $0x171] sm:$0xff]
      %s7309 = scalar_lea.vmem %s5, 28
      %v7310 = vld [vmem:[%s7309] sm:$0xf]
      %v7312 = vsel %vm2802, %v7277, 0
      %v7315 = vsel %vm2802, %v7278, 0
      %v7318 = vsel %vm2802, %v7279, 0
      %v7321 = vsel %vm2802, %v7280, 0
      %v7324 = vsel %vm2802, %v7281, 0
      %v7327 = vsel %vm2802, %v7282, 0
      %v7330 = vsel %vm2802, %v7283, 0
      %v7333 = vsel %vm2802, %v7284, 0
      %v7336 = vsel %vm2802, %v7285, 0
      %v7339 = vsel %vm2802, %v7286, 0
      %v7342 = vsel %vm2802, %v7287, 0
      %v7345 = vsel %vm2802, %v7288, 0
      %v7348 = vsel %vm2802, %v7289, 0
      %v7351 = vsel %vm2802, %v7290, 0
      %v7354 = vsel %vm2802, %v7291, 0
      %v7357 = vsel %vm2802, %v7292, 0
      %v7360 = vsel %vm2802, %v7293, 0
      %v7363 = vsel %vm2802, %v7294, 0
      %v7366 = vsel %vm2802, %v7295, 0
      %v7369 = vsel %vm2802, %v7296, 0
      %v7372 = vsel %vm2802, %v7297, 0
      %v7375 = vsel %vm2802, %v7298, 0
      %v7378 = vsel %vm2802, %v7299, 0
      %v7381 = vsel %vm2802, %v7300, 0
      %v7384 = vsel %vm2802, %v7301, 0
      %v7387 = vsel %vm2802, %v7302, 0
      %v7390 = vsel %vm2802, %v7303, 0
      %v7393 = vsel %vm2802, %v7304, 0
      %v7396 = vsel %vm2802, %v7305, 0
      %v7399 = vsel %vm2802, %v7306, 0
      %v7402 = vsel %vm2802, %v7307, 0
      %v7405 = vsel %vm2802, %v7308, 0
      %v7408 = vsel %vm3054, %v7310, 0
      %7410 = vmatpush.msra.mxu0 0.0
      %7411 = vmatpush.msra.mxu0 0.0
      %7412 = vmatpush.msra.mxu0 0.0
      %7413 = vmatpush.msra.mxu0 0.0
      %7414 = vmatpush.msra.mxu0 0.0
      %7415 = vmatpush.msra.mxu0 0.0
      %7416 = vmatpush.msra.mxu0 0.0
      %7417 = vmatpush.msra.mxu0 0.0
      %7418 = vmatpush.msra.mxu0 0.0
      %7419 = vmatpush.msra.mxu0 0.0
      %7420 = vmatpush.msra.mxu0 0.0
      %7421 = vmatpush.msra.mxu0 0.0
      %7422 = vmatpush.msra.mxu0 0.0
      %7423 = vmatpush.msra.mxu0 0.0
      %7424 = vmatpush.msra.mxu0 0.0
      %7425 = vmatpush.msra.mxu0 %v7408
      %7426 = vmatmul.f32.gmra.mxu0 %v7312
      %v7427 = vpop.f32.mrf.mxu0
      %v7428 = vadd.f32 0.0, %v7427
      %7429 = vmatmul.f32.gmra.mxu0 %v7315
      %v7430 = vpop.f32.mrf.mxu0
      %v7431 = vadd.f32 0.0, %v7430
      %7432 = vmatmul.f32.gmra.mxu0 %v7318
      %v7433 = vpop.f32.mrf.mxu0
      %v7434 = vadd.f32 0.0, %v7433
      %7435 = vmatmul.f32.gmra.mxu0 %v7321
      %v7436 = vpop.f32.mrf.mxu0
      %v7437 = vadd.f32 0.0, %v7436
      %7438 = vmatmul.f32.gmra.mxu0 %v7324
      %v7439 = vpop.f32.mrf.mxu0
      %v7440 = vadd.f32 0.0, %v7439
      %7441 = vmatmul.f32.gmra.mxu0 %v7327
      %v7442 = vpop.f32.mrf.mxu0
      %v7443 = vadd.f32 0.0, %v7442
      %7444 = vmatmul.f32.gmra.mxu0 %v7330
      %v7445 = vpop.f32.mrf.mxu0
      %v7446 = vadd.f32 0.0, %v7445
      %7447 = vmatmul.f32.gmra.mxu0 %v7333
      %v7448 = vpop.f32.mrf.mxu0
      %v7449 = vadd.f32 0.0, %v7448
      %7450 = vmatmul.f32.gmra.mxu0 %v7336
      %v7451 = vpop.f32.mrf.mxu0
      %v7452 = vadd.f32 0.0, %v7451
      %7453 = vmatmul.f32.gmra.mxu0 %v7339
      %v7454 = vpop.f32.mrf.mxu0
      %v7455 = vadd.f32 0.0, %v7454
      %7456 = vmatmul.f32.gmra.mxu0 %v7342
      %v7457 = vpop.f32.mrf.mxu0
      %v7458 = vadd.f32 0.0, %v7457
      %7459 = vmatmul.f32.gmra.mxu0 %v7345
      %v7460 = vpop.f32.mrf.mxu0
      %v7461 = vadd.f32 0.0, %v7460
      %7462 = vmatmul.f32.gmra.mxu0 %v7348
      %v7463 = vpop.f32.mrf.mxu0
      %v7464 = vadd.f32 0.0, %v7463
      %7465 = vmatmul.f32.gmra.mxu0 %v7351
      %v7466 = vpop.f32.mrf.mxu0
      %v7467 = vadd.f32 0.0, %v7466
      %7468 = vmatmul.f32.gmra.mxu0 %v7354
      %v7469 = vpop.f32.mrf.mxu0
      %v7470 = vadd.f32 0.0, %v7469
      %7471 = vmatmul.f32.gmra.mxu0 %v7357
      %v7472 = vpop.f32.mrf.mxu0
      %v7473 = vadd.f32 0.0, %v7472
      %7474 = vmatmul.f32.gmra.mxu0 %v7360
      %v7475 = vpop.f32.mrf.mxu0
      %v7476 = vadd.f32 0.0, %v7475
      %7477 = vmatmul.f32.gmra.mxu0 %v7363
      %v7478 = vpop.f32.mrf.mxu0
      %v7479 = vadd.f32 0.0, %v7478
      %7480 = vmatmul.f32.gmra.mxu0 %v7366
      %v7481 = vpop.f32.mrf.mxu0
      %v7482 = vadd.f32 0.0, %v7481
      %7483 = vmatmul.f32.gmra.mxu0 %v7369
      %v7484 = vpop.f32.mrf.mxu0
      %v7485 = vadd.f32 0.0, %v7484
      %7486 = vmatmul.f32.gmra.mxu0 %v7372
      %v7487 = vpop.f32.mrf.mxu0
      %v7488 = vadd.f32 0.0, %v7487
      %7489 = vmatmul.f32.gmra.mxu0 %v7375
      %v7490 = vpop.f32.mrf.mxu0
      %v7491 = vadd.f32 0.0, %v7490
      %7492 = vmatmul.f32.gmra.mxu0 %v7378
      %v7493 = vpop.f32.mrf.mxu0
      %v7494 = vadd.f32 0.0, %v7493
      %7495 = vmatmul.f32.gmra.mxu0 %v7381
      %v7496 = vpop.f32.mrf.mxu0
      %v7497 = vadd.f32 0.0, %v7496
      %7498 = vmatmul.f32.gmra.mxu0 %v7384
      %v7499 = vpop.f32.mrf.mxu0
      %v7500 = vadd.f32 0.0, %v7499
      %7501 = vmatmul.f32.gmra.mxu0 %v7387
      %v7502 = vpop.f32.mrf.mxu0
      %v7503 = vadd.f32 0.0, %v7502
      %7504 = vmatmul.f32.gmra.mxu0 %v7390
      %v7505 = vpop.f32.mrf.mxu0
      %v7506 = vadd.f32 0.0, %v7505
      %7507 = vmatmul.f32.gmra.mxu0 %v7393
      %v7508 = vpop.f32.mrf.mxu0
      %v7509 = vadd.f32 0.0, %v7508
      %7510 = vmatmul.f32.gmra.mxu0 %v7396
      %v7511 = vpop.f32.mrf.mxu0
      %v7512 = vadd.f32 0.0, %v7511
      %7513 = vmatmul.f32.gmra.mxu0 %v7399
      %v7514 = vpop.f32.mrf.mxu0
      %v7515 = vadd.f32 0.0, %v7514
      %7516 = vmatmul.f32.gmra.mxu0 %v7402
      %v7517 = vpop.f32.mrf.mxu0
      %v7518 = vadd.f32 0.0, %v7517
      %7519 = vmatmul.f32.gmra.mxu0 %v7405
      %v7520 = vpop.f32.mrf.mxu0
      %v7521 = vadd.f32 0.0, %v7520
      %7522 = vdwg.mxu0
      %v7523 = vadd.f32 %v7245, %v7428
      %v7524 = vadd.f32 %v7246, %v7431
      %v7525 = vadd.f32 %v7247, %v7434
      %v7526 = vadd.f32 %v7248, %v7437
      %v7527 = vadd.f32 %v7249, %v7440
      %v7528 = vadd.f32 %v7250, %v7443
      %v7529 = vadd.f32 %v7251, %v7446
      %v7530 = vadd.f32 %v7252, %v7449
      %v7531 = vadd.f32 %v7253, %v7452
      %v7532 = vadd.f32 %v7254, %v7455
      %v7533 = vadd.f32 %v7255, %v7458
      %v7534 = vadd.f32 %v7256, %v7461
      %v7535 = vadd.f32 %v7257, %v7464
      %v7536 = vadd.f32 %v7258, %v7467
      %v7537 = vadd.f32 %v7259, %v7470
      %v7538 = vadd.f32 %v7260, %v7473
      %v7539 = vadd.f32 %v7261, %v7476
      %v7540 = vadd.f32 %v7262, %v7479
      %v7541 = vadd.f32 %v7263, %v7482
      %v7542 = vadd.f32 %v7264, %v7485
      %v7543 = vadd.f32 %v7265, %v7488
      %v7544 = vadd.f32 %v7266, %v7491
      %v7545 = vadd.f32 %v7267, %v7494
      %v7546 = vadd.f32 %v7268, %v7497
      %v7547 = vadd.f32 %v7269, %v7500
      %v7548 = vadd.f32 %v7270, %v7503
      %v7549 = vadd.f32 %v7271, %v7506
      %v7550 = vadd.f32 %v7272, %v7509
      %v7551 = vadd.f32 %v7273, %v7512
      %v7552 = vadd.f32 %v7274, %v7515
      %v7553 = vadd.f32 %v7275, %v7518
      %v7554 = vadd.f32 %v7276, %v7521
      %v7555 = vld [vmem:[%s6998 + $0x2] sm:$0xff]
      %v7556 = vld [vmem:[%s6998 + $0xa] sm:$0xff]
      %v7557 = vld [vmem:[%s6998 + $0x1a] sm:$0xff]
      %v7558 = vld [vmem:[%s6998 + $0x22] sm:$0xff]
      %v7559 = vld [vmem:[%s6998 + $0x32] sm:$0xff]
      %v7560 = vld [vmem:[%s6998 + $0x3a] sm:$0xff]
      %v7561 = vld [vmem:[%s6998 + $0x4a] sm:$0xff]
      %v7562 = vld [vmem:[%s6998 + $0x52] sm:$0xff]
      %v7563 = vld [vmem:[%s6998 + $0x62] sm:$0xff]
      %v7564 = vld [vmem:[%s6998 + $0x6a] sm:$0xff]
      %v7565 = vld [vmem:[%s6998 + $0x7a] sm:$0xff]
      %v7566 = vld [vmem:[%s6998 + $0x82] sm:$0xff]
      %v7567 = vld [vmem:[%s6998 + $0x92] sm:$0xff]
      %v7568 = vld [vmem:[%s6998 + $0x9a] sm:$0xff]
      %v7569 = vld [vmem:[%s6998 + $0xaa] sm:$0xff]
      %v7570 = vld [vmem:[%s6998 + $0xb2] sm:$0xff]
      %v7571 = vld [vmem:[%s6998 + $0xc2] sm:$0xff]
      %v7572 = vld [vmem:[%s6998 + $0xca] sm:$0xff]
      %v7573 = vld [vmem:[%s6998 + $0xda] sm:$0xff]
      %v7574 = vld [vmem:[%s6998 + $0xe2] sm:$0xff]
      %v7575 = vld [vmem:[%s6998 + $0xf2] sm:$0xff]
      %v7576 = vld [vmem:[%s6998 + $0xfa] sm:$0xff]
      %v7577 = vld [vmem:[%s6998 + $0x10a] sm:$0xff]
      %v7578 = vld [vmem:[%s6998 + $0x112] sm:$0xff]
      %v7579 = vld [vmem:[%s6998 + $0x122] sm:$0xff]
      %v7580 = vld [vmem:[%s6998 + $0x12a] sm:$0xff]
      %v7581 = vld [vmem:[%s6998 + $0x13a] sm:$0xff]
      %v7582 = vld [vmem:[%s6998 + $0x142] sm:$0xff]
      %v7583 = vld [vmem:[%s6998 + $0x152] sm:$0xff]
      %v7584 = vld [vmem:[%s6998 + $0x15a] sm:$0xff]
      %v7585 = vld [vmem:[%s6998 + $0x16a] sm:$0xff]
      %v7586 = vld [vmem:[%s6998 + $0x172] sm:$0xff]
      %s7587 = scalar_lea.vmem %s5, 32
      %v7588 = vld [vmem:[%s7587] sm:$0xf]
      %v7590 = vsel %vm2802, %v7555, 0
      %v7593 = vsel %vm2802, %v7556, 0
      %v7596 = vsel %vm2802, %v7557, 0
      %v7599 = vsel %vm2802, %v7558, 0
      %v7602 = vsel %vm2802, %v7559, 0
      %v7605 = vsel %vm2802, %v7560, 0
      %v7608 = vsel %vm2802, %v7561, 0
      %v7611 = vsel %vm2802, %v7562, 0
      %v7614 = vsel %vm2802, %v7563, 0
      %v7617 = vsel %vm2802, %v7564, 0
      %v7620 = vsel %vm2802, %v7565, 0
      %v7623 = vsel %vm2802, %v7566, 0
      %v7626 = vsel %vm2802, %v7567, 0
      %v7629 = vsel %vm2802, %v7568, 0
      %v7632 = vsel %vm2802, %v7569, 0
      %v7635 = vsel %vm2802, %v7570, 0
      %v7638 = vsel %vm2802, %v7571, 0
      %v7641 = vsel %vm2802, %v7572, 0
      %v7644 = vsel %vm2802, %v7573, 0
      %v7647 = vsel %vm2802, %v7574, 0
      %v7650 = vsel %vm2802, %v7575, 0
      %v7653 = vsel %vm2802, %v7576, 0
      %v7656 = vsel %vm2802, %v7577, 0
      %v7659 = vsel %vm2802, %v7578, 0
      %v7662 = vsel %vm2802, %v7579, 0
      %v7665 = vsel %vm2802, %v7580, 0
      %v7668 = vsel %vm2802, %v7581, 0
      %v7671 = vsel %vm2802, %v7582, 0
      %v7674 = vsel %vm2802, %v7583, 0
      %v7677 = vsel %vm2802, %v7584, 0
      %v7680 = vsel %vm2802, %v7585, 0
      %v7683 = vsel %vm2802, %v7586, 0
      %v7686 = vsel %vm3054, %v7588, 0
      %7688 = vmatpush.msra.mxu0 0.0
      %7689 = vmatpush.msra.mxu0 0.0
      %7690 = vmatpush.msra.mxu0 0.0
      %7691 = vmatpush.msra.mxu0 0.0
      %7692 = vmatpush.msra.mxu0 0.0
      %7693 = vmatpush.msra.mxu0 0.0
      %7694 = vmatpush.msra.mxu0 0.0
      %7695 = vmatpush.msra.mxu0 0.0
      %7696 = vmatpush.msra.mxu0 0.0
      %7697 = vmatpush.msra.mxu0 0.0
      %7698 = vmatpush.msra.mxu0 0.0
      %7699 = vmatpush.msra.mxu0 0.0
      %7700 = vmatpush.msra.mxu0 0.0
      %7701 = vmatpush.msra.mxu0 0.0
      %7702 = vmatpush.msra.mxu0 0.0
      %7703 = vmatpush.msra.mxu0 %v7686
      %7704 = vmatmul.f32.gmra.mxu0 %v7590
      %v7705 = vpop.f32.mrf.mxu0
      %v7706 = vadd.f32 0.0, %v7705
      %7707 = vmatmul.f32.gmra.mxu0 %v7593
      %v7708 = vpop.f32.mrf.mxu0
      %v7709 = vadd.f32 0.0, %v7708
      %7710 = vmatmul.f32.gmra.mxu0 %v7596
      %v7711 = vpop.f32.mrf.mxu0
      %v7712 = vadd.f32 0.0, %v7711
      %7713 = vmatmul.f32.gmra.mxu0 %v7599
      %v7714 = vpop.f32.mrf.mxu0
      %v7715 = vadd.f32 0.0, %v7714
      %7716 = vmatmul.f32.gmra.mxu0 %v7602
      %v7717 = vpop.f32.mrf.mxu0
      %v7718 = vadd.f32 0.0, %v7717
      %7719 = vmatmul.f32.gmra.mxu0 %v7605
      %v7720 = vpop.f32.mrf.mxu0
      %v7721 = vadd.f32 0.0, %v7720
      %7722 = vmatmul.f32.gmra.mxu0 %v7608
      %v7723 = vpop.f32.mrf.mxu0
      %v7724 = vadd.f32 0.0, %v7723
      %7725 = vmatmul.f32.gmra.mxu0 %v7611
      %v7726 = vpop.f32.mrf.mxu0
      %v7727 = vadd.f32 0.0, %v7726
      %7728 = vmatmul.f32.gmra.mxu0 %v7614
      %v7729 = vpop.f32.mrf.mxu0
      %v7730 = vadd.f32 0.0, %v7729
      %7731 = vmatmul.f32.gmra.mxu0 %v7617
      %v7732 = vpop.f32.mrf.mxu0
      %v7733 = vadd.f32 0.0, %v7732
      %7734 = vmatmul.f32.gmra.mxu0 %v7620
      %v7735 = vpop.f32.mrf.mxu0
      %v7736 = vadd.f32 0.0, %v7735
      %7737 = vmatmul.f32.gmra.mxu0 %v7623
      %v7738 = vpop.f32.mrf.mxu0
      %v7739 = vadd.f32 0.0, %v7738
      %7740 = vmatmul.f32.gmra.mxu0 %v7626
      %v7741 = vpop.f32.mrf.mxu0
      %v7742 = vadd.f32 0.0, %v7741
      %7743 = vmatmul.f32.gmra.mxu0 %v7629
      %v7744 = vpop.f32.mrf.mxu0
      %v7745 = vadd.f32 0.0, %v7744
      %7746 = vmatmul.f32.gmra.mxu0 %v7632
      %v7747 = vpop.f32.mrf.mxu0
      %v7748 = vadd.f32 0.0, %v7747
      %7749 = vmatmul.f32.gmra.mxu0 %v7635
      %v7750 = vpop.f32.mrf.mxu0
      %v7751 = vadd.f32 0.0, %v7750
      %7752 = vmatmul.f32.gmra.mxu0 %v7638
      %v7753 = vpop.f32.mrf.mxu0
      %v7754 = vadd.f32 0.0, %v7753
      %7755 = vmatmul.f32.gmra.mxu0 %v7641
      %v7756 = vpop.f32.mrf.mxu0
      %v7757 = vadd.f32 0.0, %v7756
      %7758 = vmatmul.f32.gmra.mxu0 %v7644
      %v7759 = vpop.f32.mrf.mxu0
      %v7760 = vadd.f32 0.0, %v7759
      %7761 = vmatmul.f32.gmra.mxu0 %v7647
      %v7762 = vpop.f32.mrf.mxu0
      %v7763 = vadd.f32 0.0, %v7762
      %7764 = vmatmul.f32.gmra.mxu0 %v7650
      %v7765 = vpop.f32.mrf.mxu0
      %v7766 = vadd.f32 0.0, %v7765
      %7767 = vmatmul.f32.gmra.mxu0 %v7653
      %v7768 = vpop.f32.mrf.mxu0
      %v7769 = vadd.f32 0.0, %v7768
      %7770 = vmatmul.f32.gmra.mxu0 %v7656
      %v7771 = vpop.f32.mrf.mxu0
      %v7772 = vadd.f32 0.0, %v7771
      %7773 = vmatmul.f32.gmra.mxu0 %v7659
      %v7774 = vpop.f32.mrf.mxu0
      %v7775 = vadd.f32 0.0, %v7774
      %7776 = vmatmul.f32.gmra.mxu0 %v7662
      %v7777 = vpop.f32.mrf.mxu0
      %v7778 = vadd.f32 0.0, %v7777
      %7779 = vmatmul.f32.gmra.mxu0 %v7665
      %v7780 = vpop.f32.mrf.mxu0
      %v7781 = vadd.f32 0.0, %v7780
      %7782 = vmatmul.f32.gmra.mxu0 %v7668
      %v7783 = vpop.f32.mrf.mxu0
      %v7784 = vadd.f32 0.0, %v7783
      %7785 = vmatmul.f32.gmra.mxu0 %v7671
      %v7786 = vpop.f32.mrf.mxu0
      %v7787 = vadd.f32 0.0, %v7786
      %7788 = vmatmul.f32.gmra.mxu0 %v7674
      %v7789 = vpop.f32.mrf.mxu0
      %v7790 = vadd.f32 0.0, %v7789
      %7791 = vmatmul.f32.gmra.mxu0 %v7677
      %v7792 = vpop.f32.mrf.mxu0
      %v7793 = vadd.f32 0.0, %v7792
      %7794 = vmatmul.f32.gmra.mxu0 %v7680
      %v7795 = vpop.f32.mrf.mxu0
      %v7796 = vadd.f32 0.0, %v7795
      %7797 = vmatmul.f32.gmra.mxu0 %v7683
      %v7798 = vpop.f32.mrf.mxu0
      %v7799 = vadd.f32 0.0, %v7798
      %7800 = vdwg.mxu0
      %v7801 = vadd.f32 %v7523, %v7706
      %v7802 = vadd.f32 %v7524, %v7709
      %v7803 = vadd.f32 %v7525, %v7712
      %v7804 = vadd.f32 %v7526, %v7715
      %v7805 = vadd.f32 %v7527, %v7718
      %v7806 = vadd.f32 %v7528, %v7721
      %v7807 = vadd.f32 %v7529, %v7724
      %v7808 = vadd.f32 %v7530, %v7727
      %v7809 = vadd.f32 %v7531, %v7730
      %v7810 = vadd.f32 %v7532, %v7733
      %v7811 = vadd.f32 %v7533, %v7736
      %v7812 = vadd.f32 %v7534, %v7739
      %v7813 = vadd.f32 %v7535, %v7742
      %v7814 = vadd.f32 %v7536, %v7745
      %v7815 = vadd.f32 %v7537, %v7748
      %v7816 = vadd.f32 %v7538, %v7751
      %v7817 = vadd.f32 %v7539, %v7754
      %v7818 = vadd.f32 %v7540, %v7757
      %v7819 = vadd.f32 %v7541, %v7760
      %v7820 = vadd.f32 %v7542, %v7763
      %v7821 = vadd.f32 %v7543, %v7766
      %v7822 = vadd.f32 %v7544, %v7769
      %v7823 = vadd.f32 %v7545, %v7772
      %v7824 = vadd.f32 %v7546, %v7775
      %v7825 = vadd.f32 %v7547, %v7778
      %v7826 = vadd.f32 %v7548, %v7781
      %v7827 = vadd.f32 %v7549, %v7784
      %v7828 = vadd.f32 %v7550, %v7787
      %v7829 = vadd.f32 %v7551, %v7790
      %v7830 = vadd.f32 %v7552, %v7793
      %v7831 = vadd.f32 %v7553, %v7796
      %v7832 = vadd.f32 %v7554, %v7799
      %v7833 = vld [vmem:[%s6] sm:$0x1]
      %v7835 = vperm.slane %v7833, 0
      %v7837 = vadd.f32 %v7801, %v7835
      %v7838 = vadd.f32 %v7802, %v7835
      %v7839 = vadd.f32 %v7803, %v7835
      %v7840 = vadd.f32 %v7804, %v7835
      %v7841 = vadd.f32 %v7805, %v7835
      %v7842 = vadd.f32 %v7806, %v7835
      %v7843 = vadd.f32 %v7807, %v7835
      %v7844 = vadd.f32 %v7808, %v7835
      %v7845 = vadd.f32 %v7809, %v7835
      %v7846 = vadd.f32 %v7810, %v7835
      %v7847 = vadd.f32 %v7811, %v7835
      %v7848 = vadd.f32 %v7812, %v7835
      %v7849 = vadd.f32 %v7813, %v7835
      %v7850 = vadd.f32 %v7814, %v7835
      %v7851 = vadd.f32 %v7815, %v7835
      %v7852 = vadd.f32 %v7816, %v7835
      %v7853 = vadd.f32 %v7817, %v7835
      %v7854 = vadd.f32 %v7818, %v7835
      %v7855 = vadd.f32 %v7819, %v7835
      %v7856 = vadd.f32 %v7820, %v7835
      %v7857 = vadd.f32 %v7821, %v7835
      %v7858 = vadd.f32 %v7822, %v7835
      %v7859 = vadd.f32 %v7823, %v7835
      %v7860 = vadd.f32 %v7824, %v7835
      %v7861 = vadd.f32 %v7825, %v7835
      %v7862 = vadd.f32 %v7826, %v7835
      %v7863 = vadd.f32 %v7827, %v7835
      %v7864 = vadd.f32 %v7828, %v7835
      %v7865 = vadd.f32 %v7829, %v7835
      %v7866 = vadd.f32 %v7830, %v7835
      %v7867 = vadd.f32 %v7831, %v7835
      %v7868 = vadd.f32 %v7832, %v7835
      %vm7869 = vcmp.ge.f32.partialorder %v7837, 0.0
      %vm7870 = vcmp.ge.f32.partialorder %v7838, 0.0
      %vm7871 = vcmp.ge.f32.partialorder %v7839, 0.0
      %vm7872 = vcmp.ge.f32.partialorder %v7840, 0.0
      %vm7873 = vcmp.ge.f32.partialorder %v7841, 0.0
      %vm7874 = vcmp.ge.f32.partialorder %v7842, 0.0
      %vm7875 = vcmp.ge.f32.partialorder %v7843, 0.0
      %vm7876 = vcmp.ge.f32.partialorder %v7844, 0.0
      %vm7877 = vcmp.ge.f32.partialorder %v7845, 0.0
      %vm7878 = vcmp.ge.f32.partialorder %v7846, 0.0
      %vm7879 = vcmp.ge.f32.partialorder %v7847, 0.0
      %vm7880 = vcmp.ge.f32.partialorder %v7848, 0.0
      %vm7881 = vcmp.ge.f32.partialorder %v7849, 0.0
      %vm7882 = vcmp.ge.f32.partialorder %v7850, 0.0
      %vm7883 = vcmp.ge.f32.partialorder %v7851, 0.0
      %vm7884 = vcmp.ge.f32.partialorder %v7852, 0.0
      %vm7885 = vcmp.ge.f32.partialorder %v7853, 0.0
      %vm7886 = vcmp.ge.f32.partialorder %v7854, 0.0
      %vm7887 = vcmp.ge.f32.partialorder %v7855, 0.0
      %vm7888 = vcmp.ge.f32.partialorder %v7856, 0.0
      %vm7889 = vcmp.ge.f32.partialorder %v7857, 0.0
      %vm7890 = vcmp.ge.f32.partialorder %v7858, 0.0
      %vm7891 = vcmp.ge.f32.partialorder %v7859, 0.0
      %vm7892 = vcmp.ge.f32.partialorder %v7860, 0.0
      %vm7893 = vcmp.ge.f32.partialorder %v7861, 0.0
      %vm7894 = vcmp.ge.f32.partialorder %v7862, 0.0
      %vm7895 = vcmp.ge.f32.partialorder %v7863, 0.0
      %vm7896 = vcmp.ge.f32.partialorder %v7864, 0.0
      %vm7897 = vcmp.ge.f32.partialorder %v7865, 0.0
      %vm7898 = vcmp.ge.f32.partialorder %v7866, 0.0
      %vm7899 = vcmp.ge.f32.partialorder %v7867, 0.0
      %vm7900 = vcmp.ge.f32.partialorder %v7868, 0.0
      %v7901 = vmul.f32 %v7837, 0.2
      %v7902 = vmul.f32 %v7838, 0.2
      %v7903 = vmul.f32 %v7839, 0.2
      %v7904 = vmul.f32 %v7840, 0.2
      %v7905 = vmul.f32 %v7841, 0.2
      %v7906 = vmul.f32 %v7842, 0.2
      %v7907 = vmul.f32 %v7843, 0.2
      %v7908 = vmul.f32 %v7844, 0.2
      %v7909 = vmul.f32 %v7845, 0.2
      %v7910 = vmul.f32 %v7846, 0.2
      %v7911 = vmul.f32 %v7847, 0.2
      %v7912 = vmul.f32 %v7848, 0.2
      %v7913 = vmul.f32 %v7849, 0.2
      %v7914 = vmul.f32 %v7850, 0.2
      %v7915 = vmul.f32 %v7851, 0.2
      %v7916 = vmul.f32 %v7852, 0.2
      %v7917 = vmul.f32 %v7853, 0.2
      %v7918 = vmul.f32 %v7854, 0.2
      %v7919 = vmul.f32 %v7855, 0.2
      %v7920 = vmul.f32 %v7856, 0.2
      %v7921 = vmul.f32 %v7857, 0.2
      %v7922 = vmul.f32 %v7858, 0.2
      %v7923 = vmul.f32 %v7859, 0.2
      %v7924 = vmul.f32 %v7860, 0.2
      %v7925 = vmul.f32 %v7861, 0.2
      %v7926 = vmul.f32 %v7862, 0.2
      %v7927 = vmul.f32 %v7863, 0.2
      %v7928 = vmul.f32 %v7864, 0.2
      %v7929 = vmul.f32 %v7865, 0.2
      %v7930 = vmul.f32 %v7866, 0.2
      %v7931 = vmul.f32 %v7867, 0.2
      %v7932 = vmul.f32 %v7868, 0.2
      %v7933 = vsel %vm7869, %v7837, %v7901
      %v7934 = vsel %vm7870, %v7838, %v7902
      %v7935 = vsel %vm7871, %v7839, %v7903
      %v7936 = vsel %vm7872, %v7840, %v7904
      %v7937 = vsel %vm7873, %v7841, %v7905
      %v7938 = vsel %vm7874, %v7842, %v7906
      %v7939 = vsel %vm7875, %v7843, %v7907
      %v7940 = vsel %vm7876, %v7844, %v7908
      %v7941 = vsel %vm7877, %v7845, %v7909
      %v7942 = vsel %vm7878, %v7846, %v7910
      %v7943 = vsel %vm7879, %v7847, %v7911
      %v7944 = vsel %vm7880, %v7848, %v7912
      %v7945 = vsel %vm7881, %v7849, %v7913
      %v7946 = vsel %vm7882, %v7850, %v7914
      %v7947 = vsel %vm7883, %v7851, %v7915
      %v7948 = vsel %vm7884, %v7852, %v7916
      %v7949 = vsel %vm7885, %v7853, %v7917
      %v7950 = vsel %vm7886, %v7854, %v7918
      %v7951 = vsel %vm7887, %v7855, %v7919
      %v7952 = vsel %vm7888, %v7856, %v7920
      %v7953 = vsel %vm7889, %v7857, %v7921
      %v7954 = vsel %vm7890, %v7858, %v7922
      %v7955 = vsel %vm7891, %v7859, %v7923
      %v7956 = vsel %vm7892, %v7860, %v7924
      %v7957 = vsel %vm7893, %v7861, %v7925
      %v7958 = vsel %vm7894, %v7862, %v7926
      %v7959 = vsel %vm7895, %v7863, %v7927
      %v7960 = vsel %vm7896, %v7864, %v7928
      %v7961 = vsel %vm7897, %v7865, %v7929
      %v7962 = vsel %vm7898, %v7866, %v7930
      %v7963 = vsel %vm7899, %v7867, %v7931
      %v7964 = vsel %vm7900, %v7868, %v7932
      %7965 = vst.msk [vmem:[#allocation3] sm:$0xff] %vm2802, 0.0
      %7966 = vst.msk [vmem:[#allocation3 + $0x8] sm:$0xff] %vm2802, 0.0
      %7967 = vst.msk [vmem:[#allocation3 + $0x10] sm:$0x3] %vm2805, 0.0
      %7968 = vst.msk [vmem:[#allocation3 + $0x18] sm:$0xff] %vm2802, 0.0
      %7969 = vst.msk [vmem:[#allocation3 + $0x20] sm:$0xff] %vm2802, 0.0
      %7970 = vst.msk [vmem:[#allocation3 + $0x28] sm:$0x3] %vm2805, 0.0
      %7971 = vst.msk [vmem:[#allocation3 + $0x30] sm:$0xff] %vm2802, 0.0
      %7972 = vst.msk [vmem:[#allocation3 + $0x38] sm:$0xff] %vm2802, 0.0
      %7973 = vst.msk [vmem:[#allocation3 + $0x40] sm:$0x3] %vm2805, 0.0
      %7974 = vst.msk [vmem:[#allocation3 + $0x48] sm:$0xff] %vm2802, 0.0
      %7975 = vst.msk [vmem:[#allocation3 + $0x50] sm:$0xff] %vm2802, 0.0
      %7976 = vst.msk [vmem:[#allocation3 + $0x58] sm:$0x3] %vm2805, 0.0
      %7977 = vst.msk [vmem:[#allocation3 + $0x60] sm:$0xff] %vm2802, 0.0
      %7978 = vst.msk [vmem:[#allocation3 + $0x68] sm:$0xff] %vm2802, 0.0
      %7979 = vst.msk [vmem:[#allocation3 + $0x70] sm:$0x3] %vm2805, 0.0
      %7980 = vst.msk [vmem:[#allocation3 + $0x78] sm:$0xff] %vm2802, 0.0
      %7981 = vst.msk [vmem:[#allocation3 + $0x80] sm:$0xff] %vm2802, 0.0
      %7982 = vst.msk [vmem:[#allocation3 + $0x88] sm:$0x3] %vm2805, 0.0
      %7983 = vst.msk [vmem:[#allocation3 + $0x90] sm:$0xff] %vm2802, 0.0
      %7984 = vst.msk [vmem:[#allocation3 + $0x98] sm:$0xff] %vm2802, 0.0
      %7985 = vst.msk [vmem:[#allocation3 + $0xa0] sm:$0x3] %vm2805, 0.0
      %7986 = vst.msk [vmem:[#allocation3 + $0xa8] sm:$0xff] %vm2802, 0.0
      %7987 = vst.msk [vmem:[#allocation3 + $0xb0] sm:$0xff] %vm2802, 0.0
      %7988 = vst.msk [vmem:[#allocation3 + $0xb8] sm:$0x3] %vm2805, 0.0
      %7989 = vst.msk [vmem:[#allocation3 + $0xc0] sm:$0xff] %vm2802, 0.0
      %7990 = vst.msk [vmem:[#allocation3 + $0xc8] sm:$0xff] %vm2802, 0.0
      %7991 = vst.msk [vmem:[#allocation3 + $0xd0] sm:$0x3] %vm2805, 0.0
      %7992 = vst.msk [vmem:[#allocation3 + $0xd8] sm:$0xff] %vm2802, 0.0
      %7993 = vst.msk [vmem:[#allocation3 + $0xe0] sm:$0xff] %vm2802, 0.0
      %7994 = vst.msk [vmem:[#allocation3 + $0xe8] sm:$0x3] %vm2805, 0.0
      %7995 = vst.msk [vmem:[#allocation3 + $0xf0] sm:$0xff] %vm2802, 0.0
      %7996 = vst.msk [vmem:[#allocation3 + $0xf8] sm:$0xff] %vm2802, 0.0
      %7997 = vst.msk [vmem:[#allocation3 + $0x100] sm:$0x3] %vm2805, 0.0
      %7998 = vst.msk [vmem:[#allocation3 + $0x108] sm:$0xff] %vm2802, 0.0
      %7999 = vst.msk [vmem:[#allocation3 + $0x110] sm:$0xff] %vm2802, 0.0
      %8000 = vst.msk [vmem:[#allocation3 + $0x118] sm:$0x3] %vm2805, 0.0
      %8001 = vst.msk [vmem:[#allocation3 + $0x120] sm:$0xff] %vm2802, 0.0
      %8002 = vst.msk [vmem:[#allocation3 + $0x128] sm:$0xff] %vm2802, 0.0
      %8003 = vst.msk [vmem:[#allocation3 + $0x130] sm:$0x3] %vm2805, 0.0
      %8004 = vst.msk [vmem:[#allocation3 + $0x138] sm:$0xff] %vm2802, 0.0
      %8005 = vst.msk [vmem:[#allocation3 + $0x140] sm:$0xff] %vm2802, 0.0
      %8006 = vst.msk [vmem:[#allocation3 + $0x148] sm:$0x3] %vm2805, 0.0
      %8007 = vst.msk [vmem:[#allocation3 + $0x150] sm:$0xff] %vm2802, 0.0
      %8008 = vst.msk [vmem:[#allocation3 + $0x158] sm:$0xff] %vm2802, 0.0
      %8009 = vst.msk [vmem:[#allocation3 + $0x160] sm:$0x3] %vm2805, 0.0
      %8010 = vst.msk [vmem:[#allocation3 + $0x168] sm:$0xff] %vm2802, 0.0
      %8011 = vst.msk [vmem:[#allocation3 + $0x170] sm:$0xff] %vm2802, 0.0
      %8012 = vst.msk [vmem:[#allocation3 + $0x178] sm:$0x3] %vm2805, 0.0
      %8013 = vst.msk [vmem:[#allocation3 + $0x180] sm:$0xff] %vm2802, 0.0
      %8014 = vst.msk [vmem:[#allocation3 + $0x188] sm:$0xff] %vm2802, 0.0
      %8015 = vst.msk [vmem:[#allocation3 + $0x190] sm:$0x3] %vm2805, 0.0
      %8016 = vst.msk [vmem:[#allocation3 + $0x198] sm:$0xff] %vm2802, 0.0
      %8017 = vst.msk [vmem:[#allocation3 + $0x1a0] sm:$0xff] %vm2802, 0.0
      %8018 = vst.msk [vmem:[#allocation3 + $0x1a8] sm:$0x3] %vm2805, 0.0
      %s8019 = scalar_lea.vmem [#allocation3], 24
      %8020 = vst.msk [vmem:[%s8019 + $0x1] sm:$0xff] %vm2802, %v7933
      %8021 = vst.msk [vmem:[%s8019 + $0x9] sm:$0xff] %vm2802, %v7934
      %8022 = vst.msk [vmem:[%s8019 + $0x19] sm:$0xff] %vm2802, %v7935
      %8023 = vst.msk [vmem:[%s8019 + $0x21] sm:$0xff] %vm2802, %v7936
      %8024 = vst.msk [vmem:[%s8019 + $0x31] sm:$0xff] %vm2802, %v7937
      %8025 = vst.msk [vmem:[%s8019 + $0x39] sm:$0xff] %vm2802, %v7938
      %8026 = vst.msk [vmem:[%s8019 + $0x49] sm:$0xff] %vm2802, %v7939
      %8027 = vst.msk [vmem:[%s8019 + $0x51] sm:$0xff] %vm2802, %v7940
      %8028 = vst.msk [vmem:[%s8019 + $0x61] sm:$0xff] %vm2802, %v7941
      %8029 = vst.msk [vmem:[%s8019 + $0x69] sm:$0xff] %vm2802, %v7942
      %8030 = vst.msk [vmem:[%s8019 + $0x79] sm:$0xff] %vm2802, %v7943
      %8031 = vst.msk [vmem:[%s8019 + $0x81] sm:$0xff] %vm2802, %v7944
      %8032 = vst.msk [vmem:[%s8019 + $0x91] sm:$0xff] %vm2802, %v7945
      %8033 = vst.msk [vmem:[%s8019 + $0x99] sm:$0xff] %vm2802, %v7946
      %8034 = vst.msk [vmem:[%s8019 + $0xa9] sm:$0xff] %vm2802, %v7947
      %8035 = vst.msk [vmem:[%s8019 + $0xb1] sm:$0xff] %vm2802, %v7948
      %8036 = vst.msk [vmem:[%s8019 + $0xc1] sm:$0xff] %vm2802, %v7949
      %8037 = vst.msk [vmem:[%s8019 + $0xc9] sm:$0xff] %vm2802, %v7950
      %8038 = vst.msk [vmem:[%s8019 + $0xd9] sm:$0xff] %vm2802, %v7951
      %8039 = vst.msk [vmem:[%s8019 + $0xe1] sm:$0xff] %vm2802, %v7952
      %8040 = vst.msk [vmem:[%s8019 + $0xf1] sm:$0xff] %vm2802, %v7953
      %8041 = vst.msk [vmem:[%s8019 + $0xf9] sm:$0xff] %vm2802, %v7954
      %8042 = vst.msk [vmem:[%s8019 + $0x109] sm:$0xff] %vm2802, %v7955
      %8043 = vst.msk [vmem:[%s8019 + $0x111] sm:$0xff] %vm2802, %v7956
      %8044 = vst.msk [vmem:[%s8019 + $0x121] sm:$0xff] %vm2802, %v7957
      %8045 = vst.msk [vmem:[%s8019 + $0x129] sm:$0xff] %vm2802, %v7958
      %8046 = vst.msk [vmem:[%s8019 + $0x139] sm:$0xff] %vm2802, %v7959
      %8047 = vst.msk [vmem:[%s8019 + $0x141] sm:$0xff] %vm2802, %v7960
      %8048 = vst.msk [vmem:[%s8019 + $0x151] sm:$0xff] %vm2802, %v7961
      %8049 = vst.msk [vmem:[%s8019 + $0x159] sm:$0xff] %vm2802, %v7962
      %8050 = vst.msk [vmem:[%s8019 + $0x169] sm:$0xff] %vm2802, %v7963
      %8051 = vst.msk [vmem:[%s8019 + $0x171] sm:$0xff] %vm2802, %v7964
      %v8052 = vld [vmem:[#allocation3] sm:$0xff]
      %v8053 = vld [vmem:[#allocation3 + $0x8] sm:$0xff]
      %v8054 = vld [vmem:[#allocation3 + $0x18] sm:$0xff]
      %v8055 = vld [vmem:[#allocation3 + $0x20] sm:$0xff]
      %v8056 = vld [vmem:[#allocation3 + $0x30] sm:$0xff]
      %v8057 = vld [vmem:[#allocation3 + $0x38] sm:$0xff]
      %v8058 = vld [vmem:[#allocation3 + $0x48] sm:$0xff]
      %v8059 = vld [vmem:[#allocation3 + $0x50] sm:$0xff]
      %v8060 = vld [vmem:[#allocation3 + $0x60] sm:$0xff]
      %v8061 = vld [vmem:[#allocation3 + $0x68] sm:$0xff]
      %v8062 = vld [vmem:[#allocation3 + $0x78] sm:$0xff]
      %v8063 = vld [vmem:[#allocation3 + $0x80] sm:$0xff]
      %v8064 = vld [vmem:[#allocation3 + $0x90] sm:$0xff]
      %v8065 = vld [vmem:[#allocation3 + $0x98] sm:$0xff]
      %v8066 = vld [vmem:[#allocation3 + $0xa8] sm:$0xff]
      %v8067 = vld [vmem:[#allocation3 + $0xb0] sm:$0xff]
      %v8068 = vld [vmem:[#allocation3 + $0xc0] sm:$0xff]
      %v8069 = vld [vmem:[#allocation3 + $0xc8] sm:$0xff]
      %v8070 = vld [vmem:[#allocation3 + $0xd8] sm:$0xff]
      %v8071 = vld [vmem:[#allocation3 + $0xe0] sm:$0xff]
      %v8072 = vld [vmem:[#allocation3 + $0xf0] sm:$0xff]
      %v8073 = vld [vmem:[#allocation3 + $0xf8] sm:$0xff]
      %v8074 = vld [vmem:[#allocation3 + $0x108] sm:$0xff]
      %v8075 = vld [vmem:[#allocation3 + $0x110] sm:$0xff]
      %v8076 = vld [vmem:[#allocation3 + $0x120] sm:$0xff]
      %v8077 = vld [vmem:[#allocation3 + $0x128] sm:$0xff]
      %v8078 = vld [vmem:[#allocation3 + $0x138] sm:$0xff]
      %v8079 = vld [vmem:[#allocation3 + $0x140] sm:$0xff]
      %v8080 = vld [vmem:[#allocation3 + $0x150] sm:$0xff]
      %v8081 = vld [vmem:[#allocation3 + $0x158] sm:$0xff]
      %v8082 = vld [vmem:[#allocation3 + $0x168] sm:$0xff]
      %v8083 = vld [vmem:[#allocation3 + $0x170] sm:$0xff]
      %v8084 = vld [vmem:[%s7] sm:$0xf]
      %v8085 = vld [vmem:[#allocation3 + $0x1] sm:$0xff]
      %v8086 = vld [vmem:[#allocation3 + $0x9] sm:$0xff]
      %v8087 = vld [vmem:[#allocation3 + $0x19] sm:$0xff]
      %v8088 = vld [vmem:[#allocation3 + $0x21] sm:$0xff]
      %v8089 = vld [vmem:[#allocation3 + $0x31] sm:$0xff]
      %v8090 = vld [vmem:[#allocation3 + $0x39] sm:$0xff]
      %v8091 = vld [vmem:[#allocation3 + $0x49] sm:$0xff]
      %v8092 = vld [vmem:[#allocation3 + $0x51] sm:$0xff]
      %v8093 = vld [vmem:[#allocation3 + $0x61] sm:$0xff]
      %v8094 = vld [vmem:[#allocation3 + $0x69] sm:$0xff]
      %v8095 = vld [vmem:[#allocation3 + $0x79] sm:$0xff]
      %v8096 = vld [vmem:[#allocation3 + $0x81] sm:$0xff]
      %v8097 = vld [vmem:[#allocation3 + $0x91] sm:$0xff]
      %v8098 = vld [vmem:[#allocation3 + $0x99] sm:$0xff]
      %v8099 = vld [vmem:[#allocation3 + $0xa9] sm:$0xff]
      %v8100 = vld [vmem:[#allocation3 + $0xb1] sm:$0xff]
      %v8101 = vld [vmem:[#allocation3 + $0xc1] sm:$0xff]
      %v8102 = vld [vmem:[#allocation3 + $0xc9] sm:$0xff]
      %v8103 = vld [vmem:[#allocation3 + $0xd9] sm:$0xff]
      %v8104 = vld [vmem:[#allocation3 + $0xe1] sm:$0xff]
      %v8105 = vld [vmem:[#allocation3 + $0xf1] sm:$0xff]
      %v8106 = vld [vmem:[#allocation3 + $0xf9] sm:$0xff]
      %v8107 = vld [vmem:[#allocation3 + $0x109] sm:$0xff]
      %v8108 = vld [vmem:[#allocation3 + $0x111] sm:$0xff]
      %v8109 = vld [vmem:[#allocation3 + $0x121] sm:$0xff]
      %v8110 = vld [vmem:[#allocation3 + $0x129] sm:$0xff]
      %v8111 = vld [vmem:[#allocation3 + $0x139] sm:$0xff]
      %v8112 = vld [vmem:[#allocation3 + $0x141] sm:$0xff]
      %v8113 = vld [vmem:[#allocation3 + $0x151] sm:$0xff]
      %v8114 = vld [vmem:[#allocation3 + $0x159] sm:$0xff]
      %v8115 = vld [vmem:[#allocation3 + $0x169] sm:$0xff]
      %v8116 = vld [vmem:[#allocation3 + $0x171] sm:$0xff]
      %s8117 = scalar_lea.vmem %s7, 4
      %v8118 = vld [vmem:[%s8117] sm:$0xf]
      %v8120 = vsel %vm2802, %v8085, 0
      %v8123 = vsel %vm2802, %v8086, 0
      %v8126 = vsel %vm2802, %v8087, 0
      %v8129 = vsel %vm2802, %v8088, 0
      %v8132 = vsel %vm2802, %v8089, 0
      %v8135 = vsel %vm2802, %v8090, 0
      %v8138 = vsel %vm2802, %v8091, 0
      %v8141 = vsel %vm2802, %v8092, 0
      %v8144 = vsel %vm2802, %v8093, 0
      %v8147 = vsel %vm2802, %v8094, 0
      %v8150 = vsel %vm2802, %v8095, 0
      %v8153 = vsel %vm2802, %v8096, 0
      %v8156 = vsel %vm2802, %v8097, 0
      %v8159 = vsel %vm2802, %v8098, 0
      %v8162 = vsel %vm2802, %v8099, 0
      %v8165 = vsel %vm2802, %v8100, 0
      %v8168 = vsel %vm2802, %v8101, 0
      %v8171 = vsel %vm2802, %v8102, 0
      %v8174 = vsel %vm2802, %v8103, 0
      %v8177 = vsel %vm2802, %v8104, 0
      %v8180 = vsel %vm2802, %v8105, 0
      %v8183 = vsel %vm2802, %v8106, 0
      %v8186 = vsel %vm2802, %v8107, 0
      %v8189 = vsel %vm2802, %v8108, 0
      %v8192 = vsel %vm2802, %v8109, 0
      %v8195 = vsel %vm2802, %v8110, 0
      %v8198 = vsel %vm2802, %v8111, 0
      %v8201 = vsel %vm2802, %v8112, 0
      %v8204 = vsel %vm2802, %v8113, 0
      %v8207 = vsel %vm2802, %v8114, 0
      %v8210 = vsel %vm2802, %v8115, 0
      %v8213 = vsel %vm2802, %v8116, 0
      %v8216 = vsel %vm3054, %v8118, 0
      %8218 = vmatpush.msra.mxu0 0.0
      %8219 = vmatpush.msra.mxu0 0.0
      %8220 = vmatpush.msra.mxu0 0.0
      %8221 = vmatpush.msra.mxu0 0.0
      %8222 = vmatpush.msra.mxu0 0.0
      %8223 = vmatpush.msra.mxu0 0.0
      %8224 = vmatpush.msra.mxu0 0.0
      %8225 = vmatpush.msra.mxu0 0.0
      %8226 = vmatpush.msra.mxu0 0.0
      %8227 = vmatpush.msra.mxu0 0.0
      %8228 = vmatpush.msra.mxu0 0.0
      %8229 = vmatpush.msra.mxu0 0.0
      %8230 = vmatpush.msra.mxu0 0.0
      %8231 = vmatpush.msra.mxu0 0.0
      %8232 = vmatpush.msra.mxu0 0.0
      %8233 = vmatpush.msra.mxu0 %v8216
      %8234 = vmatmul.f32.gmra.mxu0 %v8120
      %v8235 = vpop.f32.mrf.mxu0
      %v8236 = vadd.f32 0.0, %v8235
      %8237 = vmatmul.f32.gmra.mxu0 %v8123
      %v8238 = vpop.f32.mrf.mxu0
      %v8239 = vadd.f32 0.0, %v8238
      %8240 = vmatmul.f32.gmra.mxu0 %v8126
      %v8241 = vpop.f32.mrf.mxu0
      %v8242 = vadd.f32 0.0, %v8241
      %8243 = vmatmul.f32.gmra.mxu0 %v8129
      %v8244 = vpop.f32.mrf.mxu0
      %v8245 = vadd.f32 0.0, %v8244
      %8246 = vmatmul.f32.gmra.mxu0 %v8132
      %v8247 = vpop.f32.mrf.mxu0
      %v8248 = vadd.f32 0.0, %v8247
      %8249 = vmatmul.f32.gmra.mxu0 %v8135
      %v8250 = vpop.f32.mrf.mxu0
      %v8251 = vadd.f32 0.0, %v8250
      %8252 = vmatmul.f32.gmra.mxu0 %v8138
      %v8253 = vpop.f32.mrf.mxu0
      %v8254 = vadd.f32 0.0, %v8253
      %8255 = vmatmul.f32.gmra.mxu0 %v8141
      %v8256 = vpop.f32.mrf.mxu0
      %v8257 = vadd.f32 0.0, %v8256
      %8258 = vmatmul.f32.gmra.mxu0 %v8144
      %v8259 = vpop.f32.mrf.mxu0
      %v8260 = vadd.f32 0.0, %v8259
      %8261 = vmatmul.f32.gmra.mxu0 %v8147
      %v8262 = vpop.f32.mrf.mxu0
      %v8263 = vadd.f32 0.0, %v8262
      %8264 = vmatmul.f32.gmra.mxu0 %v8150
      %v8265 = vpop.f32.mrf.mxu0
      %v8266 = vadd.f32 0.0, %v8265
      %8267 = vmatmul.f32.gmra.mxu0 %v8153
      %v8268 = vpop.f32.mrf.mxu0
      %v8269 = vadd.f32 0.0, %v8268
      %8270 = vmatmul.f32.gmra.mxu0 %v8156
      %v8271 = vpop.f32.mrf.mxu0
      %v8272 = vadd.f32 0.0, %v8271
      %8273 = vmatmul.f32.gmra.mxu0 %v8159
      %v8274 = vpop.f32.mrf.mxu0
      %v8275 = vadd.f32 0.0, %v8274
      %8276 = vmatmul.f32.gmra.mxu0 %v8162
      %v8277 = vpop.f32.mrf.mxu0
      %v8278 = vadd.f32 0.0, %v8277
      %8279 = vmatmul.f32.gmra.mxu0 %v8165
      %v8280 = vpop.f32.mrf.mxu0
      %v8281 = vadd.f32 0.0, %v8280
      %8282 = vmatmul.f32.gmra.mxu0 %v8168
      %v8283 = vpop.f32.mrf.mxu0
      %v8284 = vadd.f32 0.0, %v8283
      %8285 = vmatmul.f32.gmra.mxu0 %v8171
      %v8286 = vpop.f32.mrf.mxu0
      %v8287 = vadd.f32 0.0, %v8286
      %8288 = vmatmul.f32.gmra.mxu0 %v8174
      %v8289 = vpop.f32.mrf.mxu0
      %v8290 = vadd.f32 0.0, %v8289
      %8291 = vmatmul.f32.gmra.mxu0 %v8177
      %v8292 = vpop.f32.mrf.mxu0
      %v8293 = vadd.f32 0.0, %v8292
      %8294 = vmatmul.f32.gmra.mxu0 %v8180
      %v8295 = vpop.f32.mrf.mxu0
      %v8296 = vadd.f32 0.0, %v8295
      %8297 = vmatmul.f32.gmra.mxu0 %v8183
      %v8298 = vpop.f32.mrf.mxu0
      %v8299 = vadd.f32 0.0, %v8298
      %8300 = vmatmul.f32.gmra.mxu0 %v8186
      %v8301 = vpop.f32.mrf.mxu0
      %v8302 = vadd.f32 0.0, %v8301
      %8303 = vmatmul.f32.gmra.mxu0 %v8189
      %v8304 = vpop.f32.mrf.mxu0
      %v8305 = vadd.f32 0.0, %v8304
      %8306 = vmatmul.f32.gmra.mxu0 %v8192
      %v8307 = vpop.f32.mrf.mxu0
      %v8308 = vadd.f32 0.0, %v8307
      %8309 = vmatmul.f32.gmra.mxu0 %v8195
      %v8310 = vpop.f32.mrf.mxu0
      %v8311 = vadd.f32 0.0, %v8310
      %8312 = vmatmul.f32.gmra.mxu0 %v8198
      %v8313 = vpop.f32.mrf.mxu0
      %v8314 = vadd.f32 0.0, %v8313
      %8315 = vmatmul.f32.gmra.mxu0 %v8201
      %v8316 = vpop.f32.mrf.mxu0
      %v8317 = vadd.f32 0.0, %v8316
      %8318 = vmatmul.f32.gmra.mxu0 %v8204
      %v8319 = vpop.f32.mrf.mxu0
      %v8320 = vadd.f32 0.0, %v8319
      %8321 = vmatmul.f32.gmra.mxu0 %v8207
      %v8322 = vpop.f32.mrf.mxu0
      %v8323 = vadd.f32 0.0, %v8322
      %8324 = vmatmul.f32.gmra.mxu0 %v8210
      %v8325 = vpop.f32.mrf.mxu0
      %v8326 = vadd.f32 0.0, %v8325
      %8327 = vmatmul.f32.gmra.mxu0 %v8213
      %v8328 = vpop.f32.mrf.mxu0
      %v8329 = vadd.f32 0.0, %v8328
      %8330 = vdwg.mxu0
      %v8332 = vsel %vm2802, %v8052, 0
      %v8335 = vsel %vm2802, %v8053, 0
      %v8338 = vsel %vm2802, %v8054, 0
      %v8341 = vsel %vm2802, %v8055, 0
      %v8344 = vsel %vm2802, %v8056, 0
      %v8347 = vsel %vm2802, %v8057, 0
      %v8350 = vsel %vm2802, %v8058, 0
      %v8353 = vsel %vm2802, %v8059, 0
      %v8356 = vsel %vm2802, %v8060, 0
      %v8359 = vsel %vm2802, %v8061, 0
      %v8362 = vsel %vm2802, %v8062, 0
      %v8365 = vsel %vm2802, %v8063, 0
      %v8368 = vsel %vm2802, %v8064, 0
      %v8371 = vsel %vm2802, %v8065, 0
      %v8374 = vsel %vm2802, %v8066, 0
      %v8377 = vsel %vm2802, %v8067, 0
      %v8380 = vsel %vm2802, %v8068, 0
      %v8383 = vsel %vm2802, %v8069, 0
      %v8386 = vsel %vm2802, %v8070, 0
      %v8389 = vsel %vm2802, %v8071, 0
      %v8392 = vsel %vm2802, %v8072, 0
      %v8395 = vsel %vm2802, %v8073, 0
      %v8398 = vsel %vm2802, %v8074, 0
      %v8401 = vsel %vm2802, %v8075, 0
      %v8404 = vsel %vm2802, %v8076, 0
      %v8407 = vsel %vm2802, %v8077, 0
      %v8410 = vsel %vm2802, %v8078, 0
      %v8413 = vsel %vm2802, %v8079, 0
      %v8416 = vsel %vm2802, %v8080, 0
      %v8419 = vsel %vm2802, %v8081, 0
      %v8422 = vsel %vm2802, %v8082, 0
      %v8425 = vsel %vm2802, %v8083, 0
      %v8428 = vsel %vm3054, %v8084, 0
      %8430 = vmatpush.msra.mxu0 0.0
      %8431 = vmatpush.msra.mxu0 0.0
      %8432 = vmatpush.msra.mxu0 0.0
      %8433 = vmatpush.msra.mxu0 0.0
      %8434 = vmatpush.msra.mxu0 0.0
      %8435 = vmatpush.msra.mxu0 0.0
      %8436 = vmatpush.msra.mxu0 0.0
      %8437 = vmatpush.msra.mxu0 0.0
      %8438 = vmatpush.msra.mxu0 0.0
      %8439 = vmatpush.msra.mxu0 0.0
      %8440 = vmatpush.msra.mxu0 0.0
      %8441 = vmatpush.msra.mxu0 0.0
      %8442 = vmatpush.msra.mxu0 0.0
      %8443 = vmatpush.msra.mxu0 0.0
      %8444 = vmatpush.msra.mxu0 0.0
      %8445 = vmatpush.msra.mxu0 %v8428
      %8446 = vmatmul.f32.gmra.mxu0 %v8332
      %v8447 = vpop.f32.mrf.mxu0
      %v8448 = vadd.f32 %v8236, %v8447
      %8449 = vmatmul.f32.gmra.mxu0 %v8335
      %v8450 = vpop.f32.mrf.mxu0
      %v8451 = vadd.f32 %v8239, %v8450
      %8452 = vmatmul.f32.gmra.mxu0 %v8338
      %v8453 = vpop.f32.mrf.mxu0
      %v8454 = vadd.f32 %v8242, %v8453
      %8455 = vmatmul.f32.gmra.mxu0 %v8341
      %v8456 = vpop.f32.mrf.mxu0
      %v8457 = vadd.f32 %v8245, %v8456
      %8458 = vmatmul.f32.gmra.mxu0 %v8344
      %v8459 = vpop.f32.mrf.mxu0
      %v8460 = vadd.f32 %v8248, %v8459
      %8461 = vmatmul.f32.gmra.mxu0 %v8347
      %v8462 = vpop.f32.mrf.mxu0
      %v8463 = vadd.f32 %v8251, %v8462
      %8464 = vmatmul.f32.gmra.mxu0 %v8350
      %v8465 = vpop.f32.mrf.mxu0
      %v8466 = vadd.f32 %v8254, %v8465
      %8467 = vmatmul.f32.gmra.mxu0 %v8353
      %v8468 = vpop.f32.mrf.mxu0
      %v8469 = vadd.f32 %v8257, %v8468
      %8470 = vmatmul.f32.gmra.mxu0 %v8356
      %v8471 = vpop.f32.mrf.mxu0
      %v8472 = vadd.f32 %v8260, %v8471
      %8473 = vmatmul.f32.gmra.mxu0 %v8359
      %v8474 = vpop.f32.mrf.mxu0
      %v8475 = vadd.f32 %v8263, %v8474
      %8476 = vmatmul.f32.gmra.mxu0 %v8362
      %v8477 = vpop.f32.mrf.mxu0
      %v8478 = vadd.f32 %v8266, %v8477
      %8479 = vmatmul.f32.gmra.mxu0 %v8365
      %v8480 = vpop.f32.mrf.mxu0
      %v8481 = vadd.f32 %v8269, %v8480
      %8482 = vmatmul.f32.gmra.mxu0 %v8368
      %v8483 = vpop.f32.mrf.mxu0
      %v8484 = vadd.f32 %v8272, %v8483
      %8485 = vmatmul.f32.gmra.mxu0 %v8371
      %v8486 = vpop.f32.mrf.mxu0
      %v8487 = vadd.f32 %v8275, %v8486
      %8488 = vmatmul.f32.gmra.mxu0 %v8374
      %v8489 = vpop.f32.mrf.mxu0
      %v8490 = vadd.f32 %v8278, %v8489
      %8491 = vmatmul.f32.gmra.mxu0 %v8377
      %v8492 = vpop.f32.mrf.mxu0
      %v8493 = vadd.f32 %v8281, %v8492
      %8494 = vmatmul.f32.gmra.mxu0 %v8380
      %v8495 = vpop.f32.mrf.mxu0
      %v8496 = vadd.f32 %v8284, %v8495
      %8497 = vmatmul.f32.gmra.mxu0 %v8383
      %v8498 = vpop.f32.mrf.mxu0
      %v8499 = vadd.f32 %v8287, %v8498
      %8500 = vmatmul.f32.gmra.mxu0 %v8386
      %v8501 = vpop.f32.mrf.mxu0
      %v8502 = vadd.f32 %v8290, %v8501
      %8503 = vmatmul.f32.gmra.mxu0 %v8389
      %v8504 = vpop.f32.mrf.mxu0
      %v8505 = vadd.f32 %v8293, %v8504
      %8506 = vmatmul.f32.gmra.mxu0 %v8392
      %v8507 = vpop.f32.mrf.mxu0
      %v8508 = vadd.f32 %v8296, %v8507
      %8509 = vmatmul.f32.gmra.mxu0 %v8395
      %v8510 = vpop.f32.mrf.mxu0
      %v8511 = vadd.f32 %v8299, %v8510
      %8512 = vmatmul.f32.gmra.mxu0 %v8398
      %v8513 = vpop.f32.mrf.mxu0
      %v8514 = vadd.f32 %v8302, %v8513
      %8515 = vmatmul.f32.gmra.mxu0 %v8401
      %v8516 = vpop.f32.mrf.mxu0
      %v8517 = vadd.f32 %v8305, %v8516
      %8518 = vmatmul.f32.gmra.mxu0 %v8404
      %v8519 = vpop.f32.mrf.mxu0
      %v8520 = vadd.f32 %v8308, %v8519
      %8521 = vmatmul.f32.gmra.mxu0 %v8407
      %v8522 = vpop.f32.mrf.mxu0
      %v8523 = vadd.f32 %v8311, %v8522
      %8524 = vmatmul.f32.gmra.mxu0 %v8410
      %v8525 = vpop.f32.mrf.mxu0
      %v8526 = vadd.f32 %v8314, %v8525
      %8527 = vmatmul.f32.gmra.mxu0 %v8413
      %v8528 = vpop.f32.mrf.mxu0
      %v8529 = vadd.f32 %v8317, %v8528
      %8530 = vmatmul.f32.gmra.mxu0 %v8416
      %v8531 = vpop.f32.mrf.mxu0
      %v8532 = vadd.f32 %v8320, %v8531
      %8533 = vmatmul.f32.gmra.mxu0 %v8419
      %v8534 = vpop.f32.mrf.mxu0
      %v8535 = vadd.f32 %v8323, %v8534
      %8536 = vmatmul.f32.gmra.mxu0 %v8422
      %v8537 = vpop.f32.mrf.mxu0
      %v8538 = vadd.f32 %v8326, %v8537
      %8539 = vmatmul.f32.gmra.mxu0 %v8425
      %v8540 = vpop.f32.mrf.mxu0
      %v8541 = vadd.f32 %v8329, %v8540
      %8542 = vdwg.mxu0
      %v8543 = vld [vmem:[#allocation3 + $0x2] sm:$0xff]
      %v8544 = vld [vmem:[#allocation3 + $0xa] sm:$0xff]
      %v8545 = vld [vmem:[#allocation3 + $0x1a] sm:$0xff]
      %v8546 = vld [vmem:[#allocation3 + $0x22] sm:$0xff]
      %v8547 = vld [vmem:[#allocation3 + $0x32] sm:$0xff]
      %v8548 = vld [vmem:[#allocation3 + $0x3a] sm:$0xff]
      %v8549 = vld [vmem:[#allocation3 + $0x4a] sm:$0xff]
      %v8550 = vld [vmem:[#allocation3 + $0x52] sm:$0xff]
      %v8551 = vld [vmem:[#allocation3 + $0x62] sm:$0xff]
      %v8552 = vld [vmem:[#allocation3 + $0x6a] sm:$0xff]
      %v8553 = vld [vmem:[#allocation3 + $0x7a] sm:$0xff]
      %v8554 = vld [vmem:[#allocation3 + $0x82] sm:$0xff]
      %v8555 = vld [vmem:[#allocation3 + $0x92] sm:$0xff]
      %v8556 = vld [vmem:[#allocation3 + $0x9a] sm:$0xff]
      %v8557 = vld [vmem:[#allocation3 + $0xaa] sm:$0xff]
      %v8558 = vld [vmem:[#allocation3 + $0xb2] sm:$0xff]
      %v8559 = vld [vmem:[#allocation3 + $0xc2] sm:$0xff]
      %v8560 = vld [vmem:[#allocation3 + $0xca] sm:$0xff]
      %v8561 = vld [vmem:[#allocation3 + $0xda] sm:$0xff]
      %v8562 = vld [vmem:[#allocation3 + $0xe2] sm:$0xff]
      %v8563 = vld [vmem:[#allocation3 + $0xf2] sm:$0xff]
      %v8564 = vld [vmem:[#allocation3 + $0xfa] sm:$0xff]
      %v8565 = vld [vmem:[#allocation3 + $0x10a] sm:$0xff]
      %v8566 = vld [vmem:[#allocation3 + $0x112] sm:$0xff]
      %v8567 = vld [vmem:[#allocation3 + $0x122] sm:$0xff]
      %v8568 = vld [vmem:[#allocation3 + $0x12a] sm:$0xff]
      %v8569 = vld [vmem:[#allocation3 + $0x13a] sm:$0xff]
      %v8570 = vld [vmem:[#allocation3 + $0x142] sm:$0xff]
      %v8571 = vld [vmem:[#allocation3 + $0x152] sm:$0xff]
      %v8572 = vld [vmem:[#allocation3 + $0x15a] sm:$0xff]
      %v8573 = vld [vmem:[#allocation3 + $0x16a] sm:$0xff]
      %v8574 = vld [vmem:[#allocation3 + $0x172] sm:$0xff]
      %s8575 = scalar_lea.vmem %s7, 8
      %v8576 = vld [vmem:[%s8575] sm:$0xf]
      %v8578 = vsel %vm2802, %v8543, 0
      %v8581 = vsel %vm2802, %v8544, 0
      %v8584 = vsel %vm2802, %v8545, 0
      %v8587 = vsel %vm2802, %v8546, 0
      %v8590 = vsel %vm2802, %v8547, 0
      %v8593 = vsel %vm2802, %v8548, 0
      %v8596 = vsel %vm2802, %v8549, 0
      %v8599 = vsel %vm2802, %v8550, 0
      %v8602 = vsel %vm2802, %v8551, 0
      %v8605 = vsel %vm2802, %v8552, 0
      %v8608 = vsel %vm2802, %v8553, 0
      %v8611 = vsel %vm2802, %v8554, 0
      %v8614 = vsel %vm2802, %v8555, 0
      %v8617 = vsel %vm2802, %v8556, 0
      %v8620 = vsel %vm2802, %v8557, 0
      %v8623 = vsel %vm2802, %v8558, 0
      %v8626 = vsel %vm2802, %v8559, 0
      %v8629 = vsel %vm2802, %v8560, 0
      %v8632 = vsel %vm2802, %v8561, 0
      %v8635 = vsel %vm2802, %v8562, 0
      %v8638 = vsel %vm2802, %v8563, 0
      %v8641 = vsel %vm2802, %v8564, 0
      %v8644 = vsel %vm2802, %v8565, 0
      %v8647 = vsel %vm2802, %v8566, 0
      %v8650 = vsel %vm2802, %v8567, 0
      %v8653 = vsel %vm2802, %v8568, 0
      %v8656 = vsel %vm2802, %v8569, 0
      %v8659 = vsel %vm2802, %v8570, 0
      %v8662 = vsel %vm2802, %v8571, 0
      %v8665 = vsel %vm2802, %v8572, 0
      %v8668 = vsel %vm2802, %v8573, 0
      %v8671 = vsel %vm2802, %v8574, 0
      %v8674 = vsel %vm3054, %v8576, 0
      %8676 = vmatpush.msra.mxu0 0.0
      %8677 = vmatpush.msra.mxu0 0.0
      %8678 = vmatpush.msra.mxu0 0.0
      %8679 = vmatpush.msra.mxu0 0.0
      %8680 = vmatpush.msra.mxu0 0.0
      %8681 = vmatpush.msra.mxu0 0.0
      %8682 = vmatpush.msra.mxu0 0.0
      %8683 = vmatpush.msra.mxu0 0.0
      %8684 = vmatpush.msra.mxu0 0.0
      %8685 = vmatpush.msra.mxu0 0.0
      %8686 = vmatpush.msra.mxu0 0.0
      %8687 = vmatpush.msra.mxu0 0.0
      %8688 = vmatpush.msra.mxu0 0.0
      %8689 = vmatpush.msra.mxu0 0.0
      %8690 = vmatpush.msra.mxu0 0.0
      %8691 = vmatpush.msra.mxu0 %v8674
      %8692 = vmatmul.f32.gmra.mxu0 %v8578
      %v8693 = vpop.f32.mrf.mxu0
      %v8694 = vadd.f32 0.0, %v8693
      %8695 = vmatmul.f32.gmra.mxu0 %v8581
      %v8696 = vpop.f32.mrf.mxu0
      %v8697 = vadd.f32 0.0, %v8696
      %8698 = vmatmul.f32.gmra.mxu0 %v8584
      %v8699 = vpop.f32.mrf.mxu0
      %v8700 = vadd.f32 0.0, %v8699
      %8701 = vmatmul.f32.gmra.mxu0 %v8587
      %v8702 = vpop.f32.mrf.mxu0
      %v8703 = vadd.f32 0.0, %v8702
      %8704 = vmatmul.f32.gmra.mxu0 %v8590
      %v8705 = vpop.f32.mrf.mxu0
      %v8706 = vadd.f32 0.0, %v8705
      %8707 = vmatmul.f32.gmra.mxu0 %v8593
      %v8708 = vpop.f32.mrf.mxu0
      %v8709 = vadd.f32 0.0, %v8708
      %8710 = vmatmul.f32.gmra.mxu0 %v8596
      %v8711 = vpop.f32.mrf.mxu0
      %v8712 = vadd.f32 0.0, %v8711
      %8713 = vmatmul.f32.gmra.mxu0 %v8599
      %v8714 = vpop.f32.mrf.mxu0
      %v8715 = vadd.f32 0.0, %v8714
      %8716 = vmatmul.f32.gmra.mxu0 %v8602
      %v8717 = vpop.f32.mrf.mxu0
      %v8718 = vadd.f32 0.0, %v8717
      %8719 = vmatmul.f32.gmra.mxu0 %v8605
      %v8720 = vpop.f32.mrf.mxu0
      %v8721 = vadd.f32 0.0, %v8720
      %8722 = vmatmul.f32.gmra.mxu0 %v8608
      %v8723 = vpop.f32.mrf.mxu0
      %v8724 = vadd.f32 0.0, %v8723
      %8725 = vmatmul.f32.gmra.mxu0 %v8611
      %v8726 = vpop.f32.mrf.mxu0
      %v8727 = vadd.f32 0.0, %v8726
      %8728 = vmatmul.f32.gmra.mxu0 %v8614
      %v8729 = vpop.f32.mrf.mxu0
      %v8730 = vadd.f32 0.0, %v8729
      %8731 = vmatmul.f32.gmra.mxu0 %v8617
      %v8732 = vpop.f32.mrf.mxu0
      %v8733 = vadd.f32 0.0, %v8732
      %8734 = vmatmul.f32.gmra.mxu0 %v8620
      %v8735 = vpop.f32.mrf.mxu0
      %v8736 = vadd.f32 0.0, %v8735
      %8737 = vmatmul.f32.gmra.mxu0 %v8623
      %v8738 = vpop.f32.mrf.mxu0
      %v8739 = vadd.f32 0.0, %v8738
      %8740 = vmatmul.f32.gmra.mxu0 %v8626
      %v8741 = vpop.f32.mrf.mxu0
      %v8742 = vadd.f32 0.0, %v8741
      %8743 = vmatmul.f32.gmra.mxu0 %v8629
      %v8744 = vpop.f32.mrf.mxu0
      %v8745 = vadd.f32 0.0, %v8744
      %8746 = vmatmul.f32.gmra.mxu0 %v8632
      %v8747 = vpop.f32.mrf.mxu0
      %v8748 = vadd.f32 0.0, %v8747
      %8749 = vmatmul.f32.gmra.mxu0 %v8635
      %v8750 = vpop.f32.mrf.mxu0
      %v8751 = vadd.f32 0.0, %v8750
      %8752 = vmatmul.f32.gmra.mxu0 %v8638
      %v8753 = vpop.f32.mrf.mxu0
      %v8754 = vadd.f32 0.0, %v8753
      %8755 = vmatmul.f32.gmra.mxu0 %v8641
      %v8756 = vpop.f32.mrf.mxu0
      %v8757 = vadd.f32 0.0, %v8756
      %8758 = vmatmul.f32.gmra.mxu0 %v8644
      %v8759 = vpop.f32.mrf.mxu0
      %v8760 = vadd.f32 0.0, %v8759
      %8761 = vmatmul.f32.gmra.mxu0 %v8647
      %v8762 = vpop.f32.mrf.mxu0
      %v8763 = vadd.f32 0.0, %v8762
      %8764 = vmatmul.f32.gmra.mxu0 %v8650
      %v8765 = vpop.f32.mrf.mxu0
      %v8766 = vadd.f32 0.0, %v8765
      %8767 = vmatmul.f32.gmra.mxu0 %v8653
      %v8768 = vpop.f32.mrf.mxu0
      %v8769 = vadd.f32 0.0, %v8768
      %8770 = vmatmul.f32.gmra.mxu0 %v8656
      %v8771 = vpop.f32.mrf.mxu0
      %v8772 = vadd.f32 0.0, %v8771
      %8773 = vmatmul.f32.gmra.mxu0 %v8659
      %v8774 = vpop.f32.mrf.mxu0
      %v8775 = vadd.f32 0.0, %v8774
      %8776 = vmatmul.f32.gmra.mxu0 %v8662
      %v8777 = vpop.f32.mrf.mxu0
      %v8778 = vadd.f32 0.0, %v8777
      %8779 = vmatmul.f32.gmra.mxu0 %v8665
      %v8780 = vpop.f32.mrf.mxu0
      %v8781 = vadd.f32 0.0, %v8780
      %8782 = vmatmul.f32.gmra.mxu0 %v8668
      %v8783 = vpop.f32.mrf.mxu0
      %v8784 = vadd.f32 0.0, %v8783
      %8785 = vmatmul.f32.gmra.mxu0 %v8671
      %v8786 = vpop.f32.mrf.mxu0
      %v8787 = vadd.f32 0.0, %v8786
      %8788 = vdwg.mxu0
      %v8789 = vadd.f32 %v8448, %v8694
      %v8790 = vadd.f32 %v8451, %v8697
      %v8791 = vadd.f32 %v8454, %v8700
      %v8792 = vadd.f32 %v8457, %v8703
      %v8793 = vadd.f32 %v8460, %v8706
      %v8794 = vadd.f32 %v8463, %v8709
      %v8795 = vadd.f32 %v8466, %v8712
      %v8796 = vadd.f32 %v8469, %v8715
      %v8797 = vadd.f32 %v8472, %v8718
      %v8798 = vadd.f32 %v8475, %v8721
      %v8799 = vadd.f32 %v8478, %v8724
      %v8800 = vadd.f32 %v8481, %v8727
      %v8801 = vadd.f32 %v8484, %v8730
      %v8802 = vadd.f32 %v8487, %v8733
      %v8803 = vadd.f32 %v8490, %v8736
      %v8804 = vadd.f32 %v8493, %v8739
      %v8805 = vadd.f32 %v8496, %v8742
      %v8806 = vadd.f32 %v8499, %v8745
      %v8807 = vadd.f32 %v8502, %v8748
      %v8808 = vadd.f32 %v8505, %v8751
      %v8809 = vadd.f32 %v8508, %v8754
      %v8810 = vadd.f32 %v8511, %v8757
      %v8811 = vadd.f32 %v8514, %v8760
      %v8812 = vadd.f32 %v8517, %v8763
      %v8813 = vadd.f32 %v8520, %v8766
      %v8814 = vadd.f32 %v8523, %v8769
      %v8815 = vadd.f32 %v8526, %v8772
      %v8816 = vadd.f32 %v8529, %v8775
      %v8817 = vadd.f32 %v8532, %v8778
      %v8818 = vadd.f32 %v8535, %v8781
      %v8819 = vadd.f32 %v8538, %v8784
      %v8820 = vadd.f32 %v8541, %v8787
      %v8821 = vld [vmem:[%s8019] sm:$0xff]
      %v8822 = vld [vmem:[%s8019 + $0x8] sm:$0xff]
      %v8823 = vld [vmem:[%s8019 + $0x18] sm:$0xff]
      %v8824 = vld [vmem:[%s8019 + $0x20] sm:$0xff]
      %v8825 = vld [vmem:[%s8019 + $0x30] sm:$0xff]
      %v8826 = vld [vmem:[%s8019 + $0x38] sm:$0xff]
      %v8827 = vld [vmem:[%s8019 + $0x48] sm:$0xff]
      %v8828 = vld [vmem:[%s8019 + $0x50] sm:$0xff]
      %v8829 = vld [vmem:[%s8019 + $0x60] sm:$0xff]
      %v8830 = vld [vmem:[%s8019 + $0x68] sm:$0xff]
      %v8831 = vld [vmem:[%s8019 + $0x78] sm:$0xff]
      %v8832 = vld [vmem:[%s8019 + $0x80] sm:$0xff]
      %v8833 = vld [vmem:[%s8019 + $0x90] sm:$0xff]
      %v8834 = vld [vmem:[%s8019 + $0x98] sm:$0xff]
      %v8835 = vld [vmem:[%s8019 + $0xa8] sm:$0xff]
      %v8836 = vld [vmem:[%s8019 + $0xb0] sm:$0xff]
      %v8837 = vld [vmem:[%s8019 + $0xc0] sm:$0xff]
      %v8838 = vld [vmem:[%s8019 + $0xc8] sm:$0xff]
      %v8839 = vld [vmem:[%s8019 + $0xd8] sm:$0xff]
      %v8840 = vld [vmem:[%s8019 + $0xe0] sm:$0xff]
      %v8841 = vld [vmem:[%s8019 + $0xf0] sm:$0xff]
      %v8842 = vld [vmem:[%s8019 + $0xf8] sm:$0xff]
      %v8843 = vld [vmem:[%s8019 + $0x108] sm:$0xff]
      %v8844 = vld [vmem:[%s8019 + $0x110] sm:$0xff]
      %v8845 = vld [vmem:[%s8019 + $0x120] sm:$0xff]
      %v8846 = vld [vmem:[%s8019 + $0x128] sm:$0xff]
      %v8847 = vld [vmem:[%s8019 + $0x138] sm:$0xff]
      %v8848 = vld [vmem:[%s8019 + $0x140] sm:$0xff]
      %v8849 = vld [vmem:[%s8019 + $0x150] sm:$0xff]
      %v8850 = vld [vmem:[%s8019 + $0x158] sm:$0xff]
      %v8851 = vld [vmem:[%s8019 + $0x168] sm:$0xff]
      %v8852 = vld [vmem:[%s8019 + $0x170] sm:$0xff]
      %s8853 = scalar_lea.vmem %s7, 12
      %v8854 = vld [vmem:[%s8853] sm:$0xf]
      %v8856 = vsel %vm2802, %v8821, 0
      %v8859 = vsel %vm2802, %v8822, 0
      %v8862 = vsel %vm2802, %v8823, 0
      %v8865 = vsel %vm2802, %v8824, 0
      %v8868 = vsel %vm2802, %v8825, 0
      %v8871 = vsel %vm2802, %v8826, 0
      %v8874 = vsel %vm2802, %v8827, 0
      %v8877 = vsel %vm2802, %v8828, 0
      %v8880 = vsel %vm2802, %v8829, 0
      %v8883 = vsel %vm2802, %v8830, 0
      %v8886 = vsel %vm2802, %v8831, 0
      %v8889 = vsel %vm2802, %v8832, 0
      %v8892 = vsel %vm2802, %v8833, 0
      %v8895 = vsel %vm2802, %v8834, 0
      %v8898 = vsel %vm2802, %v8835, 0
      %v8901 = vsel %vm2802, %v8836, 0
      %v8904 = vsel %vm2802, %v8837, 0
      %v8907 = vsel %vm2802, %v8838, 0
      %v8910 = vsel %vm2802, %v8839, 0
      %v8913 = vsel %vm2802, %v8840, 0
      %v8916 = vsel %vm2802, %v8841, 0
      %v8919 = vsel %vm2802, %v8842, 0
      %v8922 = vsel %vm2802, %v8843, 0
      %v8925 = vsel %vm2802, %v8844, 0
      %v8928 = vsel %vm2802, %v8845, 0
      %v8931 = vsel %vm2802, %v8846, 0
      %v8934 = vsel %vm2802, %v8847, 0
      %v8937 = vsel %vm2802, %v8848, 0
      %v8940 = vsel %vm2802, %v8849, 0
      %v8943 = vsel %vm2802, %v8850, 0
      %v8946 = vsel %vm2802, %v8851, 0
      %v8949 = vsel %vm2802, %v8852, 0
      %v8952 = vsel %vm3054, %v8854, 0
      %8954 = vmatpush.msra.mxu0 0.0
      %8955 = vmatpush.msra.mxu0 0.0
      %8956 = vmatpush.msra.mxu0 0.0
      %8957 = vmatpush.msra.mxu0 0.0
      %8958 = vmatpush.msra.mxu0 0.0
      %8959 = vmatpush.msra.mxu0 0.0
      %8960 = vmatpush.msra.mxu0 0.0
      %8961 = vmatpush.msra.mxu0 0.0
      %8962 = vmatpush.msra.mxu0 0.0
      %8963 = vmatpush.msra.mxu0 0.0
      %8964 = vmatpush.msra.mxu0 0.0
      %8965 = vmatpush.msra.mxu0 0.0
      %8966 = vmatpush.msra.mxu0 0.0
      %8967 = vmatpush.msra.mxu0 0.0
      %8968 = vmatpush.msra.mxu0 0.0
      %8969 = vmatpush.msra.mxu0 %v8952
      %8970 = vmatmul.f32.gmra.mxu0 %v8856
      %v8971 = vpop.f32.mrf.mxu0
      %v8972 = vadd.f32 0.0, %v8971
      %8973 = vmatmul.f32.gmra.mxu0 %v8859
      %v8974 = vpop.f32.mrf.mxu0
      %v8975 = vadd.f32 0.0, %v8974
      %8976 = vmatmul.f32.gmra.mxu0 %v8862
      %v8977 = vpop.f32.mrf.mxu0
      %v8978 = vadd.f32 0.0, %v8977
      %8979 = vmatmul.f32.gmra.mxu0 %v8865
      %v8980 = vpop.f32.mrf.mxu0
      %v8981 = vadd.f32 0.0, %v8980
      %8982 = vmatmul.f32.gmra.mxu0 %v8868
      %v8983 = vpop.f32.mrf.mxu0
      %v8984 = vadd.f32 0.0, %v8983
      %8985 = vmatmul.f32.gmra.mxu0 %v8871
      %v8986 = vpop.f32.mrf.mxu0
      %v8987 = vadd.f32 0.0, %v8986
      %8988 = vmatmul.f32.gmra.mxu0 %v8874
      %v8989 = vpop.f32.mrf.mxu0
      %v8990 = vadd.f32 0.0, %v8989
      %8991 = vmatmul.f32.gmra.mxu0 %v8877
      %v8992 = vpop.f32.mrf.mxu0
      %v8993 = vadd.f32 0.0, %v8992
      %8994 = vmatmul.f32.gmra.mxu0 %v8880
      %v8995 = vpop.f32.mrf.mxu0
      %v8996 = vadd.f32 0.0, %v8995
      %8997 = vmatmul.f32.gmra.mxu0 %v8883
      %v8998 = vpop.f32.mrf.mxu0
      %v8999 = vadd.f32 0.0, %v8998
      %9000 = vmatmul.f32.gmra.mxu0 %v8886
      %v9001 = vpop.f32.mrf.mxu0
      %v9002 = vadd.f32 0.0, %v9001
      %9003 = vmatmul.f32.gmra.mxu0 %v8889
      %v9004 = vpop.f32.mrf.mxu0
      %v9005 = vadd.f32 0.0, %v9004
      %9006 = vmatmul.f32.gmra.mxu0 %v8892
      %v9007 = vpop.f32.mrf.mxu0
      %v9008 = vadd.f32 0.0, %v9007
      %9009 = vmatmul.f32.gmra.mxu0 %v8895
      %v9010 = vpop.f32.mrf.mxu0
      %v9011 = vadd.f32 0.0, %v9010
      %9012 = vmatmul.f32.gmra.mxu0 %v8898
      %v9013 = vpop.f32.mrf.mxu0
      %v9014 = vadd.f32 0.0, %v9013
      %9015 = vmatmul.f32.gmra.mxu0 %v8901
      %v9016 = vpop.f32.mrf.mxu0
      %v9017 = vadd.f32 0.0, %v9016
      %9018 = vmatmul.f32.gmra.mxu0 %v8904
      %v9019 = vpop.f32.mrf.mxu0
      %v9020 = vadd.f32 0.0, %v9019
      %9021 = vmatmul.f32.gmra.mxu0 %v8907
      %v9022 = vpop.f32.mrf.mxu0
      %v9023 = vadd.f32 0.0, %v9022
      %9024 = vmatmul.f32.gmra.mxu0 %v8910
      %v9025 = vpop.f32.mrf.mxu0
      %v9026 = vadd.f32 0.0, %v9025
      %9027 = vmatmul.f32.gmra.mxu0 %v8913
      %v9028 = vpop.f32.mrf.mxu0
      %v9029 = vadd.f32 0.0, %v9028
      %9030 = vmatmul.f32.gmra.mxu0 %v8916
      %v9031 = vpop.f32.mrf.mxu0
      %v9032 = vadd.f32 0.0, %v9031
      %9033 = vmatmul.f32.gmra.mxu0 %v8919
      %v9034 = vpop.f32.mrf.mxu0
      %v9035 = vadd.f32 0.0, %v9034
      %9036 = vmatmul.f32.gmra.mxu0 %v8922
      %v9037 = vpop.f32.mrf.mxu0
      %v9038 = vadd.f32 0.0, %v9037
      %9039 = vmatmul.f32.gmra.mxu0 %v8925
      %v9040 = vpop.f32.mrf.mxu0
      %v9041 = vadd.f32 0.0, %v9040
      %9042 = vmatmul.f32.gmra.mxu0 %v8928
      %v9043 = vpop.f32.mrf.mxu0
      %v9044 = vadd.f32 0.0, %v9043
      %9045 = vmatmul.f32.gmra.mxu0 %v8931
      %v9046 = vpop.f32.mrf.mxu0
      %v9047 = vadd.f32 0.0, %v9046
      %9048 = vmatmul.f32.gmra.mxu0 %v8934
      %v9049 = vpop.f32.mrf.mxu0
      %v9050 = vadd.f32 0.0, %v9049
      %9051 = vmatmul.f32.gmra.mxu0 %v8937
      %v9052 = vpop.f32.mrf.mxu0
      %v9053 = vadd.f32 0.0, %v9052
      %9054 = vmatmul.f32.gmra.mxu0 %v8940
      %v9055 = vpop.f32.mrf.mxu0
      %v9056 = vadd.f32 0.0, %v9055
      %9057 = vmatmul.f32.gmra.mxu0 %v8943
      %v9058 = vpop.f32.mrf.mxu0
      %v9059 = vadd.f32 0.0, %v9058
      %9060 = vmatmul.f32.gmra.mxu0 %v8946
      %v9061 = vpop.f32.mrf.mxu0
      %v9062 = vadd.f32 0.0, %v9061
      %9063 = vmatmul.f32.gmra.mxu0 %v8949
      %v9064 = vpop.f32.mrf.mxu0
      %v9065 = vadd.f32 0.0, %v9064
      %9066 = vdwg.mxu0
      %v9067 = vadd.f32 %v8789, %v8972
      %v9068 = vadd.f32 %v8790, %v8975
      %v9069 = vadd.f32 %v8791, %v8978
      %v9070 = vadd.f32 %v8792, %v8981
      %v9071 = vadd.f32 %v8793, %v8984
      %v9072 = vadd.f32 %v8794, %v8987
      %v9073 = vadd.f32 %v8795, %v8990
      %v9074 = vadd.f32 %v8796, %v8993
      %v9075 = vadd.f32 %v8797, %v8996
      %v9076 = vadd.f32 %v8798, %v8999
      %v9077 = vadd.f32 %v8799, %v9002
      %v9078 = vadd.f32 %v8800, %v9005
      %v9079 = vadd.f32 %v8801, %v9008
      %v9080 = vadd.f32 %v8802, %v9011
      %v9081 = vadd.f32 %v8803, %v9014
      %v9082 = vadd.f32 %v8804, %v9017
      %v9083 = vadd.f32 %v8805, %v9020
      %v9084 = vadd.f32 %v8806, %v9023
      %v9085 = vadd.f32 %v8807, %v9026
      %v9086 = vadd.f32 %v8808, %v9029
      %v9087 = vadd.f32 %v8809, %v9032
      %v9088 = vadd.f32 %v8810, %v9035
      %v9089 = vadd.f32 %v8811, %v9038
      %v9090 = vadd.f32 %v8812, %v9041
      %v9091 = vadd.f32 %v8813, %v9044
      %v9092 = vadd.f32 %v8814, %v9047
      %v9093 = vadd.f32 %v8815, %v9050
      %v9094 = vadd.f32 %v8816, %v9053
      %v9095 = vadd.f32 %v8817, %v9056
      %v9096 = vadd.f32 %v8818, %v9059
      %v9097 = vadd.f32 %v8819, %v9062
      %v9098 = vadd.f32 %v8820, %v9065
      %v9099 = vld [vmem:[%s8019 + $0x1] sm:$0xff]
      %v9100 = vld [vmem:[%s8019 + $0x9] sm:$0xff]
      %v9101 = vld [vmem:[%s8019 + $0x19] sm:$0xff]
      %v9102 = vld [vmem:[%s8019 + $0x21] sm:$0xff]
      %v9103 = vld [vmem:[%s8019 + $0x31] sm:$0xff]
      %v9104 = vld [vmem:[%s8019 + $0x39] sm:$0xff]
      %v9105 = vld [vmem:[%s8019 + $0x49] sm:$0xff]
      %v9106 = vld [vmem:[%s8019 + $0x51] sm:$0xff]
      %v9107 = vld [vmem:[%s8019 + $0x61] sm:$0xff]
      %v9108 = vld [vmem:[%s8019 + $0x69] sm:$0xff]
      %v9109 = vld [vmem:[%s8019 + $0x79] sm:$0xff]
      %v9110 = vld [vmem:[%s8019 + $0x81] sm:$0xff]
      %v9111 = vld [vmem:[%s8019 + $0x91] sm:$0xff]
      %v9112 = vld [vmem:[%s8019 + $0x99] sm:$0xff]
      %v9113 = vld [vmem:[%s8019 + $0xa9] sm:$0xff]
      %v9114 = vld [vmem:[%s8019 + $0xb1] sm:$0xff]
      %v9115 = vld [vmem:[%s8019 + $0xc1] sm:$0xff]
      %v9116 = vld [vmem:[%s8019 + $0xc9] sm:$0xff]
      %v9117 = vld [vmem:[%s8019 + $0xd9] sm:$0xff]
      %v9118 = vld [vmem:[%s8019 + $0xe1] sm:$0xff]
      %v9119 = vld [vmem:[%s8019 + $0xf1] sm:$0xff]
      %v9120 = vld [vmem:[%s8019 + $0xf9] sm:$0xff]
      %v9121 = vld [vmem:[%s8019 + $0x109] sm:$0xff]
      %v9122 = vld [vmem:[%s8019 + $0x111] sm:$0xff]
      %v9123 = vld [vmem:[%s8019 + $0x121] sm:$0xff]
      %v9124 = vld [vmem:[%s8019 + $0x129] sm:$0xff]
      %v9125 = vld [vmem:[%s8019 + $0x139] sm:$0xff]
      %v9126 = vld [vmem:[%s8019 + $0x141] sm:$0xff]
      %v9127 = vld [vmem:[%s8019 + $0x151] sm:$0xff]
      %v9128 = vld [vmem:[%s8019 + $0x159] sm:$0xff]
      %v9129 = vld [vmem:[%s8019 + $0x169] sm:$0xff]
      %v9130 = vld [vmem:[%s8019 + $0x171] sm:$0xff]
      %s9131 = scalar_lea.vmem %s7, 16
      %v9132 = vld [vmem:[%s9131] sm:$0xf]
      %v9134 = vsel %vm2802, %v9099, 0
      %v9137 = vsel %vm2802, %v9100, 0
      %v9140 = vsel %vm2802, %v9101, 0
      %v9143 = vsel %vm2802, %v9102, 0
      %v9146 = vsel %vm2802, %v9103, 0
      %v9149 = vsel %vm2802, %v9104, 0
      %v9152 = vsel %vm2802, %v9105, 0
      %v9155 = vsel %vm2802, %v9106, 0
      %v9158 = vsel %vm2802, %v9107, 0
      %v9161 = vsel %vm2802, %v9108, 0
      %v9164 = vsel %vm2802, %v9109, 0
      %v9167 = vsel %vm2802, %v9110, 0
      %v9170 = vsel %vm2802, %v9111, 0
      %v9173 = vsel %vm2802, %v9112, 0
      %v9176 = vsel %vm2802, %v9113, 0
      %v9179 = vsel %vm2802, %v9114, 0
      %v9182 = vsel %vm2802, %v9115, 0
      %v9185 = vsel %vm2802, %v9116, 0
      %v9188 = vsel %vm2802, %v9117, 0
      %v9191 = vsel %vm2802, %v9118, 0
      %v9194 = vsel %vm2802, %v9119, 0
      %v9197 = vsel %vm2802, %v9120, 0
      %v9200 = vsel %vm2802, %v9121, 0
      %v9203 = vsel %vm2802, %v9122, 0
      %v9206 = vsel %vm2802, %v9123, 0
      %v9209 = vsel %vm2802, %v9124, 0
      %v9212 = vsel %vm2802, %v9125, 0
      %v9215 = vsel %vm2802, %v9126, 0
      %v9218 = vsel %vm2802, %v9127, 0
      %v9221 = vsel %vm2802, %v9128, 0
      %v9224 = vsel %vm2802, %v9129, 0
      %v9227 = vsel %vm2802, %v9130, 0
      %v9230 = vsel %vm3054, %v9132, 0
      %9232 = vmatpush.msra.mxu0 0.0
      %9233 = vmatpush.msra.mxu0 0.0
      %9234 = vmatpush.msra.mxu0 0.0
      %9235 = vmatpush.msra.mxu0 0.0
      %9236 = vmatpush.msra.mxu0 0.0
      %9237 = vmatpush.msra.mxu0 0.0
      %9238 = vmatpush.msra.mxu0 0.0
      %9239 = vmatpush.msra.mxu0 0.0
      %9240 = vmatpush.msra.mxu0 0.0
      %9241 = vmatpush.msra.mxu0 0.0
      %9242 = vmatpush.msra.mxu0 0.0
      %9243 = vmatpush.msra.mxu0 0.0
      %9244 = vmatpush.msra.mxu0 0.0
      %9245 = vmatpush.msra.mxu0 0.0
      %9246 = vmatpush.msra.mxu0 0.0
      %9247 = vmatpush.msra.mxu0 %v9230
      %9248 = vmatmul.f32.gmra.mxu0 %v9134
      %v9249 = vpop.f32.mrf.mxu0
      %v9250 = vadd.f32 0.0, %v9249
      %9251 = vmatmul.f32.gmra.mxu0 %v9137
      %v9252 = vpop.f32.mrf.mxu0
      %v9253 = vadd.f32 0.0, %v9252
      %9254 = vmatmul.f32.gmra.mxu0 %v9140
      %v9255 = vpop.f32.mrf.mxu0
      %v9256 = vadd.f32 0.0, %v9255
      %9257 = vmatmul.f32.gmra.mxu0 %v9143
      %v9258 = vpop.f32.mrf.mxu0
      %v9259 = vadd.f32 0.0, %v9258
      %9260 = vmatmul.f32.gmra.mxu0 %v9146
      %v9261 = vpop.f32.mrf.mxu0
      %v9262 = vadd.f32 0.0, %v9261
      %9263 = vmatmul.f32.gmra.mxu0 %v9149
      %v9264 = vpop.f32.mrf.mxu0
      %v9265 = vadd.f32 0.0, %v9264
      %9266 = vmatmul.f32.gmra.mxu0 %v9152
      %v9267 = vpop.f32.mrf.mxu0
      %v9268 = vadd.f32 0.0, %v9267
      %9269 = vmatmul.f32.gmra.mxu0 %v9155
      %v9270 = vpop.f32.mrf.mxu0
      %v9271 = vadd.f32 0.0, %v9270
      %9272 = vmatmul.f32.gmra.mxu0 %v9158
      %v9273 = vpop.f32.mrf.mxu0
      %v9274 = vadd.f32 0.0, %v9273
      %9275 = vmatmul.f32.gmra.mxu0 %v9161
      %v9276 = vpop.f32.mrf.mxu0
      %v9277 = vadd.f32 0.0, %v9276
      %9278 = vmatmul.f32.gmra.mxu0 %v9164
      %v9279 = vpop.f32.mrf.mxu0
      %v9280 = vadd.f32 0.0, %v9279
      %9281 = vmatmul.f32.gmra.mxu0 %v9167
      %v9282 = vpop.f32.mrf.mxu0
      %v9283 = vadd.f32 0.0, %v9282
      %9284 = vmatmul.f32.gmra.mxu0 %v9170
      %v9285 = vpop.f32.mrf.mxu0
      %v9286 = vadd.f32 0.0, %v9285
      %9287 = vmatmul.f32.gmra.mxu0 %v9173
      %v9288 = vpop.f32.mrf.mxu0
      %v9289 = vadd.f32 0.0, %v9288
      %9290 = vmatmul.f32.gmra.mxu0 %v9176
      %v9291 = vpop.f32.mrf.mxu0
      %v9292 = vadd.f32 0.0, %v9291
      %9293 = vmatmul.f32.gmra.mxu0 %v9179
      %v9294 = vpop.f32.mrf.mxu0
      %v9295 = vadd.f32 0.0, %v9294
      %9296 = vmatmul.f32.gmra.mxu0 %v9182
      %v9297 = vpop.f32.mrf.mxu0
      %v9298 = vadd.f32 0.0, %v9297
      %9299 = vmatmul.f32.gmra.mxu0 %v9185
      %v9300 = vpop.f32.mrf.mxu0
      %v9301 = vadd.f32 0.0, %v9300
      %9302 = vmatmul.f32.gmra.mxu0 %v9188
      %v9303 = vpop.f32.mrf.mxu0
      %v9304 = vadd.f32 0.0, %v9303
      %9305 = vmatmul.f32.gmra.mxu0 %v9191
      %v9306 = vpop.f32.mrf.mxu0
      %v9307 = vadd.f32 0.0, %v9306
      %9308 = vmatmul.f32.gmra.mxu0 %v9194
      %v9309 = vpop.f32.mrf.mxu0
      %v9310 = vadd.f32 0.0, %v9309
      %9311 = vmatmul.f32.gmra.mxu0 %v9197
      %v9312 = vpop.f32.mrf.mxu0
      %v9313 = vadd.f32 0.0, %v9312
      %9314 = vmatmul.f32.gmra.mxu0 %v9200
      %v9315 = vpop.f32.mrf.mxu0
      %v9316 = vadd.f32 0.0, %v9315
      %9317 = vmatmul.f32.gmra.mxu0 %v9203
      %v9318 = vpop.f32.mrf.mxu0
      %v9319 = vadd.f32 0.0, %v9318
      %9320 = vmatmul.f32.gmra.mxu0 %v9206
      %v9321 = vpop.f32.mrf.mxu0
      %v9322 = vadd.f32 0.0, %v9321
      %9323 = vmatmul.f32.gmra.mxu0 %v9209
      %v9324 = vpop.f32.mrf.mxu0
      %v9325 = vadd.f32 0.0, %v9324
      %9326 = vmatmul.f32.gmra.mxu0 %v9212
      %v9327 = vpop.f32.mrf.mxu0
      %v9328 = vadd.f32 0.0, %v9327
      %9329 = vmatmul.f32.gmra.mxu0 %v9215
      %v9330 = vpop.f32.mrf.mxu0
      %v9331 = vadd.f32 0.0, %v9330
      %9332 = vmatmul.f32.gmra.mxu0 %v9218
      %v9333 = vpop.f32.mrf.mxu0
      %v9334 = vadd.f32 0.0, %v9333
      %9335 = vmatmul.f32.gmra.mxu0 %v9221
      %v9336 = vpop.f32.mrf.mxu0
      %v9337 = vadd.f32 0.0, %v9336
      %9338 = vmatmul.f32.gmra.mxu0 %v9224
      %v9339 = vpop.f32.mrf.mxu0
      %v9340 = vadd.f32 0.0, %v9339
      %9341 = vmatmul.f32.gmra.mxu0 %v9227
      %v9342 = vpop.f32.mrf.mxu0
      %v9343 = vadd.f32 0.0, %v9342
      %9344 = vdwg.mxu0
      %v9345 = vadd.f32 %v9067, %v9250
      %v9346 = vadd.f32 %v9068, %v9253
      %v9347 = vadd.f32 %v9069, %v9256
      %v9348 = vadd.f32 %v9070, %v9259
      %v9349 = vadd.f32 %v9071, %v9262
      %v9350 = vadd.f32 %v9072, %v9265
      %v9351 = vadd.f32 %v9073, %v9268
      %v9352 = vadd.f32 %v9074, %v9271
      %v9353 = vadd.f32 %v9075, %v9274
      %v9354 = vadd.f32 %v9076, %v9277
      %v9355 = vadd.f32 %v9077, %v9280
      %v9356 = vadd.f32 %v9078, %v9283
      %v9357 = vadd.f32 %v9079, %v9286
      %v9358 = vadd.f32 %v9080, %v9289
      %v9359 = vadd.f32 %v9081, %v9292
      %v9360 = vadd.f32 %v9082, %v9295
      %v9361 = vadd.f32 %v9083, %v9298
      %v9362 = vadd.f32 %v9084, %v9301
      %v9363 = vadd.f32 %v9085, %v9304
      %v9364 = vadd.f32 %v9086, %v9307
      %v9365 = vadd.f32 %v9087, %v9310
      %v9366 = vadd.f32 %v9088, %v9313
      %v9367 = vadd.f32 %v9089, %v9316
      %v9368 = vadd.f32 %v9090, %v9319
      %v9369 = vadd.f32 %v9091, %v9322
      %v9370 = vadd.f32 %v9092, %v9325
      %v9371 = vadd.f32 %v9093, %v9328
      %v9372 = vadd.f32 %v9094, %v9331
      %v9373 = vadd.f32 %v9095, %v9334
      %v9374 = vadd.f32 %v9096, %v9337
      %v9375 = vadd.f32 %v9097, %v9340
      %v9376 = vadd.f32 %v9098, %v9343
      %v9377 = vld [vmem:[%s8019 + $0x2] sm:$0xff]
      %v9378 = vld [vmem:[%s8019 + $0xa] sm:$0xff]
      %v9379 = vld [vmem:[%s8019 + $0x1a] sm:$0xff]
      %v9380 = vld [vmem:[%s8019 + $0x22] sm:$0xff]
      %v9381 = vld [vmem:[%s8019 + $0x32] sm:$0xff]
      %v9382 = vld [vmem:[%s8019 + $0x3a] sm:$0xff]
      %v9383 = vld [vmem:[%s8019 + $0x4a] sm:$0xff]
      %v9384 = vld [vmem:[%s8019 + $0x52] sm:$0xff]
      %v9385 = vld [vmem:[%s8019 + $0x62] sm:$0xff]
      %v9386 = vld [vmem:[%s8019 + $0x6a] sm:$0xff]
      %v9387 = vld [vmem:[%s8019 + $0x7a] sm:$0xff]
      %v9388 = vld [vmem:[%s8019 + $0x82] sm:$0xff]
      %v9389 = vld [vmem:[%s8019 + $0x92] sm:$0xff]
      %v9390 = vld [vmem:[%s8019 + $0x9a] sm:$0xff]
      %v9391 = vld [vmem:[%s8019 + $0xaa] sm:$0xff]
      %v9392 = vld [vmem:[%s8019 + $0xb2] sm:$0xff]
      %v9393 = vld [vmem:[%s8019 + $0xc2] sm:$0xff]
      %v9394 = vld [vmem:[%s8019 + $0xca] sm:$0xff]
      %v9395 = vld [vmem:[%s8019 + $0xda] sm:$0xff]
      %v9396 = vld [vmem:[%s8019 + $0xe2] sm:$0xff]
      %v9397 = vld [vmem:[%s8019 + $0xf2] sm:$0xff]
      %v9398 = vld [vmem:[%s8019 + $0xfa] sm:$0xff]
      %v9399 = vld [vmem:[%s8019 + $0x10a] sm:$0xff]
      %v9400 = vld [vmem:[%s8019 + $0x112] sm:$0xff]
      %v9401 = vld [vmem:[%s8019 + $0x122] sm:$0xff]
      %v9402 = vld [vmem:[%s8019 + $0x12a] sm:$0xff]
      %v9403 = vld [vmem:[%s8019 + $0x13a] sm:$0xff]
      %v9404 = vld [vmem:[%s8019 + $0x142] sm:$0xff]
      %v9405 = vld [vmem:[%s8019 + $0x152] sm:$0xff]
      %v9406 = vld [vmem:[%s8019 + $0x15a] sm:$0xff]
      %v9407 = vld [vmem:[%s8019 + $0x16a] sm:$0xff]
      %v9408 = vld [vmem:[%s8019 + $0x172] sm:$0xff]
      %s9409 = scalar_lea.vmem %s7, 20
      %v9410 = vld [vmem:[%s9409] sm:$0xf]
      %v9412 = vsel %vm2802, %v9377, 0
      %v9415 = vsel %vm2802, %v9378, 0
      %v9418 = vsel %vm2802, %v9379, 0
      %v9421 = vsel %vm2802, %v9380, 0
      %v9424 = vsel %vm2802, %v9381, 0
      %v9427 = vsel %vm2802, %v9382, 0
      %v9430 = vsel %vm2802, %v9383, 0
      %v9433 = vsel %vm2802, %v9384, 0
      %v9436 = vsel %vm2802, %v9385, 0
      %v9439 = vsel %vm2802, %v9386, 0
      %v9442 = vsel %vm2802, %v9387, 0
      %v9445 = vsel %vm2802, %v9388, 0
      %v9448 = vsel %vm2802, %v9389, 0
      %v9451 = vsel %vm2802, %v9390, 0
      %v9454 = vsel %vm2802, %v9391, 0
      %v9457 = vsel %vm2802, %v9392, 0
      %v9460 = vsel %vm2802, %v9393, 0
      %v9463 = vsel %vm2802, %v9394, 0
      %v9466 = vsel %vm2802, %v9395, 0
      %v9469 = vsel %vm2802, %v9396, 0
      %v9472 = vsel %vm2802, %v9397, 0
      %v9475 = vsel %vm2802, %v9398, 0
      %v9478 = vsel %vm2802, %v9399, 0
      %v9481 = vsel %vm2802, %v9400, 0
      %v9484 = vsel %vm2802, %v9401, 0
      %v9487 = vsel %vm2802, %v9402, 0
      %v9490 = vsel %vm2802, %v9403, 0
      %v9493 = vsel %vm2802, %v9404, 0
      %v9496 = vsel %vm2802, %v9405, 0
      %v9499 = vsel %vm2802, %v9406, 0
      %v9502 = vsel %vm2802, %v9407, 0
      %v9505 = vsel %vm2802, %v9408, 0
      %v9508 = vsel %vm3054, %v9410, 0
      %9510 = vmatpush.msra.mxu0 0.0
      %9511 = vmatpush.msra.mxu0 0.0
      %9512 = vmatpush.msra.mxu0 0.0
      %9513 = vmatpush.msra.mxu0 0.0
      %9514 = vmatpush.msra.mxu0 0.0
      %9515 = vmatpush.msra.mxu0 0.0
      %9516 = vmatpush.msra.mxu0 0.0
      %9517 = vmatpush.msra.mxu0 0.0
      %9518 = vmatpush.msra.mxu0 0.0
      %9519 = vmatpush.msra.mxu0 0.0
      %9520 = vmatpush.msra.mxu0 0.0
      %9521 = vmatpush.msra.mxu0 0.0
      %9522 = vmatpush.msra.mxu0 0.0
      %9523 = vmatpush.msra.mxu0 0.0
      %9524 = vmatpush.msra.mxu0 0.0
      %9525 = vmatpush.msra.mxu0 %v9508
      %9526 = vmatmul.f32.gmra.mxu0 %v9412
      %v9527 = vpop.f32.mrf.mxu0
      %v9528 = vadd.f32 0.0, %v9527
      %9529 = vmatmul.f32.gmra.mxu0 %v9415
      %v9530 = vpop.f32.mrf.mxu0
      %v9531 = vadd.f32 0.0, %v9530
      %9532 = vmatmul.f32.gmra.mxu0 %v9418
      %v9533 = vpop.f32.mrf.mxu0
      %v9534 = vadd.f32 0.0, %v9533
      %9535 = vmatmul.f32.gmra.mxu0 %v9421
      %v9536 = vpop.f32.mrf.mxu0
      %v9537 = vadd.f32 0.0, %v9536
      %9538 = vmatmul.f32.gmra.mxu0 %v9424
      %v9539 = vpop.f32.mrf.mxu0
      %v9540 = vadd.f32 0.0, %v9539
      %9541 = vmatmul.f32.gmra.mxu0 %v9427
      %v9542 = vpop.f32.mrf.mxu0
      %v9543 = vadd.f32 0.0, %v9542
      %9544 = vmatmul.f32.gmra.mxu0 %v9430
      %v9545 = vpop.f32.mrf.mxu0
      %v9546 = vadd.f32 0.0, %v9545
      %9547 = vmatmul.f32.gmra.mxu0 %v9433
      %v9548 = vpop.f32.mrf.mxu0
      %v9549 = vadd.f32 0.0, %v9548
      %9550 = vmatmul.f32.gmra.mxu0 %v9436
      %v9551 = vpop.f32.mrf.mxu0
      %v9552 = vadd.f32 0.0, %v9551
      %9553 = vmatmul.f32.gmra.mxu0 %v9439
      %v9554 = vpop.f32.mrf.mxu0
      %v9555 = vadd.f32 0.0, %v9554
      %9556 = vmatmul.f32.gmra.mxu0 %v9442
      %v9557 = vpop.f32.mrf.mxu0
      %v9558 = vadd.f32 0.0, %v9557
      %9559 = vmatmul.f32.gmra.mxu0 %v9445
      %v9560 = vpop.f32.mrf.mxu0
      %v9561 = vadd.f32 0.0, %v9560
      %9562 = vmatmul.f32.gmra.mxu0 %v9448
      %v9563 = vpop.f32.mrf.mxu0
      %v9564 = vadd.f32 0.0, %v9563
      %9565 = vmatmul.f32.gmra.mxu0 %v9451
      %v9566 = vpop.f32.mrf.mxu0
      %v9567 = vadd.f32 0.0, %v9566
      %9568 = vmatmul.f32.gmra.mxu0 %v9454
      %v9569 = vpop.f32.mrf.mxu0
      %v9570 = vadd.f32 0.0, %v9569
      %9571 = vmatmul.f32.gmra.mxu0 %v9457
      %v9572 = vpop.f32.mrf.mxu0
      %v9573 = vadd.f32 0.0, %v9572
      %9574 = vmatmul.f32.gmra.mxu0 %v9460
      %v9575 = vpop.f32.mrf.mxu0
      %v9576 = vadd.f32 0.0, %v9575
      %9577 = vmatmul.f32.gmra.mxu0 %v9463
      %v9578 = vpop.f32.mrf.mxu0
      %v9579 = vadd.f32 0.0, %v9578
      %9580 = vmatmul.f32.gmra.mxu0 %v9466
      %v9581 = vpop.f32.mrf.mxu0
      %v9582 = vadd.f32 0.0, %v9581
      %9583 = vmatmul.f32.gmra.mxu0 %v9469
      %v9584 = vpop.f32.mrf.mxu0
      %v9585 = vadd.f32 0.0, %v9584
      %9586 = vmatmul.f32.gmra.mxu0 %v9472
      %v9587 = vpop.f32.mrf.mxu0
      %v9588 = vadd.f32 0.0, %v9587
      %9589 = vmatmul.f32.gmra.mxu0 %v9475
      %v9590 = vpop.f32.mrf.mxu0
      %v9591 = vadd.f32 0.0, %v9590
      %9592 = vmatmul.f32.gmra.mxu0 %v9478
      %v9593 = vpop.f32.mrf.mxu0
      %v9594 = vadd.f32 0.0, %v9593
      %9595 = vmatmul.f32.gmra.mxu0 %v9481
      %v9596 = vpop.f32.mrf.mxu0
      %v9597 = vadd.f32 0.0, %v9596
      %9598 = vmatmul.f32.gmra.mxu0 %v9484
      %v9599 = vpop.f32.mrf.mxu0
      %v9600 = vadd.f32 0.0, %v9599
      %9601 = vmatmul.f32.gmra.mxu0 %v9487
      %v9602 = vpop.f32.mrf.mxu0
      %v9603 = vadd.f32 0.0, %v9602
      %9604 = vmatmul.f32.gmra.mxu0 %v9490
      %v9605 = vpop.f32.mrf.mxu0
      %v9606 = vadd.f32 0.0, %v9605
      %9607 = vmatmul.f32.gmra.mxu0 %v9493
      %v9608 = vpop.f32.mrf.mxu0
      %v9609 = vadd.f32 0.0, %v9608
      %9610 = vmatmul.f32.gmra.mxu0 %v9496
      %v9611 = vpop.f32.mrf.mxu0
      %v9612 = vadd.f32 0.0, %v9611
      %9613 = vmatmul.f32.gmra.mxu0 %v9499
      %v9614 = vpop.f32.mrf.mxu0
      %v9615 = vadd.f32 0.0, %v9614
      %9616 = vmatmul.f32.gmra.mxu0 %v9502
      %v9617 = vpop.f32.mrf.mxu0
      %v9618 = vadd.f32 0.0, %v9617
      %9619 = vmatmul.f32.gmra.mxu0 %v9505
      %v9620 = vpop.f32.mrf.mxu0
      %v9621 = vadd.f32 0.0, %v9620
      %9622 = vdwg.mxu0
      %v9623 = vadd.f32 %v9345, %v9528
      %v9624 = vadd.f32 %v9346, %v9531
      %v9625 = vadd.f32 %v9347, %v9534
      %v9626 = vadd.f32 %v9348, %v9537
      %v9627 = vadd.f32 %v9349, %v9540
      %v9628 = vadd.f32 %v9350, %v9543
      %v9629 = vadd.f32 %v9351, %v9546
      %v9630 = vadd.f32 %v9352, %v9549
      %v9631 = vadd.f32 %v9353, %v9552
      %v9632 = vadd.f32 %v9354, %v9555
      %v9633 = vadd.f32 %v9355, %v9558
      %v9634 = vadd.f32 %v9356, %v9561
      %v9635 = vadd.f32 %v9357, %v9564
      %v9636 = vadd.f32 %v9358, %v9567
      %v9637 = vadd.f32 %v9359, %v9570
      %v9638 = vadd.f32 %v9360, %v9573
      %v9639 = vadd.f32 %v9361, %v9576
      %v9640 = vadd.f32 %v9362, %v9579
      %v9641 = vadd.f32 %v9363, %v9582
      %v9642 = vadd.f32 %v9364, %v9585
      %v9643 = vadd.f32 %v9365, %v9588
      %v9644 = vadd.f32 %v9366, %v9591
      %v9645 = vadd.f32 %v9367, %v9594
      %v9646 = vadd.f32 %v9368, %v9597
      %v9647 = vadd.f32 %v9369, %v9600
      %v9648 = vadd.f32 %v9370, %v9603
      %v9649 = vadd.f32 %v9371, %v9606
      %v9650 = vadd.f32 %v9372, %v9609
      %v9651 = vadd.f32 %v9373, %v9612
      %v9652 = vadd.f32 %v9374, %v9615
      %v9653 = vadd.f32 %v9375, %v9618
      %v9654 = vadd.f32 %v9376, %v9621
      %s9655 = scalar_lea.vmem [#allocation3], 48
      %v9656 = vld [vmem:[%s9655] sm:$0xff]
      %v9657 = vld [vmem:[%s9655 + $0x8] sm:$0xff]
      %v9658 = vld [vmem:[%s9655 + $0x18] sm:$0xff]
      %v9659 = vld [vmem:[%s9655 + $0x20] sm:$0xff]
      %v9660 = vld [vmem:[%s9655 + $0x30] sm:$0xff]
      %v9661 = vld [vmem:[%s9655 + $0x38] sm:$0xff]
      %v9662 = vld [vmem:[%s9655 + $0x48] sm:$0xff]
      %v9663 = vld [vmem:[%s9655 + $0x50] sm:$0xff]
      %v9664 = vld [vmem:[%s9655 + $0x60] sm:$0xff]
      %v9665 = vld [vmem:[%s9655 + $0x68] sm:$0xff]
      %v9666 = vld [vmem:[%s9655 + $0x78] sm:$0xff]
      %v9667 = vld [vmem:[%s9655 + $0x80] sm:$0xff]
      %v9668 = vld [vmem:[%s9655 + $0x90] sm:$0xff]
      %v9669 = vld [vmem:[%s9655 + $0x98] sm:$0xff]
      %v9670 = vld [vmem:[%s9655 + $0xa8] sm:$0xff]
      %v9671 = vld [vmem:[%s9655 + $0xb0] sm:$0xff]
      %v9672 = vld [vmem:[%s9655 + $0xc0] sm:$0xff]
      %v9673 = vld [vmem:[%s9655 + $0xc8] sm:$0xff]
      %v9674 = vld [vmem:[%s9655 + $0xd8] sm:$0xff]
      %v9675 = vld [vmem:[%s9655 + $0xe0] sm:$0xff]
      %v9676 = vld [vmem:[%s9655 + $0xf0] sm:$0xff]
      %v9677 = vld [vmem:[%s9655 + $0xf8] sm:$0xff]
      %v9678 = vld [vmem:[%s9655 + $0x108] sm:$0xff]
      %v9679 = vld [vmem:[%s9655 + $0x110] sm:$0xff]
      %v9680 = vld [vmem:[%s9655 + $0x120] sm:$0xff]
      %v9681 = vld [vmem:[%s9655 + $0x128] sm:$0xff]
      %v9682 = vld [vmem:[%s9655 + $0x138] sm:$0xff]
      %v9683 = vld [vmem:[%s9655 + $0x140] sm:$0xff]
      %v9684 = vld [vmem:[%s9655 + $0x150] sm:$0xff]
      %v9685 = vld [vmem:[%s9655 + $0x158] sm:$0xff]
      %v9686 = vld [vmem:[%s9655 + $0x168] sm:$0xff]
      %v9687 = vld [vmem:[%s9655 + $0x170] sm:$0xff]
      %s9688 = scalar_lea.vmem %s7, 24
      %v9689 = vld [vmem:[%s9688] sm:$0xf]
      %v9691 = vsel %vm2802, %v9656, 0
      %v9694 = vsel %vm2802, %v9657, 0
      %v9697 = vsel %vm2802, %v9658, 0
      %v9700 = vsel %vm2802, %v9659, 0
      %v9703 = vsel %vm2802, %v9660, 0
      %v9706 = vsel %vm2802, %v9661, 0
      %v9709 = vsel %vm2802, %v9662, 0
      %v9712 = vsel %vm2802, %v9663, 0
      %v9715 = vsel %vm2802, %v9664, 0
      %v9718 = vsel %vm2802, %v9665, 0
      %v9721 = vsel %vm2802, %v9666, 0
      %v9724 = vsel %vm2802, %v9667, 0
      %v9727 = vsel %vm2802, %v9668, 0
      %v9730 = vsel %vm2802, %v9669, 0
      %v9733 = vsel %vm2802, %v9670, 0
      %v9736 = vsel %vm2802, %v9671, 0
      %v9739 = vsel %vm2802, %v9672, 0
      %v9742 = vsel %vm2802, %v9673, 0
      %v9745 = vsel %vm2802, %v9674, 0
      %v9748 = vsel %vm2802, %v9675, 0
      %v9751 = vsel %vm2802, %v9676, 0
      %v9754 = vsel %vm2802, %v9677, 0
      %v9757 = vsel %vm2802, %v9678, 0
      %v9760 = vsel %vm2802, %v9679, 0
      %v9763 = vsel %vm2802, %v9680, 0
      %v9766 = vsel %vm2802, %v9681, 0
      %v9769 = vsel %vm2802, %v9682, 0
      %v9772 = vsel %vm2802, %v9683, 0
      %v9775 = vsel %vm2802, %v9684, 0
      %v9778 = vsel %vm2802, %v9685, 0
      %v9781 = vsel %vm2802, %v9686, 0
      %v9784 = vsel %vm2802, %v9687, 0
      %v9787 = vsel %vm3054, %v9689, 0
      %9789 = vmatpush.msra.mxu0 0.0
      %9790 = vmatpush.msra.mxu0 0.0
      %9791 = vmatpush.msra.mxu0 0.0
      %9792 = vmatpush.msra.mxu0 0.0
      %9793 = vmatpush.msra.mxu0 0.0
      %9794 = vmatpush.msra.mxu0 0.0
      %9795 = vmatpush.msra.mxu0 0.0
      %9796 = vmatpush.msra.mxu0 0.0
      %9797 = vmatpush.msra.mxu0 0.0
      %9798 = vmatpush.msra.mxu0 0.0
      %9799 = vmatpush.msra.mxu0 0.0
      %9800 = vmatpush.msra.mxu0 0.0
      %9801 = vmatpush.msra.mxu0 0.0
      %9802 = vmatpush.msra.mxu0 0.0
      %9803 = vmatpush.msra.mxu0 0.0
      %9804 = vmatpush.msra.mxu0 %v9787
      %9805 = vmatmul.f32.gmra.mxu0 %v9691
      %v9806 = vpop.f32.mrf.mxu0
      %v9807 = vadd.f32 0.0, %v9806
      %9808 = vmatmul.f32.gmra.mxu0 %v9694
      %v9809 = vpop.f32.mrf.mxu0
      %v9810 = vadd.f32 0.0, %v9809
      %9811 = vmatmul.f32.gmra.mxu0 %v9697
      %v9812 = vpop.f32.mrf.mxu0
      %v9813 = vadd.f32 0.0, %v9812
      %9814 = vmatmul.f32.gmra.mxu0 %v9700
      %v9815 = vpop.f32.mrf.mxu0
      %v9816 = vadd.f32 0.0, %v9815
      %9817 = vmatmul.f32.gmra.mxu0 %v9703
      %v9818 = vpop.f32.mrf.mxu0
      %v9819 = vadd.f32 0.0, %v9818
      %9820 = vmatmul.f32.gmra.mxu0 %v9706
      %v9821 = vpop.f32.mrf.mxu0
      %v9822 = vadd.f32 0.0, %v9821
      %9823 = vmatmul.f32.gmra.mxu0 %v9709
      %v9824 = vpop.f32.mrf.mxu0
      %v9825 = vadd.f32 0.0, %v9824
      %9826 = vmatmul.f32.gmra.mxu0 %v9712
      %v9827 = vpop.f32.mrf.mxu0
      %v9828 = vadd.f32 0.0, %v9827
      %9829 = vmatmul.f32.gmra.mxu0 %v9715
      %v9830 = vpop.f32.mrf.mxu0
      %v9831 = vadd.f32 0.0, %v9830
      %9832 = vmatmul.f32.gmra.mxu0 %v9718
      %v9833 = vpop.f32.mrf.mxu0
      %v9834 = vadd.f32 0.0, %v9833
      %9835 = vmatmul.f32.gmra.mxu0 %v9721
      %v9836 = vpop.f32.mrf.mxu0
      %v9837 = vadd.f32 0.0, %v9836
      %9838 = vmatmul.f32.gmra.mxu0 %v9724
      %v9839 = vpop.f32.mrf.mxu0
      %v9840 = vadd.f32 0.0, %v9839
      %9841 = vmatmul.f32.gmra.mxu0 %v9727
      %v9842 = vpop.f32.mrf.mxu0
      %v9843 = vadd.f32 0.0, %v9842
      %9844 = vmatmul.f32.gmra.mxu0 %v9730
      %v9845 = vpop.f32.mrf.mxu0
      %v9846 = vadd.f32 0.0, %v9845
      %9847 = vmatmul.f32.gmra.mxu0 %v9733
      %v9848 = vpop.f32.mrf.mxu0
      %v9849 = vadd.f32 0.0, %v9848
      %9850 = vmatmul.f32.gmra.mxu0 %v9736
      %v9851 = vpop.f32.mrf.mxu0
      %v9852 = vadd.f32 0.0, %v9851
      %9853 = vmatmul.f32.gmra.mxu0 %v9739
      %v9854 = vpop.f32.mrf.mxu0
      %v9855 = vadd.f32 0.0, %v9854
      %9856 = vmatmul.f32.gmra.mxu0 %v9742
      %v9857 = vpop.f32.mrf.mxu0
      %v9858 = vadd.f32 0.0, %v9857
      %9859 = vmatmul.f32.gmra.mxu0 %v9745
      %v9860 = vpop.f32.mrf.mxu0
      %v9861 = vadd.f32 0.0, %v9860
      %9862 = vmatmul.f32.gmra.mxu0 %v9748
      %v9863 = vpop.f32.mrf.mxu0
      %v9864 = vadd.f32 0.0, %v9863
      %9865 = vmatmul.f32.gmra.mxu0 %v9751
      %v9866 = vpop.f32.mrf.mxu0
      %v9867 = vadd.f32 0.0, %v9866
      %9868 = vmatmul.f32.gmra.mxu0 %v9754
      %v9869 = vpop.f32.mrf.mxu0
      %v9870 = vadd.f32 0.0, %v9869
      %9871 = vmatmul.f32.gmra.mxu0 %v9757
      %v9872 = vpop.f32.mrf.mxu0
      %v9873 = vadd.f32 0.0, %v9872
      %9874 = vmatmul.f32.gmra.mxu0 %v9760
      %v9875 = vpop.f32.mrf.mxu0
      %v9876 = vadd.f32 0.0, %v9875
      %9877 = vmatmul.f32.gmra.mxu0 %v9763
      %v9878 = vpop.f32.mrf.mxu0
      %v9879 = vadd.f32 0.0, %v9878
      %9880 = vmatmul.f32.gmra.mxu0 %v9766
      %v9881 = vpop.f32.mrf.mxu0
      %v9882 = vadd.f32 0.0, %v9881
      %9883 = vmatmul.f32.gmra.mxu0 %v9769
      %v9884 = vpop.f32.mrf.mxu0
      %v9885 = vadd.f32 0.0, %v9884
      %9886 = vmatmul.f32.gmra.mxu0 %v9772
      %v9887 = vpop.f32.mrf.mxu0
      %v9888 = vadd.f32 0.0, %v9887
      %9889 = vmatmul.f32.gmra.mxu0 %v9775
      %v9890 = vpop.f32.mrf.mxu0
      %v9891 = vadd.f32 0.0, %v9890
      %9892 = vmatmul.f32.gmra.mxu0 %v9778
      %v9893 = vpop.f32.mrf.mxu0
      %v9894 = vadd.f32 0.0, %v9893
      %9895 = vmatmul.f32.gmra.mxu0 %v9781
      %v9896 = vpop.f32.mrf.mxu0
      %v9897 = vadd.f32 0.0, %v9896
      %9898 = vmatmul.f32.gmra.mxu0 %v9784
      %v9899 = vpop.f32.mrf.mxu0
      %v9900 = vadd.f32 0.0, %v9899
      %9901 = vdwg.mxu0
      %v9902 = vadd.f32 %v9623, %v9807
      %v9903 = vadd.f32 %v9624, %v9810
      %v9904 = vadd.f32 %v9625, %v9813
      %v9905 = vadd.f32 %v9626, %v9816
      %v9906 = vadd.f32 %v9627, %v9819
      %v9907 = vadd.f32 %v9628, %v9822
      %v9908 = vadd.f32 %v9629, %v9825
      %v9909 = vadd.f32 %v9630, %v9828
      %v9910 = vadd.f32 %v9631, %v9831
      %v9911 = vadd.f32 %v9632, %v9834
      %v9912 = vadd.f32 %v9633, %v9837
      %v9913 = vadd.f32 %v9634, %v9840
      %v9914 = vadd.f32 %v9635, %v9843
      %v9915 = vadd.f32 %v9636, %v9846
      %v9916 = vadd.f32 %v9637, %v9849
      %v9917 = vadd.f32 %v9638, %v9852
      %v9918 = vadd.f32 %v9639, %v9855
      %v9919 = vadd.f32 %v9640, %v9858
      %v9920 = vadd.f32 %v9641, %v9861
      %v9921 = vadd.f32 %v9642, %v9864
      %v9922 = vadd.f32 %v9643, %v9867
      %v9923 = vadd.f32 %v9644, %v9870
      %v9924 = vadd.f32 %v9645, %v9873
      %v9925 = vadd.f32 %v9646, %v9876
      %v9926 = vadd.f32 %v9647, %v9879
      %v9927 = vadd.f32 %v9648, %v9882
      %v9928 = vadd.f32 %v9649, %v9885
      %v9929 = vadd.f32 %v9650, %v9888
      %v9930 = vadd.f32 %v9651, %v9891
      %v9931 = vadd.f32 %v9652, %v9894
      %v9932 = vadd.f32 %v9653, %v9897
      %v9933 = vadd.f32 %v9654, %v9900
      %v9934 = vld [vmem:[%s9655 + $0x1] sm:$0xff]
      %v9935 = vld [vmem:[%s9655 + $0x9] sm:$0xff]
      %v9936 = vld [vmem:[%s9655 + $0x19] sm:$0xff]
      %v9937 = vld [vmem:[%s9655 + $0x21] sm:$0xff]
      %v9938 = vld [vmem:[%s9655 + $0x31] sm:$0xff]
      %v9939 = vld [vmem:[%s9655 + $0x39] sm:$0xff]
      %v9940 = vld [vmem:[%s9655 + $0x49] sm:$0xff]
      %v9941 = vld [vmem:[%s9655 + $0x51] sm:$0xff]
      %v9942 = vld [vmem:[%s9655 + $0x61] sm:$0xff]
      %v9943 = vld [vmem:[%s9655 + $0x69] sm:$0xff]
      %v9944 = vld [vmem:[%s9655 + $0x79] sm:$0xff]
      %v9945 = vld [vmem:[%s9655 + $0x81] sm:$0xff]
      %v9946 = vld [vmem:[%s9655 + $0x91] sm:$0xff]
      %v9947 = vld [vmem:[%s9655 + $0x99] sm:$0xff]
      %v9948 = vld [vmem:[%s9655 + $0xa9] sm:$0xff]
      %v9949 = vld [vmem:[%s9655 + $0xb1] sm:$0xff]
      %v9950 = vld [vmem:[%s9655 + $0xc1] sm:$0xff]
      %v9951 = vld [vmem:[%s9655 + $0xc9] sm:$0xff]
      %v9952 = vld [vmem:[%s9655 + $0xd9] sm:$0xff]
      %v9953 = vld [vmem:[%s9655 + $0xe1] sm:$0xff]
      %v9954 = vld [vmem:[%s9655 + $0xf1] sm:$0xff]
      %v9955 = vld [vmem:[%s9655 + $0xf9] sm:$0xff]
      %v9956 = vld [vmem:[%s9655 + $0x109] sm:$0xff]
      %v9957 = vld [vmem:[%s9655 + $0x111] sm:$0xff]
      %v9958 = vld [vmem:[%s9655 + $0x121] sm:$0xff]
      %v9959 = vld [vmem:[%s9655 + $0x129] sm:$0xff]
      %v9960 = vld [vmem:[%s9655 + $0x139] sm:$0xff]
      %v9961 = vld [vmem:[%s9655 + $0x141] sm:$0xff]
      %v9962 = vld [vmem:[%s9655 + $0x151] sm:$0xff]
      %v9963 = vld [vmem:[%s9655 + $0x159] sm:$0xff]
      %v9964 = vld [vmem:[%s9655 + $0x169] sm:$0xff]
      %v9965 = vld [vmem:[%s9655 + $0x171] sm:$0xff]
      %s9966 = scalar_lea.vmem %s7, 28
      %v9967 = vld [vmem:[%s9966] sm:$0xf]
      %v9969 = vsel %vm2802, %v9934, 0
      %v9972 = vsel %vm2802, %v9935, 0
      %v9975 = vsel %vm2802, %v9936, 0
      %v9978 = vsel %vm2802, %v9937, 0
      %v9981 = vsel %vm2802, %v9938, 0
      %v9984 = vsel %vm2802, %v9939, 0
      %v9987 = vsel %vm2802, %v9940, 0
      %v9990 = vsel %vm2802, %v9941, 0
      %v9993 = vsel %vm2802, %v9942, 0
      %v9996 = vsel %vm2802, %v9943, 0
      %v9999 = vsel %vm2802, %v9944, 0
      %v10002 = vsel %vm2802, %v9945, 0
      %v10005 = vsel %vm2802, %v9946, 0
      %v10008 = vsel %vm2802, %v9947, 0
      %v10011 = vsel %vm2802, %v9948, 0
      %v10014 = vsel %vm2802, %v9949, 0
      %v10017 = vsel %vm2802, %v9950, 0
      %v10020 = vsel %vm2802, %v9951, 0
      %v10023 = vsel %vm2802, %v9952, 0
      %v10026 = vsel %vm2802, %v9953, 0
      %v10029 = vsel %vm2802, %v9954, 0
      %v10032 = vsel %vm2802, %v9955, 0
      %v10035 = vsel %vm2802, %v9956, 0
      %v10038 = vsel %vm2802, %v9957, 0
      %v10041 = vsel %vm2802, %v9958, 0
      %v10044 = vsel %vm2802, %v9959, 0
      %v10047 = vsel %vm2802, %v9960, 0
      %v10050 = vsel %vm2802, %v9961, 0
      %v10053 = vsel %vm2802, %v9962, 0
      %v10056 = vsel %vm2802, %v9963, 0
      %v10059 = vsel %vm2802, %v9964, 0
      %v10062 = vsel %vm2802, %v9965, 0
      %v10065 = vsel %vm3054, %v9967, 0
      %10067 = vmatpush.msra.mxu0 0.0
      %10068 = vmatpush.msra.mxu0 0.0
      %10069 = vmatpush.msra.mxu0 0.0
      %10070 = vmatpush.msra.mxu0 0.0
      %10071 = vmatpush.msra.mxu0 0.0
      %10072 = vmatpush.msra.mxu0 0.0
      %10073 = vmatpush.msra.mxu0 0.0
      %10074 = vmatpush.msra.mxu0 0.0
      %10075 = vmatpush.msra.mxu0 0.0
      %10076 = vmatpush.msra.mxu0 0.0
      %10077 = vmatpush.msra.mxu0 0.0
      %10078 = vmatpush.msra.mxu0 0.0
      %10079 = vmatpush.msra.mxu0 0.0
      %10080 = vmatpush.msra.mxu0 0.0
      %10081 = vmatpush.msra.mxu0 0.0
      %10082 = vmatpush.msra.mxu0 %v10065
      %10083 = vmatmul.f32.gmra.mxu0 %v9969
      %v10084 = vpop.f32.mrf.mxu0
      %v10085 = vadd.f32 0.0, %v10084
      %10086 = vmatmul.f32.gmra.mxu0 %v9972
      %v10087 = vpop.f32.mrf.mxu0
      %v10088 = vadd.f32 0.0, %v10087
      %10089 = vmatmul.f32.gmra.mxu0 %v9975
      %v10090 = vpop.f32.mrf.mxu0
      %v10091 = vadd.f32 0.0, %v10090
      %10092 = vmatmul.f32.gmra.mxu0 %v9978
      %v10093 = vpop.f32.mrf.mxu0
      %v10094 = vadd.f32 0.0, %v10093
      %10095 = vmatmul.f32.gmra.mxu0 %v9981
      %v10096 = vpop.f32.mrf.mxu0
      %v10097 = vadd.f32 0.0, %v10096
      %10098 = vmatmul.f32.gmra.mxu0 %v9984
      %v10099 = vpop.f32.mrf.mxu0
      %v10100 = vadd.f32 0.0, %v10099
      %10101 = vmatmul.f32.gmra.mxu0 %v9987
      %v10102 = vpop.f32.mrf.mxu0
      %v10103 = vadd.f32 0.0, %v10102
      %10104 = vmatmul.f32.gmra.mxu0 %v9990
      %v10105 = vpop.f32.mrf.mxu0
      %v10106 = vadd.f32 0.0, %v10105
      %10107 = vmatmul.f32.gmra.mxu0 %v9993
      %v10108 = vpop.f32.mrf.mxu0
      %v10109 = vadd.f32 0.0, %v10108
      %10110 = vmatmul.f32.gmra.mxu0 %v9996
      %v10111 = vpop.f32.mrf.mxu0
      %v10112 = vadd.f32 0.0, %v10111
      %10113 = vmatmul.f32.gmra.mxu0 %v9999
      %v10114 = vpop.f32.mrf.mxu0
      %v10115 = vadd.f32 0.0, %v10114
      %10116 = vmatmul.f32.gmra.mxu0 %v10002
      %v10117 = vpop.f32.mrf.mxu0
      %v10118 = vadd.f32 0.0, %v10117
      %10119 = vmatmul.f32.gmra.mxu0 %v10005
      %v10120 = vpop.f32.mrf.mxu0
      %v10121 = vadd.f32 0.0, %v10120
      %10122 = vmatmul.f32.gmra.mxu0 %v10008
      %v10123 = vpop.f32.mrf.mxu0
      %v10124 = vadd.f32 0.0, %v10123
      %10125 = vmatmul.f32.gmra.mxu0 %v10011
      %v10126 = vpop.f32.mrf.mxu0
      %v10127 = vadd.f32 0.0, %v10126
      %10128 = vmatmul.f32.gmra.mxu0 %v10014
      %v10129 = vpop.f32.mrf.mxu0
      %v10130 = vadd.f32 0.0, %v10129
      %10131 = vmatmul.f32.gmra.mxu0 %v10017
      %v10132 = vpop.f32.mrf.mxu0
      %v10133 = vadd.f32 0.0, %v10132
      %10134 = vmatmul.f32.gmra.mxu0 %v10020
      %v10135 = vpop.f32.mrf.mxu0
      %v10136 = vadd.f32 0.0, %v10135
      %10137 = vmatmul.f32.gmra.mxu0 %v10023
      %v10138 = vpop.f32.mrf.mxu0
      %v10139 = vadd.f32 0.0, %v10138
      %10140 = vmatmul.f32.gmra.mxu0 %v10026
      %v10141 = vpop.f32.mrf.mxu0
      %v10142 = vadd.f32 0.0, %v10141
      %10143 = vmatmul.f32.gmra.mxu0 %v10029
      %v10144 = vpop.f32.mrf.mxu0
      %v10145 = vadd.f32 0.0, %v10144
      %10146 = vmatmul.f32.gmra.mxu0 %v10032
      %v10147 = vpop.f32.mrf.mxu0
      %v10148 = vadd.f32 0.0, %v10147
      %10149 = vmatmul.f32.gmra.mxu0 %v10035
      %v10150 = vpop.f32.mrf.mxu0
      %v10151 = vadd.f32 0.0, %v10150
      %10152 = vmatmul.f32.gmra.mxu0 %v10038
      %v10153 = vpop.f32.mrf.mxu0
      %v10154 = vadd.f32 0.0, %v10153
      %10155 = vmatmul.f32.gmra.mxu0 %v10041
      %v10156 = vpop.f32.mrf.mxu0
      %v10157 = vadd.f32 0.0, %v10156
      %10158 = vmatmul.f32.gmra.mxu0 %v10044
      %v10159 = vpop.f32.mrf.mxu0
      %v10160 = vadd.f32 0.0, %v10159
      %10161 = vmatmul.f32.gmra.mxu0 %v10047
      %v10162 = vpop.f32.mrf.mxu0
      %v10163 = vadd.f32 0.0, %v10162
      %10164 = vmatmul.f32.gmra.mxu0 %v10050
      %v10165 = vpop.f32.mrf.mxu0
      %v10166 = vadd.f32 0.0, %v10165
      %10167 = vmatmul.f32.gmra.mxu0 %v10053
      %v10168 = vpop.f32.mrf.mxu0
      %v10169 = vadd.f32 0.0, %v10168
      %10170 = vmatmul.f32.gmra.mxu0 %v10056
      %v10171 = vpop.f32.mrf.mxu0
      %v10172 = vadd.f32 0.0, %v10171
      %10173 = vmatmul.f32.gmra.mxu0 %v10059
      %v10174 = vpop.f32.mrf.mxu0
      %v10175 = vadd.f32 0.0, %v10174
      %10176 = vmatmul.f32.gmra.mxu0 %v10062
      %v10177 = vpop.f32.mrf.mxu0
      %v10178 = vadd.f32 0.0, %v10177
      %10179 = vdwg.mxu0
      %v10180 = vadd.f32 %v9902, %v10085
      %v10181 = vadd.f32 %v9903, %v10088
      %v10182 = vadd.f32 %v9904, %v10091
      %v10183 = vadd.f32 %v9905, %v10094
      %v10184 = vadd.f32 %v9906, %v10097
      %v10185 = vadd.f32 %v9907, %v10100
      %v10186 = vadd.f32 %v9908, %v10103
      %v10187 = vadd.f32 %v9909, %v10106
      %v10188 = vadd.f32 %v9910, %v10109
      %v10189 = vadd.f32 %v9911, %v10112
      %v10190 = vadd.f32 %v9912, %v10115
      %v10191 = vadd.f32 %v9913, %v10118
      %v10192 = vadd.f32 %v9914, %v10121
      %v10193 = vadd.f32 %v9915, %v10124
      %v10194 = vadd.f32 %v9916, %v10127
      %v10195 = vadd.f32 %v9917, %v10130
      %v10196 = vadd.f32 %v9918, %v10133
      %v10197 = vadd.f32 %v9919, %v10136
      %v10198 = vadd.f32 %v9920, %v10139
      %v10199 = vadd.f32 %v9921, %v10142
      %v10200 = vadd.f32 %v9922, %v10145
      %v10201 = vadd.f32 %v9923, %v10148
      %v10202 = vadd.f32 %v9924, %v10151
      %v10203 = vadd.f32 %v9925, %v10154
      %v10204 = vadd.f32 %v9926, %v10157
      %v10205 = vadd.f32 %v9927, %v10160
      %v10206 = vadd.f32 %v9928, %v10163
      %v10207 = vadd.f32 %v9929, %v10166
      %v10208 = vadd.f32 %v9930, %v10169
      %v10209 = vadd.f32 %v9931, %v10172
      %v10210 = vadd.f32 %v9932, %v10175
      %v10211 = vadd.f32 %v9933, %v10178
      %v10212 = vld [vmem:[%s9655 + $0x2] sm:$0xff]
      %v10213 = vld [vmem:[%s9655 + $0xa] sm:$0xff]
      %v10214 = vld [vmem:[%s9655 + $0x1a] sm:$0xff]
      %v10215 = vld [vmem:[%s9655 + $0x22] sm:$0xff]
      %v10216 = vld [vmem:[%s9655 + $0x32] sm:$0xff]
      %v10217 = vld [vmem:[%s9655 + $0x3a] sm:$0xff]
      %v10218 = vld [vmem:[%s9655 + $0x4a] sm:$0xff]
      %v10219 = vld [vmem:[%s9655 + $0x52] sm:$0xff]
      %v10220 = vld [vmem:[%s9655 + $0x62] sm:$0xff]
      %v10221 = vld [vmem:[%s9655 + $0x6a] sm:$0xff]
      %v10222 = vld [vmem:[%s9655 + $0x7a] sm:$0xff]
      %v10223 = vld [vmem:[%s9655 + $0x82] sm:$0xff]
      %v10224 = vld [vmem:[%s9655 + $0x92] sm:$0xff]
      %v10225 = vld [vmem:[%s9655 + $0x9a] sm:$0xff]
      %v10226 = vld [vmem:[%s9655 + $0xaa] sm:$0xff]
      %v10227 = vld [vmem:[%s9655 + $0xb2] sm:$0xff]
      %v10228 = vld [vmem:[%s9655 + $0xc2] sm:$0xff]
      %v10229 = vld [vmem:[%s9655 + $0xca] sm:$0xff]
      %v10230 = vld [vmem:[%s9655 + $0xda] sm:$0xff]
      %v10231 = vld [vmem:[%s9655 + $0xe2] sm:$0xff]
      %v10232 = vld [vmem:[%s9655 + $0xf2] sm:$0xff]
      %v10233 = vld [vmem:[%s9655 + $0xfa] sm:$0xff]
      %v10234 = vld [vmem:[%s9655 + $0x10a] sm:$0xff]
      %v10235 = vld [vmem:[%s9655 + $0x112] sm:$0xff]
      %v10236 = vld [vmem:[%s9655 + $0x122] sm:$0xff]
      %v10237 = vld [vmem:[%s9655 + $0x12a] sm:$0xff]
      %v10238 = vld [vmem:[%s9655 + $0x13a] sm:$0xff]
      %v10239 = vld [vmem:[%s9655 + $0x142] sm:$0xff]
      %v10240 = vld [vmem:[%s9655 + $0x152] sm:$0xff]
      %v10241 = vld [vmem:[%s9655 + $0x15a] sm:$0xff]
      %v10242 = vld [vmem:[%s9655 + $0x16a] sm:$0xff]
      %v10243 = vld [vmem:[%s9655 + $0x172] sm:$0xff]
      %s10244 = scalar_lea.vmem %s7, 32
      %v10245 = vld [vmem:[%s10244] sm:$0xf]
      %v10247 = vsel %vm2802, %v10212, 0
      %v10250 = vsel %vm2802, %v10213, 0
      %v10253 = vsel %vm2802, %v10214, 0
      %v10256 = vsel %vm2802, %v10215, 0
      %v10259 = vsel %vm2802, %v10216, 0
      %v10262 = vsel %vm2802, %v10217, 0
      %v10265 = vsel %vm2802, %v10218, 0
      %v10268 = vsel %vm2802, %v10219, 0
      %v10271 = vsel %vm2802, %v10220, 0
      %v10274 = vsel %vm2802, %v10221, 0
      %v10277 = vsel %vm2802, %v10222, 0
      %v10280 = vsel %vm2802, %v10223, 0
      %v10283 = vsel %vm2802, %v10224, 0
      %v10286 = vsel %vm2802, %v10225, 0
      %v10289 = vsel %vm2802, %v10226, 0
      %v10292 = vsel %vm2802, %v10227, 0
      %v10295 = vsel %vm2802, %v10228, 0
      %v10298 = vsel %vm2802, %v10229, 0
      %v10301 = vsel %vm2802, %v10230, 0
      %v10304 = vsel %vm2802, %v10231, 0
      %v10307 = vsel %vm2802, %v10232, 0
      %v10310 = vsel %vm2802, %v10233, 0
      %v10313 = vsel %vm2802, %v10234, 0
      %v10316 = vsel %vm2802, %v10235, 0
      %v10319 = vsel %vm2802, %v10236, 0
      %v10322 = vsel %vm2802, %v10237, 0
      %v10325 = vsel %vm2802, %v10238, 0
      %v10328 = vsel %vm2802, %v10239, 0
      %v10331 = vsel %vm2802, %v10240, 0
      %v10334 = vsel %vm2802, %v10241, 0
      %v10337 = vsel %vm2802, %v10242, 0
      %v10340 = vsel %vm2802, %v10243, 0
      %v10343 = vsel %vm3054, %v10245, 0
      %10345 = vmatpush.msra.mxu0 0.0
      %10346 = vmatpush.msra.mxu0 0.0
      %10347 = vmatpush.msra.mxu0 0.0
      %10348 = vmatpush.msra.mxu0 0.0
      %10349 = vmatpush.msra.mxu0 0.0
      %10350 = vmatpush.msra.mxu0 0.0
      %10351 = vmatpush.msra.mxu0 0.0
      %10352 = vmatpush.msra.mxu0 0.0
      %10353 = vmatpush.msra.mxu0 0.0
      %10354 = vmatpush.msra.mxu0 0.0
      %10355 = vmatpush.msra.mxu0 0.0
      %10356 = vmatpush.msra.mxu0 0.0
      %10357 = vmatpush.msra.mxu0 0.0
      %10358 = vmatpush.msra.mxu0 0.0
      %10359 = vmatpush.msra.mxu0 0.0
      %10360 = vmatpush.msra.mxu0 %v10343
      %10361 = vmatmul.f32.gmra.mxu0 %v10247
      %v10362 = vpop.f32.mrf.mxu0
      %v10363 = vadd.f32 0.0, %v10362
      %10364 = vmatmul.f32.gmra.mxu0 %v10250
      %v10365 = vpop.f32.mrf.mxu0
      %v10366 = vadd.f32 0.0, %v10365
      %10367 = vmatmul.f32.gmra.mxu0 %v10253
      %v10368 = vpop.f32.mrf.mxu0
      %v10369 = vadd.f32 0.0, %v10368
      %10370 = vmatmul.f32.gmra.mxu0 %v10256
      %v10371 = vpop.f32.mrf.mxu0
      %v10372 = vadd.f32 0.0, %v10371
      %10373 = vmatmul.f32.gmra.mxu0 %v10259
      %v10374 = vpop.f32.mrf.mxu0
      %v10375 = vadd.f32 0.0, %v10374
      %10376 = vmatmul.f32.gmra.mxu0 %v10262
      %v10377 = vpop.f32.mrf.mxu0
      %v10378 = vadd.f32 0.0, %v10377
      %10379 = vmatmul.f32.gmra.mxu0 %v10265
      %v10380 = vpop.f32.mrf.mxu0
      %v10381 = vadd.f32 0.0, %v10380
      %10382 = vmatmul.f32.gmra.mxu0 %v10268
      %v10383 = vpop.f32.mrf.mxu0
      %v10384 = vadd.f32 0.0, %v10383
      %10385 = vmatmul.f32.gmra.mxu0 %v10271
      %v10386 = vpop.f32.mrf.mxu0
      %v10387 = vadd.f32 0.0, %v10386
      %10388 = vmatmul.f32.gmra.mxu0 %v10274
      %v10389 = vpop.f32.mrf.mxu0
      %v10390 = vadd.f32 0.0, %v10389
      %10391 = vmatmul.f32.gmra.mxu0 %v10277
      %v10392 = vpop.f32.mrf.mxu0
      %v10393 = vadd.f32 0.0, %v10392
      %10394 = vmatmul.f32.gmra.mxu0 %v10280
      %v10395 = vpop.f32.mrf.mxu0
      %v10396 = vadd.f32 0.0, %v10395
      %10397 = vmatmul.f32.gmra.mxu0 %v10283
      %v10398 = vpop.f32.mrf.mxu0
      %v10399 = vadd.f32 0.0, %v10398
      %10400 = vmatmul.f32.gmra.mxu0 %v10286
      %v10401 = vpop.f32.mrf.mxu0
      %v10402 = vadd.f32 0.0, %v10401
      %10403 = vmatmul.f32.gmra.mxu0 %v10289
      %v10404 = vpop.f32.mrf.mxu0
      %v10405 = vadd.f32 0.0, %v10404
      %10406 = vmatmul.f32.gmra.mxu0 %v10292
      %v10407 = vpop.f32.mrf.mxu0
      %v10408 = vadd.f32 0.0, %v10407
      %10409 = vmatmul.f32.gmra.mxu0 %v10295
      %v10410 = vpop.f32.mrf.mxu0
      %v10411 = vadd.f32 0.0, %v10410
      %10412 = vmatmul.f32.gmra.mxu0 %v10298
      %v10413 = vpop.f32.mrf.mxu0
      %v10414 = vadd.f32 0.0, %v10413
      %10415 = vmatmul.f32.gmra.mxu0 %v10301
      %v10416 = vpop.f32.mrf.mxu0
      %v10417 = vadd.f32 0.0, %v10416
      %10418 = vmatmul.f32.gmra.mxu0 %v10304
      %v10419 = vpop.f32.mrf.mxu0
      %v10420 = vadd.f32 0.0, %v10419
      %10421 = vmatmul.f32.gmra.mxu0 %v10307
      %v10422 = vpop.f32.mrf.mxu0
      %v10423 = vadd.f32 0.0, %v10422
      %10424 = vmatmul.f32.gmra.mxu0 %v10310
      %v10425 = vpop.f32.mrf.mxu0
      %v10426 = vadd.f32 0.0, %v10425
      %10427 = vmatmul.f32.gmra.mxu0 %v10313
      %v10428 = vpop.f32.mrf.mxu0
      %v10429 = vadd.f32 0.0, %v10428
      %10430 = vmatmul.f32.gmra.mxu0 %v10316
      %v10431 = vpop.f32.mrf.mxu0
      %v10432 = vadd.f32 0.0, %v10431
      %10433 = vmatmul.f32.gmra.mxu0 %v10319
      %v10434 = vpop.f32.mrf.mxu0
      %v10435 = vadd.f32 0.0, %v10434
      %10436 = vmatmul.f32.gmra.mxu0 %v10322
      %v10437 = vpop.f32.mrf.mxu0
      %v10438 = vadd.f32 0.0, %v10437
      %10439 = vmatmul.f32.gmra.mxu0 %v10325
      %v10440 = vpop.f32.mrf.mxu0
      %v10441 = vadd.f32 0.0, %v10440
      %10442 = vmatmul.f32.gmra.mxu0 %v10328
      %v10443 = vpop.f32.mrf.mxu0
      %v10444 = vadd.f32 0.0, %v10443
      %10445 = vmatmul.f32.gmra.mxu0 %v10331
      %v10446 = vpop.f32.mrf.mxu0
      %v10447 = vadd.f32 0.0, %v10446
      %10448 = vmatmul.f32.gmra.mxu0 %v10334
      %v10449 = vpop.f32.mrf.mxu0
      %v10450 = vadd.f32 0.0, %v10449
      %10451 = vmatmul.f32.gmra.mxu0 %v10337
      %v10452 = vpop.f32.mrf.mxu0
      %v10453 = vadd.f32 0.0, %v10452
      %10454 = vmatmul.f32.gmra.mxu0 %v10340
      %v10455 = vpop.f32.mrf.mxu0
      %v10456 = vadd.f32 0.0, %v10455
      %10457 = vdwg.mxu0
      %v10458 = vadd.f32 %v10180, %v10363
      %v10459 = vadd.f32 %v10181, %v10366
      %v10460 = vadd.f32 %v10182, %v10369
      %v10461 = vadd.f32 %v10183, %v10372
      %v10462 = vadd.f32 %v10184, %v10375
      %v10463 = vadd.f32 %v10185, %v10378
      %v10464 = vadd.f32 %v10186, %v10381
      %v10465 = vadd.f32 %v10187, %v10384
      %v10466 = vadd.f32 %v10188, %v10387
      %v10467 = vadd.f32 %v10189, %v10390
      %v10468 = vadd.f32 %v10190, %v10393
      %v10469 = vadd.f32 %v10191, %v10396
      %v10470 = vadd.f32 %v10192, %v10399
      %v10471 = vadd.f32 %v10193, %v10402
      %v10472 = vadd.f32 %v10194, %v10405
      %v10473 = vadd.f32 %v10195, %v10408
      %v10474 = vadd.f32 %v10196, %v10411
      %v10475 = vadd.f32 %v10197, %v10414
      %v10476 = vadd.f32 %v10198, %v10417
      %v10477 = vadd.f32 %v10199, %v10420
      %v10478 = vadd.f32 %v10200, %v10423
      %v10479 = vadd.f32 %v10201, %v10426
      %v10480 = vadd.f32 %v10202, %v10429
      %v10481 = vadd.f32 %v10203, %v10432
      %v10482 = vadd.f32 %v10204, %v10435
      %v10483 = vadd.f32 %v10205, %v10438
      %v10484 = vadd.f32 %v10206, %v10441
      %v10485 = vadd.f32 %v10207, %v10444
      %v10486 = vadd.f32 %v10208, %v10447
      %v10487 = vadd.f32 %v10209, %v10450
      %v10488 = vadd.f32 %v10210, %v10453
      %v10489 = vadd.f32 %v10211, %v10456
      %v10490 = vld [vmem:[%s8] sm:$0x1]
      %v10492 = vperm.slane %v10490, 0
      %v10494 = vadd.f32 %v10458, %v10492
      %v10495 = vadd.f32 %v10459, %v10492
      %v10496 = vadd.f32 %v10460, %v10492
      %v10497 = vadd.f32 %v10461, %v10492
      %v10498 = vadd.f32 %v10462, %v10492
      %v10499 = vadd.f32 %v10463, %v10492
      %v10500 = vadd.f32 %v10464, %v10492
      %v10501 = vadd.f32 %v10465, %v10492
      %v10502 = vadd.f32 %v10466, %v10492
      %v10503 = vadd.f32 %v10467, %v10492
      %v10504 = vadd.f32 %v10468, %v10492
      %v10505 = vadd.f32 %v10469, %v10492
      %v10506 = vadd.f32 %v10470, %v10492
      %v10507 = vadd.f32 %v10471, %v10492
      %v10508 = vadd.f32 %v10472, %v10492
      %v10509 = vadd.f32 %v10473, %v10492
      %v10510 = vadd.f32 %v10474, %v10492
      %v10511 = vadd.f32 %v10475, %v10492
      %v10512 = vadd.f32 %v10476, %v10492
      %v10513 = vadd.f32 %v10477, %v10492
      %v10514 = vadd.f32 %v10478, %v10492
      %v10515 = vadd.f32 %v10479, %v10492
      %v10516 = vadd.f32 %v10480, %v10492
      %v10517 = vadd.f32 %v10481, %v10492
      %v10518 = vadd.f32 %v10482, %v10492
      %v10519 = vadd.f32 %v10483, %v10492
      %v10520 = vadd.f32 %v10484, %v10492
      %v10521 = vadd.f32 %v10485, %v10492
      %v10522 = vadd.f32 %v10486, %v10492
      %v10523 = vadd.f32 %v10487, %v10492
      %v10524 = vadd.f32 %v10488, %v10492
      %v10525 = vadd.f32 %v10489, %v10492
      %vm10526 = vcmp.ge.f32.partialorder %v10494, 0.0
      %vm10527 = vcmp.ge.f32.partialorder %v10495, 0.0
      %vm10528 = vcmp.ge.f32.partialorder %v10496, 0.0
      %vm10529 = vcmp.ge.f32.partialorder %v10497, 0.0
      %vm10530 = vcmp.ge.f32.partialorder %v10498, 0.0
      %vm10531 = vcmp.ge.f32.partialorder %v10499, 0.0
      %vm10532 = vcmp.ge.f32.partialorder %v10500, 0.0
      %vm10533 = vcmp.ge.f32.partialorder %v10501, 0.0
      %vm10534 = vcmp.ge.f32.partialorder %v10502, 0.0
      %vm10535 = vcmp.ge.f32.partialorder %v10503, 0.0
      %vm10536 = vcmp.ge.f32.partialorder %v10504, 0.0
      %vm10537 = vcmp.ge.f32.partialorder %v10505, 0.0
      %vm10538 = vcmp.ge.f32.partialorder %v10506, 0.0
      %vm10539 = vcmp.ge.f32.partialorder %v10507, 0.0
      %vm10540 = vcmp.ge.f32.partialorder %v10508, 0.0
      %vm10541 = vcmp.ge.f32.partialorder %v10509, 0.0
      %vm10542 = vcmp.ge.f32.partialorder %v10510, 0.0
      %vm10543 = vcmp.ge.f32.partialorder %v10511, 0.0
      %vm10544 = vcmp.ge.f32.partialorder %v10512, 0.0
      %vm10545 = vcmp.ge.f32.partialorder %v10513, 0.0
      %vm10546 = vcmp.ge.f32.partialorder %v10514, 0.0
      %vm10547 = vcmp.ge.f32.partialorder %v10515, 0.0
      %vm10548 = vcmp.ge.f32.partialorder %v10516, 0.0
      %vm10549 = vcmp.ge.f32.partialorder %v10517, 0.0
      %vm10550 = vcmp.ge.f32.partialorder %v10518, 0.0
      %vm10551 = vcmp.ge.f32.partialorder %v10519, 0.0
      %vm10552 = vcmp.ge.f32.partialorder %v10520, 0.0
      %vm10553 = vcmp.ge.f32.partialorder %v10521, 0.0
      %vm10554 = vcmp.ge.f32.partialorder %v10522, 0.0
      %vm10555 = vcmp.ge.f32.partialorder %v10523, 0.0
      %vm10556 = vcmp.ge.f32.partialorder %v10524, 0.0
      %vm10557 = vcmp.ge.f32.partialorder %v10525, 0.0
      %v10558 = vmul.f32 %v10494, 0.2
      %v10559 = vmul.f32 %v10495, 0.2
      %v10560 = vmul.f32 %v10496, 0.2
      %v10561 = vmul.f32 %v10497, 0.2
      %v10562 = vmul.f32 %v10498, 0.2
      %v10563 = vmul.f32 %v10499, 0.2
      %v10564 = vmul.f32 %v10500, 0.2
      %v10565 = vmul.f32 %v10501, 0.2
      %v10566 = vmul.f32 %v10502, 0.2
      %v10567 = vmul.f32 %v10503, 0.2
      %v10568 = vmul.f32 %v10504, 0.2
      %v10569 = vmul.f32 %v10505, 0.2
      %v10570 = vmul.f32 %v10506, 0.2
      %v10571 = vmul.f32 %v10507, 0.2
      %v10572 = vmul.f32 %v10508, 0.2
      %v10573 = vmul.f32 %v10509, 0.2
      %v10574 = vmul.f32 %v10510, 0.2
      %v10575 = vmul.f32 %v10511, 0.2
      %v10576 = vmul.f32 %v10512, 0.2
      %v10577 = vmul.f32 %v10513, 0.2
      %v10578 = vmul.f32 %v10514, 0.2
      %v10579 = vmul.f32 %v10515, 0.2
      %v10580 = vmul.f32 %v10516, 0.2
      %v10581 = vmul.f32 %v10517, 0.2
      %v10582 = vmul.f32 %v10518, 0.2
      %v10583 = vmul.f32 %v10519, 0.2
      %v10584 = vmul.f32 %v10520, 0.2
      %v10585 = vmul.f32 %v10521, 0.2
      %v10586 = vmul.f32 %v10522, 0.2
      %v10587 = vmul.f32 %v10523, 0.2
      %v10588 = vmul.f32 %v10524, 0.2
      %v10589 = vmul.f32 %v10525, 0.2
      %v10590 = vsel %vm10526, %v10494, %v10558
      %v10591 = vsel %vm10527, %v10495, %v10559
      %v10592 = vsel %vm10528, %v10496, %v10560
      %v10593 = vsel %vm10529, %v10497, %v10561
      %v10594 = vsel %vm10530, %v10498, %v10562
      %v10595 = vsel %vm10531, %v10499, %v10563
      %v10596 = vsel %vm10532, %v10500, %v10564
      %v10597 = vsel %vm10533, %v10501, %v10565
      %v10598 = vsel %vm10534, %v10502, %v10566
      %v10599 = vsel %vm10535, %v10503, %v10567
      %v10600 = vsel %vm10536, %v10504, %v10568
      %v10601 = vsel %vm10537, %v10505, %v10569
      %v10602 = vsel %vm10538, %v10506, %v10570
      %v10603 = vsel %vm10539, %v10507, %v10571
      %v10604 = vsel %vm10540, %v10508, %v10572
      %v10605 = vsel %vm10541, %v10509, %v10573
      %v10606 = vsel %vm10542, %v10510, %v10574
      %v10607 = vsel %vm10543, %v10511, %v10575
      %v10608 = vsel %vm10544, %v10512, %v10576
      %v10609 = vsel %vm10545, %v10513, %v10577
      %v10610 = vsel %vm10546, %v10514, %v10578
      %v10611 = vsel %vm10547, %v10515, %v10579
      %v10612 = vsel %vm10548, %v10516, %v10580
      %v10613 = vsel %vm10549, %v10517, %v10581
      %v10614 = vsel %vm10550, %v10518, %v10582
      %v10615 = vsel %vm10551, %v10519, %v10583
      %v10616 = vsel %vm10552, %v10520, %v10584
      %v10617 = vsel %vm10553, %v10521, %v10585
      %v10618 = vsel %vm10554, %v10522, %v10586
      %v10619 = vsel %vm10555, %v10523, %v10587
      %v10620 = vsel %vm10556, %v10524, %v10588
      %v10621 = vsel %vm10557, %v10525, %v10589
      %10622 = vst.msk [vmem:[%s352] sm:$0xff] %vm2802, %v10590
      %10623 = vst.msk [vmem:[%s352 + $0x8] sm:$0xff] %vm2802, %v10591
      %10624 = vst.msk [vmem:[%s352 + $0x10] sm:$0xff] %vm2802, %v10592
      %10625 = vst.msk [vmem:[%s352 + $0x18] sm:$0xff] %vm2802, %v10593
      %10626 = vst.msk [vmem:[%s352 + $0x20] sm:$0xff] %vm2802, %v10594
      %10627 = vst.msk [vmem:[%s352 + $0x28] sm:$0xff] %vm2802, %v10595
      %10628 = vst.msk [vmem:[%s352 + $0x30] sm:$0xff] %vm2802, %v10596
      %10629 = vst.msk [vmem:[%s352 + $0x38] sm:$0xff] %vm2802, %v10597
      %10630 = vst.msk [vmem:[%s352 + $0x40] sm:$0xff] %vm2802, %v10598
      %10631 = vst.msk [vmem:[%s352 + $0x48] sm:$0xff] %vm2802, %v10599
      %10632 = vst.msk [vmem:[%s352 + $0x50] sm:$0xff] %vm2802, %v10600
      %10633 = vst.msk [vmem:[%s352 + $0x58] sm:$0xff] %vm2802, %v10601
      %10634 = vst.msk [vmem:[%s352 + $0x60] sm:$0xff] %vm2802, %v10602
      %10635 = vst.msk [vmem:[%s352 + $0x68] sm:$0xff] %vm2802, %v10603
      %10636 = vst.msk [vmem:[%s352 + $0x70] sm:$0xff] %vm2802, %v10604
      %10637 = vst.msk [vmem:[%s352 + $0x78] sm:$0xff] %vm2802, %v10605
      %10638 = vst.msk [vmem:[%s352 + $0x80] sm:$0xff] %vm2802, %v10606
      %10639 = vst.msk [vmem:[%s352 + $0x88] sm:$0xff] %vm2802, %v10607
      %10640 = vst.msk [vmem:[%s352 + $0x90] sm:$0xff] %vm2802, %v10608
      %10641 = vst.msk [vmem:[%s352 + $0x98] sm:$0xff] %vm2802, %v10609
      %10642 = vst.msk [vmem:[%s352 + $0xa0] sm:$0xff] %vm2802, %v10610
      %10643 = vst.msk [vmem:[%s352 + $0xa8] sm:$0xff] %vm2802, %v10611
      %10644 = vst.msk [vmem:[%s352 + $0xb0] sm:$0xff] %vm2802, %v10612
      %10645 = vst.msk [vmem:[%s352 + $0xb8] sm:$0xff] %vm2802, %v10613
      %10646 = vst.msk [vmem:[%s352 + $0xc0] sm:$0xff] %vm2802, %v10614
      %10647 = vst.msk [vmem:[%s352 + $0xc8] sm:$0xff] %vm2802, %v10615
      %10648 = vst.msk [vmem:[%s352 + $0xd0] sm:$0xff] %vm2802, %v10616
      %10649 = vst.msk [vmem:[%s352 + $0xd8] sm:$0xff] %vm2802, %v10617
      %10650 = vst.msk [vmem:[%s352 + $0xe0] sm:$0xff] %vm2802, %v10618
      %10651 = vst.msk [vmem:[%s352 + $0xe8] sm:$0xff] %vm2802, %v10619
      %10652 = vst.msk [vmem:[%s352 + $0xf0] sm:$0xff] %vm2802, %v10620
      %10653 = vst.msk [vmem:[%s352 + $0xf8] sm:$0xff] %vm2802, %v10621
      %p10654 = scmp.lt.s32.totalorder %s20, 1
      %s10655 = scalar_select %p10654, %s20, 1
      %s10656 = smul.addr %s10655, 32
      %s10657 = smul.addr %s10656, 8
      %s10658 = scalar_lea.vmem %s9, %s10657
      // Predicated region
      $region57: #{unet_up_forward.1} parent=55 // pred_check
        %p10659 = pneg %p237
      $region58: #{unet_up_forward.1} parent=55 // pred_check_branch
        %10661 = sbr.rel (%p10659) target = $region60
      $region59: #{unet_up_forward.1} parent=55 // pred_region
        _
      $region60: #{unet_up_forward.1} parent=55 // pred_fallthru
        _
    $region56: #{unet_up_forward.1} parent=5 // pred_fallthru
      _
    %p10662 = scmp.le.s32.totalorder 2, %s15
    // Predicated region
    $region61: #{unet_up_forward.1} parent=5 // pred_check
      %p10663 = pneg %p10662
    $region62: #{unet_up_forward.1} parent=5 // pred_check_branch
      %10665 = sbr.rel (%p10663) target = $region64
    $region63: #{unet_up_forward.1} parent=5 // pred_region
      %s10666 = ssub.s32 %s15, 2
      // Predicated region
      $region65: #{unet_up_forward.1} parent=63 // pred_check
        %p10667 = pneg %p243
      $region66: #{unet_up_forward.1} parent=63 // pred_check_branch
        %10669 = sbr.rel (%p10667) target = $region68
      $region67: #{unet_up_forward.1} parent=63 // pred_region
        %p10670 = scmp.lt.s32.totalorder %s21, 1
        %s10671 = scalar_select %p10670, %s21, 1
        %s10672 = smul.addr %s10671, 32
        %s10673 = smul.addr %s10672, 8
        %s10674 = scalar_lea.vmem %s9, %s10673
      $region68: #{unet_up_forward.1} parent=63 // pred_fallthru
        _
    $region64: #{unet_up_forward.1} parent=5 // pred_fallthru
      _
  $region6: #{unet_up_forward.1} parent=0 // loop_footer
    %s19 = sadd.s32 1, %s15
  $region7: #{unet_up_forward.1} parent=0 // loop_footer_branch
    %14 = sbr.rel target = $region3
  $region8: #{unet_up_forward.1} parent=0 // loop_exit
    _

</llo_original>
